<compile_context>
chip_gen: v6e
topology: v6e:2x2x1
jax: 0.10.0
libtpu: 0.0.40
codegen_flags: <defaults>
</compile_context>

<pallas_src>
import functools

import jax
import jax.numpy as jnp
from jax import lax
from jax.experimental import pallas as pl
from jax.experimental.pallas import tpu as pltpu  # noqa: F401  (kept for TPU-specific tuning hooks)

BP = 8     # padded batch rows  (one f32 sublane tile)
HP = 128   # per-gate lane-padded hidden width (one lane tile); >= max hidden dim (64)
DP = 128   # lane-padded input feature width


# ------------------------------ Fused kernel ---------------------------------
def _fused_lstm_kernel(x_ref,
                       w0i_ref, w0h_ref, b0_ref,
                       w1i_ref, w1h_ref, b1_ref,
                       w2i_ref, w2h_ref, b2_ref,
                       wo_ref, bo_ref,
                       out_ref,
                       *, T, Bp, Hp):
    """Whole network, one invocation, no grid.

    x_ref:   (T*Bp, DP)   time-major, batch padded to Bp rows, features padded to DP lanes
    w*i_ref: (DP|Hp, 4Hp) pre-transposed W_ih, gate order (i,f,o,g), each gate 128-lane padded
    w*h_ref: (Hp, 4Hp)    pre-transposed W_hh, same gate layout
    b*_ref:  (1, 4Hp)     b_ih + b_hh, same gate layout
    wo_ref:  (Hp, 128), bo_ref: (1, 128)
    out_ref: (Bp, 128)
    """
    f32 = jnp.float32
    H3 = 3 * Hp

    def cell(pre, h, c, whh):
        # pre already includes x-projection + fused bias.
        gates = pre + jnp.dot(h, whh, preferred_element_type=f32)       # (Bp, 4Hp)
        sg = jax.nn.sigmoid(gates[:, :H3])   # i | f | o  — one wide EUP region
        gg = jnp.tanh(gates[:, H3:])         # g          — one EUP region
        i_g = sg[:, 0:Hp]                    # whole-vreg lane views (128-aligned)
        f_g = sg[:, Hp:2 * Hp]
        o_g = sg[:, 2 * Hp:H3]
        c = f_g * c + i_g * gg
        h = o_g * jnp.tanh(c)
        return h, c

    # Weight loads and bias broadcasts hoisted once (JAX does not CSE broadcasts).
    w0h = w0h_ref[...]
    w1i, w1h = w1i_ref[...], w1h_ref[...]
    w2i, w2h = w2i_ref[...], w2h_ref[...]
    b1 = jnp.broadcast_to(b1_ref[...], (Bp, 4 * Hp))
    b2 = jnp.broadcast_to(b2_ref[...], (Bp, 4 * Hp))

    # Hoisted, time-parallel layer-0 input projection: one MXU matmul for all T steps.
    xp0 = jnp.dot(x_ref[...], w0i_ref[...], preferred_element_type=f32) + b0_ref[...]

    z = jnp.zeros((Bp, Hp), f32)
    h0, c0 = z, z
    h1, c1 = z, z
    h2, c2 = z, z

    # Wavefront-interleaved static unroll: at wavefront step s, layer 2 consumes h1(t=s-2),
    # layer 1 consumes h0(t=s-1), layer 0 produces h0(t=s).  Emitting the oldest stage first
    # lets the plain h0/h1 variables act as the pipeline registers.
    # TODO(synk): optional further win — block-diagonal-pack the three recurrent weight
    # matrices so each wavefront step issues a single vmatmul instead of three.
    for s in range(T + 2):
        if s >= 2:                          # layer 2, time t = s-2
            pre2 = jnp.dot(h1, w2i, preferred_element_type=f32) + b2
            h2, c2 = cell(pre2, h2, c2, w2h)
        if 1 <= s <= T:                     # layer 1, time t = s-1
            pre1 = jnp.dot(h0, w1i, preferred_element_type=f32) + b1
            h1, c1 = cell(pre1, h1, c1, w1h)
        if s < T:                           # layer 0, time t = s
            pre0 = xp0[s * Bp:(s + 1) * Bp, :]   # tile-aligned 8-row view
            h0, c0 = cell(pre0, h0, c0, w0h)

    # Fused linear head on the last timestep of layer 2; lane-dense (8, 128) store.
    out_ref[...] = (jnp.dot(h2, wo_ref[...], preferred_element_type=f32)
                    + bo_ref[...]).astype(out_ref.dtype)


# ------------------------------ Param handling --------------------------------
def init_params(key, data_dim, hidden_dim):
    """PyTorch-layout parameters (W_ih: (4H, Din), W_hh: (4H, H), biases (4H,))."""
    dims = [(data_dim, hidden_dim), (hidden_dim, 64), (64, 32)]
    params = {}
    keys = jax.random.split(key, 4 * len(dims) + 2)
    k = 0
    for li, (din, h) in enumerate(dims):
        bound = 1.0 / jnp.sqrt(h)
        params[f"lstm{li}_w_ih"] = jax.random.uniform(
            keys[k], (4 * h, din), jnp.float32, -bound, bound); k += 1
        params[f"lstm{li}_w_hh"] = jax.random.uniform(
            keys[k], (4 * h, h), jnp.float32, -bound, bound); k += 1
        params[f"lstm{li}_b_ih"] = jax.random.uniform(
            keys[k], (4 * h,), jnp.float32, -bound, bound); k += 1
        params[f"lstm{li}_b_hh"] = jax.random.uniform(
            keys[k], (4 * h,), jnp.float32, -bound, bound); k += 1
    bound = 1.0 / jnp.sqrt(32.0)
    params["out_w"] = jax.random.uniform(
        keys[k], (data_dim, 32), jnp.float32, -bound, bound); k += 1
    params["out_b"] = jax.random.uniform(
        keys[k], (data_dim,), jnp.float32, -bound, bound)
    return params


_GATE_ORDER = (0, 1, 3, 2)  # PyTorch (i, f, g, o) -> kernel (i, f, o, g)


def _reorder_pad_cols(w_t, H, Hp):
    """w_t: (Din, 4H) transposed weight -> (Din, 4Hp) gate-reordered, lane-padded."""
    blocks = [jnp.pad(w_t[:, k * H:(k + 1) * H], ((0, 0), (0, Hp - H)))
              for k in _GATE_ORDER]
    return jnp.concatenate(blocks, axis=1)


def _reorder_pad_bias(b, H, Hp):
    blocks = [jnp.pad(b[k * H:(k + 1) * H], (0, Hp - H)) for k in _GATE_ORDER]
    return jnp.concatenate(blocks).reshape(1, -1)


def pack_params(params, hp=HP, dp=DP):
    """One-time transpose / gate-permute / zero-pad / bias-fusion.  Kernel layout:
    W_ih^T, W_hh^T with gate order (i,f,o,g), each gate padded to `hp` lanes; input
    (K) dims padded to dp (layer 0) / hp (layers 1,2); biases fused b_ih + b_hh."""
    packed = {}
    in_pad = [dp, hp, hp]
    for li in range(3):
        w_ih = jnp.asarray(params[f"lstm{li}_w_ih"], jnp.float32)    # (4H, Din)
        w_hh = jnp.asarray(params[f"lstm{li}_w_hh"], jnp.float32)    # (4H, H)
        H = w_hh.shape[1]
        din = w_ih.shape[1]
        b = (jnp.asarray(params[f"lstm{li}_b_ih"], jnp.float32)
             + jnp.asarray(params[f"lstm{li}_b_hh"], jnp.float32))
        wih_t = _reorder_pad_cols(w_ih.T, H, hp)                     # (Din, 4hp)
        whh_t = _reorder_pad_cols(w_hh.T, H, hp)                     # (H,   4hp)
        packed[f"l{li}_wih"] = jnp.pad(wih_t, ((0, in_pad[li] - din), (0, 0)))
        packed[f"l{li}_whh"] = jnp.pad(whh_t, ((0, hp - H), (0, 0)))
        packed[f"l{li}_b"] = _reorder_pad_bias(b, H, hp)             # (1, 4hp)
    w_out = jnp.asarray(params["out_w"], jnp.float32)                # (data_dim, 32)
    b_out = jnp.asarray(params["out_b"], jnp.float32)                # (data_dim,)
    h2, data_dim = w_out.shape[1], w_out.shape[0]
    packed["wo"] = jnp.pad(w_out.T, ((0, hp - h2), (0, 128 - data_dim)))   # (hp, 128)
    packed["bo"] = jnp.pad(b_out, (0, 128 - data_dim)).reshape(1, -1)      # (1, 128)
    return packed


# --------------------------------- Forward ------------------------------------
@jax.jit
def lstm_network_forward(packed, x_btd):
    """x_btd: (B, T, data_dim) batch-first, like the PyTorch module."""
    B, T, D = x_btd.shape
    assert B <= BP and D <= DP

    # Time-major + pad batch to one sublane tile and features to one lane tile
    # (tiny, fuses into a single XLA prologue op under jit).
    x = jnp.transpose(x_btd.astype(jnp.float32), (1, 0, 2))          # (T, B, D)
    x = jnp.pad(x, ((0, 0), (0, BP - B), (0, DP - D)))               # (T, BP, DP)
    x2 = x.reshape(T * BP, DP)

    kernel = functools.partial(_fused_lstm_kernel, T=T, Bp=BP, Hp=HP)
    out_p = pl.pallas_call(
        kernel,
        out_shape=jax.ShapeDtypeStruct((BP, 128), jnp.float32),
    )(x2,
      packed["l0_wih"], packed["l0_whh"], packed["l0_b"],
      packed["l1_wih"], packed["l1_whh"], packed["l1_b"],
      packed["l2_wih"], packed["l2_whh"], packed["l2_b"],
      packed["wo"], packed["bo"])
    return out_p[:B, :D]


# --------------------------- Pure-JAX reference check --------------------------
def _ref_lstm_layer(x_tbd, w_ih, w_hh, b_ih, b_hh):
    H = w_hh.shape[1]

    def step(carry, xt):
        h, c = carry
        gates = xt @ w_ih.T + h @ w_hh.T + b_ih + b_hh
        i_g = jax.nn.sigmoid(gates[:, 0 * H:1 * H])
        f_g = jax.nn.sigmoid(gates[:, 1 * H:2 * H])
        g_g = jnp.tanh(gates[:, 2 * H:3 * H])
        o_g = jax.nn.sigmoid(gates[:, 3 * H:4 * H])
        c = f_g * c + i_g * g_g
        h = o_g * jnp.tanh(c)
        return (h, c), h

    B = x_tbd.shape[1]
    init = (jnp.zeros((B, H), jnp.float32), jnp.zeros((B, H), jnp.float32))
    _, hs = lax.scan(step, init, x_tbd)
    return hs


def _ref_forward(params, x_btd):
    x = jnp.transpose(x_btd, (1, 0, 2)).astype(jnp.float32)
    for li in range(3):
        x = _ref_lstm_layer(
            x,
            params[f"lstm{li}_w_ih"], params[f"lstm{li}_w_hh"],
            params[f"lstm{li}_b_ih"], params[f"lstm{li}_b_hh"],
        )
    return x[-1] @ params["out_w"].T + params["out_b"]


if __name__ == "__main__":
    B, T, DATA_DIM, HIDDEN_DIM = 2, 8, 4, 32

    key = jax.random.PRNGKey(0)
    k_params, k_x = jax.random.split(key)
    params = init_params(k_params, DATA_DIM, HIDDEN_DIM)
    packed = pack_params(params)
    x = jax.random.normal(k_x, (B, T, DATA_DIM), jnp.float32)

    out = lstm_network_forward(packed, x)
    out = jax.block_until_ready(out)
    assert out.shape == (B, DATA_DIM), out.shape

    ref = _ref_forward(params, x)
    assert jnp.allclose(out, ref, atol=1e-4, rtol=1e-4), (out, ref)

    print("KERNEL_OK")
</pallas_src>

<mosaic_0001>
module attributes {stable_mosaic.version = 11 : i64} {
  func.func @_fused_lstm_kernel(%arg0: memref<64x128xf32, #tpu.memory_space<vmem>>, %arg1: memref<128x512xf32, #tpu.memory_space<vmem>>, %arg2: memref<128x512xf32, #tpu.memory_space<vmem>>, %arg3: memref<1x512xf32, #tpu.memory_space<vmem>>, %arg4: memref<128x512xf32, #tpu.memory_space<vmem>>, %arg5: memref<128x512xf32, #tpu.memory_space<vmem>>, %arg6: memref<1x512xf32, #tpu.memory_space<vmem>>, %arg7: memref<128x512xf32, #tpu.memory_space<vmem>>, %arg8: memref<128x512xf32, #tpu.memory_space<vmem>>, %arg9: memref<1x512xf32, #tpu.memory_space<vmem>>, %arg10: memref<128x128xf32, #tpu.memory_space<vmem>>, %arg11: memref<1x128xf32, #tpu.memory_space<vmem>>, %arg12: memref<8x128xf32, #tpu.memory_space<vmem>>) attributes {dimension_semantics = [], scalar_prefetch = 0 : i64, scratch_operands = 0 : i64, tpu.core_type = #tpu.core_type<tc>} {
    %c0 = arith.constant 0 : index
    %c0_0 = arith.constant 0 : index
    %0 = vector.load %arg2[%c0, %c0_0] : memref<128x512xf32, #tpu.memory_space<vmem>>, vector<128x512xf32>
    %c0_1 = arith.constant 0 : index
    %c0_2 = arith.constant 0 : index
    %1 = vector.load %arg4[%c0_1, %c0_2] : memref<128x512xf32, #tpu.memory_space<vmem>>, vector<128x512xf32>
    %c0_3 = arith.constant 0 : index
    %c0_4 = arith.constant 0 : index
    %2 = vector.load %arg5[%c0_3, %c0_4] : memref<128x512xf32, #tpu.memory_space<vmem>>, vector<128x512xf32>
    %c0_5 = arith.constant 0 : index
    %c0_6 = arith.constant 0 : index
    %3 = vector.load %arg7[%c0_5, %c0_6] : memref<128x512xf32, #tpu.memory_space<vmem>>, vector<128x512xf32>
    %c0_7 = arith.constant 0 : index
    %c0_8 = arith.constant 0 : index
    %4 = vector.load %arg8[%c0_7, %c0_8] : memref<128x512xf32, #tpu.memory_space<vmem>>, vector<128x512xf32>
    %c0_9 = arith.constant 0 : index
    %c0_10 = arith.constant 0 : index
    %5 = vector.load %arg6[%c0_9, %c0_10] : memref<1x512xf32, #tpu.memory_space<vmem>>, vector<1x512xf32>
    %6 = vector.shape_cast %5 : vector<1x512xf32> to vector<1x512xf32>
    %7 = vector.broadcast %6 : vector<1x512xf32> to vector<8x512xf32>
    %c0_11 = arith.constant 0 : index
    %c0_12 = arith.constant 0 : index
    %8 = vector.load %arg9[%c0_11, %c0_12] : memref<1x512xf32, #tpu.memory_space<vmem>>, vector<1x512xf32>
    %9 = vector.shape_cast %8 : vector<1x512xf32> to vector<1x512xf32>
    %10 = vector.broadcast %9 : vector<1x512xf32> to vector<8x512xf32>
    %c0_13 = arith.constant 0 : index
    %c0_14 = arith.constant 0 : index
    %11 = vector.load %arg0[%c0_13, %c0_14] : memref<64x128xf32, #tpu.memory_space<vmem>>, vector<64x128xf32>
    %c0_15 = arith.constant 0 : index
    %c0_16 = arith.constant 0 : index
    %12 = vector.load %arg1[%c0_15, %c0_16] : memref<128x512xf32, #tpu.memory_space<vmem>>, vector<128x512xf32>
    %cst = arith.constant dense<0.000000e+00> : vector<64x512xf32>
    %13 = tpu.matmul %11, %12, %cst {dimension_numbers = #tpu.dot_dimension_numbers<[1], [0], [0], [1], [0, 0, 1, 1], [], []>} : vector<64x128xf32>, vector<128x512xf32>, vector<64x512xf32> -> vector<64x512xf32>
    %c0_17 = arith.constant 0 : index
    %c0_18 = arith.constant 0 : index
    %14 = vector.load %arg3[%c0_17, %c0_18] : memref<1x512xf32, #tpu.memory_space<vmem>>, vector<1x512xf32>
    %15 = vector.broadcast %14 : vector<1x512xf32> to vector<64x512xf32>
    %16 = arith.addf %13, %15 : vector<64x512xf32>
    %cst_19 = arith.constant 0.000000e+00 : f32
    %17 = vector.broadcast %cst_19 : f32 to vector<8x128xf32>
    %18 = vector.extract_strided_slice %16 {offsets = [0, 0], sizes = [8, 512], strides = [1, 1]} : vector<64x512xf32> to vector<8x512xf32>
    %cst_20 = arith.constant dense<0.000000e+00> : vector<8x512xf32>
    %19 = tpu.matmul %17, %0, %cst_20 {dimension_numbers = #tpu.dot_dimension_numbers<[1], [0], [0], [1], [0, 0, 1, 1], [], []>} : vector<8x128xf32>, vector<128x512xf32>, vector<8x512xf32> -> vector<8x512xf32>
    %20 = arith.addf %18, %19 : vector<8x512xf32>
    %21 = vector.extract_strided_slice %20 {offsets = [0, 0], sizes = [8, 384], strides = [1, 1]} : vector<8x512xf32> to vector<8x384xf32>
    %22 = arith.negf %21 : vector<8x384xf32>
    %23 = math.exp %22 : vector<8x384xf32>
    %cst_21 = arith.constant 1.000000e+00 : f32
    %24 = vector.broadcast %cst_21 : f32 to vector<8x384xf32>
    %25 = arith.addf %24, %23 : vector<8x384xf32>
    %26 = arith.divf %24, %25 : vector<8x384xf32>
    %27 = vector.extract_strided_slice %20 {offsets = [0, 384], sizes = [8, 128], strides = [1, 1]} : vector<8x512xf32> to vector<8x128xf32>
    %28 = math.tanh %27 : vector<8x128xf32>
    %29 = vector.extract_strided_slice %26 {offsets = [0, 0], sizes = [8, 128], strides = [1, 1]} : vector<8x384xf32> to vector<8x128xf32>
    %30 = vector.extract_strided_slice %26 {offsets = [0, 128], sizes = [8, 128], strides = [1, 1]} : vector<8x384xf32> to vector<8x128xf32>
    %31 = vector.extract_strided_slice %26 {offsets = [0, 256], sizes = [8, 128], strides = [1, 1]} : vector<8x384xf32> to vector<8x128xf32>
    %32 = arith.mulf %30, %17 : vector<8x128xf32>
    %33 = arith.mulf %29, %28 : vector<8x128xf32>
    %34 = arith.addf %32, %33 : vector<8x128xf32>
    %35 = math.tanh %34 : vector<8x128xf32>
    %36 = arith.mulf %31, %35 : vector<8x128xf32>
    %cst_22 = arith.constant dense<0.000000e+00> : vector<8x512xf32>
    %37 = tpu.matmul %36, %1, %cst_22 {dimension_numbers = #tpu.dot_dimension_numbers<[1], [0], [0], [1], [0, 0, 1, 1], [], []>} : vector<8x128xf32>, vector<128x512xf32>, vector<8x512xf32> -> vector<8x512xf32>
    %38 = arith.addf %37, %7 : vector<8x512xf32>
    %cst_23 = arith.constant dense<0.000000e+00> : vector<8x512xf32>
    %39 = tpu.matmul %17, %2, %cst_23 {dimension_numbers = #tpu.dot_dimension_numbers<[1], [0], [0], [1], [0, 0, 1, 1], [], []>} : vector<8x128xf32>, vector<128x512xf32>, vector<8x512xf32> -> vector<8x512xf32>
    %40 = arith.addf %38, %39 : vector<8x512xf32>
    %41 = vector.extract_strided_slice %40 {offsets = [0, 0], sizes = [8, 384], strides = [1, 1]} : vector<8x512xf32> to vector<8x384xf32>
    %42 = arith.negf %41 : vector<8x384xf32>
    %43 = math.exp %42 : vector<8x384xf32>
    %cst_24 = arith.constant 1.000000e+00 : f32
    %44 = vector.broadcast %cst_24 : f32 to vector<8x384xf32>
    %45 = arith.addf %44, %43 : vector<8x384xf32>
    %46 = arith.divf %44, %45 : vector<8x384xf32>
    %47 = vector.extract_strided_slice %40 {offsets = [0, 384], sizes = [8, 128], strides = [1, 1]} : vector<8x512xf32> to vector<8x128xf32>
    %48 = math.tanh %47 : vector<8x128xf32>
    %49 = vector.extract_strided_slice %46 {offsets = [0, 0], sizes = [8, 128], strides = [1, 1]} : vector<8x384xf32> to vector<8x128xf32>
    %50 = vector.extract_strided_slice %46 {offsets = [0, 128], sizes = [8, 128], strides = [1, 1]} : vector<8x384xf32> to vector<8x128xf32>
    %51 = vector.extract_strided_slice %46 {offsets = [0, 256], sizes = [8, 128], strides = [1, 1]} : vector<8x384xf32> to vector<8x128xf32>
    %52 = arith.mulf %50, %17 : vector<8x128xf32>
    %53 = arith.mulf %49, %48 : vector<8x128xf32>
    %54 = arith.addf %52, %53 : vector<8x128xf32>
    %55 = math.tanh %54 : vector<8x128xf32>
    %56 = arith.mulf %51, %55 : vector<8x128xf32>
    %57 = vector.extract_strided_slice %16 {offsets = [8, 0], sizes = [8, 512], strides = [1, 1]} : vector<64x512xf32> to vector<8x512xf32>
    %cst_25 = arith.constant dense<0.000000e+00> : vector<8x512xf32>
    %58 = tpu.matmul %36, %0, %cst_25 {dimension_numbers = #tpu.dot_dimension_numbers<[1], [0], [0], [1], [0, 0, 1, 1], [], []>} : vector<8x128xf32>, vector<128x512xf32>, vector<8x512xf32> -> vector<8x512xf32>
    %59 = arith.addf %57, %58 : vector<8x512xf32>
    %60 = vector.extract_strided_slice %59 {offsets = [0, 0], sizes = [8, 384], strides = [1, 1]} : vector<8x512xf32> to vector<8x384xf32>
    %61 = arith.negf %60 : vector<8x384xf32>
    %62 = math.exp %61 : vector<8x384xf32>
    %cst_26 = arith.constant 1.000000e+00 : f32
    %63 = vector.broadcast %cst_26 : f32 to vector<8x384xf32>
    %64 = arith.addf %63, %62 : vector<8x384xf32>
    %65 = arith.divf %63, %64 : vector<8x384xf32>
    %66 = vector.extract_strided_slice %59 {offsets = [0, 384], sizes = [8, 128], strides = [1, 1]} : vector<8x512xf32> to vector<8x128xf32>
    %67 = math.tanh %66 : vector<8x128xf32>
    %68 = vector.extract_strided_slice %65 {offsets = [0, 0], sizes = [8, 128], strides = [1, 1]} : vector<8x384xf32> to vector<8x128xf32>
    %69 = vector.extract_strided_slice %65 {offsets = [0, 128], sizes = [8, 128], strides = [1, 1]} : vector<8x384xf32> to vector<8x128xf32>
    %70 = vector.extract_strided_slice %65 {offsets = [0, 256], sizes = [8, 128], strides = [1, 1]} : vector<8x384xf32> to vector<8x128xf32>
    %71 = arith.mulf %69, %34 : vector<8x128xf32>
    %72 = arith.mulf %68, %67 : vector<8x128xf32>
    %73 = arith.addf %71, %72 : vector<8x128xf32>
    %74 = math.tanh %73 : vector<8x128xf32>
    %75 = arith.mulf %70, %74 : vector<8x128xf32>
    %cst_27 = arith.constant dense<0.000000e+00> : vector<8x512xf32>
    %76 = tpu.matmul %56, %3, %cst_27 {dimension_numbers = #tpu.dot_dimension_numbers<[1], [0], [0], [1], [0, 0, 1, 1], [], []>} : vector<8x128xf32>, vector<128x512xf32>, vector<8x512xf32> -> vector<8x512xf32>
    %77 = arith.addf %76, %10 : vector<8x512xf32>
    %cst_28 = arith.constant dense<0.000000e+00> : vector<8x512xf32>
    %78 = tpu.matmul %17, %4, %cst_28 {dimension_numbers = #tpu.dot_dimension_numbers<[1], [0], [0], [1], [0, 0, 1, 1], [], []>} : vector<8x128xf32>, vector<128x512xf32>, vector<8x512xf32> -> vector<8x512xf32>
    %79 = arith.addf %77, %78 : vector<8x512xf32>
    %80 = vector.extract_strided_slice %79 {offsets = [0, 0], sizes = [8, 384], strides = [1, 1]} : vector<8x512xf32> to vector<8x384xf32>
    %81 = arith.negf %80 : vector<8x384xf32>
    %82 = math.exp %81 : vector<8x384xf32>
    %cst_29 = arith.constant 1.000000e+00 : f32
    %83 = vector.broadcast %cst_29 : f32 to vector<8x384xf32>
    %84 = arith.addf %83, %82 : vector<8x384xf32>
    %85 = arith.divf %83, %84 : vector<8x384xf32>
    %86 = vector.extract_strided_slice %79 {offsets = [0, 384], sizes = [8, 128], strides = [1, 1]} : vector<8x512xf32> to vector<8x128xf32>
    %87 = math.tanh %86 : vector<8x128xf32>
    %88 = vector.extract_strided_slice %85 {offsets = [0, 0], sizes = [8, 128], strides = [1, 1]} : vector<8x384xf32> to vector<8x128xf32>
    %89 = vector.extract_strided_slice %85 {offsets = [0, 128], sizes = [8, 128], strides = [1, 1]} : vector<8x384xf32> to vector<8x128xf32>
    %90 = vector.extract_strided_slice %85 {offsets = [0, 256], sizes = [8, 128], strides = [1, 1]} : vector<8x384xf32> to vector<8x128xf32>
    %91 = arith.mulf %89, %17 : vector<8x128xf32>
    %92 = arith.mulf %88, %87 : vector<8x128xf32>
    %93 = arith.addf %91, %92 : vector<8x128xf32>
    %94 = math.tanh %93 : vector<8x128xf32>
    %95 = arith.mulf %90, %94 : vector<8x128xf32>
    %cst_30 = arith.constant dense<0.000000e+00> : vector<8x512xf32>
    %96 = tpu.matmul %75, %1, %cst_30 {dimension_numbers = #tpu.dot_dimension_numbers<[1], [0], [0], [1], [0, 0, 1, 1], [], []>} : vector<8x128xf32>, vector<128x512xf32>, vector<8x512xf32> -> vector<8x512xf32>
    %97 = arith.addf %96, %7 : vector<8x512xf32>
    %cst_31 = arith.constant dense<0.000000e+00> : vector<8x512xf32>
    %98 = tpu.matmul %56, %2, %cst_31 {dimension_numbers = #tpu.dot_dimension_numbers<[1], [0], [0], [1], [0, 0, 1, 1], [], []>} : vector<8x128xf32>, vector<128x512xf32>, vector<8x512xf32> -> vector<8x512xf32>
    %99 = arith.addf %97, %98 : vector<8x512xf32>
    %100 = vector.extract_strided_slice %99 {offsets = [0, 0], sizes = [8, 384], strides = [1, 1]} : vector<8x512xf32> to vector<8x384xf32>
    %101 = arith.negf %100 : vector<8x384xf32>
    %102 = math.exp %101 : vector<8x384xf32>
    %cst_32 = arith.constant 1.000000e+00 : f32
    %103 = vector.broadcast %cst_32 : f32 to vector<8x384xf32>
    %104 = arith.addf %103, %102 : vector<8x384xf32>
    %105 = arith.divf %103, %104 : vector<8x384xf32>
    %106 = vector.extract_strided_slice %99 {offsets = [0, 384], sizes = [8, 128], strides = [1, 1]} : vector<8x512xf32> to vector<8x128xf32>
    %107 = math.tanh %106 : vector<8x128xf32>
    %108 = vector.extract_strided_slice %105 {offsets = [0, 0], sizes = [8, 128], strides = [1, 1]} : vector<8x384xf32> to vector<8x128xf32>
    %109 = vector.extract_strided_slice %105 {offsets = [0, 128], sizes = [8, 128], strides = [1, 1]} : vector<8x384xf32> to vector<8x128xf32>
    %110 = vector.extract_strided_slice %105 {offsets = [0, 256], sizes = [8, 128], strides = [1, 1]} : vector<8x384xf32> to vector<8x128xf32>
    %111 = arith.mulf %109, %54 : vector<8x128xf32>
    %112 = arith.mulf %108, %107 : vector<8x128xf32>
    %113 = arith.addf %111, %112 : vector<8x128xf32>
    %114 = math.tanh %113 : vector<8x128xf32>
    %115 = arith.mulf %110, %114 : vector<8x128xf32>
    %116 = vector.extract_strided_slice %16 {offsets = [16, 0], sizes = [8, 512], strides = [1, 1]} : vector<64x512xf32> to vector<8x512xf32>
    %cst_33 = arith.constant dense<0.000000e+00> : vector<8x512xf32>
    %117 = tpu.matmul %75, %0, %cst_33 {dimension_numbers = #tpu.dot_dimension_numbers<[1], [0], [0], [1], [0, 0, 1, 1], [], []>} : vector<8x128xf32>, vector<128x512xf32>, vector<8x512xf32> -> vector<8x512xf32>
    %118 = arith.addf %116, %117 : vector<8x512xf32>
    %119 = vector.extract_strided_slice %118 {offsets = [0, 0], sizes = [8, 384], strides = [1, 1]} : vector<8x512xf32> to vector<8x384xf32>
    %120 = arith.negf %119 : vector<8x384xf32>
    %121 = math.exp %120 : vector<8x384xf32>
    %cst_34 = arith.constant 1.000000e+00 : f32
    %122 = vector.broadcast %cst_34 : f32 to vector<8x384xf32>
    %123 = arith.addf %122, %121 : vector<8x384xf32>
    %124 = arith.divf %122, %123 : vector<8x384xf32>
    %125 = vector.extract_strided_slice %118 {offsets = [0, 384], sizes = [8, 128], strides = [1, 1]} : vector<8x512xf32> to vector<8x128xf32>
    %126 = math.tanh %125 : vector<8x128xf32>
    %127 = vector.extract_strided_slice %124 {offsets = [0, 0], sizes = [8, 128], strides = [1, 1]} : vector<8x384xf32> to vector<8x128xf32>
    %128 = vector.extract_strided_slice %124 {offsets = [0, 128], sizes = [8, 128], strides = [1, 1]} : vector<8x384xf32> to vector<8x128xf32>
    %129 = vector.extract_strided_slice %124 {offsets = [0, 256], sizes = [8, 128], strides = [1, 1]} : vector<8x384xf32> to vector<8x128xf32>
    %130 = arith.mulf %128, %73 : vector<8x128xf32>
    %131 = arith.mulf %127, %126 : vector<8x128xf32>
    %132 = arith.addf %130, %131 : vector<8x128xf32>
    %133 = math.tanh %132 : vector<8x128xf32>
    %134 = arith.mulf %129, %133 : vector<8x128xf32>
    %cst_35 = arith.constant dense<0.000000e+00> : vector<8x512xf32>
    %135 = tpu.matmul %115, %3, %cst_35 {dimension_numbers = #tpu.dot_dimension_numbers<[1], [0], [0], [1], [0, 0, 1, 1], [], []>} : vector<8x128xf32>, vector<128x512xf32>, vector<8x512xf32> -> vector<8x512xf32>
    %136 = arith.addf %135, %10 : vector<8x512xf32>
    %cst_36 = arith.constant dense<0.000000e+00> : vector<8x512xf32>
    %137 = tpu.matmul %95, %4, %cst_36 {dimension_numbers = #tpu.dot_dimension_numbers<[1], [0], [0], [1], [0, 0, 1, 1], [], []>} : vector<8x128xf32>, vector<128x512xf32>, vector<8x512xf32> -> vector<8x512xf32>
    %138 = arith.addf %136, %137 : vector<8x512xf32>
    %139 = vector.extract_strided_slice %138 {offsets = [0, 0], sizes = [8, 384], strides = [1, 1]} : vector<8x512xf32> to vector<8x384xf32>
    %140 = arith.negf %139 : vector<8x384xf32>
    %141 = math.exp %140 : vector<8x384xf32>
    %cst_37 = arith.constant 1.000000e+00 : f32
    %142 = vector.broadcast %cst_37 : f32 to vector<8x384xf32>
    %143 = arith.addf %142, %141 : vector<8x384xf32>
    %144 = arith.divf %142, %143 : vector<8x384xf32>
    %145 = vector.extract_strided_slice %138 {offsets = [0, 384], sizes = [8, 128], strides = [1, 1]} : vector<8x512xf32> to vector<8x128xf32>
    %146 = math.tanh %145 : vector<8x128xf32>
    %147 = vector.extract_strided_slice %144 {offsets = [0, 0], sizes = [8, 128], strides = [1, 1]} : vector<8x384xf32> to vector<8x128xf32>
    %148 = vector.extract_strided_slice %144 {offsets = [0, 128], sizes = [8, 128], strides = [1, 1]} : vector<8x384xf32> to vector<8x128xf32>
    %149 = vector.extract_strided_slice %144 {offsets = [0, 256], sizes = [8, 128], strides = [1, 1]} : vector<8x384xf32> to vector<8x128xf32>
    %150 = arith.mulf %148, %93 : vector<8x128xf32>
    %151 = arith.mulf %147, %146 : vector<8x128xf32>
    %152 = arith.addf %150, %151 : vector<8x128xf32>
    %153 = math.tanh %152 : vector<8x128xf32>
    %154 = arith.mulf %149, %153 : vector<8x128xf32>
    %cst_38 = arith.constant dense<0.000000e+00> : vector<8x512xf32>
    %155 = tpu.matmul %134, %1, %cst_38 {dimension_numbers = #tpu.dot_dimension_numbers<[1], [0], [0], [1], [0, 0, 1, 1], [], []>} : vector<8x128xf32>, vector<128x512xf32>, vector<8x512xf32> -> vector<8x512xf32>
    %156 = arith.addf %155, %7 : vector<8x512xf32>
    %cst_39 = arith.constant dense<0.000000e+00> : vector<8x512xf32>
    %157 = tpu.matmul %115, %2, %cst_39 {dimension_numbers = #tpu.dot_dimension_numbers<[1], [0], [0], [1], [0, 0, 1, 1], [], []>} : vector<8x128xf32>, vector<128x512xf32>, vector<8x512xf32> -> vector<8x512xf32>
    %158 = arith.addf %156, %157 : vector<8x512xf32>
    %159 = vector.extract_strided_slice %158 {offsets = [0, 0], sizes = [8, 384], strides = [1, 1]} : vector<8x512xf32> to vector<8x384xf32>
    %160 = arith.negf %159 : vector<8x384xf32>
    %161 = math.exp %160 : vector<8x384xf32>
    %cst_40 = arith.constant 1.000000e+00 : f32
    %162 = vector.broadcast %cst_40 : f32 to vector<8x384xf32>
    %163 = arith.addf %162, %161 : vector<8x384xf32>
    %164 = arith.divf %162, %163 : vector<8x384xf32>
    %165 = vector.extract_strided_slice %158 {offsets = [0, 384], sizes = [8, 128], strides = [1, 1]} : vector<8x512xf32> to vector<8x128xf32>
    %166 = math.tanh %165 : vector<8x128xf32>
    %167 = vector.extract_strided_slice %164 {offsets = [0, 0], sizes = [8, 128], strides = [1, 1]} : vector<8x384xf32> to vector<8x128xf32>
    %168 = vector.extract_strided_slice %164 {offsets = [0, 128], sizes = [8, 128], strides = [1, 1]} : vector<8x384xf32> to vector<8x128xf32>
    %169 = vector.extract_strided_slice %164 {offsets = [0, 256], sizes = [8, 128], strides = [1, 1]} : vector<8x384xf32> to vector<8x128xf32>
    %170 = arith.mulf %168, %113 : vector<8x128xf32>
    %171 = arith.mulf %167, %166 : vector<8x128xf32>
    %172 = arith.addf %170, %171 : vector<8x128xf32>
    %173 = math.tanh %172 : vector<8x128xf32>
    %174 = arith.mulf %169, %173 : vector<8x128xf32>
    %175 = vector.extract_strided_slice %16 {offsets = [24, 0], sizes = [8, 512], strides = [1, 1]} : vector<64x512xf32> to vector<8x512xf32>
    %cst_41 = arith.constant dense<0.000000e+00> : vector<8x512xf32>
    %176 = tpu.matmul %134, %0, %cst_41 {dimension_numbers = #tpu.dot_dimension_numbers<[1], [0], [0], [1], [0, 0, 1, 1], [], []>} : vector<8x128xf32>, vector<128x512xf32>, vector<8x512xf32> -> vector<8x512xf32>
    %177 = arith.addf %175, %176 : vector<8x512xf32>
    %178 = vector.extract_strided_slice %177 {offsets = [0, 0], sizes = [8, 384], strides = [1, 1]} : vector<8x512xf32> to vector<8x384xf32>
    %179 = arith.negf %178 : vector<8x384xf32>
    %180 = math.exp %179 : vector<8x384xf32>
    %cst_42 = arith.constant 1.000000e+00 : f32
    %181 = vector.broadcast %cst_42 : f32 to vector<8x384xf32>
    %182 = arith.addf %181, %180 : vector<8x384xf32>
    %183 = arith.divf %181, %182 : vector<8x384xf32>
    %184 = vector.extract_strided_slice %177 {offsets = [0, 384], sizes = [8, 128], strides = [1, 1]} : vector<8x512xf32> to vector<8x128xf32>
    %185 = math.tanh %184 : vector<8x128xf32>
    %186 = vector.extract_strided_slice %183 {offsets = [0, 0], sizes = [8, 128], strides = [1, 1]} : vector<8x384xf32> to vector<8x128xf32>
    %187 = vector.extract_strided_slice %183 {offsets = [0, 128], sizes = [8, 128], strides = [1, 1]} : vector<8x384xf32> to vector<8x128xf32>
    %188 = vector.extract_strided_slice %183 {offsets = [0, 256], sizes = [8, 128], strides = [1, 1]} : vector<8x384xf32> to vector<8x128xf32>
    %189 = arith.mulf %187, %132 : vector<8x128xf32>
    %190 = arith.mulf %186, %185 : vector<8x128xf32>
    %191 = arith.addf %189, %190 : vector<8x128xf32>
    %192 = math.tanh %191 : vector<8x128xf32>
    %193 = arith.mulf %188, %192 : vector<8x128xf32>
    %cst_43 = arith.constant dense<0.000000e+00> : vector<8x512xf32>
    %194 = tpu.matmul %174, %3, %cst_43 {dimension_numbers = #tpu.dot_dimension_numbers<[1], [0], [0], [1], [0, 0, 1, 1], [], []>} : vector<8x128xf32>, vector<128x512xf32>, vector<8x512xf32> -> vector<8x512xf32>
    %195 = arith.addf %194, %10 : vector<8x512xf32>
    %cst_44 = arith.constant dense<0.000000e+00> : vector<8x512xf32>
    %196 = tpu.matmul %154, %4, %cst_44 {dimension_numbers = #tpu.dot_dimension_numbers<[1], [0], [0], [1], [0, 0, 1, 1], [], []>} : vector<8x128xf32>, vector<128x512xf32>, vector<8x512xf32> -> vector<8x512xf32>
    %197 = arith.addf %195, %196 : vector<8x512xf32>
    %198 = vector.extract_strided_slice %197 {offsets = [0, 0], sizes = [8, 384], strides = [1, 1]} : vector<8x512xf32> to vector<8x384xf32>
    %199 = arith.negf %198 : vector<8x384xf32>
    %200 = math.exp %199 : vector<8x384xf32>
    %cst_45 = arith.constant 1.000000e+00 : f32
    %201 = vector.broadcast %cst_45 : f32 to vector<8x384xf32>
    %202 = arith.addf %201, %200 : vector<8x384xf32>
    %203 = arith.divf %201, %202 : vector<8x384xf32>
    %204 = vector.extract_strided_slice %197 {offsets = [0, 384], sizes = [8, 128], strides = [1, 1]} : vector<8x512xf32> to vector<8x128xf32>
    %205 = math.tanh %204 : vector<8x128xf32>
    %206 = vector.extract_strided_slice %203 {offsets = [0, 0], sizes = [8, 128], strides = [1, 1]} : vector<8x384xf32> to vector<8x128xf32>
    %207 = vector.extract_strided_slice %203 {offsets = [0, 128], sizes = [8, 128], strides = [1, 1]} : vector<8x384xf32> to vector<8x128xf32>
    %208 = vector.extract_strided_slice %203 {offsets = [0, 256], sizes = [8, 128], strides = [1, 1]} : vector<8x384xf32> to vector<8x128xf32>
    %209 = arith.mulf %207, %152 : vector<8x128xf32>
    %210 = arith.mulf %206, %205 : vector<8x128xf32>
    %211 = arith.addf %209, %210 : vector<8x128xf32>
    %212 = math.tanh %211 : vector<8x128xf32>
    %213 = arith.mulf %208, %212 : vector<8x128xf32>
    %cst_46 = arith.constant dense<0.000000e+00> : vector<8x512xf32>
    %214 = tpu.matmul %193, %1, %cst_46 {dimension_numbers = #tpu.dot_dimension_numbers<[1], [0], [0], [1], [0, 0, 1, 1], [], []>} : vector<8x128xf32>, vector<128x512xf32>, vector<8x512xf32> -> vector<8x512xf32>
    %215 = arith.addf %214, %7 : vector<8x512xf32>
    %cst_47 = arith.constant dense<0.000000e+00> : vector<8x512xf32>
    %216 = tpu.matmul %174, %2, %cst_47 {dimension_numbers = #tpu.dot_dimension_numbers<[1], [0], [0], [1], [0, 0, 1, 1], [], []>} : vector<8x128xf32>, vector<128x512xf32>, vector<8x512xf32> -> vector<8x512xf32>
    %217 = arith.addf %215, %216 : vector<8x512xf32>
    %218 = vector.extract_strided_slice %217 {offsets = [0, 0], sizes = [8, 384], strides = [1, 1]} : vector<8x512xf32> to vector<8x384xf32>
    %219 = arith.negf %218 : vector<8x384xf32>
    %220 = math.exp %219 : vector<8x384xf32>
    %cst_48 = arith.constant 1.000000e+00 : f32
    %221 = vector.broadcast %cst_48 : f32 to vector<8x384xf32>
    %222 = arith.addf %221, %220 : vector<8x384xf32>
    %223 = arith.divf %221, %222 : vector<8x384xf32>
    %224 = vector.extract_strided_slice %217 {offsets = [0, 384], sizes = [8, 128], strides = [1, 1]} : vector<8x512xf32> to vector<8x128xf32>
    %225 = math.tanh %224 : vector<8x128xf32>
    %226 = vector.extract_strided_slice %223 {offsets = [0, 0], sizes = [8, 128], strides = [1, 1]} : vector<8x384xf32> to vector<8x128xf32>
    %227 = vector.extract_strided_slice %223 {offsets = [0, 128], sizes = [8, 128], strides = [1, 1]} : vector<8x384xf32> to vector<8x128xf32>
    %228 = vector.extract_strided_slice %223 {offsets = [0, 256], sizes = [8, 128], strides = [1, 1]} : vector<8x384xf32> to vector<8x128xf32>
    %229 = arith.mulf %227, %172 : vector<8x128xf32>
    %230 = arith.mulf %226, %225 : vector<8x128xf32>
    %231 = arith.addf %229, %230 : vector<8x128xf32>
    %232 = math.tanh %231 : vector<8x128xf32>
    %233 = arith.mulf %228, %232 : vector<8x128xf32>
    %234 = vector.extract_strided_slice %16 {offsets = [32, 0], sizes = [8, 512], strides = [1, 1]} : vector<64x512xf32> to vector<8x512xf32>
    %cst_49 = arith.constant dense<0.000000e+00> : vector<8x512xf32>
    %235 = tpu.matmul %193, %0, %cst_49 {dimension_numbers = #tpu.dot_dimension_numbers<[1], [0], [0], [1], [0, 0, 1, 1], [], []>} : vector<8x128xf32>, vector<128x512xf32>, vector<8x512xf32> -> vector<8x512xf32>
    %236 = arith.addf %234, %235 : vector<8x512xf32>
    %237 = vector.extract_strided_slice %236 {offsets = [0, 0], sizes = [8, 384], strides = [1, 1]} : vector<8x512xf32> to vector<8x384xf32>
    %238 = arith.negf %237 : vector<8x384xf32>
    %239 = math.exp %238 : vector<8x384xf32>
    %cst_50 = arith.constant 1.000000e+00 : f32
    %240 = vector.broadcast %cst_50 : f32 to vector<8x384xf32>
    %241 = arith.addf %240, %239 : vector<8x384xf32>
    %242 = arith.divf %240, %241 : vector<8x384xf32>
    %243 = vector.extract_strided_slice %236 {offsets = [0, 384], sizes = [8, 128], strides = [1, 1]} : vector<8x512xf32> to vector<8x128xf32>
    %244 = math.tanh %243 : vector<8x128xf32>
    %245 = vector.extract_strided_slice %242 {offsets = [0, 0], sizes = [8, 128], strides = [1, 1]} : vector<8x384xf32> to vector<8x128xf32>
    %246 = vector.extract_strided_slice %242 {offsets = [0, 128], sizes = [8, 128], strides = [1, 1]} : vector<8x384xf32> to vector<8x128xf32>
    %247 = vector.extract_strided_slice %242 {offsets = [0, 256], sizes = [8, 128], strides = [1, 1]} : vector<8x384xf32> to vector<8x128xf32>
    %248 = arith.mulf %246, %191 : vector<8x128xf32>
    %249 = arith.mulf %245, %244 : vector<8x128xf32>
    %250 = arith.addf %248, %249 : vector<8x128xf32>
    %251 = math.tanh %250 : vector<8x128xf32>
    %252 = arith.mulf %247, %251 : vector<8x128xf32>
    %cst_51 = arith.constant dense<0.000000e+00> : vector<8x512xf32>
    %253 = tpu.matmul %233, %3, %cst_51 {dimension_numbers = #tpu.dot_dimension_numbers<[1], [0], [0], [1], [0, 0, 1, 1], [], []>} : vector<8x128xf32>, vector<128x512xf32>, vector<8x512xf32> -> vector<8x512xf32>
    %254 = arith.addf %253, %10 : vector<8x512xf32>
    %cst_52 = arith.constant dense<0.000000e+00> : vector<8x512xf32>
    %255 = tpu.matmul %213, %4, %cst_52 {dimension_numbers = #tpu.dot_dimension_numbers<[1], [0], [0], [1], [0, 0, 1, 1], [], []>} : vector<8x128xf32>, vector<128x512xf32>, vector<8x512xf32> -> vector<8x512xf32>
    %256 = arith.addf %254, %255 : vector<8x512xf32>
    %257 = vector.extract_strided_slice %256 {offsets = [0, 0], sizes = [8, 384], strides = [1, 1]} : vector<8x512xf32> to vector<8x384xf32>
    %258 = arith.negf %257 : vector<8x384xf32>
    %259 = math.exp %258 : vector<8x384xf32>
    %cst_53 = arith.constant 1.000000e+00 : f32
    %260 = vector.broadcast %cst_53 : f32 to vector<8x384xf32>
    %261 = arith.addf %260, %259 : vector<8x384xf32>
    %262 = arith.divf %260, %261 : vector<8x384xf32>
    %263 = vector.extract_strided_slice %256 {offsets = [0, 384], sizes = [8, 128], strides = [1, 1]} : vector<8x512xf32> to vector<8x128xf32>
    %264 = math.tanh %263 : vector<8x128xf32>
    %265 = vector.extract_strided_slice %262 {offsets = [0, 0], sizes = [8, 128], strides = [1, 1]} : vector<8x384xf32> to vector<8x128xf32>
    %266 = vector.extract_strided_slice %262 {offsets = [0, 128], sizes = [8, 128], strides = [1, 1]} : vector<8x384xf32> to vector<8x128xf32>
    %267 = vector.extract_strided_slice %262 {offsets = [0, 256], sizes = [8, 128], strides = [1, 1]} : vector<8x384xf32> to vector<8x128xf32>
    %268 = arith.mulf %266, %211 : vector<8x128xf32>
    %269 = arith.mulf %265, %264 : vector<8x128xf32>
    %270 = arith.addf %268, %269 : vector<8x128xf32>
    %271 = math.tanh %270 : vector<8x128xf32>
    %272 = arith.mulf %267, %271 : vector<8x128xf32>
    %cst_54 = arith.constant dense<0.000000e+00> : vector<8x512xf32>
    %273 = tpu.matmul %252, %1, %cst_54 {dimension_numbers = #tpu.dot_dimension_numbers<[1], [0], [0], [1], [0, 0, 1, 1], [], []>} : vector<8x128xf32>, vector<128x512xf32>, vector<8x512xf32> -> vector<8x512xf32>
    %274 = arith.addf %273, %7 : vector<8x512xf32>
    %cst_55 = arith.constant dense<0.000000e+00> : vector<8x512xf32>
    %275 = tpu.matmul %233, %2, %cst_55 {dimension_numbers = #tpu.dot_dimension_numbers<[1], [0], [0], [1], [0, 0, 1, 1], [], []>} : vector<8x128xf32>, vector<128x512xf32>, vector<8x512xf32> -> vector<8x512xf32>
    %276 = arith.addf %274, %275 : vector<8x512xf32>
    %277 = vector.extract_strided_slice %276 {offsets = [0, 0], sizes = [8, 384], strides = [1, 1]} : vector<8x512xf32> to vector<8x384xf32>
    %278 = arith.negf %277 : vector<8x384xf32>
    %279 = math.exp %278 : vector<8x384xf32>
    %cst_56 = arith.constant 1.000000e+00 : f32
    %280 = vector.broadcast %cst_56 : f32 to vector<8x384xf32>
    %281 = arith.addf %280, %279 : vector<8x384xf32>
    %282 = arith.divf %280, %281 : vector<8x384xf32>
    %283 = vector.extract_strided_slice %276 {offsets = [0, 384], sizes = [8, 128], strides = [1, 1]} : vector<8x512xf32> to vector<8x128xf32>
    %284 = math.tanh %283 : vector<8x128xf32>
    %285 = vector.extract_strided_slice %282 {offsets = [0, 0], sizes = [8, 128], strides = [1, 1]} : vector<8x384xf32> to vector<8x128xf32>
    %286 = vector.extract_strided_slice %282 {offsets = [0, 128], sizes = [8, 128], strides = [1, 1]} : vector<8x384xf32> to vector<8x128xf32>
    %287 = vector.extract_strided_slice %282 {offsets = [0, 256], sizes = [8, 128], strides = [1, 1]} : vector<8x384xf32> to vector<8x128xf32>
    %288 = arith.mulf %286, %231 : vector<8x128xf32>
    %289 = arith.mulf %285, %284 : vector<8x128xf32>
    %290 = arith.addf %288, %289 : vector<8x128xf32>
    %291 = math.tanh %290 : vector<8x128xf32>
    %292 = arith.mulf %287, %291 : vector<8x128xf32>
    %293 = vector.extract_strided_slice %16 {offsets = [40, 0], sizes = [8, 512], strides = [1, 1]} : vector<64x512xf32> to vector<8x512xf32>
    %cst_57 = arith.constant dense<0.000000e+00> : vector<8x512xf32>
    %294 = tpu.matmul %252, %0, %cst_57 {dimension_numbers = #tpu.dot_dimension_numbers<[1], [0], [0], [1], [0, 0, 1, 1], [], []>} : vector<8x128xf32>, vector<128x512xf32>, vector<8x512xf32> -> vector<8x512xf32>
    %295 = arith.addf %293, %294 : vector<8x512xf32>
    %296 = vector.extract_strided_slice %295 {offsets = [0, 0], sizes = [8, 384], strides = [1, 1]} : vector<8x512xf32> to vector<8x384xf32>
    %297 = arith.negf %296 : vector<8x384xf32>
    %298 = math.exp %297 : vector<8x384xf32>
    %cst_58 = arith.constant 1.000000e+00 : f32
    %299 = vector.broadcast %cst_58 : f32 to vector<8x384xf32>
    %300 = arith.addf %299, %298 : vector<8x384xf32>
    %301 = arith.divf %299, %300 : vector<8x384xf32>
    %302 = vector.extract_strided_slice %295 {offsets = [0, 384], sizes = [8, 128], strides = [1, 1]} : vector<8x512xf32> to vector<8x128xf32>
    %303 = math.tanh %302 : vector<8x128xf32>
    %304 = vector.extract_strided_slice %301 {offsets = [0, 0], sizes = [8, 128], strides = [1, 1]} : vector<8x384xf32> to vector<8x128xf32>
    %305 = vector.extract_strided_slice %301 {offsets = [0, 128], sizes = [8, 128], strides = [1, 1]} : vector<8x384xf32> to vector<8x128xf32>
    %306 = vector.extract_strided_slice %301 {offsets = [0, 256], sizes = [8, 128], strides = [1, 1]} : vector<8x384xf32> to vector<8x128xf32>
    %307 = arith.mulf %305, %250 : vector<8x128xf32>
    %308 = arith.mulf %304, %303 : vector<8x128xf32>
    %309 = arith.addf %307, %308 : vector<8x128xf32>
    %310 = math.tanh %309 : vector<8x128xf32>
    %311 = arith.mulf %306, %310 : vector<8x128xf32>
    %cst_59 = arith.constant dense<0.000000e+00> : vector<8x512xf32>
    %312 = tpu.matmul %292, %3, %cst_59 {dimension_numbers = #tpu.dot_dimension_numbers<[1], [0], [0], [1], [0, 0, 1, 1], [], []>} : vector<8x128xf32>, vector<128x512xf32>, vector<8x512xf32> -> vector<8x512xf32>
    %313 = arith.addf %312, %10 : vector<8x512xf32>
    %cst_60 = arith.constant dense<0.000000e+00> : vector<8x512xf32>
    %314 = tpu.matmul %272, %4, %cst_60 {dimension_numbers = #tpu.dot_dimension_numbers<[1], [0], [0], [1], [0, 0, 1, 1], [], []>} : vector<8x128xf32>, vector<128x512xf32>, vector<8x512xf32> -> vector<8x512xf32>
    %315 = arith.addf %313, %314 : vector<8x512xf32>
    %316 = vector.extract_strided_slice %315 {offsets = [0, 0], sizes = [8, 384], strides = [1, 1]} : vector<8x512xf32> to vector<8x384xf32>
    %317 = arith.negf %316 : vector<8x384xf32>
    %318 = math.exp %317 : vector<8x384xf32>
    %cst_61 = arith.constant 1.000000e+00 : f32
    %319 = vector.broadcast %cst_61 : f32 to vector<8x384xf32>
    %320 = arith.addf %319, %318 : vector<8x384xf32>
    %321 = arith.divf %319, %320 : vector<8x384xf32>
    %322 = vector.extract_strided_slice %315 {offsets = [0, 384], sizes = [8, 128], strides = [1, 1]} : vector<8x512xf32> to vector<8x128xf32>
    %323 = math.tanh %322 : vector<8x128xf32>
    %324 = vector.extract_strided_slice %321 {offsets = [0, 0], sizes = [8, 128], strides = [1, 1]} : vector<8x384xf32> to vector<8x128xf32>
    %325 = vector.extract_strided_slice %321 {offsets = [0, 128], sizes = [8, 128], strides = [1, 1]} : vector<8x384xf32> to vector<8x128xf32>
    %326 = vector.extract_strided_slice %321 {offsets = [0, 256], sizes = [8, 128], strides = [1, 1]} : vector<8x384xf32> to vector<8x128xf32>
    %327 = arith.mulf %325, %270 : vector<8x128xf32>
    %328 = arith.mulf %324, %323 : vector<8x128xf32>
    %329 = arith.addf %327, %328 : vector<8x128xf32>
    %330 = math.tanh %329 : vector<8x128xf32>
    %331 = arith.mulf %326, %330 : vector<8x128xf32>
    %cst_62 = arith.constant dense<0.000000e+00> : vector<8x512xf32>
    %332 = tpu.matmul %311, %1, %cst_62 {dimension_numbers = #tpu.dot_dimension_numbers<[1], [0], [0], [1], [0, 0, 1, 1], [], []>} : vector<8x128xf32>, vector<128x512xf32>, vector<8x512xf32> -> vector<8x512xf32>
    %333 = arith.addf %332, %7 : vector<8x512xf32>
    %cst_63 = arith.constant dense<0.000000e+00> : vector<8x512xf32>
    %334 = tpu.matmul %292, %2, %cst_63 {dimension_numbers = #tpu.dot_dimension_numbers<[1], [0], [0], [1], [0, 0, 1, 1], [], []>} : vector<8x128xf32>, vector<128x512xf32>, vector<8x512xf32> -> vector<8x512xf32>
    %335 = arith.addf %333, %334 : vector<8x512xf32>
    %336 = vector.extract_strided_slice %335 {offsets = [0, 0], sizes = [8, 384], strides = [1, 1]} : vector<8x512xf32> to vector<8x384xf32>
    %337 = arith.negf %336 : vector<8x384xf32>
    %338 = math.exp %337 : vector<8x384xf32>
    %cst_64 = arith.constant 1.000000e+00 : f32
    %339 = vector.broadcast %cst_64 : f32 to vector<8x384xf32>
    %340 = arith.addf %339, %338 : vector<8x384xf32>
    %341 = arith.divf %339, %340 : vector<8x384xf32>
    %342 = vector.extract_strided_slice %335 {offsets = [0, 384], sizes = [8, 128], strides = [1, 1]} : vector<8x512xf32> to vector<8x128xf32>
    %343 = math.tanh %342 : vector<8x128xf32>
    %344 = vector.extract_strided_slice %341 {offsets = [0, 0], sizes = [8, 128], strides = [1, 1]} : vector<8x384xf32> to vector<8x128xf32>
    %345 = vector.extract_strided_slice %341 {offsets = [0, 128], sizes = [8, 128], strides = [1, 1]} : vector<8x384xf32> to vector<8x128xf32>
    %346 = vector.extract_strided_slice %341 {offsets = [0, 256], sizes = [8, 128], strides = [1, 1]} : vector<8x384xf32> to vector<8x128xf32>
    %347 = arith.mulf %345, %290 : vector<8x128xf32>
    %348 = arith.mulf %344, %343 : vector<8x128xf32>
    %349 = arith.addf %347, %348 : vector<8x128xf32>
    %350 = math.tanh %349 : vector<8x128xf32>
    %351 = arith.mulf %346, %350 : vector<8x128xf32>
    %352 = vector.extract_strided_slice %16 {offsets = [48, 0], sizes = [8, 512], strides = [1, 1]} : vector<64x512xf32> to vector<8x512xf32>
    %cst_65 = arith.constant dense<0.000000e+00> : vector<8x512xf32>
    %353 = tpu.matmul %311, %0, %cst_65 {dimension_numbers = #tpu.dot_dimension_numbers<[1], [0], [0], [1], [0, 0, 1, 1], [], []>} : vector<8x128xf32>, vector<128x512xf32>, vector<8x512xf32> -> vector<8x512xf32>
    %354 = arith.addf %352, %353 : vector<8x512xf32>
    %355 = vector.extract_strided_slice %354 {offsets = [0, 0], sizes = [8, 384], strides = [1, 1]} : vector<8x512xf32> to vector<8x384xf32>
    %356 = arith.negf %355 : vector<8x384xf32>
    %357 = math.exp %356 : vector<8x384xf32>
    %cst_66 = arith.constant 1.000000e+00 : f32
    %358 = vector.broadcast %cst_66 : f32 to vector<8x384xf32>
    %359 = arith.addf %358, %357 : vector<8x384xf32>
    %360 = arith.divf %358, %359 : vector<8x384xf32>
    %361 = vector.extract_strided_slice %354 {offsets = [0, 384], sizes = [8, 128], strides = [1, 1]} : vector<8x512xf32> to vector<8x128xf32>
    %362 = math.tanh %361 : vector<8x128xf32>
    %363 = vector.extract_strided_slice %360 {offsets = [0, 0], sizes = [8, 128], strides = [1, 1]} : vector<8x384xf32> to vector<8x128xf32>
    %364 = vector.extract_strided_slice %360 {offsets = [0, 128], sizes = [8, 128], strides = [1, 1]} : vector<8x384xf32> to vector<8x128xf32>
    %365 = vector.extract_strided_slice %360 {offsets = [0, 256], sizes = [8, 128], strides = [1, 1]} : vector<8x384xf32> to vector<8x128xf32>
    %366 = arith.mulf %364, %309 : vector<8x128xf32>
    %367 = arith.mulf %363, %362 : vector<8x128xf32>
    %368 = arith.addf %366, %367 : vector<8x128xf32>
    %369 = math.tanh %368 : vector<8x128xf32>
    %370 = arith.mulf %365, %369 : vector<8x128xf32>
    %cst_67 = arith.constant dense<0.000000e+00> : vector<8x512xf32>
    %371 = tpu.matmul %351, %3, %cst_67 {dimension_numbers = #tpu.dot_dimension_numbers<[1], [0], [0], [1], [0, 0, 1, 1], [], []>} : vector<8x128xf32>, vector<128x512xf32>, vector<8x512xf32> -> vector<8x512xf32>
    %372 = arith.addf %371, %10 : vector<8x512xf32>
    %cst_68 = arith.constant dense<0.000000e+00> : vector<8x512xf32>
    %373 = tpu.matmul %331, %4, %cst_68 {dimension_numbers = #tpu.dot_dimension_numbers<[1], [0], [0], [1], [0, 0, 1, 1], [], []>} : vector<8x128xf32>, vector<128x512xf32>, vector<8x512xf32> -> vector<8x512xf32>
    %374 = arith.addf %372, %373 : vector<8x512xf32>
    %375 = vector.extract_strided_slice %374 {offsets = [0, 0], sizes = [8, 384], strides = [1, 1]} : vector<8x512xf32> to vector<8x384xf32>
    %376 = arith.negf %375 : vector<8x384xf32>
    %377 = math.exp %376 : vector<8x384xf32>
    %cst_69 = arith.constant 1.000000e+00 : f32
    %378 = vector.broadcast %cst_69 : f32 to vector<8x384xf32>
    %379 = arith.addf %378, %377 : vector<8x384xf32>
    %380 = arith.divf %378, %379 : vector<8x384xf32>
    %381 = vector.extract_strided_slice %374 {offsets = [0, 384], sizes = [8, 128], strides = [1, 1]} : vector<8x512xf32> to vector<8x128xf32>
    %382 = math.tanh %381 : vector<8x128xf32>
    %383 = vector.extract_strided_slice %380 {offsets = [0, 0], sizes = [8, 128], strides = [1, 1]} : vector<8x384xf32> to vector<8x128xf32>
    %384 = vector.extract_strided_slice %380 {offsets = [0, 128], sizes = [8, 128], strides = [1, 1]} : vector<8x384xf32> to vector<8x128xf32>
    %385 = vector.extract_strided_slice %380 {offsets = [0, 256], sizes = [8, 128], strides = [1, 1]} : vector<8x384xf32> to vector<8x128xf32>
    %386 = arith.mulf %384, %329 : vector<8x128xf32>
    %387 = arith.mulf %383, %382 : vector<8x128xf32>
    %388 = arith.addf %386, %387 : vector<8x128xf32>
    %389 = math.tanh %388 : vector<8x128xf32>
    %390 = arith.mulf %385, %389 : vector<8x128xf32>
    %cst_70 = arith.constant dense<0.000000e+00> : vector<8x512xf32>
    %391 = tpu.matmul %370, %1, %cst_70 {dimension_numbers = #tpu.dot_dimension_numbers<[1], [0], [0], [1], [0, 0, 1, 1], [], []>} : vector<8x128xf32>, vector<128x512xf32>, vector<8x512xf32> -> vector<8x512xf32>
    %392 = arith.addf %391, %7 : vector<8x512xf32>
    %cst_71 = arith.constant dense<0.000000e+00> : vector<8x512xf32>
    %393 = tpu.matmul %351, %2, %cst_71 {dimension_numbers = #tpu.dot_dimension_numbers<[1], [0], [0], [1], [0, 0, 1, 1], [], []>} : vector<8x128xf32>, vector<128x512xf32>, vector<8x512xf32> -> vector<8x512xf32>
    %394 = arith.addf %392, %393 : vector<8x512xf32>
    %395 = vector.extract_strided_slice %394 {offsets = [0, 0], sizes = [8, 384], strides = [1, 1]} : vector<8x512xf32> to vector<8x384xf32>
    %396 = arith.negf %395 : vector<8x384xf32>
    %397 = math.exp %396 : vector<8x384xf32>
    %cst_72 = arith.constant 1.000000e+00 : f32
    %398 = vector.broadcast %cst_72 : f32 to vector<8x384xf32>
    %399 = arith.addf %398, %397 : vector<8x384xf32>
    %400 = arith.divf %398, %399 : vector<8x384xf32>
    %401 = vector.extract_strided_slice %394 {offsets = [0, 384], sizes = [8, 128], strides = [1, 1]} : vector<8x512xf32> to vector<8x128xf32>
    %402 = math.tanh %401 : vector<8x128xf32>
    %403 = vector.extract_strided_slice %400 {offsets = [0, 0], sizes = [8, 128], strides = [1, 1]} : vector<8x384xf32> to vector<8x128xf32>
    %404 = vector.extract_strided_slice %400 {offsets = [0, 128], sizes = [8, 128], strides = [1, 1]} : vector<8x384xf32> to vector<8x128xf32>
    %405 = vector.extract_strided_slice %400 {offsets = [0, 256], sizes = [8, 128], strides = [1, 1]} : vector<8x384xf32> to vector<8x128xf32>
    %406 = arith.mulf %404, %349 : vector<8x128xf32>
    %407 = arith.mulf %403, %402 : vector<8x128xf32>
    %408 = arith.addf %406, %407 : vector<8x128xf32>
    %409 = math.tanh %408 : vector<8x128xf32>
    %410 = arith.mulf %405, %409 : vector<8x128xf32>
    %411 = vector.extract_strided_slice %16 {offsets = [56, 0], sizes = [8, 512], strides = [1, 1]} : vector<64x512xf32> to vector<8x512xf32>
    %cst_73 = arith.constant dense<0.000000e+00> : vector<8x512xf32>
    %412 = tpu.matmul %370, %0, %cst_73 {dimension_numbers = #tpu.dot_dimension_numbers<[1], [0], [0], [1], [0, 0, 1, 1], [], []>} : vector<8x128xf32>, vector<128x512xf32>, vector<8x512xf32> -> vector<8x512xf32>
    %413 = arith.addf %411, %412 : vector<8x512xf32>
    %414 = vector.extract_strided_slice %413 {offsets = [0, 0], sizes = [8, 384], strides = [1, 1]} : vector<8x512xf32> to vector<8x384xf32>
    %415 = arith.negf %414 : vector<8x384xf32>
    %416 = math.exp %415 : vector<8x384xf32>
    %cst_74 = arith.constant 1.000000e+00 : f32
    %417 = vector.broadcast %cst_74 : f32 to vector<8x384xf32>
    %418 = arith.addf %417, %416 : vector<8x384xf32>
    %419 = arith.divf %417, %418 : vector<8x384xf32>
    %420 = vector.extract_strided_slice %413 {offsets = [0, 384], sizes = [8, 128], strides = [1, 1]} : vector<8x512xf32> to vector<8x128xf32>
    %421 = math.tanh %420 : vector<8x128xf32>
    %422 = vector.extract_strided_slice %419 {offsets = [0, 0], sizes = [8, 128], strides = [1, 1]} : vector<8x384xf32> to vector<8x128xf32>
    %423 = vector.extract_strided_slice %419 {offsets = [0, 128], sizes = [8, 128], strides = [1, 1]} : vector<8x384xf32> to vector<8x128xf32>
    %424 = vector.extract_strided_slice %419 {offsets = [0, 256], sizes = [8, 128], strides = [1, 1]} : vector<8x384xf32> to vector<8x128xf32>
    %425 = arith.mulf %423, %368 : vector<8x128xf32>
    %426 = arith.mulf %422, %421 : vector<8x128xf32>
    %427 = arith.addf %425, %426 : vector<8x128xf32>
    %428 = math.tanh %427 : vector<8x128xf32>
    %429 = arith.mulf %424, %428 : vector<8x128xf32>
    %cst_75 = arith.constant dense<0.000000e+00> : vector<8x512xf32>
    %430 = tpu.matmul %410, %3, %cst_75 {dimension_numbers = #tpu.dot_dimension_numbers<[1], [0], [0], [1], [0, 0, 1, 1], [], []>} : vector<8x128xf32>, vector<128x512xf32>, vector<8x512xf32> -> vector<8x512xf32>
    %431 = arith.addf %430, %10 : vector<8x512xf32>
    %cst_76 = arith.constant dense<0.000000e+00> : vector<8x512xf32>
    %432 = tpu.matmul %390, %4, %cst_76 {dimension_numbers = #tpu.dot_dimension_numbers<[1], [0], [0], [1], [0, 0, 1, 1], [], []>} : vector<8x128xf32>, vector<128x512xf32>, vector<8x512xf32> -> vector<8x512xf32>
    %433 = arith.addf %431, %432 : vector<8x512xf32>
    %434 = vector.extract_strided_slice %433 {offsets = [0, 0], sizes = [8, 384], strides = [1, 1]} : vector<8x512xf32> to vector<8x384xf32>
    %435 = arith.negf %434 : vector<8x384xf32>
    %436 = math.exp %435 : vector<8x384xf32>
    %cst_77 = arith.constant 1.000000e+00 : f32
    %437 = vector.broadcast %cst_77 : f32 to vector<8x384xf32>
    %438 = arith.addf %437, %436 : vector<8x384xf32>
    %439 = arith.divf %437, %438 : vector<8x384xf32>
    %440 = vector.extract_strided_slice %433 {offsets = [0, 384], sizes = [8, 128], strides = [1, 1]} : vector<8x512xf32> to vector<8x128xf32>
    %441 = math.tanh %440 : vector<8x128xf32>
    %442 = vector.extract_strided_slice %439 {offsets = [0, 0], sizes = [8, 128], strides = [1, 1]} : vector<8x384xf32> to vector<8x128xf32>
    %443 = vector.extract_strided_slice %439 {offsets = [0, 128], sizes = [8, 128], strides = [1, 1]} : vector<8x384xf32> to vector<8x128xf32>
    %444 = vector.extract_strided_slice %439 {offsets = [0, 256], sizes = [8, 128], strides = [1, 1]} : vector<8x384xf32> to vector<8x128xf32>
    %445 = arith.mulf %443, %388 : vector<8x128xf32>
    %446 = arith.mulf %442, %441 : vector<8x128xf32>
    %447 = arith.addf %445, %446 : vector<8x128xf32>
    %448 = math.tanh %447 : vector<8x128xf32>
    %449 = arith.mulf %444, %448 : vector<8x128xf32>
    %cst_78 = arith.constant dense<0.000000e+00> : vector<8x512xf32>
    %450 = tpu.matmul %429, %1, %cst_78 {dimension_numbers = #tpu.dot_dimension_numbers<[1], [0], [0], [1], [0, 0, 1, 1], [], []>} : vector<8x128xf32>, vector<128x512xf32>, vector<8x512xf32> -> vector<8x512xf32>
    %451 = arith.addf %450, %7 : vector<8x512xf32>
    %cst_79 = arith.constant dense<0.000000e+00> : vector<8x512xf32>
    %452 = tpu.matmul %410, %2, %cst_79 {dimension_numbers = #tpu.dot_dimension_numbers<[1], [0], [0], [1], [0, 0, 1, 1], [], []>} : vector<8x128xf32>, vector<128x512xf32>, vector<8x512xf32> -> vector<8x512xf32>
    %453 = arith.addf %451, %452 : vector<8x512xf32>
    %454 = vector.extract_strided_slice %453 {offsets = [0, 0], sizes = [8, 384], strides = [1, 1]} : vector<8x512xf32> to vector<8x384xf32>
    %455 = arith.negf %454 : vector<8x384xf32>
    %456 = math.exp %455 : vector<8x384xf32>
    %cst_80 = arith.constant 1.000000e+00 : f32
    %457 = vector.broadcast %cst_80 : f32 to vector<8x384xf32>
    %458 = arith.addf %457, %456 : vector<8x384xf32>
    %459 = arith.divf %457, %458 : vector<8x384xf32>
    %460 = vector.extract_strided_slice %453 {offsets = [0, 384], sizes = [8, 128], strides = [1, 1]} : vector<8x512xf32> to vector<8x128xf32>
    %461 = math.tanh %460 : vector<8x128xf32>
    %462 = vector.extract_strided_slice %459 {offsets = [0, 0], sizes = [8, 128], strides = [1, 1]} : vector<8x384xf32> to vector<8x128xf32>
    %463 = vector.extract_strided_slice %459 {offsets = [0, 128], sizes = [8, 128], strides = [1, 1]} : vector<8x384xf32> to vector<8x128xf32>
    %464 = vector.extract_strided_slice %459 {offsets = [0, 256], sizes = [8, 128], strides = [1, 1]} : vector<8x384xf32> to vector<8x128xf32>
    %465 = arith.mulf %463, %408 : vector<8x128xf32>
    %466 = arith.mulf %462, %461 : vector<8x128xf32>
    %467 = arith.addf %465, %466 : vector<8x128xf32>
    %468 = math.tanh %467 : vector<8x128xf32>
    %469 = arith.mulf %464, %468 : vector<8x128xf32>
    %cst_81 = arith.constant dense<0.000000e+00> : vector<8x512xf32>
    %470 = tpu.matmul %469, %3, %cst_81 {dimension_numbers = #tpu.dot_dimension_numbers<[1], [0], [0], [1], [0, 0, 1, 1], [], []>} : vector<8x128xf32>, vector<128x512xf32>, vector<8x512xf32> -> vector<8x512xf32>
    %471 = arith.addf %470, %10 : vector<8x512xf32>
    %cst_82 = arith.constant dense<0.000000e+00> : vector<8x512xf32>
    %472 = tpu.matmul %449, %4, %cst_82 {dimension_numbers = #tpu.dot_dimension_numbers<[1], [0], [0], [1], [0, 0, 1, 1], [], []>} : vector<8x128xf32>, vector<128x512xf32>, vector<8x512xf32> -> vector<8x512xf32>
    %473 = arith.addf %471, %472 : vector<8x512xf32>
    %474 = vector.extract_strided_slice %473 {offsets = [0, 0], sizes = [8, 384], strides = [1, 1]} : vector<8x512xf32> to vector<8x384xf32>
    %475 = arith.negf %474 : vector<8x384xf32>
    %476 = math.exp %475 : vector<8x384xf32>
    %cst_83 = arith.constant 1.000000e+00 : f32
    %477 = vector.broadcast %cst_83 : f32 to vector<8x384xf32>
    %478 = arith.addf %477, %476 : vector<8x384xf32>
    %479 = arith.divf %477, %478 : vector<8x384xf32>
    %480 = vector.extract_strided_slice %473 {offsets = [0, 384], sizes = [8, 128], strides = [1, 1]} : vector<8x512xf32> to vector<8x128xf32>
    %481 = math.tanh %480 : vector<8x128xf32>
    %482 = vector.extract_strided_slice %479 {offsets = [0, 0], sizes = [8, 128], strides = [1, 1]} : vector<8x384xf32> to vector<8x128xf32>
    %483 = vector.extract_strided_slice %479 {offsets = [0, 128], sizes = [8, 128], strides = [1, 1]} : vector<8x384xf32> to vector<8x128xf32>
    %484 = vector.extract_strided_slice %479 {offsets = [0, 256], sizes = [8, 128], strides = [1, 1]} : vector<8x384xf32> to vector<8x128xf32>
    %485 = arith.mulf %483, %447 : vector<8x128xf32>
    %486 = arith.mulf %482, %481 : vector<8x128xf32>
    %487 = arith.addf %485, %486 : vector<8x128xf32>
    %488 = math.tanh %487 : vector<8x128xf32>
    %489 = arith.mulf %484, %488 : vector<8x128xf32>
    %c0_84 = arith.constant 0 : index
    %c0_85 = arith.constant 0 : index
    %490 = vector.load %arg10[%c0_84, %c0_85] : memref<128x128xf32, #tpu.memory_space<vmem>>, vector<128x128xf32>
    %cst_86 = arith.constant dense<0.000000e+00> : vector<8x128xf32>
    %491 = tpu.matmul %489, %490, %cst_86 {dimension_numbers = #tpu.dot_dimension_numbers<[1], [0], [0], [1], [0, 0, 1, 1], [], []>} : vector<8x128xf32>, vector<128x128xf32>, vector<8x128xf32> -> vector<8x128xf32>
    %c0_87 = arith.constant 0 : index
    %c0_88 = arith.constant 0 : index
    %492 = vector.load %arg11[%c0_87, %c0_88] : memref<1x128xf32, #tpu.memory_space<vmem>>, vector<1x128xf32>
    %493 = vector.broadcast %492 : vector<1x128xf32> to vector<8x128xf32>
    %494 = arith.addf %491, %493 : vector<8x128xf32>
    %c0_89 = arith.constant 0 : index
    %c0_90 = arith.constant 0 : index
    %495 = vector.load %arg12[%c0_89, %c0_90] : memref<8x128xf32, #tpu.memory_space<vmem>>, vector<8x128xf32>
    tpu.vector_store %arg12[%c0_89, %c0_90], %494 {strides = array<i32>} : memref<8x128xf32, #tpu.memory_space<vmem>>, vector<8x128xf32>,
    return
  }
}

</mosaic_0001>

<llo_original>
// kernel: lstm_network_forward.1
$region0: #{lstm_network_forward.1}
  #allocation0 [shape = 'u32[]', space=smem, size = 0x4, offset = 0x4, fixed_abs, tag = 'smem constant byte address 0x4 - core index']
  #allocation1 [shape = 'u32[144,128]{1,0:T(1,128)}', space=vmem, size = 0x12000, scoped, tag = 'internal scratch']
  %s0 = inlined_call_operand.vmem [shape: f32[64,128], index: 0, kind: input, shape index: {}]
  %s1 = inlined_call_operand.hbm [shape: f32[128,512], index: 1, kind: input, shape index: {}]
  %s2 = inlined_call_operand.hbm [shape: f32[128,512], index: 2, kind: input, shape index: {}]
  %s3 = inlined_call_operand.vmem [shape: f32[1,512], index: 3, kind: input, shape index: {}]
  %s4 = inlined_call_operand.hbm [shape: f32[128,512], index: 4, kind: input, shape index: {}]
  %s5 = inlined_call_operand.hbm [shape: f32[128,512], index: 5, kind: input, shape index: {}]
  %s6 = inlined_call_operand.vmem [shape: f32[1,512], index: 6, kind: input, shape index: {}]
  %s7 = inlined_call_operand.hbm [shape: f32[128,512], index: 7, kind: input, shape index: {}]
  %s8 = inlined_call_operand.hbm [shape: f32[128,512], index: 8, kind: input, shape index: {}]
  %s9 = inlined_call_operand.vmem [shape: f32[1,512], index: 9, kind: input, shape index: {}]
  %s10 = inlined_call_operand.hbm [shape: f32[128,128], index: 10, kind: input, shape index: {}]
  %s11 = inlined_call_operand.vmem [shape: f32[1,128], index: 11, kind: input, shape index: {}]
  %s12 = inlined_call_operand.vmem [shape: f32[8,128], index: 12, kind: output, shape index: {}]
  %s13 = sld [smem:[#allocation0]]
  $region86: #{lstm_network_forward.1} parent=0
    _
  %s15 = ssub.s32 1, %s13
  %s16 = scalar_select 0, %s15, %s13
  $region1: #{lstm_network_forward.1} parent=0
    #allocation2 [shape = 'u8[262144]{0}', space=vmem, size = 0x40000, scoped, tag = 'input window, operand 1, single buffered']
    #allocation3 [shape = 's32[1]{0}', space=sflag, size = 0x4, scoped, tag = 'scoped memory for lstm_network_forward.1']
    #allocation4 [shape = 'u8[262144]{0}', space=vmem, size = 0x40000, scoped, tag = 'input window, operand 2, single buffered']
    #allocation5 [shape = 's32[1]{0}', space=sflag, size = 0x4, scoped, tag = 'scoped memory for lstm_network_forward.1']
    #allocation6 [shape = 'u8[262144]{0}', space=vmem, size = 0x40000, scoped, tag = 'input window, operand 4, single buffered']
    #allocation7 [shape = 'u8[262144]{0}', space=vmem, size = 0x40000, scoped, tag = 'input window, operand 5, single buffered']
    #allocation8 [shape = 's32[1]{0}', space=sflag, size = 0x4, scoped, tag = 'scoped memory for lstm_network_forward.1']
    #allocation9 [shape = 'u8[262144]{0}', space=vmem, size = 0x40000, scoped, tag = 'input window, operand 7, single buffered']
    #allocation10 [shape = 'u8[262144]{0}', space=vmem, size = 0x40000, scoped, tag = 'input window, operand 8, single buffered']
    #allocation11 [shape = 's32[1]{0}', space=sflag, size = 0x4, scoped, tag = 'scoped memory for lstm_network_forward.1']
    #allocation12 [shape = 'u8[65536]{0}', space=vmem, size = 0x10000, scoped, tag = 'input window, operand 10, single buffered']
    %17 = vsyncpa [#allocation3], 0
    %18 = vsyncpa [#allocation5], 0
    %19 = vsyncpa [#allocation8], 0
    %20 = vsyncpa [#allocation11], 0
    // Predicated region
    $region2: #{lstm_network_forward.1} parent=1 // pred_check
      _
    $region3: #{lstm_network_forward.1} parent=1 // pred_check_branch
      %22 = sbr.rel (0) target = $region5
    $region4: #{lstm_network_forward.1} parent=1 // pred_region
      _
    $region5: #{lstm_network_forward.1} parent=1 // pred_fallthru
      _
    // Predicated region
    $region6: #{lstm_network_forward.1} parent=1 // pred_check
      _
    $region7: #{lstm_network_forward.1} parent=1 // pred_check_branch
      %24 = sbr.rel (0) target = $region9
    $region8: #{lstm_network_forward.1} parent=1 // pred_region
      %s26 = ssub.s32 8192, 8192
      %27 = vsyncadd [#allocation3], %s26
      %s28 = sshll.u32 [#allocation2], 4
      %s29 = int_to_ptr.vmem [resolvable:$true] %s28
      %34 = dma.hbm_to_vmem [thread:$0]  %s1, 8192, %s29, [#allocation3], 512, 512, 32
    $region9: #{lstm_network_forward.1} parent=1 // pred_fallthru
      _
    // Predicated region
    $region10: #{lstm_network_forward.1} parent=1 // pred_check
      _
    $region11: #{lstm_network_forward.1} parent=1 // pred_check_branch
      %36 = sbr.rel (0) target = $region13
    $region12: #{lstm_network_forward.1} parent=1 // pred_region
      %s38 = ssub.s32 8192, 8192
      %39 = vsyncadd [#allocation5], %s38
      %s40 = sshll.u32 [#allocation4], 4
      %s41 = int_to_ptr.vmem [resolvable:$true] %s40
      %46 = dma.hbm_to_vmem [thread:$0]  %s2, 8192, %s41, [#allocation5], 512, 512, 32
    $region13: #{lstm_network_forward.1} parent=1 // pred_fallthru
      _
    // Predicated region
    $region14: #{lstm_network_forward.1} parent=1 // pred_check
      _
    $region15: #{lstm_network_forward.1} parent=1 // pred_check_branch
      %48 = sbr.rel (0) target = $region17
    $region16: #{lstm_network_forward.1} parent=1 // pred_region
      _
    $region17: #{lstm_network_forward.1} parent=1 // pred_fallthru
      _
    // Predicated region
    $region18: #{lstm_network_forward.1} parent=1 // pred_check
      _
    $region19: #{lstm_network_forward.1} parent=1 // pred_check_branch
      %50 = sbr.rel (0) target = $region21
    $region20: #{lstm_network_forward.1} parent=1 // pred_region
      %s52 = ssub.s32 8192, 8192
      %53 = vsyncadd [#allocation5], %s52
      %s54 = sshll.u32 [#allocation6], 4
      %s55 = int_to_ptr.vmem [resolvable:$true] %s54
      %60 = dma.hbm_to_vmem [thread:$0]  %s4, 8192, %s55, [#allocation5], 512, 512, 32
    $region21: #{lstm_network_forward.1} parent=1 // pred_fallthru
      _
    // Predicated region
    $region22: #{lstm_network_forward.1} parent=1 // pred_check
      _
    $region23: #{lstm_network_forward.1} parent=1 // pred_check_branch
      %62 = sbr.rel (0) target = $region25
    $region24: #{lstm_network_forward.1} parent=1 // pred_region
      %s64 = ssub.s32 8192, 8192
      %65 = vsyncadd [#allocation8], %s64
      %s66 = sshll.u32 [#allocation7], 4
      %s67 = int_to_ptr.vmem [resolvable:$true] %s66
      %72 = dma.hbm_to_vmem [thread:$0]  %s5, 8192, %s67, [#allocation8], 512, 512, 32
    $region25: #{lstm_network_forward.1} parent=1 // pred_fallthru
      _
    // Predicated region
    $region26: #{lstm_network_forward.1} parent=1 // pred_check
      _
    $region27: #{lstm_network_forward.1} parent=1 // pred_check_branch
      %74 = sbr.rel (0) target = $region29
    $region28: #{lstm_network_forward.1} parent=1 // pred_region
      _
    $region29: #{lstm_network_forward.1} parent=1 // pred_fallthru
      _
    // Predicated region
    $region30: #{lstm_network_forward.1} parent=1 // pred_check
      _
    $region31: #{lstm_network_forward.1} parent=1 // pred_check_branch
      %76 = sbr.rel (0) target = $region33
    $region32: #{lstm_network_forward.1} parent=1 // pred_region
      %s78 = ssub.s32 8192, 8192
      %79 = vsyncadd [#allocation8], %s78
      %s80 = sshll.u32 [#allocation9], 4
      %s81 = int_to_ptr.vmem [resolvable:$true] %s80
      %86 = dma.hbm_to_vmem [thread:$0]  %s7, 8192, %s81, [#allocation8], 512, 512, 32
    $region33: #{lstm_network_forward.1} parent=1 // pred_fallthru
      _
    // Predicated region
    $region34: #{lstm_network_forward.1} parent=1 // pred_check
      _
    $region35: #{lstm_network_forward.1} parent=1 // pred_check_branch
      %88 = sbr.rel (0) target = $region37
    $region36: #{lstm_network_forward.1} parent=1 // pred_region
      %s90 = ssub.s32 8192, 8192
      %91 = vsyncadd [#allocation11], %s90
      %s92 = sshll.u32 [#allocation10], 4
      %s93 = int_to_ptr.vmem [resolvable:$true] %s92
      %98 = dma.hbm_to_vmem [thread:$0]  %s8, 8192, %s93, [#allocation11], 512, 512, 32
    $region37: #{lstm_network_forward.1} parent=1 // pred_fallthru
      _
    // Predicated region
    $region38: #{lstm_network_forward.1} parent=1 // pred_check
      _
    $region39: #{lstm_network_forward.1} parent=1 // pred_check_branch
      %100 = sbr.rel (0) target = $region41
    $region40: #{lstm_network_forward.1} parent=1 // pred_region
      _
    $region41: #{lstm_network_forward.1} parent=1 // pred_fallthru
      _
    // Predicated region
    $region42: #{lstm_network_forward.1} parent=1 // pred_check
      _
    $region43: #{lstm_network_forward.1} parent=1 // pred_check_branch
      %102 = sbr.rel (0) target = $region45
    $region44: #{lstm_network_forward.1} parent=1 // pred_region
      %s104 = ssub.s32 2048, 2048
      %105 = vsyncadd [#allocation11], %s104
      %s106 = sshll.u32 [#allocation12], 4
      %s107 = int_to_ptr.vmem [resolvable:$true] %s106
      %112 = dma.hbm_to_vmem [thread:$0]  %s10, 2048, %s107, [#allocation11], 128, 128, 8
    $region45: #{lstm_network_forward.1} parent=1 // pred_fallthru
      _
    // Predicated region
    $region46: #{lstm_network_forward.1} parent=1 // pred_check
      _
    $region47: #{lstm_network_forward.1} parent=1 // pred_check_branch
      %114 = sbr.rel (0) target = $region49
    $region48: #{lstm_network_forward.1} parent=1 // pred_region
      _
    $region49: #{lstm_network_forward.1} parent=1 // pred_fallthru
      _
    // Predicated region
    $region50: #{lstm_network_forward.1} parent=1 // pred_check
      _
    $region51: #{lstm_network_forward.1} parent=1 // pred_check_branch
      %116 = sbr.rel (0) target = $region53
    $region52: #{lstm_network_forward.1} parent=1 // pred_region
      %117 = dma.done [#allocation3], 8192
    $region53: #{lstm_network_forward.1} parent=1 // pred_fallthru
      _
    // Predicated region
    $region54: #{lstm_network_forward.1} parent=1 // pred_check
      _
    $region55: #{lstm_network_forward.1} parent=1 // pred_check_branch
      %119 = sbr.rel (0) target = $region57
    $region56: #{lstm_network_forward.1} parent=1 // pred_region
      %120 = dma.done [#allocation5], 8192
    $region57: #{lstm_network_forward.1} parent=1 // pred_fallthru
      _
    // Predicated region
    $region58: #{lstm_network_forward.1} parent=1 // pred_check
      _
    $region59: #{lstm_network_forward.1} parent=1 // pred_check_branch
      %122 = sbr.rel (0) target = $region61
    $region60: #{lstm_network_forward.1} parent=1 // pred_region
      %123 = dma.done [#allocation5], 8192
    $region61: #{lstm_network_forward.1} parent=1 // pred_fallthru
      _
    // Predicated region
    $region62: #{lstm_network_forward.1} parent=1 // pred_check
      _
    $region63: #{lstm_network_forward.1} parent=1 // pred_check_branch
      %125 = sbr.rel (0) target = $region65
    $region64: #{lstm_network_forward.1} parent=1 // pred_region
      %126 = dma.done [#allocation8], 8192
    $region65: #{lstm_network_forward.1} parent=1 // pred_fallthru
      _
    // Predicated region
    $region66: #{lstm_network_forward.1} parent=1 // pred_check
      _
    $region67: #{lstm_network_forward.1} parent=1 // pred_check_branch
      %128 = sbr.rel (0) target = $region69
    $region68: #{lstm_network_forward.1} parent=1 // pred_region
      %129 = dma.done [#allocation8], 8192
    $region69: #{lstm_network_forward.1} parent=1 // pred_fallthru
      _
    // Predicated region
    $region70: #{lstm_network_forward.1} parent=1 // pred_check
      _
    $region71: #{lstm_network_forward.1} parent=1 // pred_check_branch
      %131 = sbr.rel (0) target = $region73
    $region72: #{lstm_network_forward.1} parent=1 // pred_region
      %132 = dma.done [#allocation11], 8192
    $region73: #{lstm_network_forward.1} parent=1 // pred_fallthru
      _
    // Predicated region
    $region74: #{lstm_network_forward.1} parent=1 // pred_check
      _
    $region75: #{lstm_network_forward.1} parent=1 // pred_check_branch
      %134 = sbr.rel (0) target = $region77
    $region76: #{lstm_network_forward.1} parent=1 // pred_region
      %135 = dma.done [#allocation11], 2048
    $region77: #{lstm_network_forward.1} parent=1 // pred_fallthru
      _
    %v136 = vld [vmem:[#allocation4] sm:$0xff]
    %v137 = vld [vmem:[#allocation4 + $0x8] sm:$0xff]
    %v138 = vld [vmem:[#allocation4 + $0x10] sm:$0xff]
    %v139 = vld [vmem:[#allocation4 + $0x18] sm:$0xff]
    %v140 = vld [vmem:[#allocation4 + $0x20] sm:$0xff]
    %v141 = vld [vmem:[#allocation4 + $0x28] sm:$0xff]
    %v142 = vld [vmem:[#allocation4 + $0x30] sm:$0xff]
    %v143 = vld [vmem:[#allocation4 + $0x38] sm:$0xff]
    %v144 = vld [vmem:[#allocation4 + $0x40] sm:$0xff]
    %v145 = vld [vmem:[#allocation4 + $0x48] sm:$0xff]
    %v146 = vld [vmem:[#allocation4 + $0x50] sm:$0xff]
    %v147 = vld [vmem:[#allocation4 + $0x58] sm:$0xff]
    %v148 = vld [vmem:[#allocation4 + $0x60] sm:$0xff]
    %v149 = vld [vmem:[#allocation4 + $0x68] sm:$0xff]
    %v150 = vld [vmem:[#allocation4 + $0x70] sm:$0xff]
    %v151 = vld [vmem:[#allocation4 + $0x78] sm:$0xff]
    %v152 = vld [vmem:[#allocation4 + $0x80] sm:$0xff]
    %v153 = vld [vmem:[#allocation4 + $0x88] sm:$0xff]
    %v154 = vld [vmem:[#allocation4 + $0x90] sm:$0xff]
    %v155 = vld [vmem:[#allocation4 + $0x98] sm:$0xff]
    %v156 = vld [vmem:[#allocation4 + $0xa0] sm:$0xff]
    %v157 = vld [vmem:[#allocation4 + $0xa8] sm:$0xff]
    %v158 = vld [vmem:[#allocation4 + $0xb0] sm:$0xff]
    %v159 = vld [vmem:[#allocation4 + $0xb8] sm:$0xff]
    %v160 = vld [vmem:[#allocation4 + $0xc0] sm:$0xff]
    %v161 = vld [vmem:[#allocation4 + $0xc8] sm:$0xff]
    %v162 = vld [vmem:[#allocation4 + $0xd0] sm:$0xff]
    %v163 = vld [vmem:[#allocation4 + $0xd8] sm:$0xff]
    %v164 = vld [vmem:[#allocation4 + $0xe0] sm:$0xff]
    %v165 = vld [vmem:[#allocation4 + $0xe8] sm:$0xff]
    %v166 = vld [vmem:[#allocation4 + $0xf0] sm:$0xff]
    %v167 = vld [vmem:[#allocation4 + $0xf8] sm:$0xff]
    %v168 = vld [vmem:[#allocation4 + $0x100] sm:$0xff]
    %v169 = vld [vmem:[#allocation4 + $0x108] sm:$0xff]
    %v170 = vld [vmem:[#allocation4 + $0x110] sm:$0xff]
    %v171 = vld [vmem:[#allocation4 + $0x118] sm:$0xff]
    %v172 = vld [vmem:[#allocation4 + $0x120] sm:$0xff]
    %v173 = vld [vmem:[#allocation4 + $0x128] sm:$0xff]
    %v174 = vld [vmem:[#allocation4 + $0x130] sm:$0xff]
    %v175 = vld [vmem:[#allocation4 + $0x138] sm:$0xff]
    %v176 = vld [vmem:[#allocation4 + $0x140] sm:$0xff]
    %v177 = vld [vmem:[#allocation4 + $0x148] sm:$0xff]
    %v178 = vld [vmem:[#allocation4 + $0x150] sm:$0xff]
    %v179 = vld [vmem:[#allocation4 + $0x158] sm:$0xff]
    %v180 = vld [vmem:[#allocation4 + $0x160] sm:$0xff]
    %v181 = vld [vmem:[#allocation4 + $0x168] sm:$0xff]
    %v182 = vld [vmem:[#allocation4 + $0x170] sm:$0xff]
    %v183 = vld [vmem:[#allocation4 + $0x178] sm:$0xff]
    %v184 = vld [vmem:[#allocation4 + $0x180] sm:$0xff]
    %v185 = vld [vmem:[#allocation4 + $0x188] sm:$0xff]
    %v186 = vld [vmem:[#allocation4 + $0x190] sm:$0xff]
    %v187 = vld [vmem:[#allocation4 + $0x198] sm:$0xff]
    %v188 = vld [vmem:[#allocation4 + $0x1a0] sm:$0xff]
    %v189 = vld [vmem:[#allocation4 + $0x1a8] sm:$0xff]
    %v190 = vld [vmem:[#allocation4 + $0x1b0] sm:$0xff]
    %v191 = vld [vmem:[#allocation4 + $0x1b8] sm:$0xff]
    %v192 = vld [vmem:[#allocation4 + $0x1c0] sm:$0xff]
    %v193 = vld [vmem:[#allocation4 + $0x1c8] sm:$0xff]
    %v194 = vld [vmem:[#allocation4 + $0x1d0] sm:$0xff]
    %v195 = vld [vmem:[#allocation4 + $0x1d8] sm:$0xff]
    %v196 = vld [vmem:[#allocation4 + $0x1e0] sm:$0xff]
    %v197 = vld [vmem:[#allocation4 + $0x1e8] sm:$0xff]
    %v198 = vld [vmem:[#allocation4 + $0x1f0] sm:$0xff]
    %v199 = vld [vmem:[#allocation4 + $0x1f8] sm:$0xff]
    %v200 = vld [vmem:[#allocation6] sm:$0xff]
    %v201 = vld [vmem:[#allocation6 + $0x8] sm:$0xff]
    %v202 = vld [vmem:[#allocation6 + $0x10] sm:$0xff]
    %v203 = vld [vmem:[#allocation6 + $0x18] sm:$0xff]
    %v204 = vld [vmem:[#allocation6 + $0x20] sm:$0xff]
    %v205 = vld [vmem:[#allocation6 + $0x28] sm:$0xff]
    %v206 = vld [vmem:[#allocation6 + $0x30] sm:$0xff]
    %v207 = vld [vmem:[#allocation6 + $0x38] sm:$0xff]
    %v208 = vld [vmem:[#allocation6 + $0x40] sm:$0xff]
    %v209 = vld [vmem:[#allocation6 + $0x48] sm:$0xff]
    %v210 = vld [vmem:[#allocation6 + $0x50] sm:$0xff]
    %v211 = vld [vmem:[#allocation6 + $0x58] sm:$0xff]
    %v212 = vld [vmem:[#allocation6 + $0x60] sm:$0xff]
    %v213 = vld [vmem:[#allocation6 + $0x68] sm:$0xff]
    %v214 = vld [vmem:[#allocation6 + $0x70] sm:$0xff]
    %v215 = vld [vmem:[#allocation6 + $0x78] sm:$0xff]
    %v216 = vld [vmem:[#allocation6 + $0x80] sm:$0xff]
    %v217 = vld [vmem:[#allocation6 + $0x88] sm:$0xff]
    %v218 = vld [vmem:[#allocation6 + $0x90] sm:$0xff]
    %v219 = vld [vmem:[#allocation6 + $0x98] sm:$0xff]
    %v220 = vld [vmem:[#allocation6 + $0xa0] sm:$0xff]
    %v221 = vld [vmem:[#allocation6 + $0xa8] sm:$0xff]
    %v222 = vld [vmem:[#allocation6 + $0xb0] sm:$0xff]
    %v223 = vld [vmem:[#allocation6 + $0xb8] sm:$0xff]
    %v224 = vld [vmem:[#allocation6 + $0xc0] sm:$0xff]
    %v225 = vld [vmem:[#allocation6 + $0xc8] sm:$0xff]
    %v226 = vld [vmem:[#allocation6 + $0xd0] sm:$0xff]
    %v227 = vld [vmem:[#allocation6 + $0xd8] sm:$0xff]
    %v228 = vld [vmem:[#allocation6 + $0xe0] sm:$0xff]
    %v229 = vld [vmem:[#allocation6 + $0xe8] sm:$0xff]
    %v230 = vld [vmem:[#allocation6 + $0xf0] sm:$0xff]
    %v231 = vld [vmem:[#allocation6 + $0xf8] sm:$0xff]
    %v232 = vld [vmem:[#allocation6 + $0x100] sm:$0xff]
    %v233 = vld [vmem:[#allocation6 + $0x108] sm:$0xff]
    %v234 = vld [vmem:[#allocation6 + $0x110] sm:$0xff]
    %v235 = vld [vmem:[#allocation6 + $0x118] sm:$0xff]
    %v236 = vld [vmem:[#allocation6 + $0x120] sm:$0xff]
    %v237 = vld [vmem:[#allocation6 + $0x128] sm:$0xff]
    %v238 = vld [vmem:[#allocation6 + $0x130] sm:$0xff]
    %v239 = vld [vmem:[#allocation6 + $0x138] sm:$0xff]
    %v240 = vld [vmem:[#allocation6 + $0x140] sm:$0xff]
    %v241 = vld [vmem:[#allocation6 + $0x148] sm:$0xff]
    %v242 = vld [vmem:[#allocation6 + $0x150] sm:$0xff]
    %v243 = vld [vmem:[#allocation6 + $0x158] sm:$0xff]
    %v244 = vld [vmem:[#allocation6 + $0x160] sm:$0xff]
    %v245 = vld [vmem:[#allocation6 + $0x168] sm:$0xff]
    %v246 = vld [vmem:[#allocation6 + $0x170] sm:$0xff]
    %v247 = vld [vmem:[#allocation6 + $0x178] sm:$0xff]
    %v248 = vld [vmem:[#allocation6 + $0x180] sm:$0xff]
    %v249 = vld [vmem:[#allocation6 + $0x188] sm:$0xff]
    %v250 = vld [vmem:[#allocation6 + $0x190] sm:$0xff]
    %v251 = vld [vmem:[#allocation6 + $0x198] sm:$0xff]
    %v252 = vld [vmem:[#allocation6 + $0x1a0] sm:$0xff]
    %v253 = vld [vmem:[#allocation6 + $0x1a8] sm:$0xff]
    %v254 = vld [vmem:[#allocation6 + $0x1b0] sm:$0xff]
    %v255 = vld [vmem:[#allocation6 + $0x1b8] sm:$0xff]
    %v256 = vld [vmem:[#allocation6 + $0x1c0] sm:$0xff]
    %v257 = vld [vmem:[#allocation6 + $0x1c8] sm:$0xff]
    %v258 = vld [vmem:[#allocation6 + $0x1d0] sm:$0xff]
    %v259 = vld [vmem:[#allocation6 + $0x1d8] sm:$0xff]
    %v260 = vld [vmem:[#allocation6 + $0x1e0] sm:$0xff]
    %v261 = vld [vmem:[#allocation6 + $0x1e8] sm:$0xff]
    %v262 = vld [vmem:[#allocation6 + $0x1f0] sm:$0xff]
    %v263 = vld [vmem:[#allocation6 + $0x1f8] sm:$0xff]
    %v264 = vld [vmem:[#allocation7] sm:$0xff]
    %v265 = vld [vmem:[#allocation7 + $0x8] sm:$0xff]
    %v266 = vld [vmem:[#allocation7 + $0x10] sm:$0xff]
    %v267 = vld [vmem:[#allocation7 + $0x18] sm:$0xff]
    %v268 = vld [vmem:[#allocation7 + $0x20] sm:$0xff]
    %v269 = vld [vmem:[#allocation7 + $0x28] sm:$0xff]
    %v270 = vld [vmem:[#allocation7 + $0x30] sm:$0xff]
    %v271 = vld [vmem:[#allocation7 + $0x38] sm:$0xff]
    %v272 = vld [vmem:[#allocation7 + $0x40] sm:$0xff]
    %v273 = vld [vmem:[#allocation7 + $0x48] sm:$0xff]
    %v274 = vld [vmem:[#allocation7 + $0x50] sm:$0xff]
    %v275 = vld [vmem:[#allocation7 + $0x58] sm:$0xff]
    %v276 = vld [vmem:[#allocation7 + $0x60] sm:$0xff]
    %v277 = vld [vmem:[#allocation7 + $0x68] sm:$0xff]
    %v278 = vld [vmem:[#allocation7 + $0x70] sm:$0xff]
    %v279 = vld [vmem:[#allocation7 + $0x78] sm:$0xff]
    %v280 = vld [vmem:[#allocation7 + $0x80] sm:$0xff]
    %v281 = vld [vmem:[#allocation7 + $0x88] sm:$0xff]
    %v282 = vld [vmem:[#allocation7 + $0x90] sm:$0xff]
    %v283 = vld [vmem:[#allocation7 + $0x98] sm:$0xff]
    %v284 = vld [vmem:[#allocation7 + $0xa0] sm:$0xff]
    %v285 = vld [vmem:[#allocation7 + $0xa8] sm:$0xff]
    %v286 = vld [vmem:[#allocation7 + $0xb0] sm:$0xff]
    %v287 = vld [vmem:[#allocation7 + $0xb8] sm:$0xff]
    %v288 = vld [vmem:[#allocation7 + $0xc0] sm:$0xff]
    %v289 = vld [vmem:[#allocation7 + $0xc8] sm:$0xff]
    %v290 = vld [vmem:[#allocation7 + $0xd0] sm:$0xff]
    %v291 = vld [vmem:[#allocation7 + $0xd8] sm:$0xff]
    %v292 = vld [vmem:[#allocation7 + $0xe0] sm:$0xff]
    %v293 = vld [vmem:[#allocation7 + $0xe8] sm:$0xff]
    %v294 = vld [vmem:[#allocation7 + $0xf0] sm:$0xff]
    %v295 = vld [vmem:[#allocation7 + $0xf8] sm:$0xff]
    %v296 = vld [vmem:[#allocation7 + $0x100] sm:$0xff]
    %v297 = vld [vmem:[#allocation7 + $0x108] sm:$0xff]
    %v298 = vld [vmem:[#allocation7 + $0x110] sm:$0xff]
    %v299 = vld [vmem:[#allocation7 + $0x118] sm:$0xff]
    %v300 = vld [vmem:[#allocation7 + $0x120] sm:$0xff]
    %v301 = vld [vmem:[#allocation7 + $0x128] sm:$0xff]
    %v302 = vld [vmem:[#allocation7 + $0x130] sm:$0xff]
    %v303 = vld [vmem:[#allocation7 + $0x138] sm:$0xff]
    %v304 = vld [vmem:[#allocation7 + $0x140] sm:$0xff]
    %v305 = vld [vmem:[#allocation7 + $0x148] sm:$0xff]
    %v306 = vld [vmem:[#allocation7 + $0x150] sm:$0xff]
    %v307 = vld [vmem:[#allocation7 + $0x158] sm:$0xff]
    %v308 = vld [vmem:[#allocation7 + $0x160] sm:$0xff]
    %v309 = vld [vmem:[#allocation7 + $0x168] sm:$0xff]
    %v310 = vld [vmem:[#allocation7 + $0x170] sm:$0xff]
    %v311 = vld [vmem:[#allocation7 + $0x178] sm:$0xff]
    %v312 = vld [vmem:[#allocation7 + $0x180] sm:$0xff]
    %v313 = vld [vmem:[#allocation7 + $0x188] sm:$0xff]
    %v314 = vld [vmem:[#allocation7 + $0x190] sm:$0xff]
    %v315 = vld [vmem:[#allocation7 + $0x198] sm:$0xff]
    %v316 = vld [vmem:[#allocation7 + $0x1a0] sm:$0xff]
    %v317 = vld [vmem:[#allocation7 + $0x1a8] sm:$0xff]
    %v318 = vld [vmem:[#allocation7 + $0x1b0] sm:$0xff]
    %v319 = vld [vmem:[#allocation7 + $0x1b8] sm:$0xff]
    %v320 = vld [vmem:[#allocation7 + $0x1c0] sm:$0xff]
    %v321 = vld [vmem:[#allocation7 + $0x1c8] sm:$0xff]
    %v322 = vld [vmem:[#allocation7 + $0x1d0] sm:$0xff]
    %v323 = vld [vmem:[#allocation7 + $0x1d8] sm:$0xff]
    %v324 = vld [vmem:[#allocation7 + $0x1e0] sm:$0xff]
    %v325 = vld [vmem:[#allocation7 + $0x1e8] sm:$0xff]
    %v326 = vld [vmem:[#allocation7 + $0x1f0] sm:$0xff]
    %v327 = vld [vmem:[#allocation7 + $0x1f8] sm:$0xff]
    %v328 = vld [vmem:[#allocation9] sm:$0xff]
    %v329 = vld [vmem:[#allocation9 + $0x8] sm:$0xff]
    %v330 = vld [vmem:[#allocation9 + $0x10] sm:$0xff]
    %v331 = vld [vmem:[#allocation9 + $0x18] sm:$0xff]
    %v332 = vld [vmem:[#allocation9 + $0x20] sm:$0xff]
    %v333 = vld [vmem:[#allocation9 + $0x28] sm:$0xff]
    %v334 = vld [vmem:[#allocation9 + $0x30] sm:$0xff]
    %v335 = vld [vmem:[#allocation9 + $0x38] sm:$0xff]
    %v336 = vld [vmem:[#allocation9 + $0x40] sm:$0xff]
    %v337 = vld [vmem:[#allocation9 + $0x48] sm:$0xff]
    %v338 = vld [vmem:[#allocation9 + $0x50] sm:$0xff]
    %v339 = vld [vmem:[#allocation9 + $0x58] sm:$0xff]
    %v340 = vld [vmem:[#allocation9 + $0x60] sm:$0xff]
    %v341 = vld [vmem:[#allocation9 + $0x68] sm:$0xff]
    %v342 = vld [vmem:[#allocation9 + $0x70] sm:$0xff]
    %v343 = vld [vmem:[#allocation9 + $0x78] sm:$0xff]
    %v344 = vld [vmem:[#allocation9 + $0x80] sm:$0xff]
    %v345 = vld [vmem:[#allocation9 + $0x88] sm:$0xff]
    %v346 = vld [vmem:[#allocation9 + $0x90] sm:$0xff]
    %v347 = vld [vmem:[#allocation9 + $0x98] sm:$0xff]
    %v348 = vld [vmem:[#allocation9 + $0xa0] sm:$0xff]
    %v349 = vld [vmem:[#allocation9 + $0xa8] sm:$0xff]
    %v350 = vld [vmem:[#allocation9 + $0xb0] sm:$0xff]
    %v351 = vld [vmem:[#allocation9 + $0xb8] sm:$0xff]
    %v352 = vld [vmem:[#allocation9 + $0xc0] sm:$0xff]
    %v353 = vld [vmem:[#allocation9 + $0xc8] sm:$0xff]
    %v354 = vld [vmem:[#allocation9 + $0xd0] sm:$0xff]
    %v355 = vld [vmem:[#allocation9 + $0xd8] sm:$0xff]
    %v356 = vld [vmem:[#allocation9 + $0xe0] sm:$0xff]
    %v357 = vld [vmem:[#allocation9 + $0xe8] sm:$0xff]
    %v358 = vld [vmem:[#allocation9 + $0xf0] sm:$0xff]
    %v359 = vld [vmem:[#allocation9 + $0xf8] sm:$0xff]
    %v360 = vld [vmem:[#allocation9 + $0x100] sm:$0xff]
    %v361 = vld [vmem:[#allocation9 + $0x108] sm:$0xff]
    %v362 = vld [vmem:[#allocation9 + $0x110] sm:$0xff]
    %v363 = vld [vmem:[#allocation9 + $0x118] sm:$0xff]
    %v364 = vld [vmem:[#allocation9 + $0x120] sm:$0xff]
    %v365 = vld [vmem:[#allocation9 + $0x128] sm:$0xff]
    %v366 = vld [vmem:[#allocation9 + $0x130] sm:$0xff]
    %v367 = vld [vmem:[#allocation9 + $0x138] sm:$0xff]
    %v368 = vld [vmem:[#allocation9 + $0x140] sm:$0xff]
    %v369 = vld [vmem:[#allocation9 + $0x148] sm:$0xff]
    %v370 = vld [vmem:[#allocation9 + $0x150] sm:$0xff]
    %v371 = vld [vmem:[#allocation9 + $0x158] sm:$0xff]
    %v372 = vld [vmem:[#allocation9 + $0x160] sm:$0xff]
    %v373 = vld [vmem:[#allocation9 + $0x168] sm:$0xff]
    %v374 = vld [vmem:[#allocation9 + $0x170] sm:$0xff]
    %v375 = vld [vmem:[#allocation9 + $0x178] sm:$0xff]
    %v376 = vld [vmem:[#allocation9 + $0x180] sm:$0xff]
    %v377 = vld [vmem:[#allocation9 + $0x188] sm:$0xff]
    %v378 = vld [vmem:[#allocation9 + $0x190] sm:$0xff]
    %v379 = vld [vmem:[#allocation9 + $0x198] sm:$0xff]
    %v380 = vld [vmem:[#allocation9 + $0x1a0] sm:$0xff]
    %v381 = vld [vmem:[#allocation9 + $0x1a8] sm:$0xff]
    %v382 = vld [vmem:[#allocation9 + $0x1b0] sm:$0xff]
    %v383 = vld [vmem:[#allocation9 + $0x1b8] sm:$0xff]
    %v384 = vld [vmem:[#allocation9 + $0x1c0] sm:$0xff]
    %v385 = vld [vmem:[#allocation9 + $0x1c8] sm:$0xff]
    %v386 = vld [vmem:[#allocation9 + $0x1d0] sm:$0xff]
    %v387 = vld [vmem:[#allocation9 + $0x1d8] sm:$0xff]
    %v388 = vld [vmem:[#allocation9 + $0x1e0] sm:$0xff]
    %v389 = vld [vmem:[#allocation9 + $0x1e8] sm:$0xff]
    %v390 = vld [vmem:[#allocation9 + $0x1f0] sm:$0xff]
    %v391 = vld [vmem:[#allocation9 + $0x1f8] sm:$0xff]
    %v392 = vld [vmem:[#allocation10] sm:$0xff]
    %v393 = vld [vmem:[#allocation10 + $0x8] sm:$0xff]
    %v394 = vld [vmem:[#allocation10 + $0x10] sm:$0xff]
    %v395 = vld [vmem:[#allocation10 + $0x18] sm:$0xff]
    %v396 = vld [vmem:[#allocation10 + $0x20] sm:$0xff]
    %v397 = vld [vmem:[#allocation10 + $0x28] sm:$0xff]
    %v398 = vld [vmem:[#allocation10 + $0x30] sm:$0xff]
    %v399 = vld [vmem:[#allocation10 + $0x38] sm:$0xff]
    %v400 = vld [vmem:[#allocation10 + $0x40] sm:$0xff]
    %v401 = vld [vmem:[#allocation10 + $0x48] sm:$0xff]
    %v402 = vld [vmem:[#allocation10 + $0x50] sm:$0xff]
    %v403 = vld [vmem:[#allocation10 + $0x58] sm:$0xff]
    %v404 = vld [vmem:[#allocation10 + $0x60] sm:$0xff]
    %v405 = vld [vmem:[#allocation10 + $0x68] sm:$0xff]
    %v406 = vld [vmem:[#allocation10 + $0x70] sm:$0xff]
    %v407 = vld [vmem:[#allocation10 + $0x78] sm:$0xff]
    %v408 = vld [vmem:[#allocation10 + $0x80] sm:$0xff]
    %v409 = vld [vmem:[#allocation10 + $0x88] sm:$0xff]
    %v410 = vld [vmem:[#allocation10 + $0x90] sm:$0xff]
    %v411 = vld [vmem:[#allocation10 + $0x98] sm:$0xff]
    %v412 = vld [vmem:[#allocation10 + $0xa0] sm:$0xff]
    %v413 = vld [vmem:[#allocation10 + $0xa8] sm:$0xff]
    %v414 = vld [vmem:[#allocation10 + $0xb0] sm:$0xff]
    %v415 = vld [vmem:[#allocation10 + $0xb8] sm:$0xff]
    %v416 = vld [vmem:[#allocation10 + $0xc0] sm:$0xff]
    %v417 = vld [vmem:[#allocation10 + $0xc8] sm:$0xff]
    %v418 = vld [vmem:[#allocation10 + $0xd0] sm:$0xff]
    %v419 = vld [vmem:[#allocation10 + $0xd8] sm:$0xff]
    %v420 = vld [vmem:[#allocation10 + $0xe0] sm:$0xff]
    %v421 = vld [vmem:[#allocation10 + $0xe8] sm:$0xff]
    %v422 = vld [vmem:[#allocation10 + $0xf0] sm:$0xff]
    %v423 = vld [vmem:[#allocation10 + $0xf8] sm:$0xff]
    %v424 = vld [vmem:[#allocation10 + $0x100] sm:$0xff]
    %v425 = vld [vmem:[#allocation10 + $0x108] sm:$0xff]
    %v426 = vld [vmem:[#allocation10 + $0x110] sm:$0xff]
    %v427 = vld [vmem:[#allocation10 + $0x118] sm:$0xff]
    %v428 = vld [vmem:[#allocation10 + $0x120] sm:$0xff]
    %v429 = vld [vmem:[#allocation10 + $0x128] sm:$0xff]
    %v430 = vld [vmem:[#allocation10 + $0x130] sm:$0xff]
    %v431 = vld [vmem:[#allocation10 + $0x138] sm:$0xff]
    %v432 = vld [vmem:[#allocation10 + $0x140] sm:$0xff]
    %v433 = vld [vmem:[#allocation10 + $0x148] sm:$0xff]
    %v434 = vld [vmem:[#allocation10 + $0x150] sm:$0xff]
    %v435 = vld [vmem:[#allocation10 + $0x158] sm:$0xff]
    %v436 = vld [vmem:[#allocation10 + $0x160] sm:$0xff]
    %v437 = vld [vmem:[#allocation10 + $0x168] sm:$0xff]
    %v438 = vld [vmem:[#allocation10 + $0x170] sm:$0xff]
    %v439 = vld [vmem:[#allocation10 + $0x178] sm:$0xff]
    %v440 = vld [vmem:[#allocation10 + $0x180] sm:$0xff]
    %v441 = vld [vmem:[#allocation10 + $0x188] sm:$0xff]
    %v442 = vld [vmem:[#allocation10 + $0x190] sm:$0xff]
    %v443 = vld [vmem:[#allocation10 + $0x198] sm:$0xff]
    %v444 = vld [vmem:[#allocation10 + $0x1a0] sm:$0xff]
    %v445 = vld [vmem:[#allocation10 + $0x1a8] sm:$0xff]
    %v446 = vld [vmem:[#allocation10 + $0x1b0] sm:$0xff]
    %v447 = vld [vmem:[#allocation10 + $0x1b8] sm:$0xff]
    %v448 = vld [vmem:[#allocation10 + $0x1c0] sm:$0xff]
    %v449 = vld [vmem:[#allocation10 + $0x1c8] sm:$0xff]
    %v450 = vld [vmem:[#allocation10 + $0x1d0] sm:$0xff]
    %v451 = vld [vmem:[#allocation10 + $0x1d8] sm:$0xff]
    %v452 = vld [vmem:[#allocation10 + $0x1e0] sm:$0xff]
    %v453 = vld [vmem:[#allocation10 + $0x1e8] sm:$0xff]
    %v454 = vld [vmem:[#allocation10 + $0x1f0] sm:$0xff]
    %v455 = vld [vmem:[#allocation10 + $0x1f8] sm:$0xff]
    %v456 = vld [vmem:[%s6] sm:$0xf]
    %v458 = vlaneseq
    %v459 = vshrl.u32 %v458, 7
    %v460 = vsub.s32 0, %v459
    %v461 = vrot.slane %v456, %v460
    %v462 = vlaneseq
    %v463 = vshrl.u32 %v462, 7
    %v464 = vsub.s32 1, %v463
    %v465 = vrot.slane %v456, %v464
    %v466 = vlaneseq
    %v467 = vshrl.u32 %v466, 7
    %v468 = vsub.s32 2, %v467
    %v469 = vrot.slane %v456, %v468
    %v470 = vlaneseq
    %v471 = vshrl.u32 %v470, 7
    %v472 = vsub.s32 3, %v471
    %v473 = vrot.slane %v456, %v472
    %v478 = vld [vmem:[%s9] sm:$0xf]
    %v480 = vlaneseq
    %v481 = vshrl.u32 %v480, 7
    %v482 = vsub.s32 0, %v481
    %v483 = vrot.slane %v478, %v482
    %v484 = vlaneseq
    %v485 = vshrl.u32 %v484, 7
    %v486 = vsub.s32 1, %v485
    %v487 = vrot.slane %v478, %v486
    %v488 = vlaneseq
    %v489 = vshrl.u32 %v488, 7
    %v490 = vsub.s32 2, %v489
    %v491 = vrot.slane %v478, %v490
    %v492 = vlaneseq
    %v493 = vshrl.u32 %v492, 7
    %v494 = vsub.s32 3, %v493
    %v495 = vrot.slane %v478, %v494
    %v500 = vld [vmem:[%s0] sm:$0xff]
    %v501 = vld [vmem:[%s0 + $0x8] sm:$0xff]
    %v502 = vld [vmem:[%s0 + $0x10] sm:$0xff]
    %v503 = vld [vmem:[%s0 + $0x18] sm:$0xff]
    %v504 = vld [vmem:[%s0 + $0x20] sm:$0xff]
    %v505 = vld [vmem:[%s0 + $0x28] sm:$0xff]
    %v506 = vld [vmem:[%s0 + $0x30] sm:$0xff]
    %v507 = vld [vmem:[%s0 + $0x38] sm:$0xff]
    %v508 = vld [vmem:[#allocation2] sm:$0xff]
    %v509 = vld [vmem:[#allocation2 + $0x8] sm:$0xff]
    %v510 = vld [vmem:[#allocation2 + $0x10] sm:$0xff]
    %v511 = vld [vmem:[#allocation2 + $0x18] sm:$0xff]
    %v512 = vld [vmem:[#allocation2 + $0x20] sm:$0xff]
    %v513 = vld [vmem:[#allocation2 + $0x28] sm:$0xff]
    %v514 = vld [vmem:[#allocation2 + $0x30] sm:$0xff]
    %v515 = vld [vmem:[#allocation2 + $0x38] sm:$0xff]
    %v516 = vld [vmem:[#allocation2 + $0x40] sm:$0xff]
    %v517 = vld [vmem:[#allocation2 + $0x48] sm:$0xff]
    %v518 = vld [vmem:[#allocation2 + $0x50] sm:$0xff]
    %v519 = vld [vmem:[#allocation2 + $0x58] sm:$0xff]
    %v520 = vld [vmem:[#allocation2 + $0x60] sm:$0xff]
    %v521 = vld [vmem:[#allocation2 + $0x68] sm:$0xff]
    %v522 = vld [vmem:[#allocation2 + $0x70] sm:$0xff]
    %v523 = vld [vmem:[#allocation2 + $0x78] sm:$0xff]
    %v524 = vld [vmem:[#allocation2 + $0x80] sm:$0xff]
    %v525 = vld [vmem:[#allocation2 + $0x88] sm:$0xff]
    %v526 = vld [vmem:[#allocation2 + $0x90] sm:$0xff]
    %v527 = vld [vmem:[#allocation2 + $0x98] sm:$0xff]
    %v528 = vld [vmem:[#allocation2 + $0xa0] sm:$0xff]
    %v529 = vld [vmem:[#allocation2 + $0xa8] sm:$0xff]
    %v530 = vld [vmem:[#allocation2 + $0xb0] sm:$0xff]
    %v531 = vld [vmem:[#allocation2 + $0xb8] sm:$0xff]
    %v532 = vld [vmem:[#allocation2 + $0xc0] sm:$0xff]
    %v533 = vld [vmem:[#allocation2 + $0xc8] sm:$0xff]
    %v534 = vld [vmem:[#allocation2 + $0xd0] sm:$0xff]
    %v535 = vld [vmem:[#allocation2 + $0xd8] sm:$0xff]
    %v536 = vld [vmem:[#allocation2 + $0xe0] sm:$0xff]
    %v537 = vld [vmem:[#allocation2 + $0xe8] sm:$0xff]
    %v538 = vld [vmem:[#allocation2 + $0xf0] sm:$0xff]
    %v539 = vld [vmem:[#allocation2 + $0xf8] sm:$0xff]
    %v540 = vld [vmem:[#allocation2 + $0x100] sm:$0xff]
    %v541 = vld [vmem:[#allocation2 + $0x108] sm:$0xff]
    %v542 = vld [vmem:[#allocation2 + $0x110] sm:$0xff]
    %v543 = vld [vmem:[#allocation2 + $0x118] sm:$0xff]
    %v544 = vld [vmem:[#allocation2 + $0x120] sm:$0xff]
    %v545 = vld [vmem:[#allocation2 + $0x128] sm:$0xff]
    %v546 = vld [vmem:[#allocation2 + $0x130] sm:$0xff]
    %v547 = vld [vmem:[#allocation2 + $0x138] sm:$0xff]
    %v548 = vld [vmem:[#allocation2 + $0x140] sm:$0xff]
    %v549 = vld [vmem:[#allocation2 + $0x148] sm:$0xff]
    %v550 = vld [vmem:[#allocation2 + $0x150] sm:$0xff]
    %v551 = vld [vmem:[#allocation2 + $0x158] sm:$0xff]
    %v552 = vld [vmem:[#allocation2 + $0x160] sm:$0xff]
    %v553 = vld [vmem:[#allocation2 + $0x168] sm:$0xff]
    %v554 = vld [vmem:[#allocation2 + $0x170] sm:$0xff]
    %v555 = vld [vmem:[#allocation2 + $0x178] sm:$0xff]
    %v556 = vld [vmem:[#allocation2 + $0x180] sm:$0xff]
    %v557 = vld [vmem:[#allocation2 + $0x188] sm:$0xff]
    %v558 = vld [vmem:[#allocation2 + $0x190] sm:$0xff]
    %v559 = vld [vmem:[#allocation2 + $0x198] sm:$0xff]
    %v560 = vld [vmem:[#allocation2 + $0x1a0] sm:$0xff]
    %v561 = vld [vmem:[#allocation2 + $0x1a8] sm:$0xff]
    %v562 = vld [vmem:[#allocation2 + $0x1b0] sm:$0xff]
    %v563 = vld [vmem:[#allocation2 + $0x1b8] sm:$0xff]
    %v564 = vld [vmem:[#allocation2 + $0x1c0] sm:$0xff]
    %v565 = vld [vmem:[#allocation2 + $0x1c8] sm:$0xff]
    %v566 = vld [vmem:[#allocation2 + $0x1d0] sm:$0xff]
    %v567 = vld [vmem:[#allocation2 + $0x1d8] sm:$0xff]
    %v568 = vld [vmem:[#allocation2 + $0x1e0] sm:$0xff]
    %v569 = vld [vmem:[#allocation2 + $0x1e8] sm:$0xff]
    %v570 = vld [vmem:[#allocation2 + $0x1f0] sm:$0xff]
    %v571 = vld [vmem:[#allocation2 + $0x1f8] sm:$0xff]
    %v572 = vld [vmem:[%s3] sm:$0xf]
    %v574 = vlaneseq
    %v575 = vshrl.u32 %v574, 7
    %v576 = vsub.s32 0, %v575
    %v577 = vrot.slane %v572, %v576
    %v578 = vlaneseq
    %v579 = vshrl.u32 %v578, 7
    %v580 = vsub.s32 1, %v579
    %v581 = vrot.slane %v572, %v580
    %v582 = vlaneseq
    %v583 = vshrl.u32 %v582, 7
    %v584 = vsub.s32 2, %v583
    %v585 = vrot.slane %v572, %v584
    %v586 = vlaneseq
    %v587 = vshrl.u32 %v586, 7
    %v588 = vsub.s32 3, %v587
    %v589 = vrot.slane %v572, %v588
    %594 = vmatprep.subr.mxu0 %v569
    %595 = vmatpush1.msra.mxu0 %v568
    %596 = vmatprep.subr.mxu0 %v565
    %597 = vmatpush1.msra.mxu0 %v564
    %598 = vmatprep.subr.mxu0 %v561
    %599 = vmatpush1.msra.mxu0 %v560
    %600 = vmatprep.subr.mxu0 %v557
    %601 = vmatpush1.msra.mxu0 %v556
    %602 = vmatprep.subr.mxu0 %v553
    %603 = vmatpush1.msra.mxu0 %v552
    %604 = vmatprep.subr.mxu0 %v549
    %605 = vmatpush1.msra.mxu0 %v548
    %606 = vmatprep.subr.mxu0 %v545
    %607 = vmatpush1.msra.mxu0 %v544
    %608 = vmatprep.subr.mxu0 %v541
    %609 = vmatpush1.msra.mxu0 %v540
    %610 = vmatprep.subr.mxu0 %v537
    %611 = vmatpush1.msra.mxu0 %v536
    %612 = vmatprep.subr.mxu0 %v533
    %613 = vmatpush1.msra.mxu0 %v532
    %614 = vmatprep.subr.mxu0 %v529
    %615 = vmatpush1.msra.mxu0 %v528
    %616 = vmatprep.subr.mxu0 %v525
    %617 = vmatpush1.msra.mxu0 %v524
    %618 = vmatprep.subr.mxu0 %v521
    %619 = vmatpush1.msra.mxu0 %v520
    %620 = vmatprep.subr.mxu0 %v517
    %621 = vmatpush1.msra.mxu0 %v516
    %622 = vmatprep.subr.mxu0 %v513
    %623 = vmatpush1.msra.mxu0 %v512
    %624 = vmatprep.subr.mxu0 %v509
    %625 = vmatpush1.msra.mxu0 %v508
    %626 = vmatprep.subr.mxu0 0.0
    %627 = vmatpush2.msra.mxu0 0.0
    %628 = vmatprep.subr.mxu0 0.0
    %629 = vmatpush2.msra.mxu0 0.0
    %630 = vmatprep.subr.mxu0 0.0
    %631 = vmatpush2.msra.mxu0 0.0
    %632 = vmatprep.subr.mxu0 0.0
    %633 = vmatpush2.msra.mxu0 0.0
    %634 = vmatprep.subr.mxu0 0.0
    %635 = vmatpush2.msra.mxu0 0.0
    %636 = vmatprep.subr.mxu0 0.0
    %637 = vmatpush2.msra.mxu0 0.0
    %638 = vmatprep.subr.mxu0 0.0
    %639 = vmatpush2.msra.mxu0 0.0
    %640 = vmatprep.subr.mxu0 0.0
    %641 = vmatpush2.msra.mxu0 0.0
    %642 = vmatprep.subr.mxu0 0.0
    %643 = vmatpush2.msra.mxu0 0.0
    %644 = vmatprep.subr.mxu0 0.0
    %645 = vmatpush2.msra.mxu0 0.0
    %646 = vmatprep.subr.mxu0 0.0
    %647 = vmatpush2.msra.mxu0 0.0
    %648 = vmatprep.subr.mxu0 0.0
    %649 = vmatpush2.msra.mxu0 0.0
    %650 = vmatprep.subr.mxu0 0.0
    %651 = vmatpush2.msra.mxu0 0.0
    %652 = vmatprep.subr.mxu0 0.0
    %653 = vmatpush2.msra.mxu0 0.0
    %654 = vmatprep.subr.mxu0 0.0
    %655 = vmatpush2.msra.mxu0 0.0
    %656 = vmatprep.subr.mxu0 0.0
    %657 = vmatpush2.msra.mxu0 0.0
    %658 = vmatprep.mubr.f32.mxu0 0.0
    %659 = vmatmul.mubr.f32.gmra.mxu0 %v500
    %v660 = vpop.f32.mrf.mxu0
    %v661 = vadd.f32 %v577, %v660
    %v662 = vpop.f32.mrf.mxu0
    %v663 = vadd.f32 %v581, %v662
    %664 = vmatprep.mubr.f32.mxu0 0.0
    %665 = vmatmul.mubr.f32.gmra.mxu0 %v501
    %v666 = vpop.f32.mrf.mxu0
    %v667 = vadd.f32 %v577, %v666
    %v668 = vpop.f32.mrf.mxu0
    %v669 = vadd.f32 %v581, %v668
    %670 = vmatprep.mubr.f32.mxu0 0.0
    %671 = vmatmul.mubr.f32.gmra.mxu0 %v502
    %v672 = vpop.f32.mrf.mxu0
    %v673 = vadd.f32 %v577, %v672
    %v674 = vpop.f32.mrf.mxu0
    %v675 = vadd.f32 %v581, %v674
    %676 = vmatprep.mubr.f32.mxu0 0.0
    %677 = vmatmul.mubr.f32.gmra.mxu0 %v503
    %v678 = vpop.f32.mrf.mxu0
    %v679 = vadd.f32 %v577, %v678
    %v680 = vpop.f32.mrf.mxu0
    %v681 = vadd.f32 %v581, %v680
    %682 = vmatprep.mubr.f32.mxu0 0.0
    %683 = vmatmul.mubr.f32.gmra.mxu0 %v504
    %v684 = vpop.f32.mrf.mxu0
    %v685 = vadd.f32 %v577, %v684
    %v686 = vpop.f32.mrf.mxu0
    %v687 = vadd.f32 %v581, %v686
    %688 = vmatprep.mubr.f32.mxu0 0.0
    %689 = vmatmul.mubr.f32.gmra.mxu0 %v505
    %v690 = vpop.f32.mrf.mxu0
    %v691 = vadd.f32 %v577, %v690
    %v692 = vpop.f32.mrf.mxu0
    %v693 = vadd.f32 %v581, %v692
    %694 = vmatprep.mubr.f32.mxu0 0.0
    %695 = vmatmul.mubr.f32.gmra.mxu0 %v506
    %v696 = vpop.f32.mrf.mxu0
    %v697 = vadd.f32 %v577, %v696
    %v698 = vpop.f32.mrf.mxu0
    %v699 = vadd.f32 %v581, %v698
    %700 = vmatprep.mubr.f32.mxu0 0.0
    %701 = vmatmul.mubr.f32.gmra.mxu0 %v507
    %v702 = vpop.f32.mrf.mxu0
    %v703 = vadd.f32 %v577, %v702
    %v704 = vpop.f32.mrf.mxu0
    %v705 = vadd.f32 %v581, %v704
    %706 = vdwg.mxu0
    %707 = vmatprep.subr.mxu0 %v571
    %708 = vmatpush1.msra.mxu0 %v570
    %709 = vmatprep.subr.mxu0 %v567
    %710 = vmatpush1.msra.mxu0 %v566
    %711 = vmatprep.subr.mxu0 %v563
    %712 = vmatpush1.msra.mxu0 %v562
    %713 = vmatprep.subr.mxu0 %v559
    %714 = vmatpush1.msra.mxu0 %v558
    %715 = vmatprep.subr.mxu0 %v555
    %716 = vmatpush1.msra.mxu0 %v554
    %717 = vmatprep.subr.mxu0 %v551
    %718 = vmatpush1.msra.mxu0 %v550
    %719 = vmatprep.subr.mxu0 %v547
    %720 = vmatpush1.msra.mxu0 %v546
    %721 = vmatprep.subr.mxu0 %v543
    %722 = vmatpush1.msra.mxu0 %v542
    %723 = vmatprep.subr.mxu0 %v539
    %724 = vmatpush1.msra.mxu0 %v538
    %725 = vmatprep.subr.mxu0 %v535
    %726 = vmatpush1.msra.mxu0 %v534
    %727 = vmatprep.subr.mxu0 %v531
    %728 = vmatpush1.msra.mxu0 %v530
    %729 = vmatprep.subr.mxu0 %v527
    %730 = vmatpush1.msra.mxu0 %v526
    %731 = vmatprep.subr.mxu0 %v523
    %732 = vmatpush1.msra.mxu0 %v522
    %733 = vmatprep.subr.mxu0 %v519
    %734 = vmatpush1.msra.mxu0 %v518
    %735 = vmatprep.subr.mxu0 %v515
    %736 = vmatpush1.msra.mxu0 %v514
    %737 = vmatprep.subr.mxu0 %v511
    %738 = vmatpush1.msra.mxu0 %v510
    %739 = vmatprep.subr.mxu0 0.0
    %740 = vmatpush2.msra.mxu0 0.0
    %741 = vmatprep.subr.mxu0 0.0
    %742 = vmatpush2.msra.mxu0 0.0
    %743 = vmatprep.subr.mxu0 0.0
    %744 = vmatpush2.msra.mxu0 0.0
    %745 = vmatprep.subr.mxu0 0.0
    %746 = vmatpush2.msra.mxu0 0.0
    %747 = vmatprep.subr.mxu0 0.0
    %748 = vmatpush2.msra.mxu0 0.0
    %749 = vmatprep.subr.mxu0 0.0
    %750 = vmatpush2.msra.mxu0 0.0
    %751 = vmatprep.subr.mxu0 0.0
    %752 = vmatpush2.msra.mxu0 0.0
    %753 = vmatprep.subr.mxu0 0.0
    %754 = vmatpush2.msra.mxu0 0.0
    %755 = vmatprep.subr.mxu0 0.0
    %756 = vmatpush2.msra.mxu0 0.0
    %757 = vmatprep.subr.mxu0 0.0
    %758 = vmatpush2.msra.mxu0 0.0
    %759 = vmatprep.subr.mxu0 0.0
    %760 = vmatpush2.msra.mxu0 0.0
    %761 = vmatprep.subr.mxu0 0.0
    %762 = vmatpush2.msra.mxu0 0.0
    %763 = vmatprep.subr.mxu0 0.0
    %764 = vmatpush2.msra.mxu0 0.0
    %765 = vmatprep.subr.mxu0 0.0
    %766 = vmatpush2.msra.mxu0 0.0
    %767 = vmatprep.subr.mxu0 0.0
    %768 = vmatpush2.msra.mxu0 0.0
    %769 = vmatprep.subr.mxu0 0.0
    %770 = vmatpush2.msra.mxu0 0.0
    %771 = vmatprep.mubr.f32.mxu0 0.0
    %772 = vmatmul.mubr.f32.gmra.mxu0 %v500
    %v773 = vpop.f32.mrf.mxu0
    %v774 = vadd.f32 %v585, %v773
    %v775 = vpop.f32.mrf.mxu0
    %v776 = vadd.f32 %v589, %v775
    %777 = vmatprep.mubr.f32.mxu0 0.0
    %778 = vmatmul.mubr.f32.gmra.mxu0 %v501
    %v779 = vpop.f32.mrf.mxu0
    %v780 = vadd.f32 %v585, %v779
    %v781 = vpop.f32.mrf.mxu0
    %v782 = vadd.f32 %v589, %v781
    %783 = vmatprep.mubr.f32.mxu0 0.0
    %784 = vmatmul.mubr.f32.gmra.mxu0 %v502
    %v785 = vpop.f32.mrf.mxu0
    %v786 = vadd.f32 %v585, %v785
    %v787 = vpop.f32.mrf.mxu0
    %v788 = vadd.f32 %v589, %v787
    %789 = vmatprep.mubr.f32.mxu0 0.0
    %790 = vmatmul.mubr.f32.gmra.mxu0 %v503
    %v791 = vpop.f32.mrf.mxu0
    %v792 = vadd.f32 %v585, %v791
    %v793 = vpop.f32.mrf.mxu0
    %v794 = vadd.f32 %v589, %v793
    %795 = vmatprep.mubr.f32.mxu0 0.0
    %796 = vmatmul.mubr.f32.gmra.mxu0 %v504
    %v797 = vpop.f32.mrf.mxu0
    %v798 = vadd.f32 %v585, %v797
    %v799 = vpop.f32.mrf.mxu0
    %v800 = vadd.f32 %v589, %v799
    %801 = vmatprep.mubr.f32.mxu0 0.0
    %802 = vmatmul.mubr.f32.gmra.mxu0 %v505
    %v803 = vpop.f32.mrf.mxu0
    %v804 = vadd.f32 %v585, %v803
    %v805 = vpop.f32.mrf.mxu0
    %v806 = vadd.f32 %v589, %v805
    %807 = vmatprep.mubr.f32.mxu0 0.0
    %808 = vmatmul.mubr.f32.gmra.mxu0 %v506
    %v809 = vpop.f32.mrf.mxu0
    %v810 = vadd.f32 %v585, %v809
    %v811 = vpop.f32.mrf.mxu0
    %v812 = vadd.f32 %v589, %v811
    %813 = vmatprep.mubr.f32.mxu0 0.0
    %814 = vmatmul.mubr.f32.gmra.mxu0 %v507
    %v815 = vpop.f32.mrf.mxu0
    %v816 = vadd.f32 %v585, %v815
    %v817 = vpop.f32.mrf.mxu0
    %v818 = vadd.f32 %v589, %v817
    %819 = vdwg.mxu0
    %820 = vmatprep.subr.mxu0 %v197
    %821 = vmatpush1.msra.mxu0 %v196
    %822 = vmatprep.subr.mxu0 %v193
    %823 = vmatpush1.msra.mxu0 %v192
    %824 = vmatprep.subr.mxu0 %v189
    %825 = vmatpush1.msra.mxu0 %v188
    %826 = vmatprep.subr.mxu0 %v185
    %827 = vmatpush1.msra.mxu0 %v184
    %828 = vmatprep.subr.mxu0 %v181
    %829 = vmatpush1.msra.mxu0 %v180
    %830 = vmatprep.subr.mxu0 %v177
    %831 = vmatpush1.msra.mxu0 %v176
    %832 = vmatprep.subr.mxu0 %v173
    %833 = vmatpush1.msra.mxu0 %v172
    %834 = vmatprep.subr.mxu0 %v169
    %835 = vmatpush1.msra.mxu0 %v168
    %836 = vmatprep.subr.mxu0 %v165
    %837 = vmatpush1.msra.mxu0 %v164
    %838 = vmatprep.subr.mxu0 %v161
    %839 = vmatpush1.msra.mxu0 %v160
    %840 = vmatprep.subr.mxu0 %v157
    %841 = vmatpush1.msra.mxu0 %v156
    %842 = vmatprep.subr.mxu0 %v153
    %843 = vmatpush1.msra.mxu0 %v152
    %844 = vmatprep.subr.mxu0 %v149
    %845 = vmatpush1.msra.mxu0 %v148
    %846 = vmatprep.subr.mxu0 %v145
    %847 = vmatpush1.msra.mxu0 %v144
    %848 = vmatprep.subr.mxu0 %v141
    %849 = vmatpush1.msra.mxu0 %v140
    %850 = vmatprep.subr.mxu0 %v137
    %851 = vmatpush1.msra.mxu0 %v136
    %852 = vmatprep.subr.mxu0 0.0
    %853 = vmatpush2.msra.mxu0 0.0
    %854 = vmatprep.subr.mxu0 0.0
    %855 = vmatpush2.msra.mxu0 0.0
    %856 = vmatprep.subr.mxu0 0.0
    %857 = vmatpush2.msra.mxu0 0.0
    %858 = vmatprep.subr.mxu0 0.0
    %859 = vmatpush2.msra.mxu0 0.0
    %860 = vmatprep.subr.mxu0 0.0
    %861 = vmatpush2.msra.mxu0 0.0
    %862 = vmatprep.subr.mxu0 0.0
    %863 = vmatpush2.msra.mxu0 0.0
    %864 = vmatprep.subr.mxu0 0.0
    %865 = vmatpush2.msra.mxu0 0.0
    %866 = vmatprep.subr.mxu0 0.0
    %867 = vmatpush2.msra.mxu0 0.0
    %868 = vmatprep.subr.mxu0 0.0
    %869 = vmatpush2.msra.mxu0 0.0
    %870 = vmatprep.subr.mxu0 0.0
    %871 = vmatpush2.msra.mxu0 0.0
    %872 = vmatprep.subr.mxu0 0.0
    %873 = vmatpush2.msra.mxu0 0.0
    %874 = vmatprep.subr.mxu0 0.0
    %875 = vmatpush2.msra.mxu0 0.0
    %876 = vmatprep.subr.mxu0 0.0
    %877 = vmatpush2.msra.mxu0 0.0
    %878 = vmatprep.subr.mxu0 0.0
    %879 = vmatpush2.msra.mxu0 0.0
    %880 = vmatprep.subr.mxu0 0.0
    %881 = vmatpush2.msra.mxu0 0.0
    %882 = vmatprep.subr.mxu0 0.0
    %883 = vmatpush2.msra.mxu0 0.0
    %884 = vmatprep.mubr.f32.mxu0 0.0
    %885 = vmatmul.mubr.f32.gmra.mxu0 0.0
    %v886 = vpop.f32.mrf.mxu0
    %v887 = vadd.f32 0.0, %v886
    %v888 = vpop.f32.mrf.mxu0
    %v889 = vadd.f32 0.0, %v888
    %890 = vdwg.mxu0
    %891 = vmatprep.subr.mxu0 %v199
    %892 = vmatpush1.msra.mxu0 %v198
    %893 = vmatprep.subr.mxu0 %v195
    %894 = vmatpush1.msra.mxu0 %v194
    %895 = vmatprep.subr.mxu0 %v191
    %896 = vmatpush1.msra.mxu0 %v190
    %897 = vmatprep.subr.mxu0 %v187
    %898 = vmatpush1.msra.mxu0 %v186
    %899 = vmatprep.subr.mxu0 %v183
    %900 = vmatpush1.msra.mxu0 %v182
    %901 = vmatprep.subr.mxu0 %v179
    %902 = vmatpush1.msra.mxu0 %v178
    %903 = vmatprep.subr.mxu0 %v175
    %904 = vmatpush1.msra.mxu0 %v174
    %905 = vmatprep.subr.mxu0 %v171
    %906 = vmatpush1.msra.mxu0 %v170
    %907 = vmatprep.subr.mxu0 %v167
    %908 = vmatpush1.msra.mxu0 %v166
    %909 = vmatprep.subr.mxu0 %v163
    %910 = vmatpush1.msra.mxu0 %v162
    %911 = vmatprep.subr.mxu0 %v159
    %912 = vmatpush1.msra.mxu0 %v158
    %913 = vmatprep.subr.mxu0 %v155
    %914 = vmatpush1.msra.mxu0 %v154
    %915 = vmatprep.subr.mxu0 %v151
    %916 = vmatpush1.msra.mxu0 %v150
    %917 = vmatprep.subr.mxu0 %v147
    %918 = vmatpush1.msra.mxu0 %v146
    %919 = vmatprep.subr.mxu0 %v143
    %920 = vmatpush1.msra.mxu0 %v142
    %921 = vmatprep.subr.mxu0 %v139
    %922 = vmatpush1.msra.mxu0 %v138
    %923 = vmatprep.subr.mxu0 0.0
    %924 = vmatpush2.msra.mxu0 0.0
    %925 = vmatprep.subr.mxu0 0.0
    %926 = vmatpush2.msra.mxu0 0.0
    %927 = vmatprep.subr.mxu0 0.0
    %928 = vmatpush2.msra.mxu0 0.0
    %929 = vmatprep.subr.mxu0 0.0
    %930 = vmatpush2.msra.mxu0 0.0
    %931 = vmatprep.subr.mxu0 0.0
    %932 = vmatpush2.msra.mxu0 0.0
    %933 = vmatprep.subr.mxu0 0.0
    %934 = vmatpush2.msra.mxu0 0.0
    %935 = vmatprep.subr.mxu0 0.0
    %936 = vmatpush2.msra.mxu0 0.0
    %937 = vmatprep.subr.mxu0 0.0
    %938 = vmatpush2.msra.mxu0 0.0
    %939 = vmatprep.subr.mxu0 0.0
    %940 = vmatpush2.msra.mxu0 0.0
    %941 = vmatprep.subr.mxu0 0.0
    %942 = vmatpush2.msra.mxu0 0.0
    %943 = vmatprep.subr.mxu0 0.0
    %944 = vmatpush2.msra.mxu0 0.0
    %945 = vmatprep.subr.mxu0 0.0
    %946 = vmatpush2.msra.mxu0 0.0
    %947 = vmatprep.subr.mxu0 0.0
    %948 = vmatpush2.msra.mxu0 0.0
    %949 = vmatprep.subr.mxu0 0.0
    %950 = vmatpush2.msra.mxu0 0.0
    %951 = vmatprep.subr.mxu0 0.0
    %952 = vmatpush2.msra.mxu0 0.0
    %953 = vmatprep.subr.mxu0 0.0
    %954 = vmatpush2.msra.mxu0 0.0
    %955 = vmatprep.mubr.f32.mxu0 0.0
    %956 = vmatmul.mubr.f32.gmra.mxu0 0.0
    %v957 = vpop.f32.mrf.mxu0
    %v958 = vadd.f32 0.0, %v957
    %v959 = vpop.f32.mrf.mxu0
    %v960 = vadd.f32 0.0, %v959
    %961 = vdwg.mxu0
    %v962 = vadd.f32 %v661, %v887
    %v963 = vadd.f32 %v663, %v889
    %v964 = vadd.f32 %v774, %v958
    %v965 = vadd.f32 %v776, %v960
    %v966 = vxor.u32 %v962, 2147483648
    %v967 = vxor.u32 %v963, 2147483648
    %v968 = vxor.u32 %v964, 2147483648
    %v969 = vmul.f32 %v966, 1.442695
    %v970 = vpow.pop %v969
    %v971 = vmul.f32 %v967, 1.442695
    %v972 = vpow.pop %v971
    %v973 = vmul.f32 %v968, 1.442695
    %v974 = vpow.pop %v973
    %v975 = vadd.f32 %v970, 1.0
    %v976 = vadd.f32 %v972, 1.0
    %v977 = vadd.f32 %v974, 1.0
    %v978 = vrcp.pop %v975
    %v979 = vmul.f32 1.0, %v978
    %v980 = vrcp.pop %v976
    %v981 = vmul.f32 1.0, %v980
    %v982 = vrcp.pop %v977
    %v983 = vmul.f32 1.0, %v982
    %v984 = vtanh.pop %v965
    %v985 = vmul.f32 %v981, 0.0
    %v986 = vmul.f32 %v979, %v984
    %v987 = vadd.f32 %v985, %v986
    %v988 = vtanh.pop %v987
    %v989 = vmul.f32 %v983, %v988
    %990 = vmatprep.subr.mxu0 %v261
    %991 = vmatpush1.msra.mxu0 %v260
    %992 = vmatprep.subr.mxu0 %v257
    %993 = vmatpush1.msra.mxu0 %v256
    %994 = vmatprep.subr.mxu0 %v253
    %995 = vmatpush1.msra.mxu0 %v252
    %996 = vmatprep.subr.mxu0 %v249
    %997 = vmatpush1.msra.mxu0 %v248
    %998 = vmatprep.subr.mxu0 %v245
    %999 = vmatpush1.msra.mxu0 %v244
    %1000 = vmatprep.subr.mxu0 %v241
    %1001 = vmatpush1.msra.mxu0 %v240
    %1002 = vmatprep.subr.mxu0 %v237
    %1003 = vmatpush1.msra.mxu0 %v236
    %1004 = vmatprep.subr.mxu0 %v233
    %1005 = vmatpush1.msra.mxu0 %v232
    %1006 = vmatprep.subr.mxu0 %v229
    %1007 = vmatpush1.msra.mxu0 %v228
    %1008 = vmatprep.subr.mxu0 %v225
    %1009 = vmatpush1.msra.mxu0 %v224
    %1010 = vmatprep.subr.mxu0 %v221
    %1011 = vmatpush1.msra.mxu0 %v220
    %1012 = vmatprep.subr.mxu0 %v217
    %1013 = vmatpush1.msra.mxu0 %v216
    %1014 = vmatprep.subr.mxu0 %v213
    %1015 = vmatpush1.msra.mxu0 %v212
    %1016 = vmatprep.subr.mxu0 %v209
    %1017 = vmatpush1.msra.mxu0 %v208
    %1018 = vmatprep.subr.mxu0 %v205
    %1019 = vmatpush1.msra.mxu0 %v204
    %1020 = vmatprep.subr.mxu0 %v201
    %1021 = vmatpush1.msra.mxu0 %v200
    %1022 = vmatprep.subr.mxu0 0.0
    %1023 = vmatpush2.msra.mxu0 0.0
    %1024 = vmatprep.subr.mxu0 0.0
    %1025 = vmatpush2.msra.mxu0 0.0
    %1026 = vmatprep.subr.mxu0 0.0
    %1027 = vmatpush2.msra.mxu0 0.0
    %1028 = vmatprep.subr.mxu0 0.0
    %1029 = vmatpush2.msra.mxu0 0.0
    %1030 = vmatprep.subr.mxu0 0.0
    %1031 = vmatpush2.msra.mxu0 0.0
    %1032 = vmatprep.subr.mxu0 0.0
    %1033 = vmatpush2.msra.mxu0 0.0
    %1034 = vmatprep.subr.mxu0 0.0
    %1035 = vmatpush2.msra.mxu0 0.0
    %1036 = vmatprep.subr.mxu0 0.0
    %1037 = vmatpush2.msra.mxu0 0.0
    %1038 = vmatprep.subr.mxu0 0.0
    %1039 = vmatpush2.msra.mxu0 0.0
    %1040 = vmatprep.subr.mxu0 0.0
    %1041 = vmatpush2.msra.mxu0 0.0
    %1042 = vmatprep.subr.mxu0 0.0
    %1043 = vmatpush2.msra.mxu0 0.0
    %1044 = vmatprep.subr.mxu0 0.0
    %1045 = vmatpush2.msra.mxu0 0.0
    %1046 = vmatprep.subr.mxu0 0.0
    %1047 = vmatpush2.msra.mxu0 0.0
    %1048 = vmatprep.subr.mxu0 0.0
    %1049 = vmatpush2.msra.mxu0 0.0
    %1050 = vmatprep.subr.mxu0 0.0
    %1051 = vmatpush2.msra.mxu0 0.0
    %1052 = vmatprep.subr.mxu0 0.0
    %1053 = vmatpush2.msra.mxu0 0.0
    %1054 = vmatprep.mubr.f32.mxu0 0.0
    %1055 = vmatmul.mubr.f32.gmra.mxu0 %v989
    %v1056 = vpop.f32.mrf.mxu0
    %v1057 = vadd.f32 %v461, %v1056
    %v1058 = vpop.f32.mrf.mxu0
    %v1059 = vadd.f32 %v465, %v1058
    %1060 = vdwg.mxu0
    %1061 = vmatprep.subr.mxu0 %v263
    %1062 = vmatpush1.msra.mxu0 %v262
    %1063 = vmatprep.subr.mxu0 %v259
    %1064 = vmatpush1.msra.mxu0 %v258
    %1065 = vmatprep.subr.mxu0 %v255
    %1066 = vmatpush1.msra.mxu0 %v254
    %1067 = vmatprep.subr.mxu0 %v251
    %1068 = vmatpush1.msra.mxu0 %v250
    %1069 = vmatprep.subr.mxu0 %v247
    %1070 = vmatpush1.msra.mxu0 %v246
    %1071 = vmatprep.subr.mxu0 %v243
    %1072 = vmatpush1.msra.mxu0 %v242
    %1073 = vmatprep.subr.mxu0 %v239
    %1074 = vmatpush1.msra.mxu0 %v238
    %1075 = vmatprep.subr.mxu0 %v235
    %1076 = vmatpush1.msra.mxu0 %v234
    %1077 = vmatprep.subr.mxu0 %v231
    %1078 = vmatpush1.msra.mxu0 %v230
    %1079 = vmatprep.subr.mxu0 %v227
    %1080 = vmatpush1.msra.mxu0 %v226
    %1081 = vmatprep.subr.mxu0 %v223
    %1082 = vmatpush1.msra.mxu0 %v222
    %1083 = vmatprep.subr.mxu0 %v219
    %1084 = vmatpush1.msra.mxu0 %v218
    %1085 = vmatprep.subr.mxu0 %v215
    %1086 = vmatpush1.msra.mxu0 %v214
    %1087 = vmatprep.subr.mxu0 %v211
    %1088 = vmatpush1.msra.mxu0 %v210
    %1089 = vmatprep.subr.mxu0 %v207
    %1090 = vmatpush1.msra.mxu0 %v206
    %1091 = vmatprep.subr.mxu0 %v203
    %1092 = vmatpush1.msra.mxu0 %v202
    %1093 = vmatprep.subr.mxu0 0.0
    %1094 = vmatpush2.msra.mxu0 0.0
    %1095 = vmatprep.subr.mxu0 0.0
    %1096 = vmatpush2.msra.mxu0 0.0
    %1097 = vmatprep.subr.mxu0 0.0
    %1098 = vmatpush2.msra.mxu0 0.0
    %1099 = vmatprep.subr.mxu0 0.0
    %1100 = vmatpush2.msra.mxu0 0.0
    %1101 = vmatprep.subr.mxu0 0.0
    %1102 = vmatpush2.msra.mxu0 0.0
    %1103 = vmatprep.subr.mxu0 0.0
    %1104 = vmatpush2.msra.mxu0 0.0
    %1105 = vmatprep.subr.mxu0 0.0
    %1106 = vmatpush2.msra.mxu0 0.0
    %1107 = vmatprep.subr.mxu0 0.0
    %1108 = vmatpush2.msra.mxu0 0.0
    %1109 = vmatprep.subr.mxu0 0.0
    %1110 = vmatpush2.msra.mxu0 0.0
    %1111 = vmatprep.subr.mxu0 0.0
    %1112 = vmatpush2.msra.mxu0 0.0
    %1113 = vmatprep.subr.mxu0 0.0
    %1114 = vmatpush2.msra.mxu0 0.0
    %1115 = vmatprep.subr.mxu0 0.0
    %1116 = vmatpush2.msra.mxu0 0.0
    %1117 = vmatprep.subr.mxu0 0.0
    %1118 = vmatpush2.msra.mxu0 0.0
    %1119 = vmatprep.subr.mxu0 0.0
    %1120 = vmatpush2.msra.mxu0 0.0
    %1121 = vmatprep.subr.mxu0 0.0
    %1122 = vmatpush2.msra.mxu0 0.0
    %1123 = vmatprep.subr.mxu0 0.0
    %1124 = vmatpush2.msra.mxu0 0.0
    %1125 = vmatprep.mubr.f32.mxu0 0.0
    %1126 = vmatmul.mubr.f32.gmra.mxu0 %v989
    %v1127 = vpop.f32.mrf.mxu0
    %v1128 = vadd.f32 %v469, %v1127
    %v1129 = vpop.f32.mrf.mxu0
    %v1130 = vadd.f32 %v473, %v1129
    %1131 = vdwg.mxu0
    %1132 = vmatprep.subr.mxu0 %v325
    %1133 = vmatpush1.msra.mxu0 %v324
    %1134 = vmatprep.subr.mxu0 %v321
    %1135 = vmatpush1.msra.mxu0 %v320
    %1136 = vmatprep.subr.mxu0 %v317
    %1137 = vmatpush1.msra.mxu0 %v316
    %1138 = vmatprep.subr.mxu0 %v313
    %1139 = vmatpush1.msra.mxu0 %v312
    %1140 = vmatprep.subr.mxu0 %v309
    %1141 = vmatpush1.msra.mxu0 %v308
    %1142 = vmatprep.subr.mxu0 %v305
    %1143 = vmatpush1.msra.mxu0 %v304
    %1144 = vmatprep.subr.mxu0 %v301
    %1145 = vmatpush1.msra.mxu0 %v300
    %1146 = vmatprep.subr.mxu0 %v297
    %1147 = vmatpush1.msra.mxu0 %v296
    %1148 = vmatprep.subr.mxu0 %v293
    %1149 = vmatpush1.msra.mxu0 %v292
    %1150 = vmatprep.subr.mxu0 %v289
    %1151 = vmatpush1.msra.mxu0 %v288
    %1152 = vmatprep.subr.mxu0 %v285
    %1153 = vmatpush1.msra.mxu0 %v284
    %1154 = vmatprep.subr.mxu0 %v281
    %1155 = vmatpush1.msra.mxu0 %v280
    %1156 = vmatprep.subr.mxu0 %v277
    %1157 = vmatpush1.msra.mxu0 %v276
    %1158 = vmatprep.subr.mxu0 %v273
    %1159 = vmatpush1.msra.mxu0 %v272
    %1160 = vmatprep.subr.mxu0 %v269
    %1161 = vmatpush1.msra.mxu0 %v268
    %1162 = vmatprep.subr.mxu0 %v265
    %1163 = vmatpush1.msra.mxu0 %v264
    %1164 = vmatprep.subr.mxu0 0.0
    %1165 = vmatpush2.msra.mxu0 0.0
    %1166 = vmatprep.subr.mxu0 0.0
    %1167 = vmatpush2.msra.mxu0 0.0
    %1168 = vmatprep.subr.mxu0 0.0
    %1169 = vmatpush2.msra.mxu0 0.0
    %1170 = vmatprep.subr.mxu0 0.0
    %1171 = vmatpush2.msra.mxu0 0.0
    %1172 = vmatprep.subr.mxu0 0.0
    %1173 = vmatpush2.msra.mxu0 0.0
    %1174 = vmatprep.subr.mxu0 0.0
    %1175 = vmatpush2.msra.mxu0 0.0
    %1176 = vmatprep.subr.mxu0 0.0
    %1177 = vmatpush2.msra.mxu0 0.0
    %1178 = vmatprep.subr.mxu0 0.0
    %1179 = vmatpush2.msra.mxu0 0.0
    %1180 = vmatprep.subr.mxu0 0.0
    %1181 = vmatpush2.msra.mxu0 0.0
    %1182 = vmatprep.subr.mxu0 0.0
    %1183 = vmatpush2.msra.mxu0 0.0
    %1184 = vmatprep.subr.mxu0 0.0
    %1185 = vmatpush2.msra.mxu0 0.0
    %1186 = vmatprep.subr.mxu0 0.0
    %1187 = vmatpush2.msra.mxu0 0.0
    %1188 = vmatprep.subr.mxu0 0.0
    %1189 = vmatpush2.msra.mxu0 0.0
    %1190 = vmatprep.subr.mxu0 0.0
    %1191 = vmatpush2.msra.mxu0 0.0
    %1192 = vmatprep.subr.mxu0 0.0
    %1193 = vmatpush2.msra.mxu0 0.0
    %1194 = vmatprep.subr.mxu0 0.0
    %1195 = vmatpush2.msra.mxu0 0.0
    %1196 = vmatprep.mubr.f32.mxu0 0.0
    %1197 = vmatmul.mubr.f32.gmra.mxu0 0.0
    %v1198 = vpop.f32.mrf.mxu0
    %v1199 = vadd.f32 0.0, %v1198
    %v1200 = vpop.f32.mrf.mxu0
    %v1201 = vadd.f32 0.0, %v1200
    %1202 = vdwg.mxu0
    %1203 = vmatprep.subr.mxu0 %v327
    %1204 = vmatpush1.msra.mxu0 %v326
    %1205 = vmatprep.subr.mxu0 %v323
    %1206 = vmatpush1.msra.mxu0 %v322
    %1207 = vmatprep.subr.mxu0 %v319
    %1208 = vmatpush1.msra.mxu0 %v318
    %1209 = vmatprep.subr.mxu0 %v315
    %1210 = vmatpush1.msra.mxu0 %v314
    %1211 = vmatprep.subr.mxu0 %v311
    %1212 = vmatpush1.msra.mxu0 %v310
    %1213 = vmatprep.subr.mxu0 %v307
    %1214 = vmatpush1.msra.mxu0 %v306
    %1215 = vmatprep.subr.mxu0 %v303
    %1216 = vmatpush1.msra.mxu0 %v302
    %1217 = vmatprep.subr.mxu0 %v299
    %1218 = vmatpush1.msra.mxu0 %v298
    %1219 = vmatprep.subr.mxu0 %v295
    %1220 = vmatpush1.msra.mxu0 %v294
    %1221 = vmatprep.subr.mxu0 %v291
    %1222 = vmatpush1.msra.mxu0 %v290
    %1223 = vmatprep.subr.mxu0 %v287
    %1224 = vmatpush1.msra.mxu0 %v286
    %1225 = vmatprep.subr.mxu0 %v283
    %1226 = vmatpush1.msra.mxu0 %v282
    %1227 = vmatprep.subr.mxu0 %v279
    %1228 = vmatpush1.msra.mxu0 %v278
    %1229 = vmatprep.subr.mxu0 %v275
    %1230 = vmatpush1.msra.mxu0 %v274
    %1231 = vmatprep.subr.mxu0 %v271
    %1232 = vmatpush1.msra.mxu0 %v270
    %1233 = vmatprep.subr.mxu0 %v267
    %1234 = vmatpush1.msra.mxu0 %v266
    %1235 = vmatprep.subr.mxu0 0.0
    %1236 = vmatpush2.msra.mxu0 0.0
    %1237 = vmatprep.subr.mxu0 0.0
    %1238 = vmatpush2.msra.mxu0 0.0
    %1239 = vmatprep.subr.mxu0 0.0
    %1240 = vmatpush2.msra.mxu0 0.0
    %1241 = vmatprep.subr.mxu0 0.0
    %1242 = vmatpush2.msra.mxu0 0.0
    %1243 = vmatprep.subr.mxu0 0.0
    %1244 = vmatpush2.msra.mxu0 0.0
    %1245 = vmatprep.subr.mxu0 0.0
    %1246 = vmatpush2.msra.mxu0 0.0
    %1247 = vmatprep.subr.mxu0 0.0
    %1248 = vmatpush2.msra.mxu0 0.0
    %1249 = vmatprep.subr.mxu0 0.0
    %1250 = vmatpush2.msra.mxu0 0.0
    %1251 = vmatprep.subr.mxu0 0.0
    %1252 = vmatpush2.msra.mxu0 0.0
    %1253 = vmatprep.subr.mxu0 0.0
    %1254 = vmatpush2.msra.mxu0 0.0
    %1255 = vmatprep.subr.mxu0 0.0
    %1256 = vmatpush2.msra.mxu0 0.0
    %1257 = vmatprep.subr.mxu0 0.0
    %1258 = vmatpush2.msra.mxu0 0.0
    %1259 = vmatprep.subr.mxu0 0.0
    %1260 = vmatpush2.msra.mxu0 0.0
    %1261 = vmatprep.subr.mxu0 0.0
    %1262 = vmatpush2.msra.mxu0 0.0
    %1263 = vmatprep.subr.mxu0 0.0
    %1264 = vmatpush2.msra.mxu0 0.0
    %1265 = vmatprep.subr.mxu0 0.0
    %1266 = vmatpush2.msra.mxu0 0.0
    %1267 = vmatprep.mubr.f32.mxu0 0.0
    %1268 = vmatmul.mubr.f32.gmra.mxu0 0.0
    %v1269 = vpop.f32.mrf.mxu0
    %v1270 = vadd.f32 0.0, %v1269
    %v1271 = vpop.f32.mrf.mxu0
    %v1272 = vadd.f32 0.0, %v1271
    %1273 = vdwg.mxu0
    %v1274 = vadd.f32 %v1057, %v1199
    %v1275 = vadd.f32 %v1059, %v1201
    %v1276 = vadd.f32 %v1128, %v1270
    %v1277 = vadd.f32 %v1130, %v1272
    %v1278 = vxor.u32 %v1274, 2147483648
    %v1279 = vxor.u32 %v1275, 2147483648
    %v1280 = vxor.u32 %v1276, 2147483648
    %v1281 = vmul.f32 %v1278, 1.442695
    %v1282 = vpow.pop %v1281
    %v1283 = vmul.f32 %v1279, 1.442695
    %v1284 = vpow.pop %v1283
    %v1285 = vmul.f32 %v1280, 1.442695
    %v1286 = vpow.pop %v1285
    %v1287 = vadd.f32 %v1282, 1.0
    %v1288 = vadd.f32 %v1284, 1.0
    %v1289 = vadd.f32 %v1286, 1.0
    %v1290 = vrcp.pop %v1287
    %v1291 = vmul.f32 1.0, %v1290
    %v1292 = vrcp.pop %v1288
    %v1293 = vmul.f32 1.0, %v1292
    %v1294 = vrcp.pop %v1289
    %v1295 = vmul.f32 1.0, %v1294
    %v1296 = vtanh.pop %v1277
    %v1297 = vmul.f32 %v1293, 0.0
    %v1298 = vmul.f32 %v1291, %v1296
    %v1299 = vadd.f32 %v1297, %v1298
    %v1300 = vtanh.pop %v1299
    %v1301 = vmul.f32 %v1295, %v1300
    %1302 = vmatprep.subr.mxu0 %v197
    %1303 = vmatpush1.msra.mxu0 %v196
    %1304 = vmatprep.subr.mxu0 %v193
    %1305 = vmatpush1.msra.mxu0 %v192
    %1306 = vmatprep.subr.mxu0 %v189
    %1307 = vmatpush1.msra.mxu0 %v188
    %1308 = vmatprep.subr.mxu0 %v185
    %1309 = vmatpush1.msra.mxu0 %v184
    %1310 = vmatprep.subr.mxu0 %v181
    %1311 = vmatpush1.msra.mxu0 %v180
    %1312 = vmatprep.subr.mxu0 %v177
    %1313 = vmatpush1.msra.mxu0 %v176
    %1314 = vmatprep.subr.mxu0 %v173
    %1315 = vmatpush1.msra.mxu0 %v172
    %1316 = vmatprep.subr.mxu0 %v169
    %1317 = vmatpush1.msra.mxu0 %v168
    %1318 = vmatprep.subr.mxu0 %v165
    %1319 = vmatpush1.msra.mxu0 %v164
    %1320 = vmatprep.subr.mxu0 %v161
    %1321 = vmatpush1.msra.mxu0 %v160
    %1322 = vmatprep.subr.mxu0 %v157
    %1323 = vmatpush1.msra.mxu0 %v156
    %1324 = vmatprep.subr.mxu0 %v153
    %1325 = vmatpush1.msra.mxu0 %v152
    %1326 = vmatprep.subr.mxu0 %v149
    %1327 = vmatpush1.msra.mxu0 %v148
    %1328 = vmatprep.subr.mxu0 %v145
    %1329 = vmatpush1.msra.mxu0 %v144
    %1330 = vmatprep.subr.mxu0 %v141
    %1331 = vmatpush1.msra.mxu0 %v140
    %1332 = vmatprep.subr.mxu0 %v137
    %1333 = vmatpush1.msra.mxu0 %v136
    %1334 = vmatprep.subr.mxu0 0.0
    %1335 = vmatpush2.msra.mxu0 0.0
    %1336 = vmatprep.subr.mxu0 0.0
    %1337 = vmatpush2.msra.mxu0 0.0
    %1338 = vmatprep.subr.mxu0 0.0
    %1339 = vmatpush2.msra.mxu0 0.0
    %1340 = vmatprep.subr.mxu0 0.0
    %1341 = vmatpush2.msra.mxu0 0.0
    %1342 = vmatprep.subr.mxu0 0.0
    %1343 = vmatpush2.msra.mxu0 0.0
    %1344 = vmatprep.subr.mxu0 0.0
    %1345 = vmatpush2.msra.mxu0 0.0
    %1346 = vmatprep.subr.mxu0 0.0
    %1347 = vmatpush2.msra.mxu0 0.0
    %1348 = vmatprep.subr.mxu0 0.0
    %1349 = vmatpush2.msra.mxu0 0.0
    %1350 = vmatprep.subr.mxu0 0.0
    %1351 = vmatpush2.msra.mxu0 0.0
    %1352 = vmatprep.subr.mxu0 0.0
    %1353 = vmatpush2.msra.mxu0 0.0
    %1354 = vmatprep.subr.mxu0 0.0
    %1355 = vmatpush2.msra.mxu0 0.0
    %1356 = vmatprep.subr.mxu0 0.0
    %1357 = vmatpush2.msra.mxu0 0.0
    %1358 = vmatprep.subr.mxu0 0.0
    %1359 = vmatpush2.msra.mxu0 0.0
    %1360 = vmatprep.subr.mxu0 0.0
    %1361 = vmatpush2.msra.mxu0 0.0
    %1362 = vmatprep.subr.mxu0 0.0
    %1363 = vmatpush2.msra.mxu0 0.0
    %1364 = vmatprep.subr.mxu0 0.0
    %1365 = vmatpush2.msra.mxu0 0.0
    %1366 = vmatprep.mubr.f32.mxu0 0.0
    %1367 = vmatmul.mubr.f32.gmra.mxu0 %v989
    %v1368 = vpop.f32.mrf.mxu0
    %v1369 = vadd.f32 0.0, %v1368
    %v1370 = vpop.f32.mrf.mxu0
    %v1371 = vadd.f32 0.0, %v1370
    %1372 = vdwg.mxu0
    %1373 = vmatprep.subr.mxu0 %v199
    %1374 = vmatpush1.msra.mxu0 %v198
    %1375 = vmatprep.subr.mxu0 %v195
    %1376 = vmatpush1.msra.mxu0 %v194
    %1377 = vmatprep.subr.mxu0 %v191
    %1378 = vmatpush1.msra.mxu0 %v190
    %1379 = vmatprep.subr.mxu0 %v187
    %1380 = vmatpush1.msra.mxu0 %v186
    %1381 = vmatprep.subr.mxu0 %v183
    %1382 = vmatpush1.msra.mxu0 %v182
    %1383 = vmatprep.subr.mxu0 %v179
    %1384 = vmatpush1.msra.mxu0 %v178
    %1385 = vmatprep.subr.mxu0 %v175
    %1386 = vmatpush1.msra.mxu0 %v174
    %1387 = vmatprep.subr.mxu0 %v171
    %1388 = vmatpush1.msra.mxu0 %v170
    %1389 = vmatprep.subr.mxu0 %v167
    %1390 = vmatpush1.msra.mxu0 %v166
    %1391 = vmatprep.subr.mxu0 %v163
    %1392 = vmatpush1.msra.mxu0 %v162
    %1393 = vmatprep.subr.mxu0 %v159
    %1394 = vmatpush1.msra.mxu0 %v158
    %1395 = vmatprep.subr.mxu0 %v155
    %1396 = vmatpush1.msra.mxu0 %v154
    %1397 = vmatprep.subr.mxu0 %v151
    %1398 = vmatpush1.msra.mxu0 %v150
    %1399 = vmatprep.subr.mxu0 %v147
    %1400 = vmatpush1.msra.mxu0 %v146
    %1401 = vmatprep.subr.mxu0 %v143
    %1402 = vmatpush1.msra.mxu0 %v142
    %1403 = vmatprep.subr.mxu0 %v139
    %1404 = vmatpush1.msra.mxu0 %v138
    %1405 = vmatprep.subr.mxu0 0.0
    %1406 = vmatpush2.msra.mxu0 0.0
    %1407 = vmatprep.subr.mxu0 0.0
    %1408 = vmatpush2.msra.mxu0 0.0
    %1409 = vmatprep.subr.mxu0 0.0
    %1410 = vmatpush2.msra.mxu0 0.0
    %1411 = vmatprep.subr.mxu0 0.0
    %1412 = vmatpush2.msra.mxu0 0.0
    %1413 = vmatprep.subr.mxu0 0.0
    %1414 = vmatpush2.msra.mxu0 0.0
    %1415 = vmatprep.subr.mxu0 0.0
    %1416 = vmatpush2.msra.mxu0 0.0
    %1417 = vmatprep.subr.mxu0 0.0
    %1418 = vmatpush2.msra.mxu0 0.0
    %1419 = vmatprep.subr.mxu0 0.0
    %1420 = vmatpush2.msra.mxu0 0.0
    %1421 = vmatprep.subr.mxu0 0.0
    %1422 = vmatpush2.msra.mxu0 0.0
    %1423 = vmatprep.subr.mxu0 0.0
    %1424 = vmatpush2.msra.mxu0 0.0
    %1425 = vmatprep.subr.mxu0 0.0
    %1426 = vmatpush2.msra.mxu0 0.0
    %1427 = vmatprep.subr.mxu0 0.0
    %1428 = vmatpush2.msra.mxu0 0.0
    %1429 = vmatprep.subr.mxu0 0.0
    %1430 = vmatpush2.msra.mxu0 0.0
    %1431 = vmatprep.subr.mxu0 0.0
    %1432 = vmatpush2.msra.mxu0 0.0
    %1433 = vmatprep.subr.mxu0 0.0
    %1434 = vmatpush2.msra.mxu0 0.0
    %1435 = vmatprep.subr.mxu0 0.0
    %1436 = vmatpush2.msra.mxu0 0.0
    %1437 = vmatprep.mubr.f32.mxu0 0.0
    %1438 = vmatmul.mubr.f32.gmra.mxu0 %v989
    %v1439 = vpop.f32.mrf.mxu0
    %v1440 = vadd.f32 0.0, %v1439
    %v1441 = vpop.f32.mrf.mxu0
    %v1442 = vadd.f32 0.0, %v1441
    %1443 = vdwg.mxu0
    %v1444 = vadd.f32 %v667, %v1369
    %v1445 = vadd.f32 %v669, %v1371
    %v1446 = vadd.f32 %v780, %v1440
    %v1447 = vadd.f32 %v782, %v1442
    %v1448 = vxor.u32 %v1444, 2147483648
    %v1449 = vxor.u32 %v1445, 2147483648
    %v1450 = vxor.u32 %v1446, 2147483648
    %v1451 = vmul.f32 %v1448, 1.442695
    %v1452 = vpow.pop %v1451
    %v1453 = vmul.f32 %v1449, 1.442695
    %v1454 = vpow.pop %v1453
    %v1455 = vmul.f32 %v1450, 1.442695
    %v1456 = vpow.pop %v1455
    %v1457 = vadd.f32 %v1452, 1.0
    %v1458 = vadd.f32 %v1454, 1.0
    %v1459 = vadd.f32 %v1456, 1.0
    %v1460 = vrcp.pop %v1457
    %v1461 = vmul.f32 1.0, %v1460
    %v1462 = vrcp.pop %v1458
    %v1463 = vmul.f32 1.0, %v1462
    %v1464 = vrcp.pop %v1459
    %v1465 = vmul.f32 1.0, %v1464
    %v1466 = vtanh.pop %v1447
    %v1467 = vmul.f32 %v1463, %v987
    %v1468 = vmul.f32 %v1461, %v1466
    %v1469 = vadd.f32 %v1467, %v1468
    %v1470 = vtanh.pop %v1469
    %v1471 = vmul.f32 %v1465, %v1470
    %1472 = vmatprep.subr.mxu0 %v389
    %1473 = vmatpush1.msra.mxu0 %v388
    %1474 = vmatprep.subr.mxu0 %v385
    %1475 = vmatpush1.msra.mxu0 %v384
    %1476 = vmatprep.subr.mxu0 %v381
    %1477 = vmatpush1.msra.mxu0 %v380
    %1478 = vmatprep.subr.mxu0 %v377
    %1479 = vmatpush1.msra.mxu0 %v376
    %1480 = vmatprep.subr.mxu0 %v373
    %1481 = vmatpush1.msra.mxu0 %v372
    %1482 = vmatprep.subr.mxu0 %v369
    %1483 = vmatpush1.msra.mxu0 %v368
    %1484 = vmatprep.subr.mxu0 %v365
    %1485 = vmatpush1.msra.mxu0 %v364
    %1486 = vmatprep.subr.mxu0 %v361
    %1487 = vmatpush1.msra.mxu0 %v360
    %1488 = vmatprep.subr.mxu0 %v357
    %1489 = vmatpush1.msra.mxu0 %v356
    %1490 = vmatprep.subr.mxu0 %v353
    %1491 = vmatpush1.msra.mxu0 %v352
    %1492 = vmatprep.subr.mxu0 %v349
    %1493 = vmatpush1.msra.mxu0 %v348
    %1494 = vmatprep.subr.mxu0 %v345
    %1495 = vmatpush1.msra.mxu0 %v344
    %1496 = vmatprep.subr.mxu0 %v341
    %1497 = vmatpush1.msra.mxu0 %v340
    %1498 = vmatprep.subr.mxu0 %v337
    %1499 = vmatpush1.msra.mxu0 %v336
    %1500 = vmatprep.subr.mxu0 %v333
    %1501 = vmatpush1.msra.mxu0 %v332
    %1502 = vmatprep.subr.mxu0 %v329
    %1503 = vmatpush1.msra.mxu0 %v328
    %1504 = vmatprep.subr.mxu0 0.0
    %1505 = vmatpush2.msra.mxu0 0.0
    %1506 = vmatprep.subr.mxu0 0.0
    %1507 = vmatpush2.msra.mxu0 0.0
    %1508 = vmatprep.subr.mxu0 0.0
    %1509 = vmatpush2.msra.mxu0 0.0
    %1510 = vmatprep.subr.mxu0 0.0
    %1511 = vmatpush2.msra.mxu0 0.0
    %1512 = vmatprep.subr.mxu0 0.0
    %1513 = vmatpush2.msra.mxu0 0.0
    %1514 = vmatprep.subr.mxu0 0.0
    %1515 = vmatpush2.msra.mxu0 0.0
    %1516 = vmatprep.subr.mxu0 0.0
    %1517 = vmatpush2.msra.mxu0 0.0
    %1518 = vmatprep.subr.mxu0 0.0
    %1519 = vmatpush2.msra.mxu0 0.0
    %1520 = vmatprep.subr.mxu0 0.0
    %1521 = vmatpush2.msra.mxu0 0.0
    %1522 = vmatprep.subr.mxu0 0.0
    %1523 = vmatpush2.msra.mxu0 0.0
    %1524 = vmatprep.subr.mxu0 0.0
    %1525 = vmatpush2.msra.mxu0 0.0
    %1526 = vmatprep.subr.mxu0 0.0
    %1527 = vmatpush2.msra.mxu0 0.0
    %1528 = vmatprep.subr.mxu0 0.0
    %1529 = vmatpush2.msra.mxu0 0.0
    %1530 = vmatprep.subr.mxu0 0.0
    %1531 = vmatpush2.msra.mxu0 0.0
    %1532 = vmatprep.subr.mxu0 0.0
    %1533 = vmatpush2.msra.mxu0 0.0
    %1534 = vmatprep.subr.mxu0 0.0
    %1535 = vmatpush2.msra.mxu0 0.0
    %1536 = vmatprep.mubr.f32.mxu0 0.0
    %1537 = vmatmul.mubr.f32.gmra.mxu0 %v1301
    %v1538 = vpop.f32.mrf.mxu0
    %v1539 = vadd.f32 %v483, %v1538
    %v1540 = vpop.f32.mrf.mxu0
    %v1541 = vadd.f32 %v487, %v1540
    %1542 = vdwg.mxu0
    %1543 = vmatprep.subr.mxu0 %v391
    %1544 = vmatpush1.msra.mxu0 %v390
    %1545 = vmatprep.subr.mxu0 %v387
    %1546 = vmatpush1.msra.mxu0 %v386
    %1547 = vmatprep.subr.mxu0 %v383
    %1548 = vmatpush1.msra.mxu0 %v382
    %1549 = vmatprep.subr.mxu0 %v379
    %1550 = vmatpush1.msra.mxu0 %v378
    %1551 = vmatprep.subr.mxu0 %v375
    %1552 = vmatpush1.msra.mxu0 %v374
    %1553 = vmatprep.subr.mxu0 %v371
    %1554 = vmatpush1.msra.mxu0 %v370
    %1555 = vmatprep.subr.mxu0 %v367
    %1556 = vmatpush1.msra.mxu0 %v366
    %1557 = vmatprep.subr.mxu0 %v363
    %1558 = vmatpush1.msra.mxu0 %v362
    %1559 = vmatprep.subr.mxu0 %v359
    %1560 = vmatpush1.msra.mxu0 %v358
    %1561 = vmatprep.subr.mxu0 %v355
    %1562 = vmatpush1.msra.mxu0 %v354
    %1563 = vmatprep.subr.mxu0 %v351
    %1564 = vmatpush1.msra.mxu0 %v350
    %1565 = vmatprep.subr.mxu0 %v347
    %1566 = vmatpush1.msra.mxu0 %v346
    %1567 = vmatprep.subr.mxu0 %v343
    %1568 = vmatpush1.msra.mxu0 %v342
    %1569 = vmatprep.subr.mxu0 %v339
    %1570 = vmatpush1.msra.mxu0 %v338
    %1571 = vmatprep.subr.mxu0 %v335
    %1572 = vmatpush1.msra.mxu0 %v334
    %1573 = vmatprep.subr.mxu0 %v331
    %1574 = vmatpush1.msra.mxu0 %v330
    %1575 = vmatprep.subr.mxu0 0.0
    %1576 = vmatpush2.msra.mxu0 0.0
    %1577 = vmatprep.subr.mxu0 0.0
    %1578 = vmatpush2.msra.mxu0 0.0
    %1579 = vmatprep.subr.mxu0 0.0
    %1580 = vmatpush2.msra.mxu0 0.0
    %1581 = vmatprep.subr.mxu0 0.0
    %1582 = vmatpush2.msra.mxu0 0.0
    %1583 = vmatprep.subr.mxu0 0.0
    %1584 = vmatpush2.msra.mxu0 0.0
    %1585 = vmatprep.subr.mxu0 0.0
    %1586 = vmatpush2.msra.mxu0 0.0
    %1587 = vmatprep.subr.mxu0 0.0
    %1588 = vmatpush2.msra.mxu0 0.0
    %1589 = vmatprep.subr.mxu0 0.0
    %1590 = vmatpush2.msra.mxu0 0.0
    %1591 = vmatprep.subr.mxu0 0.0
    %1592 = vmatpush2.msra.mxu0 0.0
    %1593 = vmatprep.subr.mxu0 0.0
    %1594 = vmatpush2.msra.mxu0 0.0
    %1595 = vmatprep.subr.mxu0 0.0
    %1596 = vmatpush2.msra.mxu0 0.0
    %1597 = vmatprep.subr.mxu0 0.0
    %1598 = vmatpush2.msra.mxu0 0.0
    %1599 = vmatprep.subr.mxu0 0.0
    %1600 = vmatpush2.msra.mxu0 0.0
    %1601 = vmatprep.subr.mxu0 0.0
    %1602 = vmatpush2.msra.mxu0 0.0
    %1603 = vmatprep.subr.mxu0 0.0
    %1604 = vmatpush2.msra.mxu0 0.0
    %1605 = vmatprep.subr.mxu0 0.0
    %1606 = vmatpush2.msra.mxu0 0.0
    %1607 = vmatprep.mubr.f32.mxu0 0.0
    %1608 = vmatmul.mubr.f32.gmra.mxu0 %v1301
    %v1609 = vpop.f32.mrf.mxu0
    %v1610 = vadd.f32 %v491, %v1609
    %v1611 = vpop.f32.mrf.mxu0
    %v1612 = vadd.f32 %v495, %v1611
    %1613 = vdwg.mxu0
    %1614 = vmatprep.subr.mxu0 %v453
    %1615 = vmatpush1.msra.mxu0 %v452
    %1616 = vmatprep.subr.mxu0 %v449
    %1617 = vmatpush1.msra.mxu0 %v448
    %1618 = vmatprep.subr.mxu0 %v445
    %1619 = vmatpush1.msra.mxu0 %v444
    %1620 = vmatprep.subr.mxu0 %v441
    %1621 = vmatpush1.msra.mxu0 %v440
    %1622 = vmatprep.subr.mxu0 %v437
    %1623 = vmatpush1.msra.mxu0 %v436
    %1624 = vmatprep.subr.mxu0 %v433
    %1625 = vmatpush1.msra.mxu0 %v432
    %1626 = vmatprep.subr.mxu0 %v429
    %1627 = vmatpush1.msra.mxu0 %v428
    %1628 = vmatprep.subr.mxu0 %v425
    %1629 = vmatpush1.msra.mxu0 %v424
    %1630 = vmatprep.subr.mxu0 %v421
    %1631 = vmatpush1.msra.mxu0 %v420
    %1632 = vmatprep.subr.mxu0 %v417
    %1633 = vmatpush1.msra.mxu0 %v416
    %1634 = vmatprep.subr.mxu0 %v413
    %1635 = vmatpush1.msra.mxu0 %v412
    %1636 = vmatprep.subr.mxu0 %v409
    %1637 = vmatpush1.msra.mxu0 %v408
    %1638 = vmatprep.subr.mxu0 %v405
    %1639 = vmatpush1.msra.mxu0 %v404
    %1640 = vmatprep.subr.mxu0 %v401
    %1641 = vmatpush1.msra.mxu0 %v400
    %1642 = vmatprep.subr.mxu0 %v397
    %1643 = vmatpush1.msra.mxu0 %v396
    %1644 = vmatprep.subr.mxu0 %v393
    %1645 = vmatpush1.msra.mxu0 %v392
    %1646 = vmatprep.subr.mxu0 0.0
    %1647 = vmatpush2.msra.mxu0 0.0
    %1648 = vmatprep.subr.mxu0 0.0
    %1649 = vmatpush2.msra.mxu0 0.0
    %1650 = vmatprep.subr.mxu0 0.0
    %1651 = vmatpush2.msra.mxu0 0.0
    %1652 = vmatprep.subr.mxu0 0.0
    %1653 = vmatpush2.msra.mxu0 0.0
    %1654 = vmatprep.subr.mxu0 0.0
    %1655 = vmatpush2.msra.mxu0 0.0
    %1656 = vmatprep.subr.mxu0 0.0
    %1657 = vmatpush2.msra.mxu0 0.0
    %1658 = vmatprep.subr.mxu0 0.0
    %1659 = vmatpush2.msra.mxu0 0.0
    %1660 = vmatprep.subr.mxu0 0.0
    %1661 = vmatpush2.msra.mxu0 0.0
    %1662 = vmatprep.subr.mxu0 0.0
    %1663 = vmatpush2.msra.mxu0 0.0
    %1664 = vmatprep.subr.mxu0 0.0
    %1665 = vmatpush2.msra.mxu0 0.0
    %1666 = vmatprep.subr.mxu0 0.0
    %1667 = vmatpush2.msra.mxu0 0.0
    %1668 = vmatprep.subr.mxu0 0.0
    %1669 = vmatpush2.msra.mxu0 0.0
    %1670 = vmatprep.subr.mxu0 0.0
    %1671 = vmatpush2.msra.mxu0 0.0
    %1672 = vmatprep.subr.mxu0 0.0
    %1673 = vmatpush2.msra.mxu0 0.0
    %1674 = vmatprep.subr.mxu0 0.0
    %1675 = vmatpush2.msra.mxu0 0.0
    %1676 = vmatprep.subr.mxu0 0.0
    %1677 = vmatpush2.msra.mxu0 0.0
    %1678 = vmatprep.mubr.f32.mxu0 0.0
    %1679 = vmatmul.mubr.f32.gmra.mxu0 0.0
    %v1680 = vpop.f32.mrf.mxu0
    %v1681 = vadd.f32 0.0, %v1680
    %v1682 = vpop.f32.mrf.mxu0
    %v1683 = vadd.f32 0.0, %v1682
    %1684 = vdwg.mxu0
    %1685 = vmatprep.subr.mxu0 %v455
    %1686 = vmatpush1.msra.mxu0 %v454
    %1687 = vmatprep.subr.mxu0 %v451
    %1688 = vmatpush1.msra.mxu0 %v450
    %1689 = vmatprep.subr.mxu0 %v447
    %1690 = vmatpush1.msra.mxu0 %v446
    %1691 = vmatprep.subr.mxu0 %v443
    %1692 = vmatpush1.msra.mxu0 %v442
    %1693 = vmatprep.subr.mxu0 %v439
    %1694 = vmatpush1.msra.mxu0 %v438
    %1695 = vmatprep.subr.mxu0 %v435
    %1696 = vmatpush1.msra.mxu0 %v434
    %1697 = vmatprep.subr.mxu0 %v431
    %1698 = vmatpush1.msra.mxu0 %v430
    %1699 = vmatprep.subr.mxu0 %v427
    %1700 = vmatpush1.msra.mxu0 %v426
    %1701 = vmatprep.subr.mxu0 %v423
    %1702 = vmatpush1.msra.mxu0 %v422
    %1703 = vmatprep.subr.mxu0 %v419
    %1704 = vmatpush1.msra.mxu0 %v418
    %1705 = vmatprep.subr.mxu0 %v415
    %1706 = vmatpush1.msra.mxu0 %v414
    %1707 = vmatprep.subr.mxu0 %v411
    %1708 = vmatpush1.msra.mxu0 %v410
    %1709 = vmatprep.subr.mxu0 %v407
    %1710 = vmatpush1.msra.mxu0 %v406
    %1711 = vmatprep.subr.mxu0 %v403
    %1712 = vmatpush1.msra.mxu0 %v402
    %1713 = vmatprep.subr.mxu0 %v399
    %1714 = vmatpush1.msra.mxu0 %v398
    %1715 = vmatprep.subr.mxu0 %v395
    %1716 = vmatpush1.msra.mxu0 %v394
    %1717 = vmatprep.subr.mxu0 0.0
    %1718 = vmatpush2.msra.mxu0 0.0
    %1719 = vmatprep.subr.mxu0 0.0
    %1720 = vmatpush2.msra.mxu0 0.0
    %1721 = vmatprep.subr.mxu0 0.0
    %1722 = vmatpush2.msra.mxu0 0.0
    %1723 = vmatprep.subr.mxu0 0.0
    %1724 = vmatpush2.msra.mxu0 0.0
    %1725 = vmatprep.subr.mxu0 0.0
    %1726 = vmatpush2.msra.mxu0 0.0
    %1727 = vmatprep.subr.mxu0 0.0
    %1728 = vmatpush2.msra.mxu0 0.0
    %1729 = vmatprep.subr.mxu0 0.0
    %1730 = vmatpush2.msra.mxu0 0.0
    %1731 = vmatprep.subr.mxu0 0.0
    %1732 = vmatpush2.msra.mxu0 0.0
    %1733 = vmatprep.subr.mxu0 0.0
    %1734 = vmatpush2.msra.mxu0 0.0
    %1735 = vmatprep.subr.mxu0 0.0
    %1736 = vmatpush2.msra.mxu0 0.0
    %1737 = vmatprep.subr.mxu0 0.0
    %1738 = vmatpush2.msra.mxu0 0.0
    %1739 = vmatprep.subr.mxu0 0.0
    %1740 = vmatpush2.msra.mxu0 0.0
    %1741 = vmatprep.subr.mxu0 0.0
    %1742 = vmatpush2.msra.mxu0 0.0
    %1743 = vmatprep.subr.mxu0 0.0
    %1744 = vmatpush2.msra.mxu0 0.0
    %1745 = vmatprep.subr.mxu0 0.0
    %1746 = vmatpush2.msra.mxu0 0.0
    %1747 = vmatprep.subr.mxu0 0.0
    %1748 = vmatpush2.msra.mxu0 0.0
    %1749 = vmatprep.mubr.f32.mxu0 0.0
    %1750 = vmatmul.mubr.f32.gmra.mxu0 0.0
    %v1751 = vpop.f32.mrf.mxu0
    %v1752 = vadd.f32 0.0, %v1751
    %v1753 = vpop.f32.mrf.mxu0
    %v1754 = vadd.f32 0.0, %v1753
    %1755 = vdwg.mxu0
    %v1756 = vadd.f32 %v1539, %v1681
    %v1757 = vadd.f32 %v1541, %v1683
    %v1758 = vadd.f32 %v1610, %v1752
    %v1759 = vadd.f32 %v1612, %v1754
    %v1760 = vxor.u32 %v1756, 2147483648
    %v1761 = vxor.u32 %v1757, 2147483648
    %v1762 = vxor.u32 %v1758, 2147483648
    %v1763 = vmul.f32 %v1760, 1.442695
    %v1764 = vpow.pop %v1763
    %v1765 = vmul.f32 %v1761, 1.442695
    %v1766 = vpow.pop %v1765
    %v1767 = vmul.f32 %v1762, 1.442695
    %v1768 = vpow.pop %v1767
    %v1769 = vadd.f32 %v1764, 1.0
    %v1770 = vadd.f32 %v1766, 1.0
    %v1771 = vadd.f32 %v1768, 1.0
    %v1772 = vrcp.pop %v1769
    %v1773 = vmul.f32 1.0, %v1772
    %v1774 = vrcp.pop %v1770
    %v1775 = vmul.f32 1.0, %v1774
    %v1776 = vrcp.pop %v1771
    %v1777 = vmul.f32 1.0, %v1776
    %v1778 = vtanh.pop %v1759
    %v1779 = vmul.f32 %v1775, 0.0
    %v1780 = vmul.f32 %v1773, %v1778
    %v1781 = vadd.f32 %v1779, %v1780
    %v1782 = vtanh.pop %v1781
    %v1783 = vmul.f32 %v1777, %v1782
    %1784 = vmatprep.subr.mxu0 %v261
    %1785 = vmatpush1.msra.mxu0 %v260
    %1786 = vmatprep.subr.mxu0 %v257
    %1787 = vmatpush1.msra.mxu0 %v256
    %1788 = vmatprep.subr.mxu0 %v253
    %1789 = vmatpush1.msra.mxu0 %v252
    %1790 = vmatprep.subr.mxu0 %v249
    %1791 = vmatpush1.msra.mxu0 %v248
    %1792 = vmatprep.subr.mxu0 %v245
    %1793 = vmatpush1.msra.mxu0 %v244
    %1794 = vmatprep.subr.mxu0 %v241
    %1795 = vmatpush1.msra.mxu0 %v240
    %1796 = vmatprep.subr.mxu0 %v237
    %1797 = vmatpush1.msra.mxu0 %v236
    %1798 = vmatprep.subr.mxu0 %v233
    %1799 = vmatpush1.msra.mxu0 %v232
    %1800 = vmatprep.subr.mxu0 %v229
    %1801 = vmatpush1.msra.mxu0 %v228
    %1802 = vmatprep.subr.mxu0 %v225
    %1803 = vmatpush1.msra.mxu0 %v224
    %1804 = vmatprep.subr.mxu0 %v221
    %1805 = vmatpush1.msra.mxu0 %v220
    %1806 = vmatprep.subr.mxu0 %v217
    %1807 = vmatpush1.msra.mxu0 %v216
    %1808 = vmatprep.subr.mxu0 %v213
    %1809 = vmatpush1.msra.mxu0 %v212
    %1810 = vmatprep.subr.mxu0 %v209
    %1811 = vmatpush1.msra.mxu0 %v208
    %1812 = vmatprep.subr.mxu0 %v205
    %1813 = vmatpush1.msra.mxu0 %v204
    %1814 = vmatprep.subr.mxu0 %v201
    %1815 = vmatpush1.msra.mxu0 %v200
    %1816 = vmatprep.subr.mxu0 0.0
    %1817 = vmatpush2.msra.mxu0 0.0
    %1818 = vmatprep.subr.mxu0 0.0
    %1819 = vmatpush2.msra.mxu0 0.0
    %1820 = vmatprep.subr.mxu0 0.0
    %1821 = vmatpush2.msra.mxu0 0.0
    %1822 = vmatprep.subr.mxu0 0.0
    %1823 = vmatpush2.msra.mxu0 0.0
    %1824 = vmatprep.subr.mxu0 0.0
    %1825 = vmatpush2.msra.mxu0 0.0
    %1826 = vmatprep.subr.mxu0 0.0
    %1827 = vmatpush2.msra.mxu0 0.0
    %1828 = vmatprep.subr.mxu0 0.0
    %1829 = vmatpush2.msra.mxu0 0.0
    %1830 = vmatprep.subr.mxu0 0.0
    %1831 = vmatpush2.msra.mxu0 0.0
    %1832 = vmatprep.subr.mxu0 0.0
    %1833 = vmatpush2.msra.mxu0 0.0
    %1834 = vmatprep.subr.mxu0 0.0
    %1835 = vmatpush2.msra.mxu0 0.0
    %1836 = vmatprep.subr.mxu0 0.0
    %1837 = vmatpush2.msra.mxu0 0.0
    %1838 = vmatprep.subr.mxu0 0.0
    %1839 = vmatpush2.msra.mxu0 0.0
    %1840 = vmatprep.subr.mxu0 0.0
    %1841 = vmatpush2.msra.mxu0 0.0
    %1842 = vmatprep.subr.mxu0 0.0
    %1843 = vmatpush2.msra.mxu0 0.0
    %1844 = vmatprep.subr.mxu0 0.0
    %1845 = vmatpush2.msra.mxu0 0.0
    %1846 = vmatprep.subr.mxu0 0.0
    %1847 = vmatpush2.msra.mxu0 0.0
    %1848 = vmatprep.mubr.f32.mxu0 0.0
    %1849 = vmatmul.mubr.f32.gmra.mxu0 %v1471
    %v1850 = vpop.f32.mrf.mxu0
    %v1851 = vadd.f32 %v461, %v1850
    %v1852 = vpop.f32.mrf.mxu0
    %v1853 = vadd.f32 %v465, %v1852
    %1854 = vdwg.mxu0
    %1855 = vmatprep.subr.mxu0 %v263
    %1856 = vmatpush1.msra.mxu0 %v262
    %1857 = vmatprep.subr.mxu0 %v259
    %1858 = vmatpush1.msra.mxu0 %v258
    %1859 = vmatprep.subr.mxu0 %v255
    %1860 = vmatpush1.msra.mxu0 %v254
    %1861 = vmatprep.subr.mxu0 %v251
    %1862 = vmatpush1.msra.mxu0 %v250
    %1863 = vmatprep.subr.mxu0 %v247
    %1864 = vmatpush1.msra.mxu0 %v246
    %1865 = vmatprep.subr.mxu0 %v243
    %1866 = vmatpush1.msra.mxu0 %v242
    %1867 = vmatprep.subr.mxu0 %v239
    %1868 = vmatpush1.msra.mxu0 %v238
    %1869 = vmatprep.subr.mxu0 %v235
    %1870 = vmatpush1.msra.mxu0 %v234
    %1871 = vmatprep.subr.mxu0 %v231
    %1872 = vmatpush1.msra.mxu0 %v230
    %1873 = vmatprep.subr.mxu0 %v227
    %1874 = vmatpush1.msra.mxu0 %v226
    %1875 = vmatprep.subr.mxu0 %v223
    %1876 = vmatpush1.msra.mxu0 %v222
    %1877 = vmatprep.subr.mxu0 %v219
    %1878 = vmatpush1.msra.mxu0 %v218
    %1879 = vmatprep.subr.mxu0 %v215
    %1880 = vmatpush1.msra.mxu0 %v214
    %1881 = vmatprep.subr.mxu0 %v211
    %1882 = vmatpush1.msra.mxu0 %v210
    %1883 = vmatprep.subr.mxu0 %v207
    %1884 = vmatpush1.msra.mxu0 %v206
    %1885 = vmatprep.subr.mxu0 %v203
    %1886 = vmatpush1.msra.mxu0 %v202
    %1887 = vmatprep.subr.mxu0 0.0
    %1888 = vmatpush2.msra.mxu0 0.0
    %1889 = vmatprep.subr.mxu0 0.0
    %1890 = vmatpush2.msra.mxu0 0.0
    %1891 = vmatprep.subr.mxu0 0.0
    %1892 = vmatpush2.msra.mxu0 0.0
    %1893 = vmatprep.subr.mxu0 0.0
    %1894 = vmatpush2.msra.mxu0 0.0
    %1895 = vmatprep.subr.mxu0 0.0
    %1896 = vmatpush2.msra.mxu0 0.0
    %1897 = vmatprep.subr.mxu0 0.0
    %1898 = vmatpush2.msra.mxu0 0.0
    %1899 = vmatprep.subr.mxu0 0.0
    %1900 = vmatpush2.msra.mxu0 0.0
    %1901 = vmatprep.subr.mxu0 0.0
    %1902 = vmatpush2.msra.mxu0 0.0
    %1903 = vmatprep.subr.mxu0 0.0
    %1904 = vmatpush2.msra.mxu0 0.0
    %1905 = vmatprep.subr.mxu0 0.0
    %1906 = vmatpush2.msra.mxu0 0.0
    %1907 = vmatprep.subr.mxu0 0.0
    %1908 = vmatpush2.msra.mxu0 0.0
    %1909 = vmatprep.subr.mxu0 0.0
    %1910 = vmatpush2.msra.mxu0 0.0
    %1911 = vmatprep.subr.mxu0 0.0
    %1912 = vmatpush2.msra.mxu0 0.0
    %1913 = vmatprep.subr.mxu0 0.0
    %1914 = vmatpush2.msra.mxu0 0.0
    %1915 = vmatprep.subr.mxu0 0.0
    %1916 = vmatpush2.msra.mxu0 0.0
    %1917 = vmatprep.subr.mxu0 0.0
    %1918 = vmatpush2.msra.mxu0 0.0
    %1919 = vmatprep.mubr.f32.mxu0 0.0
    %1920 = vmatmul.mubr.f32.gmra.mxu0 %v1471
    %v1921 = vpop.f32.mrf.mxu0
    %v1922 = vadd.f32 %v469, %v1921
    %v1923 = vpop.f32.mrf.mxu0
    %v1924 = vadd.f32 %v473, %v1923
    %1925 = vdwg.mxu0
    %1926 = vmatprep.subr.mxu0 %v325
    %1927 = vmatpush1.msra.mxu0 %v324
    %1928 = vmatprep.subr.mxu0 %v321
    %1929 = vmatpush1.msra.mxu0 %v320
    %1930 = vmatprep.subr.mxu0 %v317
    %1931 = vmatpush1.msra.mxu0 %v316
    %1932 = vmatprep.subr.mxu0 %v313
    %1933 = vmatpush1.msra.mxu0 %v312
    %1934 = vmatprep.subr.mxu0 %v309
    %1935 = vmatpush1.msra.mxu0 %v308
    %1936 = vmatprep.subr.mxu0 %v305
    %1937 = vmatpush1.msra.mxu0 %v304
    %1938 = vmatprep.subr.mxu0 %v301
    %1939 = vmatpush1.msra.mxu0 %v300
    %1940 = vmatprep.subr.mxu0 %v297
    %1941 = vmatpush1.msra.mxu0 %v296
    %1942 = vmatprep.subr.mxu0 %v293
    %1943 = vmatpush1.msra.mxu0 %v292
    %1944 = vmatprep.subr.mxu0 %v289
    %1945 = vmatpush1.msra.mxu0 %v288
    %1946 = vmatprep.subr.mxu0 %v285
    %1947 = vmatpush1.msra.mxu0 %v284
    %1948 = vmatprep.subr.mxu0 %v281
    %1949 = vmatpush1.msra.mxu0 %v280
    %1950 = vmatprep.subr.mxu0 %v277
    %1951 = vmatpush1.msra.mxu0 %v276
    %1952 = vmatprep.subr.mxu0 %v273
    %1953 = vmatpush1.msra.mxu0 %v272
    %1954 = vmatprep.subr.mxu0 %v269
    %1955 = vmatpush1.msra.mxu0 %v268
    %1956 = vmatprep.subr.mxu0 %v265
    %1957 = vmatpush1.msra.mxu0 %v264
    %1958 = vmatprep.subr.mxu0 0.0
    %1959 = vmatpush2.msra.mxu0 0.0
    %1960 = vmatprep.subr.mxu0 0.0
    %1961 = vmatpush2.msra.mxu0 0.0
    %1962 = vmatprep.subr.mxu0 0.0
    %1963 = vmatpush2.msra.mxu0 0.0
    %1964 = vmatprep.subr.mxu0 0.0
    %1965 = vmatpush2.msra.mxu0 0.0
    %1966 = vmatprep.subr.mxu0 0.0
    %1967 = vmatpush2.msra.mxu0 0.0
    %1968 = vmatprep.subr.mxu0 0.0
    %1969 = vmatpush2.msra.mxu0 0.0
    %1970 = vmatprep.subr.mxu0 0.0
    %1971 = vmatpush2.msra.mxu0 0.0
    %1972 = vmatprep.subr.mxu0 0.0
    %1973 = vmatpush2.msra.mxu0 0.0
    %1974 = vmatprep.subr.mxu0 0.0
    %1975 = vmatpush2.msra.mxu0 0.0
    %1976 = vmatprep.subr.mxu0 0.0
    %1977 = vmatpush2.msra.mxu0 0.0
    %1978 = vmatprep.subr.mxu0 0.0
    %1979 = vmatpush2.msra.mxu0 0.0
    %1980 = vmatprep.subr.mxu0 0.0
    %1981 = vmatpush2.msra.mxu0 0.0
    %1982 = vmatprep.subr.mxu0 0.0
    %1983 = vmatpush2.msra.mxu0 0.0
    %1984 = vmatprep.subr.mxu0 0.0
    %1985 = vmatpush2.msra.mxu0 0.0
    %1986 = vmatprep.subr.mxu0 0.0
    %1987 = vmatpush2.msra.mxu0 0.0
    %1988 = vmatprep.subr.mxu0 0.0
    %1989 = vmatpush2.msra.mxu0 0.0
    %1990 = vmatprep.mubr.f32.mxu0 0.0
    %1991 = vmatmul.mubr.f32.gmra.mxu0 %v1301
    %v1992 = vpop.f32.mrf.mxu0
    %v1993 = vadd.f32 0.0, %v1992
    %v1994 = vpop.f32.mrf.mxu0
    %v1995 = vadd.f32 0.0, %v1994
    %1996 = vdwg.mxu0
    %1997 = vmatprep.subr.mxu0 %v327
    %1998 = vmatpush1.msra.mxu0 %v326
    %1999 = vmatprep.subr.mxu0 %v323
    %2000 = vmatpush1.msra.mxu0 %v322
    %2001 = vmatprep.subr.mxu0 %v319
    %2002 = vmatpush1.msra.mxu0 %v318
    %2003 = vmatprep.subr.mxu0 %v315
    %2004 = vmatpush1.msra.mxu0 %v314
    %2005 = vmatprep.subr.mxu0 %v311
    %2006 = vmatpush1.msra.mxu0 %v310
    %2007 = vmatprep.subr.mxu0 %v307
    %2008 = vmatpush1.msra.mxu0 %v306
    %2009 = vmatprep.subr.mxu0 %v303
    %2010 = vmatpush1.msra.mxu0 %v302
    %2011 = vmatprep.subr.mxu0 %v299
    %2012 = vmatpush1.msra.mxu0 %v298
    %2013 = vmatprep.subr.mxu0 %v295
    %2014 = vmatpush1.msra.mxu0 %v294
    %2015 = vmatprep.subr.mxu0 %v291
    %2016 = vmatpush1.msra.mxu0 %v290
    %2017 = vmatprep.subr.mxu0 %v287
    %2018 = vmatpush1.msra.mxu0 %v286
    %2019 = vmatprep.subr.mxu0 %v283
    %2020 = vmatpush1.msra.mxu0 %v282
    %2021 = vmatprep.subr.mxu0 %v279
    %2022 = vmatpush1.msra.mxu0 %v278
    %2023 = vmatprep.subr.mxu0 %v275
    %2024 = vmatpush1.msra.mxu0 %v274
    %2025 = vmatprep.subr.mxu0 %v271
    %2026 = vmatpush1.msra.mxu0 %v270
    %2027 = vmatprep.subr.mxu0 %v267
    %2028 = vmatpush1.msra.mxu0 %v266
    %2029 = vmatprep.subr.mxu0 0.0
    %2030 = vmatpush2.msra.mxu0 0.0
    %2031 = vmatprep.subr.mxu0 0.0
    %2032 = vmatpush2.msra.mxu0 0.0
    %2033 = vmatprep.subr.mxu0 0.0
    %2034 = vmatpush2.msra.mxu0 0.0
    %2035 = vmatprep.subr.mxu0 0.0
    %2036 = vmatpush2.msra.mxu0 0.0
    %2037 = vmatprep.subr.mxu0 0.0
    %2038 = vmatpush2.msra.mxu0 0.0
    %2039 = vmatprep.subr.mxu0 0.0
    %2040 = vmatpush2.msra.mxu0 0.0
    %2041 = vmatprep.subr.mxu0 0.0
    %2042 = vmatpush2.msra.mxu0 0.0
    %2043 = vmatprep.subr.mxu0 0.0
    %2044 = vmatpush2.msra.mxu0 0.0
    %2045 = vmatprep.subr.mxu0 0.0
    %2046 = vmatpush2.msra.mxu0 0.0
    %2047 = vmatprep.subr.mxu0 0.0
    %2048 = vmatpush2.msra.mxu0 0.0
    %2049 = vmatprep.subr.mxu0 0.0
    %2050 = vmatpush2.msra.mxu0 0.0
    %2051 = vmatprep.subr.mxu0 0.0
    %2052 = vmatpush2.msra.mxu0 0.0
    %2053 = vmatprep.subr.mxu0 0.0
    %2054 = vmatpush2.msra.mxu0 0.0
    %2055 = vmatprep.subr.mxu0 0.0
    %2056 = vmatpush2.msra.mxu0 0.0
    %2057 = vmatprep.subr.mxu0 0.0
    %2058 = vmatpush2.msra.mxu0 0.0
    %2059 = vmatprep.subr.mxu0 0.0
    %2060 = vmatpush2.msra.mxu0 0.0
    %2061 = vmatprep.mubr.f32.mxu0 0.0
    %2062 = vmatmul.mubr.f32.gmra.mxu0 %v1301
    %v2063 = vpop.f32.mrf.mxu0
    %v2064 = vadd.f32 0.0, %v2063
    %v2065 = vpop.f32.mrf.mxu0
    %v2066 = vadd.f32 0.0, %v2065
    %2067 = vdwg.mxu0
    %v2068 = vadd.f32 %v1851, %v1993
    %v2069 = vadd.f32 %v1853, %v1995
    %v2070 = vadd.f32 %v1922, %v2064
    %v2071 = vadd.f32 %v1924, %v2066
    %v2072 = vxor.u32 %v2068, 2147483648
    %v2073 = vxor.u32 %v2069, 2147483648
    %v2074 = vxor.u32 %v2070, 2147483648
    %v2075 = vmul.f32 %v2072, 1.442695
    %v2076 = vpow.pop %v2075
    %v2077 = vmul.f32 %v2073, 1.442695
    %v2078 = vpow.pop %v2077
    %v2079 = vmul.f32 %v2074, 1.442695
    %v2080 = vpow.pop %v2079
    %v2081 = vadd.f32 %v2076, 1.0
    %v2082 = vadd.f32 %v2078, 1.0
    %v2083 = vadd.f32 %v2080, 1.0
    %v2084 = vrcp.pop %v2081
    %v2085 = vmul.f32 1.0, %v2084
    %v2086 = vrcp.pop %v2082
    %v2087 = vmul.f32 1.0, %v2086
    %v2088 = vrcp.pop %v2083
    %v2089 = vmul.f32 1.0, %v2088
    %v2090 = vtanh.pop %v2071
    %v2091 = vmul.f32 %v2087, %v1299
    %v2092 = vmul.f32 %v2085, %v2090
    %v2093 = vadd.f32 %v2091, %v2092
    %v2094 = vtanh.pop %v2093
    %v2095 = vmul.f32 %v2089, %v2094
    %2096 = vmatprep.subr.mxu0 %v197
    %2097 = vmatpush1.msra.mxu0 %v196
    %2098 = vmatprep.subr.mxu0 %v193
    %2099 = vmatpush1.msra.mxu0 %v192
    %2100 = vmatprep.subr.mxu0 %v189
    %2101 = vmatpush1.msra.mxu0 %v188
    %2102 = vmatprep.subr.mxu0 %v185
    %2103 = vmatpush1.msra.mxu0 %v184
    %2104 = vmatprep.subr.mxu0 %v181
    %2105 = vmatpush1.msra.mxu0 %v180
    %2106 = vmatprep.subr.mxu0 %v177
    %2107 = vmatpush1.msra.mxu0 %v176
    %2108 = vmatprep.subr.mxu0 %v173
    %2109 = vmatpush1.msra.mxu0 %v172
    %2110 = vmatprep.subr.mxu0 %v169
    %2111 = vmatpush1.msra.mxu0 %v168
    %2112 = vmatprep.subr.mxu0 %v165
    %2113 = vmatpush1.msra.mxu0 %v164
    %2114 = vmatprep.subr.mxu0 %v161
    %2115 = vmatpush1.msra.mxu0 %v160
    %2116 = vmatprep.subr.mxu0 %v157
    %2117 = vmatpush1.msra.mxu0 %v156
    %2118 = vmatprep.subr.mxu0 %v153
    %2119 = vmatpush1.msra.mxu0 %v152
    %2120 = vmatprep.subr.mxu0 %v149
    %2121 = vmatpush1.msra.mxu0 %v148
    %2122 = vmatprep.subr.mxu0 %v145
    %2123 = vmatpush1.msra.mxu0 %v144
    %2124 = vmatprep.subr.mxu0 %v141
    %2125 = vmatpush1.msra.mxu0 %v140
    %2126 = vmatprep.subr.mxu0 %v137
    %2127 = vmatpush1.msra.mxu0 %v136
    %2128 = vmatprep.subr.mxu0 0.0
    %2129 = vmatpush2.msra.mxu0 0.0
    %2130 = vmatprep.subr.mxu0 0.0
    %2131 = vmatpush2.msra.mxu0 0.0
    %2132 = vmatprep.subr.mxu0 0.0
    %2133 = vmatpush2.msra.mxu0 0.0
    %2134 = vmatprep.subr.mxu0 0.0
    %2135 = vmatpush2.msra.mxu0 0.0
    %2136 = vmatprep.subr.mxu0 0.0
    %2137 = vmatpush2.msra.mxu0 0.0
    %2138 = vmatprep.subr.mxu0 0.0
    %2139 = vmatpush2.msra.mxu0 0.0
    %2140 = vmatprep.subr.mxu0 0.0
    %2141 = vmatpush2.msra.mxu0 0.0
    %2142 = vmatprep.subr.mxu0 0.0
    %2143 = vmatpush2.msra.mxu0 0.0
    %2144 = vmatprep.subr.mxu0 0.0
    %2145 = vmatpush2.msra.mxu0 0.0
    %2146 = vmatprep.subr.mxu0 0.0
    %2147 = vmatpush2.msra.mxu0 0.0
    %2148 = vmatprep.subr.mxu0 0.0
    %2149 = vmatpush2.msra.mxu0 0.0
    %2150 = vmatprep.subr.mxu0 0.0
    %2151 = vmatpush2.msra.mxu0 0.0
    %2152 = vmatprep.subr.mxu0 0.0
    %2153 = vmatpush2.msra.mxu0 0.0
    %2154 = vmatprep.subr.mxu0 0.0
    %2155 = vmatpush2.msra.mxu0 0.0
    %2156 = vmatprep.subr.mxu0 0.0
    %2157 = vmatpush2.msra.mxu0 0.0
    %2158 = vmatprep.subr.mxu0 0.0
    %2159 = vmatpush2.msra.mxu0 0.0
    %2160 = vmatprep.mubr.f32.mxu0 0.0
    %2161 = vmatmul.mubr.f32.gmra.mxu0 %v1471
    %v2162 = vpop.f32.mrf.mxu0
    %v2163 = vadd.f32 0.0, %v2162
    %v2164 = vpop.f32.mrf.mxu0
    %v2165 = vadd.f32 0.0, %v2164
    %2166 = vdwg.mxu0
    %2167 = vmatprep.subr.mxu0 %v199
    %2168 = vmatpush1.msra.mxu0 %v198
    %2169 = vmatprep.subr.mxu0 %v195
    %2170 = vmatpush1.msra.mxu0 %v194
    %2171 = vmatprep.subr.mxu0 %v191
    %2172 = vmatpush1.msra.mxu0 %v190
    %2173 = vmatprep.subr.mxu0 %v187
    %2174 = vmatpush1.msra.mxu0 %v186
    %2175 = vmatprep.subr.mxu0 %v183
    %2176 = vmatpush1.msra.mxu0 %v182
    %2177 = vmatprep.subr.mxu0 %v179
    %2178 = vmatpush1.msra.mxu0 %v178
    %2179 = vmatprep.subr.mxu0 %v175
    %2180 = vmatpush1.msra.mxu0 %v174
    %2181 = vmatprep.subr.mxu0 %v171
    %2182 = vmatpush1.msra.mxu0 %v170
    %2183 = vmatprep.subr.mxu0 %v167
    %2184 = vmatpush1.msra.mxu0 %v166
    %2185 = vmatprep.subr.mxu0 %v163
    %2186 = vmatpush1.msra.mxu0 %v162
    %2187 = vmatprep.subr.mxu0 %v159
    %2188 = vmatpush1.msra.mxu0 %v158
    %2189 = vmatprep.subr.mxu0 %v155
    %2190 = vmatpush1.msra.mxu0 %v154
    %2191 = vmatprep.subr.mxu0 %v151
    %2192 = vmatpush1.msra.mxu0 %v150
    %2193 = vmatprep.subr.mxu0 %v147
    %2194 = vmatpush1.msra.mxu0 %v146
    %2195 = vmatprep.subr.mxu0 %v143
    %2196 = vmatpush1.msra.mxu0 %v142
    %2197 = vmatprep.subr.mxu0 %v139
    %2198 = vmatpush1.msra.mxu0 %v138
    %2199 = vmatprep.subr.mxu0 0.0
    %2200 = vmatpush2.msra.mxu0 0.0
    %2201 = vmatprep.subr.mxu0 0.0
    %2202 = vmatpush2.msra.mxu0 0.0
    %2203 = vmatprep.subr.mxu0 0.0
    %2204 = vmatpush2.msra.mxu0 0.0
    %2205 = vmatprep.subr.mxu0 0.0
    %2206 = vmatpush2.msra.mxu0 0.0
    %2207 = vmatprep.subr.mxu0 0.0
    %2208 = vmatpush2.msra.mxu0 0.0
    %2209 = vmatprep.subr.mxu0 0.0
    %2210 = vmatpush2.msra.mxu0 0.0
    %2211 = vmatprep.subr.mxu0 0.0
    %2212 = vmatpush2.msra.mxu0 0.0
    %2213 = vmatprep.subr.mxu0 0.0
    %2214 = vmatpush2.msra.mxu0 0.0
    %2215 = vmatprep.subr.mxu0 0.0
    %2216 = vmatpush2.msra.mxu0 0.0
    %2217 = vmatprep.subr.mxu0 0.0
    %2218 = vmatpush2.msra.mxu0 0.0
    %2219 = vmatprep.subr.mxu0 0.0
    %2220 = vmatpush2.msra.mxu0 0.0
    %2221 = vmatprep.subr.mxu0 0.0
    %2222 = vmatpush2.msra.mxu0 0.0
    %2223 = vmatprep.subr.mxu0 0.0
    %2224 = vmatpush2.msra.mxu0 0.0
    %2225 = vmatprep.subr.mxu0 0.0
    %2226 = vmatpush2.msra.mxu0 0.0
    %2227 = vmatprep.subr.mxu0 0.0
    %2228 = vmatpush2.msra.mxu0 0.0
    %2229 = vmatprep.subr.mxu0 0.0
    %2230 = vmatpush2.msra.mxu0 0.0
    %2231 = vmatprep.mubr.f32.mxu0 0.0
    %2232 = vmatmul.mubr.f32.gmra.mxu0 %v1471
    %v2233 = vpop.f32.mrf.mxu0
    %v2234 = vadd.f32 0.0, %v2233
    %v2235 = vpop.f32.mrf.mxu0
    %v2236 = vadd.f32 0.0, %v2235
    %2237 = vdwg.mxu0
    %v2238 = vadd.f32 %v673, %v2163
    %v2239 = vadd.f32 %v675, %v2165
    %v2240 = vadd.f32 %v786, %v2234
    %v2241 = vadd.f32 %v788, %v2236
    %v2242 = vxor.u32 %v2238, 2147483648
    %v2243 = vxor.u32 %v2239, 2147483648
    %v2244 = vxor.u32 %v2240, 2147483648
    %v2245 = vmul.f32 %v2242, 1.442695
    %v2246 = vpow.pop %v2245
    %v2247 = vmul.f32 %v2243, 1.442695
    %v2248 = vpow.pop %v2247
    %v2249 = vmul.f32 %v2244, 1.442695
    %v2250 = vpow.pop %v2249
    %v2251 = vadd.f32 %v2246, 1.0
    %v2252 = vadd.f32 %v2248, 1.0
    %v2253 = vadd.f32 %v2250, 1.0
    %v2254 = vrcp.pop %v2251
    %v2255 = vmul.f32 1.0, %v2254
    %v2256 = vrcp.pop %v2252
    %v2257 = vmul.f32 1.0, %v2256
    %v2258 = vrcp.pop %v2253
    %v2259 = vmul.f32 1.0, %v2258
    %v2260 = vtanh.pop %v2241
    %v2261 = vmul.f32 %v2257, %v1469
    %v2262 = vmul.f32 %v2255, %v2260
    %v2263 = vadd.f32 %v2261, %v2262
    %v2264 = vtanh.pop %v2263
    %v2265 = vmul.f32 %v2259, %v2264
    %2266 = vmatprep.subr.mxu0 %v389
    %2267 = vmatpush1.msra.mxu0 %v388
    %2268 = vmatprep.subr.mxu0 %v385
    %2269 = vmatpush1.msra.mxu0 %v384
    %2270 = vmatprep.subr.mxu0 %v381
    %2271 = vmatpush1.msra.mxu0 %v380
    %2272 = vmatprep.subr.mxu0 %v377
    %2273 = vmatpush1.msra.mxu0 %v376
    %2274 = vmatprep.subr.mxu0 %v373
    %2275 = vmatpush1.msra.mxu0 %v372
    %2276 = vmatprep.subr.mxu0 %v369
    %2277 = vmatpush1.msra.mxu0 %v368
    %2278 = vmatprep.subr.mxu0 %v365
    %2279 = vmatpush1.msra.mxu0 %v364
    %2280 = vmatprep.subr.mxu0 %v361
    %2281 = vmatpush1.msra.mxu0 %v360
    %2282 = vmatprep.subr.mxu0 %v357
    %2283 = vmatpush1.msra.mxu0 %v356
    %2284 = vmatprep.subr.mxu0 %v353
    %2285 = vmatpush1.msra.mxu0 %v352
    %2286 = vmatprep.subr.mxu0 %v349
    %2287 = vmatpush1.msra.mxu0 %v348
    %2288 = vmatprep.subr.mxu0 %v345
    %2289 = vmatpush1.msra.mxu0 %v344
    %2290 = vmatprep.subr.mxu0 %v341
    %2291 = vmatpush1.msra.mxu0 %v340
    %2292 = vmatprep.subr.mxu0 %v337
    %2293 = vmatpush1.msra.mxu0 %v336
    %2294 = vmatprep.subr.mxu0 %v333
    %2295 = vmatpush1.msra.mxu0 %v332
    %2296 = vmatprep.subr.mxu0 %v329
    %2297 = vmatpush1.msra.mxu0 %v328
    %2298 = vmatprep.subr.mxu0 0.0
    %2299 = vmatpush2.msra.mxu0 0.0
    %2300 = vmatprep.subr.mxu0 0.0
    %2301 = vmatpush2.msra.mxu0 0.0
    %2302 = vmatprep.subr.mxu0 0.0
    %2303 = vmatpush2.msra.mxu0 0.0
    %2304 = vmatprep.subr.mxu0 0.0
    %2305 = vmatpush2.msra.mxu0 0.0
    %2306 = vmatprep.subr.mxu0 0.0
    %2307 = vmatpush2.msra.mxu0 0.0
    %2308 = vmatprep.subr.mxu0 0.0
    %2309 = vmatpush2.msra.mxu0 0.0
    %2310 = vmatprep.subr.mxu0 0.0
    %2311 = vmatpush2.msra.mxu0 0.0
    %2312 = vmatprep.subr.mxu0 0.0
    %2313 = vmatpush2.msra.mxu0 0.0
    %2314 = vmatprep.subr.mxu0 0.0
    %2315 = vmatpush2.msra.mxu0 0.0
    %2316 = vmatprep.subr.mxu0 0.0
    %2317 = vmatpush2.msra.mxu0 0.0
    %2318 = vmatprep.subr.mxu0 0.0
    %2319 = vmatpush2.msra.mxu0 0.0
    %2320 = vmatprep.subr.mxu0 0.0
    %2321 = vmatpush2.msra.mxu0 0.0
    %2322 = vmatprep.subr.mxu0 0.0
    %2323 = vmatpush2.msra.mxu0 0.0
    %2324 = vmatprep.subr.mxu0 0.0
    %2325 = vmatpush2.msra.mxu0 0.0
    %2326 = vmatprep.subr.mxu0 0.0
    %2327 = vmatpush2.msra.mxu0 0.0
    %2328 = vmatprep.subr.mxu0 0.0
    %2329 = vmatpush2.msra.mxu0 0.0
    %2330 = vmatprep.mubr.f32.mxu0 0.0
    %2331 = vmatmul.mubr.f32.gmra.mxu0 %v2095
    %v2332 = vpop.f32.mrf.mxu0
    %v2333 = vadd.f32 %v483, %v2332
    %v2334 = vpop.f32.mrf.mxu0
    %v2335 = vadd.f32 %v487, %v2334
    %2336 = vdwg.mxu0
    %2337 = vmatprep.subr.mxu0 %v391
    %2338 = vmatpush1.msra.mxu0 %v390
    %2339 = vmatprep.subr.mxu0 %v387
    %2340 = vmatpush1.msra.mxu0 %v386
    %2341 = vmatprep.subr.mxu0 %v383
    %2342 = vmatpush1.msra.mxu0 %v382
    %2343 = vmatprep.subr.mxu0 %v379
    %2344 = vmatpush1.msra.mxu0 %v378
    %2345 = vmatprep.subr.mxu0 %v375
    %2346 = vmatpush1.msra.mxu0 %v374
    %2347 = vmatprep.subr.mxu0 %v371
    %2348 = vmatpush1.msra.mxu0 %v370
    %2349 = vmatprep.subr.mxu0 %v367
    %2350 = vmatpush1.msra.mxu0 %v366
    %2351 = vmatprep.subr.mxu0 %v363
    %2352 = vmatpush1.msra.mxu0 %v362
    %2353 = vmatprep.subr.mxu0 %v359
    %2354 = vmatpush1.msra.mxu0 %v358
    %2355 = vmatprep.subr.mxu0 %v355
    %2356 = vmatpush1.msra.mxu0 %v354
    %2357 = vmatprep.subr.mxu0 %v351
    %2358 = vmatpush1.msra.mxu0 %v350
    %2359 = vmatprep.subr.mxu0 %v347
    %2360 = vmatpush1.msra.mxu0 %v346
    %2361 = vmatprep.subr.mxu0 %v343
    %2362 = vmatpush1.msra.mxu0 %v342
    %2363 = vmatprep.subr.mxu0 %v339
    %2364 = vmatpush1.msra.mxu0 %v338
    %2365 = vmatprep.subr.mxu0 %v335
    %2366 = vmatpush1.msra.mxu0 %v334
    %2367 = vmatprep.subr.mxu0 %v331
    %2368 = vmatpush1.msra.mxu0 %v330
    %2369 = vmatprep.subr.mxu0 0.0
    %2370 = vmatpush2.msra.mxu0 0.0
    %2371 = vmatprep.subr.mxu0 0.0
    %2372 = vmatpush2.msra.mxu0 0.0
    %2373 = vmatprep.subr.mxu0 0.0
    %2374 = vmatpush2.msra.mxu0 0.0
    %2375 = vmatprep.subr.mxu0 0.0
    %2376 = vmatpush2.msra.mxu0 0.0
    %2377 = vmatprep.subr.mxu0 0.0
    %2378 = vmatpush2.msra.mxu0 0.0
    %2379 = vmatprep.subr.mxu0 0.0
    %2380 = vmatpush2.msra.mxu0 0.0
    %2381 = vmatprep.subr.mxu0 0.0
    %2382 = vmatpush2.msra.mxu0 0.0
    %2383 = vmatprep.subr.mxu0 0.0
    %2384 = vmatpush2.msra.mxu0 0.0
    %2385 = vmatprep.subr.mxu0 0.0
    %2386 = vmatpush2.msra.mxu0 0.0
    %2387 = vmatprep.subr.mxu0 0.0
    %2388 = vmatpush2.msra.mxu0 0.0
    %2389 = vmatprep.subr.mxu0 0.0
    %2390 = vmatpush2.msra.mxu0 0.0
    %2391 = vmatprep.subr.mxu0 0.0
    %2392 = vmatpush2.msra.mxu0 0.0
    %2393 = vmatprep.subr.mxu0 0.0
    %2394 = vmatpush2.msra.mxu0 0.0
    %2395 = vmatprep.subr.mxu0 0.0
    %2396 = vmatpush2.msra.mxu0 0.0
    %2397 = vmatprep.subr.mxu0 0.0
    %2398 = vmatpush2.msra.mxu0 0.0
    %2399 = vmatprep.subr.mxu0 0.0
    %2400 = vmatpush2.msra.mxu0 0.0
    %2401 = vmatprep.mubr.f32.mxu0 0.0
    %2402 = vmatmul.mubr.f32.gmra.mxu0 %v2095
    %v2403 = vpop.f32.mrf.mxu0
    %v2404 = vadd.f32 %v491, %v2403
    %v2405 = vpop.f32.mrf.mxu0
    %v2406 = vadd.f32 %v495, %v2405
    %2407 = vdwg.mxu0
    %2408 = vmatprep.subr.mxu0 %v453
    %2409 = vmatpush1.msra.mxu0 %v452
    %2410 = vmatprep.subr.mxu0 %v449
    %2411 = vmatpush1.msra.mxu0 %v448
    %2412 = vmatprep.subr.mxu0 %v445
    %2413 = vmatpush1.msra.mxu0 %v444
    %2414 = vmatprep.subr.mxu0 %v441
    %2415 = vmatpush1.msra.mxu0 %v440
    %2416 = vmatprep.subr.mxu0 %v437
    %2417 = vmatpush1.msra.mxu0 %v436
    %2418 = vmatprep.subr.mxu0 %v433
    %2419 = vmatpush1.msra.mxu0 %v432
    %2420 = vmatprep.subr.mxu0 %v429
    %2421 = vmatpush1.msra.mxu0 %v428
    %2422 = vmatprep.subr.mxu0 %v425
    %2423 = vmatpush1.msra.mxu0 %v424
    %2424 = vmatprep.subr.mxu0 %v421
    %2425 = vmatpush1.msra.mxu0 %v420
    %2426 = vmatprep.subr.mxu0 %v417
    %2427 = vmatpush1.msra.mxu0 %v416
    %2428 = vmatprep.subr.mxu0 %v413
    %2429 = vmatpush1.msra.mxu0 %v412
    %2430 = vmatprep.subr.mxu0 %v409
    %2431 = vmatpush1.msra.mxu0 %v408
    %2432 = vmatprep.subr.mxu0 %v405
    %2433 = vmatpush1.msra.mxu0 %v404
    %2434 = vmatprep.subr.mxu0 %v401
    %2435 = vmatpush1.msra.mxu0 %v400
    %2436 = vmatprep.subr.mxu0 %v397
    %2437 = vmatpush1.msra.mxu0 %v396
    %2438 = vmatprep.subr.mxu0 %v393
    %2439 = vmatpush1.msra.mxu0 %v392
    %2440 = vmatprep.subr.mxu0 0.0
    %2441 = vmatpush2.msra.mxu0 0.0
    %2442 = vmatprep.subr.mxu0 0.0
    %2443 = vmatpush2.msra.mxu0 0.0
    %2444 = vmatprep.subr.mxu0 0.0
    %2445 = vmatpush2.msra.mxu0 0.0
    %2446 = vmatprep.subr.mxu0 0.0
    %2447 = vmatpush2.msra.mxu0 0.0
    %2448 = vmatprep.subr.mxu0 0.0
    %2449 = vmatpush2.msra.mxu0 0.0
    %2450 = vmatprep.subr.mxu0 0.0
    %2451 = vmatpush2.msra.mxu0 0.0
    %2452 = vmatprep.subr.mxu0 0.0
    %2453 = vmatpush2.msra.mxu0 0.0
    %2454 = vmatprep.subr.mxu0 0.0
    %2455 = vmatpush2.msra.mxu0 0.0
    %2456 = vmatprep.subr.mxu0 0.0
    %2457 = vmatpush2.msra.mxu0 0.0
    %2458 = vmatprep.subr.mxu0 0.0
    %2459 = vmatpush2.msra.mxu0 0.0
    %2460 = vmatprep.subr.mxu0 0.0
    %2461 = vmatpush2.msra.mxu0 0.0
    %2462 = vmatprep.subr.mxu0 0.0
    %2463 = vmatpush2.msra.mxu0 0.0
    %2464 = vmatprep.subr.mxu0 0.0
    %2465 = vmatpush2.msra.mxu0 0.0
    %2466 = vmatprep.subr.mxu0 0.0
    %2467 = vmatpush2.msra.mxu0 0.0
    %2468 = vmatprep.subr.mxu0 0.0
    %2469 = vmatpush2.msra.mxu0 0.0
    %2470 = vmatprep.subr.mxu0 0.0
    %2471 = vmatpush2.msra.mxu0 0.0
    %2472 = vmatprep.mubr.f32.mxu0 0.0
    %2473 = vmatmul.mubr.f32.gmra.mxu0 %v1783
    %v2474 = vpop.f32.mrf.mxu0
    %v2475 = vadd.f32 0.0, %v2474
    %v2476 = vpop.f32.mrf.mxu0
    %v2477 = vadd.f32 0.0, %v2476
    %2478 = vdwg.mxu0
    %2479 = vmatprep.subr.mxu0 %v455
    %2480 = vmatpush1.msra.mxu0 %v454
    %2481 = vmatprep.subr.mxu0 %v451
    %2482 = vmatpush1.msra.mxu0 %v450
    %2483 = vmatprep.subr.mxu0 %v447
    %2484 = vmatpush1.msra.mxu0 %v446
    %2485 = vmatprep.subr.mxu0 %v443
    %2486 = vmatpush1.msra.mxu0 %v442
    %2487 = vmatprep.subr.mxu0 %v439
    %2488 = vmatpush1.msra.mxu0 %v438
    %2489 = vmatprep.subr.mxu0 %v435
    %2490 = vmatpush1.msra.mxu0 %v434
    %2491 = vmatprep.subr.mxu0 %v431
    %2492 = vmatpush1.msra.mxu0 %v430
    %2493 = vmatprep.subr.mxu0 %v427
    %2494 = vmatpush1.msra.mxu0 %v426
    %2495 = vmatprep.subr.mxu0 %v423
    %2496 = vmatpush1.msra.mxu0 %v422
    %2497 = vmatprep.subr.mxu0 %v419
    %2498 = vmatpush1.msra.mxu0 %v418
    %2499 = vmatprep.subr.mxu0 %v415
    %2500 = vmatpush1.msra.mxu0 %v414
    %2501 = vmatprep.subr.mxu0 %v411
    %2502 = vmatpush1.msra.mxu0 %v410
    %2503 = vmatprep.subr.mxu0 %v407
    %2504 = vmatpush1.msra.mxu0 %v406
    %2505 = vmatprep.subr.mxu0 %v403
    %2506 = vmatpush1.msra.mxu0 %v402
    %2507 = vmatprep.subr.mxu0 %v399
    %2508 = vmatpush1.msra.mxu0 %v398
    %2509 = vmatprep.subr.mxu0 %v395
    %2510 = vmatpush1.msra.mxu0 %v394
    %2511 = vmatprep.subr.mxu0 0.0
    %2512 = vmatpush2.msra.mxu0 0.0
    %2513 = vmatprep.subr.mxu0 0.0
    %2514 = vmatpush2.msra.mxu0 0.0
    %2515 = vmatprep.subr.mxu0 0.0
    %2516 = vmatpush2.msra.mxu0 0.0
    %2517 = vmatprep.subr.mxu0 0.0
    %2518 = vmatpush2.msra.mxu0 0.0
    %2519 = vmatprep.subr.mxu0 0.0
    %2520 = vmatpush2.msra.mxu0 0.0
    %2521 = vmatprep.subr.mxu0 0.0
    %2522 = vmatpush2.msra.mxu0 0.0
    %2523 = vmatprep.subr.mxu0 0.0
    %2524 = vmatpush2.msra.mxu0 0.0
    %2525 = vmatprep.subr.mxu0 0.0
    %2526 = vmatpush2.msra.mxu0 0.0
    %2527 = vmatprep.subr.mxu0 0.0
    %2528 = vmatpush2.msra.mxu0 0.0
    %2529 = vmatprep.subr.mxu0 0.0
    %2530 = vmatpush2.msra.mxu0 0.0
    %2531 = vmatprep.subr.mxu0 0.0
    %2532 = vmatpush2.msra.mxu0 0.0
    %2533 = vmatprep.subr.mxu0 0.0
    %2534 = vmatpush2.msra.mxu0 0.0
    %2535 = vmatprep.subr.mxu0 0.0
    %2536 = vmatpush2.msra.mxu0 0.0
    %2537 = vmatprep.subr.mxu0 0.0
    %2538 = vmatpush2.msra.mxu0 0.0
    %2539 = vmatprep.subr.mxu0 0.0
    %2540 = vmatpush2.msra.mxu0 0.0
    %2541 = vmatprep.subr.mxu0 0.0
    %2542 = vmatpush2.msra.mxu0 0.0
    %2543 = vmatprep.mubr.f32.mxu0 0.0
    %2544 = vmatmul.mubr.f32.gmra.mxu0 %v1783
    %v2545 = vpop.f32.mrf.mxu0
    %v2546 = vadd.f32 0.0, %v2545
    %v2547 = vpop.f32.mrf.mxu0
    %v2548 = vadd.f32 0.0, %v2547
    %2549 = vdwg.mxu0
    %v2550 = vadd.f32 %v2333, %v2475
    %v2551 = vadd.f32 %v2335, %v2477
    %v2552 = vadd.f32 %v2404, %v2546
    %v2553 = vadd.f32 %v2406, %v2548
    %v2554 = vxor.u32 %v2550, 2147483648
    %v2555 = vxor.u32 %v2551, 2147483648
    %v2556 = vxor.u32 %v2552, 2147483648
    %v2557 = vmul.f32 %v2554, 1.442695
    %v2558 = vpow.pop %v2557
    %v2559 = vmul.f32 %v2555, 1.442695
    %v2560 = vpow.pop %v2559
    %v2561 = vmul.f32 %v2556, 1.442695
    %v2562 = vpow.pop %v2561
    %v2563 = vadd.f32 %v2558, 1.0
    %v2564 = vadd.f32 %v2560, 1.0
    %v2565 = vadd.f32 %v2562, 1.0
    %v2566 = vrcp.pop %v2563
    %v2567 = vmul.f32 1.0, %v2566
    %v2568 = vrcp.pop %v2564
    %v2569 = vmul.f32 1.0, %v2568
    %v2570 = vrcp.pop %v2565
    %v2571 = vmul.f32 1.0, %v2570
    %v2572 = vtanh.pop %v2553
    %v2573 = vmul.f32 %v2569, %v1781
    %v2574 = vmul.f32 %v2567, %v2572
    %v2575 = vadd.f32 %v2573, %v2574
    %v2576 = vtanh.pop %v2575
    %v2577 = vmul.f32 %v2571, %v2576
    %2578 = vmatprep.subr.mxu0 %v261
    %2579 = vmatpush1.msra.mxu0 %v260
    %2580 = vmatprep.subr.mxu0 %v257
    %2581 = vmatpush1.msra.mxu0 %v256
    %2582 = vmatprep.subr.mxu0 %v253
    %2583 = vmatpush1.msra.mxu0 %v252
    %2584 = vmatprep.subr.mxu0 %v249
    %2585 = vmatpush1.msra.mxu0 %v248
    %2586 = vmatprep.subr.mxu0 %v245
    %2587 = vmatpush1.msra.mxu0 %v244
    %2588 = vmatprep.subr.mxu0 %v241
    %2589 = vmatpush1.msra.mxu0 %v240
    %2590 = vmatprep.subr.mxu0 %v237
    %2591 = vmatpush1.msra.mxu0 %v236
    %2592 = vmatprep.subr.mxu0 %v233
    %2593 = vmatpush1.msra.mxu0 %v232
    %2594 = vmatprep.subr.mxu0 %v229
    %2595 = vmatpush1.msra.mxu0 %v228
    %2596 = vmatprep.subr.mxu0 %v225
    %2597 = vmatpush1.msra.mxu0 %v224
    %2598 = vmatprep.subr.mxu0 %v221
    %2599 = vmatpush1.msra.mxu0 %v220
    %2600 = vmatprep.subr.mxu0 %v217
    %2601 = vmatpush1.msra.mxu0 %v216
    %2602 = vmatprep.subr.mxu0 %v213
    %2603 = vmatpush1.msra.mxu0 %v212
    %2604 = vmatprep.subr.mxu0 %v209
    %2605 = vmatpush1.msra.mxu0 %v208
    %2606 = vmatprep.subr.mxu0 %v205
    %2607 = vmatpush1.msra.mxu0 %v204
    %2608 = vmatprep.subr.mxu0 %v201
    %2609 = vmatpush1.msra.mxu0 %v200
    %2610 = vmatprep.subr.mxu0 0.0
    %2611 = vmatpush2.msra.mxu0 0.0
    %2612 = vmatprep.subr.mxu0 0.0
    %2613 = vmatpush2.msra.mxu0 0.0
    %2614 = vmatprep.subr.mxu0 0.0
    %2615 = vmatpush2.msra.mxu0 0.0
    %2616 = vmatprep.subr.mxu0 0.0
    %2617 = vmatpush2.msra.mxu0 0.0
    %2618 = vmatprep.subr.mxu0 0.0
    %2619 = vmatpush2.msra.mxu0 0.0
    %2620 = vmatprep.subr.mxu0 0.0
    %2621 = vmatpush2.msra.mxu0 0.0
    %2622 = vmatprep.subr.mxu0 0.0
    %2623 = vmatpush2.msra.mxu0 0.0
    %2624 = vmatprep.subr.mxu0 0.0
    %2625 = vmatpush2.msra.mxu0 0.0
    %2626 = vmatprep.subr.mxu0 0.0
    %2627 = vmatpush2.msra.mxu0 0.0
    %2628 = vmatprep.subr.mxu0 0.0
    %2629 = vmatpush2.msra.mxu0 0.0
    %2630 = vmatprep.subr.mxu0 0.0
    %2631 = vmatpush2.msra.mxu0 0.0
    %2632 = vmatprep.subr.mxu0 0.0
    %2633 = vmatpush2.msra.mxu0 0.0
    %2634 = vmatprep.subr.mxu0 0.0
    %2635 = vmatpush2.msra.mxu0 0.0
    %2636 = vmatprep.subr.mxu0 0.0
    %2637 = vmatpush2.msra.mxu0 0.0
    %2638 = vmatprep.subr.mxu0 0.0
    %2639 = vmatpush2.msra.mxu0 0.0
    %2640 = vmatprep.subr.mxu0 0.0
    %2641 = vmatpush2.msra.mxu0 0.0
    %2642 = vmatprep.mubr.f32.mxu0 0.0
    %2643 = vmatmul.mubr.f32.gmra.mxu0 %v2265
    %v2644 = vpop.f32.mrf.mxu0
    %v2645 = vadd.f32 %v461, %v2644
    %v2646 = vpop.f32.mrf.mxu0
    %v2647 = vadd.f32 %v465, %v2646
    %2648 = vdwg.mxu0
    %2649 = vmatprep.subr.mxu0 %v263
    %2650 = vmatpush1.msra.mxu0 %v262
    %2651 = vmatprep.subr.mxu0 %v259
    %2652 = vmatpush1.msra.mxu0 %v258
    %2653 = vmatprep.subr.mxu0 %v255
    %2654 = vmatpush1.msra.mxu0 %v254
    %2655 = vmatprep.subr.mxu0 %v251
    %2656 = vmatpush1.msra.mxu0 %v250
    %2657 = vmatprep.subr.mxu0 %v247
    %2658 = vmatpush1.msra.mxu0 %v246
    %2659 = vmatprep.subr.mxu0 %v243
    %2660 = vmatpush1.msra.mxu0 %v242
    %2661 = vmatprep.subr.mxu0 %v239
    %2662 = vmatpush1.msra.mxu0 %v238
    %2663 = vmatprep.subr.mxu0 %v235
    %2664 = vmatpush1.msra.mxu0 %v234
    %2665 = vmatprep.subr.mxu0 %v231
    %2666 = vmatpush1.msra.mxu0 %v230
    %2667 = vmatprep.subr.mxu0 %v227
    %2668 = vmatpush1.msra.mxu0 %v226
    %2669 = vmatprep.subr.mxu0 %v223
    %2670 = vmatpush1.msra.mxu0 %v222
    %2671 = vmatprep.subr.mxu0 %v219
    %2672 = vmatpush1.msra.mxu0 %v218
    %2673 = vmatprep.subr.mxu0 %v215
    %2674 = vmatpush1.msra.mxu0 %v214
    %2675 = vmatprep.subr.mxu0 %v211
    %2676 = vmatpush1.msra.mxu0 %v210
    %2677 = vmatprep.subr.mxu0 %v207
    %2678 = vmatpush1.msra.mxu0 %v206
    %2679 = vmatprep.subr.mxu0 %v203
    %2680 = vmatpush1.msra.mxu0 %v202
    %2681 = vmatprep.subr.mxu0 0.0
    %2682 = vmatpush2.msra.mxu0 0.0
    %2683 = vmatprep.subr.mxu0 0.0
    %2684 = vmatpush2.msra.mxu0 0.0
    %2685 = vmatprep.subr.mxu0 0.0
    %2686 = vmatpush2.msra.mxu0 0.0
    %2687 = vmatprep.subr.mxu0 0.0
    %2688 = vmatpush2.msra.mxu0 0.0
    %2689 = vmatprep.subr.mxu0 0.0
    %2690 = vmatpush2.msra.mxu0 0.0
    %2691 = vmatprep.subr.mxu0 0.0
    %2692 = vmatpush2.msra.mxu0 0.0
    %2693 = vmatprep.subr.mxu0 0.0
    %2694 = vmatpush2.msra.mxu0 0.0
    %2695 = vmatprep.subr.mxu0 0.0
    %2696 = vmatpush2.msra.mxu0 0.0
    %2697 = vmatprep.subr.mxu0 0.0
    %2698 = vmatpush2.msra.mxu0 0.0
    %2699 = vmatprep.subr.mxu0 0.0
    %2700 = vmatpush2.msra.mxu0 0.0
    %2701 = vmatprep.subr.mxu0 0.0
    %2702 = vmatpush2.msra.mxu0 0.0
    %2703 = vmatprep.subr.mxu0 0.0
    %2704 = vmatpush2.msra.mxu0 0.0
    %2705 = vmatprep.subr.mxu0 0.0
    %2706 = vmatpush2.msra.mxu0 0.0
    %2707 = vmatprep.subr.mxu0 0.0
    %2708 = vmatpush2.msra.mxu0 0.0
    %2709 = vmatprep.subr.mxu0 0.0
    %2710 = vmatpush2.msra.mxu0 0.0
    %2711 = vmatprep.subr.mxu0 0.0
    %2712 = vmatpush2.msra.mxu0 0.0
    %2713 = vmatprep.mubr.f32.mxu0 0.0
    %2714 = vmatmul.mubr.f32.gmra.mxu0 %v2265
    %v2715 = vpop.f32.mrf.mxu0
    %v2716 = vadd.f32 %v469, %v2715
    %v2717 = vpop.f32.mrf.mxu0
    %v2718 = vadd.f32 %v473, %v2717
    %2719 = vdwg.mxu0
    %2720 = vmatprep.subr.mxu0 %v325
    %2721 = vmatpush1.msra.mxu0 %v324
    %2722 = vmatprep.subr.mxu0 %v321
    %2723 = vmatpush1.msra.mxu0 %v320
    %2724 = vmatprep.subr.mxu0 %v317
    %2725 = vmatpush1.msra.mxu0 %v316
    %2726 = vmatprep.subr.mxu0 %v313
    %2727 = vmatpush1.msra.mxu0 %v312
    %2728 = vmatprep.subr.mxu0 %v309
    %2729 = vmatpush1.msra.mxu0 %v308
    %2730 = vmatprep.subr.mxu0 %v305
    %2731 = vmatpush1.msra.mxu0 %v304
    %2732 = vmatprep.subr.mxu0 %v301
    %2733 = vmatpush1.msra.mxu0 %v300
    %2734 = vmatprep.subr.mxu0 %v297
    %2735 = vmatpush1.msra.mxu0 %v296
    %2736 = vmatprep.subr.mxu0 %v293
    %2737 = vmatpush1.msra.mxu0 %v292
    %2738 = vmatprep.subr.mxu0 %v289
    %2739 = vmatpush1.msra.mxu0 %v288
    %2740 = vmatprep.subr.mxu0 %v285
    %2741 = vmatpush1.msra.mxu0 %v284
    %2742 = vmatprep.subr.mxu0 %v281
    %2743 = vmatpush1.msra.mxu0 %v280
    %2744 = vmatprep.subr.mxu0 %v277
    %2745 = vmatpush1.msra.mxu0 %v276
    %2746 = vmatprep.subr.mxu0 %v273
    %2747 = vmatpush1.msra.mxu0 %v272
    %2748 = vmatprep.subr.mxu0 %v269
    %2749 = vmatpush1.msra.mxu0 %v268
    %2750 = vmatprep.subr.mxu0 %v265
    %2751 = vmatpush1.msra.mxu0 %v264
    %2752 = vmatprep.subr.mxu0 0.0
    %2753 = vmatpush2.msra.mxu0 0.0
    %2754 = vmatprep.subr.mxu0 0.0
    %2755 = vmatpush2.msra.mxu0 0.0
    %2756 = vmatprep.subr.mxu0 0.0
    %2757 = vmatpush2.msra.mxu0 0.0
    %2758 = vmatprep.subr.mxu0 0.0
    %2759 = vmatpush2.msra.mxu0 0.0
    %2760 = vmatprep.subr.mxu0 0.0
    %2761 = vmatpush2.msra.mxu0 0.0
    %2762 = vmatprep.subr.mxu0 0.0
    %2763 = vmatpush2.msra.mxu0 0.0
    %2764 = vmatprep.subr.mxu0 0.0
    %2765 = vmatpush2.msra.mxu0 0.0
    %2766 = vmatprep.subr.mxu0 0.0
    %2767 = vmatpush2.msra.mxu0 0.0
    %2768 = vmatprep.subr.mxu0 0.0
    %2769 = vmatpush2.msra.mxu0 0.0
    %2770 = vmatprep.subr.mxu0 0.0
    %2771 = vmatpush2.msra.mxu0 0.0
    %2772 = vmatprep.subr.mxu0 0.0
    %2773 = vmatpush2.msra.mxu0 0.0
    %2774 = vmatprep.subr.mxu0 0.0
    %2775 = vmatpush2.msra.mxu0 0.0
    %2776 = vmatprep.subr.mxu0 0.0
    %2777 = vmatpush2.msra.mxu0 0.0
    %2778 = vmatprep.subr.mxu0 0.0
    %2779 = vmatpush2.msra.mxu0 0.0
    %2780 = vmatprep.subr.mxu0 0.0
    %2781 = vmatpush2.msra.mxu0 0.0
    %2782 = vmatprep.subr.mxu0 0.0
    %2783 = vmatpush2.msra.mxu0 0.0
    %2784 = vmatprep.mubr.f32.mxu0 0.0
    %2785 = vmatmul.mubr.f32.gmra.mxu0 %v2095
    %v2786 = vpop.f32.mrf.mxu0
    %v2787 = vadd.f32 0.0, %v2786
    %v2788 = vpop.f32.mrf.mxu0
    %v2789 = vadd.f32 0.0, %v2788
    %2790 = vdwg.mxu0
    %2791 = vmatprep.subr.mxu0 %v327
    %2792 = vmatpush1.msra.mxu0 %v326
    %2793 = vmatprep.subr.mxu0 %v323
    %2794 = vmatpush1.msra.mxu0 %v322
    %2795 = vmatprep.subr.mxu0 %v319
    %2796 = vmatpush1.msra.mxu0 %v318
    %2797 = vmatprep.subr.mxu0 %v315
    %2798 = vmatpush1.msra.mxu0 %v314
    %2799 = vmatprep.subr.mxu0 %v311
    %2800 = vmatpush1.msra.mxu0 %v310
    %2801 = vmatprep.subr.mxu0 %v307
    %2802 = vmatpush1.msra.mxu0 %v306
    %2803 = vmatprep.subr.mxu0 %v303
    %2804 = vmatpush1.msra.mxu0 %v302
    %2805 = vmatprep.subr.mxu0 %v299
    %2806 = vmatpush1.msra.mxu0 %v298
    %2807 = vmatprep.subr.mxu0 %v295
    %2808 = vmatpush1.msra.mxu0 %v294
    %2809 = vmatprep.subr.mxu0 %v291
    %2810 = vmatpush1.msra.mxu0 %v290
    %2811 = vmatprep.subr.mxu0 %v287
    %2812 = vmatpush1.msra.mxu0 %v286
    %2813 = vmatprep.subr.mxu0 %v283
    %2814 = vmatpush1.msra.mxu0 %v282
    %2815 = vmatprep.subr.mxu0 %v279
    %2816 = vmatpush1.msra.mxu0 %v278
    %2817 = vmatprep.subr.mxu0 %v275
    %2818 = vmatpush1.msra.mxu0 %v274
    %2819 = vmatprep.subr.mxu0 %v271
    %2820 = vmatpush1.msra.mxu0 %v270
    %2821 = vmatprep.subr.mxu0 %v267
    %2822 = vmatpush1.msra.mxu0 %v266
    %2823 = vmatprep.subr.mxu0 0.0
    %2824 = vmatpush2.msra.mxu0 0.0
    %2825 = vmatprep.subr.mxu0 0.0
    %2826 = vmatpush2.msra.mxu0 0.0
    %2827 = vmatprep.subr.mxu0 0.0
    %2828 = vmatpush2.msra.mxu0 0.0
    %2829 = vmatprep.subr.mxu0 0.0
    %2830 = vmatpush2.msra.mxu0 0.0
    %2831 = vmatprep.subr.mxu0 0.0
    %2832 = vmatpush2.msra.mxu0 0.0
    %2833 = vmatprep.subr.mxu0 0.0
    %2834 = vmatpush2.msra.mxu0 0.0
    %2835 = vmatprep.subr.mxu0 0.0
    %2836 = vmatpush2.msra.mxu0 0.0
    %2837 = vmatprep.subr.mxu0 0.0
    %2838 = vmatpush2.msra.mxu0 0.0
    %2839 = vmatprep.subr.mxu0 0.0
    %2840 = vmatpush2.msra.mxu0 0.0
    %2841 = vmatprep.subr.mxu0 0.0
    %2842 = vmatpush2.msra.mxu0 0.0
    %2843 = vmatprep.subr.mxu0 0.0
    %2844 = vmatpush2.msra.mxu0 0.0
    %2845 = vmatprep.subr.mxu0 0.0
    %2846 = vmatpush2.msra.mxu0 0.0
    %2847 = vmatprep.subr.mxu0 0.0
    %2848 = vmatpush2.msra.mxu0 0.0
    %2849 = vmatprep.subr.mxu0 0.0
    %2850 = vmatpush2.msra.mxu0 0.0
    %2851 = vmatprep.subr.mxu0 0.0
    %2852 = vmatpush2.msra.mxu0 0.0
    %2853 = vmatprep.subr.mxu0 0.0
    %2854 = vmatpush2.msra.mxu0 0.0
    %2855 = vmatprep.mubr.f32.mxu0 0.0
    %2856 = vmatmul.mubr.f32.gmra.mxu0 %v2095
    %v2857 = vpop.f32.mrf.mxu0
    %v2858 = vadd.f32 0.0, %v2857
    %v2859 = vpop.f32.mrf.mxu0
    %v2860 = vadd.f32 0.0, %v2859
    %2861 = vdwg.mxu0
    %v2862 = vadd.f32 %v2645, %v2787
    %v2863 = vadd.f32 %v2647, %v2789
    %v2864 = vadd.f32 %v2716, %v2858
    %v2865 = vadd.f32 %v2718, %v2860
    %v2866 = vxor.u32 %v2862, 2147483648
    %v2867 = vxor.u32 %v2863, 2147483648
    %v2868 = vxor.u32 %v2864, 2147483648
    %v2869 = vmul.f32 %v2866, 1.442695
    %v2870 = vpow.pop %v2869
    %v2871 = vmul.f32 %v2867, 1.442695
    %v2872 = vpow.pop %v2871
    %v2873 = vmul.f32 %v2868, 1.442695
    %v2874 = vpow.pop %v2873
    %v2875 = vadd.f32 %v2870, 1.0
    %v2876 = vadd.f32 %v2872, 1.0
    %v2877 = vadd.f32 %v2874, 1.0
    %v2878 = vrcp.pop %v2875
    %v2879 = vmul.f32 1.0, %v2878
    %v2880 = vrcp.pop %v2876
    %v2881 = vmul.f32 1.0, %v2880
    %v2882 = vrcp.pop %v2877
    %v2883 = vmul.f32 1.0, %v2882
    %v2884 = vtanh.pop %v2865
    %v2885 = vmul.f32 %v2881, %v2093
    %v2886 = vmul.f32 %v2879, %v2884
    %v2887 = vadd.f32 %v2885, %v2886
    %v2888 = vtanh.pop %v2887
    %v2889 = vmul.f32 %v2883, %v2888
    %2890 = vmatprep.subr.mxu0 %v197
    %2891 = vmatpush1.msra.mxu0 %v196
    %2892 = vmatprep.subr.mxu0 %v193
    %2893 = vmatpush1.msra.mxu0 %v192
    %2894 = vmatprep.subr.mxu0 %v189
    %2895 = vmatpush1.msra.mxu0 %v188
    %2896 = vmatprep.subr.mxu0 %v185
    %2897 = vmatpush1.msra.mxu0 %v184
    %2898 = vmatprep.subr.mxu0 %v181
    %2899 = vmatpush1.msra.mxu0 %v180
    %2900 = vmatprep.subr.mxu0 %v177
    %2901 = vmatpush1.msra.mxu0 %v176
    %2902 = vmatprep.subr.mxu0 %v173
    %2903 = vmatpush1.msra.mxu0 %v172
    %2904 = vmatprep.subr.mxu0 %v169
    %2905 = vmatpush1.msra.mxu0 %v168
    %2906 = vmatprep.subr.mxu0 %v165
    %2907 = vmatpush1.msra.mxu0 %v164
    %2908 = vmatprep.subr.mxu0 %v161
    %2909 = vmatpush1.msra.mxu0 %v160
    %2910 = vmatprep.subr.mxu0 %v157
    %2911 = vmatpush1.msra.mxu0 %v156
    %2912 = vmatprep.subr.mxu0 %v153
    %2913 = vmatpush1.msra.mxu0 %v152
    %2914 = vmatprep.subr.mxu0 %v149
    %2915 = vmatpush1.msra.mxu0 %v148
    %2916 = vmatprep.subr.mxu0 %v145
    %2917 = vmatpush1.msra.mxu0 %v144
    %2918 = vmatprep.subr.mxu0 %v141
    %2919 = vmatpush1.msra.mxu0 %v140
    %2920 = vmatprep.subr.mxu0 %v137
    %2921 = vmatpush1.msra.mxu0 %v136
    %2922 = vmatprep.subr.mxu0 0.0
    %2923 = vmatpush2.msra.mxu0 0.0
    %2924 = vmatprep.subr.mxu0 0.0
    %2925 = vmatpush2.msra.mxu0 0.0
    %2926 = vmatprep.subr.mxu0 0.0
    %2927 = vmatpush2.msra.mxu0 0.0
    %2928 = vmatprep.subr.mxu0 0.0
    %2929 = vmatpush2.msra.mxu0 0.0
    %2930 = vmatprep.subr.mxu0 0.0
    %2931 = vmatpush2.msra.mxu0 0.0
    %2932 = vmatprep.subr.mxu0 0.0
    %2933 = vmatpush2.msra.mxu0 0.0
    %2934 = vmatprep.subr.mxu0 0.0
    %2935 = vmatpush2.msra.mxu0 0.0
    %2936 = vmatprep.subr.mxu0 0.0
    %2937 = vmatpush2.msra.mxu0 0.0
    %2938 = vmatprep.subr.mxu0 0.0
    %2939 = vmatpush2.msra.mxu0 0.0
    %2940 = vmatprep.subr.mxu0 0.0
    %2941 = vmatpush2.msra.mxu0 0.0
    %2942 = vmatprep.subr.mxu0 0.0
    %2943 = vmatpush2.msra.mxu0 0.0
    %2944 = vmatprep.subr.mxu0 0.0
    %2945 = vmatpush2.msra.mxu0 0.0
    %2946 = vmatprep.subr.mxu0 0.0
    %2947 = vmatpush2.msra.mxu0 0.0
    %2948 = vmatprep.subr.mxu0 0.0
    %2949 = vmatpush2.msra.mxu0 0.0
    %2950 = vmatprep.subr.mxu0 0.0
    %2951 = vmatpush2.msra.mxu0 0.0
    %2952 = vmatprep.subr.mxu0 0.0
    %2953 = vmatpush2.msra.mxu0 0.0
    %2954 = vmatprep.mubr.f32.mxu0 0.0
    %2955 = vmatmul.mubr.f32.gmra.mxu0 %v2265
    %v2956 = vpop.f32.mrf.mxu0
    %v2957 = vadd.f32 0.0, %v2956
    %v2958 = vpop.f32.mrf.mxu0
    %v2959 = vadd.f32 0.0, %v2958
    %2960 = vdwg.mxu0
    %2961 = vmatprep.subr.mxu0 %v199
    %2962 = vmatpush1.msra.mxu0 %v198
    %2963 = vmatprep.subr.mxu0 %v195
    %2964 = vmatpush1.msra.mxu0 %v194
    %2965 = vmatprep.subr.mxu0 %v191
    %2966 = vmatpush1.msra.mxu0 %v190
    %2967 = vmatprep.subr.mxu0 %v187
    %2968 = vmatpush1.msra.mxu0 %v186
    %2969 = vmatprep.subr.mxu0 %v183
    %2970 = vmatpush1.msra.mxu0 %v182
    %2971 = vmatprep.subr.mxu0 %v179
    %2972 = vmatpush1.msra.mxu0 %v178
    %2973 = vmatprep.subr.mxu0 %v175
    %2974 = vmatpush1.msra.mxu0 %v174
    %2975 = vmatprep.subr.mxu0 %v171
    %2976 = vmatpush1.msra.mxu0 %v170
    %2977 = vmatprep.subr.mxu0 %v167
    %2978 = vmatpush1.msra.mxu0 %v166
    %2979 = vmatprep.subr.mxu0 %v163
    %2980 = vmatpush1.msra.mxu0 %v162
    %2981 = vmatprep.subr.mxu0 %v159
    %2982 = vmatpush1.msra.mxu0 %v158
    %2983 = vmatprep.subr.mxu0 %v155
    %2984 = vmatpush1.msra.mxu0 %v154
    %2985 = vmatprep.subr.mxu0 %v151
    %2986 = vmatpush1.msra.mxu0 %v150
    %2987 = vmatprep.subr.mxu0 %v147
    %2988 = vmatpush1.msra.mxu0 %v146
    %2989 = vmatprep.subr.mxu0 %v143
    %2990 = vmatpush1.msra.mxu0 %v142
    %2991 = vmatprep.subr.mxu0 %v139
    %2992 = vmatpush1.msra.mxu0 %v138
    %2993 = vmatprep.subr.mxu0 0.0
    %2994 = vmatpush2.msra.mxu0 0.0
    %2995 = vmatprep.subr.mxu0 0.0
    %2996 = vmatpush2.msra.mxu0 0.0
    %2997 = vmatprep.subr.mxu0 0.0
    %2998 = vmatpush2.msra.mxu0 0.0
    %2999 = vmatprep.subr.mxu0 0.0
    %3000 = vmatpush2.msra.mxu0 0.0
    %3001 = vmatprep.subr.mxu0 0.0
    %3002 = vmatpush2.msra.mxu0 0.0
    %3003 = vmatprep.subr.mxu0 0.0
    %3004 = vmatpush2.msra.mxu0 0.0
    %3005 = vmatprep.subr.mxu0 0.0
    %3006 = vmatpush2.msra.mxu0 0.0
    %3007 = vmatprep.subr.mxu0 0.0
    %3008 = vmatpush2.msra.mxu0 0.0
    %3009 = vmatprep.subr.mxu0 0.0
    %3010 = vmatpush2.msra.mxu0 0.0
    %3011 = vmatprep.subr.mxu0 0.0
    %3012 = vmatpush2.msra.mxu0 0.0
    %3013 = vmatprep.subr.mxu0 0.0
    %3014 = vmatpush2.msra.mxu0 0.0
    %3015 = vmatprep.subr.mxu0 0.0
    %3016 = vmatpush2.msra.mxu0 0.0
    %3017 = vmatprep.subr.mxu0 0.0
    %3018 = vmatpush2.msra.mxu0 0.0
    %3019 = vmatprep.subr.mxu0 0.0
    %3020 = vmatpush2.msra.mxu0 0.0
    %3021 = vmatprep.subr.mxu0 0.0
    %3022 = vmatpush2.msra.mxu0 0.0
    %3023 = vmatprep.subr.mxu0 0.0
    %3024 = vmatpush2.msra.mxu0 0.0
    %3025 = vmatprep.mubr.f32.mxu0 0.0
    %3026 = vmatmul.mubr.f32.gmra.mxu0 %v2265
    %v3027 = vpop.f32.mrf.mxu0
    %v3028 = vadd.f32 0.0, %v3027
    %v3029 = vpop.f32.mrf.mxu0
    %v3030 = vadd.f32 0.0, %v3029
    %3031 = vdwg.mxu0
    %v3032 = vadd.f32 %v679, %v2957
    %v3033 = vadd.f32 %v681, %v2959
    %v3034 = vadd.f32 %v792, %v3028
    %v3035 = vadd.f32 %v794, %v3030
    %v3036 = vxor.u32 %v3032, 2147483648
    %v3037 = vxor.u32 %v3033, 2147483648
    %v3038 = vxor.u32 %v3034, 2147483648
    %v3039 = vmul.f32 %v3036, 1.442695
    %v3040 = vpow.pop %v3039
    %v3041 = vmul.f32 %v3037, 1.442695
    %v3042 = vpow.pop %v3041
    %v3043 = vmul.f32 %v3038, 1.442695
    %v3044 = vpow.pop %v3043
    %v3045 = vadd.f32 %v3040, 1.0
    %v3046 = vadd.f32 %v3042, 1.0
    %v3047 = vadd.f32 %v3044, 1.0
    %v3048 = vrcp.pop %v3045
    %v3049 = vmul.f32 1.0, %v3048
    %v3050 = vrcp.pop %v3046
    %v3051 = vmul.f32 1.0, %v3050
    %v3052 = vrcp.pop %v3047
    %v3053 = vmul.f32 1.0, %v3052
    %v3054 = vtanh.pop %v3035
    %v3055 = vmul.f32 %v3051, %v2263
    %v3056 = vmul.f32 %v3049, %v3054
    %v3057 = vadd.f32 %v3055, %v3056
    %v3058 = vtanh.pop %v3057
    %v3059 = vmul.f32 %v3053, %v3058
    %3060 = vmatprep.subr.mxu0 %v389
    %3061 = vmatpush1.msra.mxu0 %v388
    %3062 = vmatprep.subr.mxu0 %v385
    %3063 = vmatpush1.msra.mxu0 %v384
    %3064 = vmatprep.subr.mxu0 %v381
    %3065 = vmatpush1.msra.mxu0 %v380
    %3066 = vmatprep.subr.mxu0 %v377
    %3067 = vmatpush1.msra.mxu0 %v376
    %3068 = vmatprep.subr.mxu0 %v373
    %3069 = vmatpush1.msra.mxu0 %v372
    %3070 = vmatprep.subr.mxu0 %v369
    %3071 = vmatpush1.msra.mxu0 %v368
    %3072 = vmatprep.subr.mxu0 %v365
    %3073 = vmatpush1.msra.mxu0 %v364
    %3074 = vmatprep.subr.mxu0 %v361
    %3075 = vmatpush1.msra.mxu0 %v360
    %3076 = vmatprep.subr.mxu0 %v357
    %3077 = vmatpush1.msra.mxu0 %v356
    %3078 = vmatprep.subr.mxu0 %v353
    %3079 = vmatpush1.msra.mxu0 %v352
    %3080 = vmatprep.subr.mxu0 %v349
    %3081 = vmatpush1.msra.mxu0 %v348
    %3082 = vmatprep.subr.mxu0 %v345
    %3083 = vmatpush1.msra.mxu0 %v344
    %3084 = vmatprep.subr.mxu0 %v341
    %3085 = vmatpush1.msra.mxu0 %v340
    %3086 = vmatprep.subr.mxu0 %v337
    %3087 = vmatpush1.msra.mxu0 %v336
    %3088 = vmatprep.subr.mxu0 %v333
    %3089 = vmatpush1.msra.mxu0 %v332
    %3090 = vmatprep.subr.mxu0 %v329
    %3091 = vmatpush1.msra.mxu0 %v328
    %3092 = vmatprep.subr.mxu0 0.0
    %3093 = vmatpush2.msra.mxu0 0.0
    %3094 = vmatprep.subr.mxu0 0.0
    %3095 = vmatpush2.msra.mxu0 0.0
    %3096 = vmatprep.subr.mxu0 0.0
    %3097 = vmatpush2.msra.mxu0 0.0
    %3098 = vmatprep.subr.mxu0 0.0
    %3099 = vmatpush2.msra.mxu0 0.0
    %3100 = vmatprep.subr.mxu0 0.0
    %3101 = vmatpush2.msra.mxu0 0.0
    %3102 = vmatprep.subr.mxu0 0.0
    %3103 = vmatpush2.msra.mxu0 0.0
    %3104 = vmatprep.subr.mxu0 0.0
    %3105 = vmatpush2.msra.mxu0 0.0
    %3106 = vmatprep.subr.mxu0 0.0
    %3107 = vmatpush2.msra.mxu0 0.0
    %3108 = vmatprep.subr.mxu0 0.0
    %3109 = vmatpush2.msra.mxu0 0.0
    %3110 = vmatprep.subr.mxu0 0.0
    %3111 = vmatpush2.msra.mxu0 0.0
    %3112 = vmatprep.subr.mxu0 0.0
    %3113 = vmatpush2.msra.mxu0 0.0
    %3114 = vmatprep.subr.mxu0 0.0
    %3115 = vmatpush2.msra.mxu0 0.0
    %3116 = vmatprep.subr.mxu0 0.0
    %3117 = vmatpush2.msra.mxu0 0.0
    %3118 = vmatprep.subr.mxu0 0.0
    %3119 = vmatpush2.msra.mxu0 0.0
    %3120 = vmatprep.subr.mxu0 0.0
    %3121 = vmatpush2.msra.mxu0 0.0
    %3122 = vmatprep.subr.mxu0 0.0
    %3123 = vmatpush2.msra.mxu0 0.0
    %3124 = vmatprep.mubr.f32.mxu0 0.0
    %3125 = vmatmul.mubr.f32.gmra.mxu0 %v2889
    %v3126 = vpop.f32.mrf.mxu0
    %v3127 = vadd.f32 %v483, %v3126
    %v3128 = vpop.f32.mrf.mxu0
    %v3129 = vadd.f32 %v487, %v3128
    %3130 = vdwg.mxu0
    %3131 = vmatprep.subr.mxu0 %v391
    %3132 = vmatpush1.msra.mxu0 %v390
    %3133 = vmatprep.subr.mxu0 %v387
    %3134 = vmatpush1.msra.mxu0 %v386
    %3135 = vmatprep.subr.mxu0 %v383
    %3136 = vmatpush1.msra.mxu0 %v382
    %3137 = vmatprep.subr.mxu0 %v379
    %3138 = vmatpush1.msra.mxu0 %v378
    %3139 = vmatprep.subr.mxu0 %v375
    %3140 = vmatpush1.msra.mxu0 %v374
    %3141 = vmatprep.subr.mxu0 %v371
    %3142 = vmatpush1.msra.mxu0 %v370
    %3143 = vmatprep.subr.mxu0 %v367
    %3144 = vmatpush1.msra.mxu0 %v366
    %3145 = vmatprep.subr.mxu0 %v363
    %3146 = vmatpush1.msra.mxu0 %v362
    %3147 = vmatprep.subr.mxu0 %v359
    %3148 = vmatpush1.msra.mxu0 %v358
    %3149 = vmatprep.subr.mxu0 %v355
    %3150 = vmatpush1.msra.mxu0 %v354
    %3151 = vmatprep.subr.mxu0 %v351
    %3152 = vmatpush1.msra.mxu0 %v350
    %3153 = vmatprep.subr.mxu0 %v347
    %3154 = vmatpush1.msra.mxu0 %v346
    %3155 = vmatprep.subr.mxu0 %v343
    %3156 = vmatpush1.msra.mxu0 %v342
    %3157 = vmatprep.subr.mxu0 %v339
    %3158 = vmatpush1.msra.mxu0 %v338
    %3159 = vmatprep.subr.mxu0 %v335
    %3160 = vmatpush1.msra.mxu0 %v334
    %3161 = vmatprep.subr.mxu0 %v331
    %3162 = vmatpush1.msra.mxu0 %v330
    %3163 = vmatprep.subr.mxu0 0.0
    %3164 = vmatpush2.msra.mxu0 0.0
    %3165 = vmatprep.subr.mxu0 0.0
    %3166 = vmatpush2.msra.mxu0 0.0
    %3167 = vmatprep.subr.mxu0 0.0
    %3168 = vmatpush2.msra.mxu0 0.0
    %3169 = vmatprep.subr.mxu0 0.0
    %3170 = vmatpush2.msra.mxu0 0.0
    %3171 = vmatprep.subr.mxu0 0.0
    %3172 = vmatpush2.msra.mxu0 0.0
    %3173 = vmatprep.subr.mxu0 0.0
    %3174 = vmatpush2.msra.mxu0 0.0
    %3175 = vmatprep.subr.mxu0 0.0
    %3176 = vmatpush2.msra.mxu0 0.0
    %3177 = vmatprep.subr.mxu0 0.0
    %3178 = vmatpush2.msra.mxu0 0.0
    %3179 = vmatprep.subr.mxu0 0.0
    %3180 = vmatpush2.msra.mxu0 0.0
    %3181 = vmatprep.subr.mxu0 0.0
    %3182 = vmatpush2.msra.mxu0 0.0
    %3183 = vmatprep.subr.mxu0 0.0
    %3184 = vmatpush2.msra.mxu0 0.0
    %3185 = vmatprep.subr.mxu0 0.0
    %3186 = vmatpush2.msra.mxu0 0.0
    %3187 = vmatprep.subr.mxu0 0.0
    %3188 = vmatpush2.msra.mxu0 0.0
    %3189 = vmatprep.subr.mxu0 0.0
    %3190 = vmatpush2.msra.mxu0 0.0
    %3191 = vmatprep.subr.mxu0 0.0
    %3192 = vmatpush2.msra.mxu0 0.0
    %3193 = vmatprep.subr.mxu0 0.0
    %3194 = vmatpush2.msra.mxu0 0.0
    %3195 = vmatprep.mubr.f32.mxu0 0.0
    %3196 = vmatmul.mubr.f32.gmra.mxu0 %v2889
    %v3197 = vpop.f32.mrf.mxu0
    %v3198 = vadd.f32 %v491, %v3197
    %v3199 = vpop.f32.mrf.mxu0
    %v3200 = vadd.f32 %v495, %v3199
    %3201 = vdwg.mxu0
    %3202 = vmatprep.subr.mxu0 %v453
    %3203 = vmatpush1.msra.mxu0 %v452
    %3204 = vmatprep.subr.mxu0 %v449
    %3205 = vmatpush1.msra.mxu0 %v448
    %3206 = vmatprep.subr.mxu0 %v445
    %3207 = vmatpush1.msra.mxu0 %v444
    %3208 = vmatprep.subr.mxu0 %v441
    %3209 = vmatpush1.msra.mxu0 %v440
    %3210 = vmatprep.subr.mxu0 %v437
    %3211 = vmatpush1.msra.mxu0 %v436
    %3212 = vmatprep.subr.mxu0 %v433
    %3213 = vmatpush1.msra.mxu0 %v432
    %3214 = vmatprep.subr.mxu0 %v429
    %3215 = vmatpush1.msra.mxu0 %v428
    %3216 = vmatprep.subr.mxu0 %v425
    %3217 = vmatpush1.msra.mxu0 %v424
    %3218 = vmatprep.subr.mxu0 %v421
    %3219 = vmatpush1.msra.mxu0 %v420
    %3220 = vmatprep.subr.mxu0 %v417
    %3221 = vmatpush1.msra.mxu0 %v416
    %3222 = vmatprep.subr.mxu0 %v413
    %3223 = vmatpush1.msra.mxu0 %v412
    %3224 = vmatprep.subr.mxu0 %v409
    %3225 = vmatpush1.msra.mxu0 %v408
    %3226 = vmatprep.subr.mxu0 %v405
    %3227 = vmatpush1.msra.mxu0 %v404
    %3228 = vmatprep.subr.mxu0 %v401
    %3229 = vmatpush1.msra.mxu0 %v400
    %3230 = vmatprep.subr.mxu0 %v397
    %3231 = vmatpush1.msra.mxu0 %v396
    %3232 = vmatprep.subr.mxu0 %v393
    %3233 = vmatpush1.msra.mxu0 %v392
    %3234 = vmatprep.subr.mxu0 0.0
    %3235 = vmatpush2.msra.mxu0 0.0
    %3236 = vmatprep.subr.mxu0 0.0
    %3237 = vmatpush2.msra.mxu0 0.0
    %3238 = vmatprep.subr.mxu0 0.0
    %3239 = vmatpush2.msra.mxu0 0.0
    %3240 = vmatprep.subr.mxu0 0.0
    %3241 = vmatpush2.msra.mxu0 0.0
    %3242 = vmatprep.subr.mxu0 0.0
    %3243 = vmatpush2.msra.mxu0 0.0
    %3244 = vmatprep.subr.mxu0 0.0
    %3245 = vmatpush2.msra.mxu0 0.0
    %3246 = vmatprep.subr.mxu0 0.0
    %3247 = vmatpush2.msra.mxu0 0.0
    %3248 = vmatprep.subr.mxu0 0.0
    %3249 = vmatpush2.msra.mxu0 0.0
    %3250 = vmatprep.subr.mxu0 0.0
    %3251 = vmatpush2.msra.mxu0 0.0
    %3252 = vmatprep.subr.mxu0 0.0
    %3253 = vmatpush2.msra.mxu0 0.0
    %3254 = vmatprep.subr.mxu0 0.0
    %3255 = vmatpush2.msra.mxu0 0.0
    %3256 = vmatprep.subr.mxu0 0.0
    %3257 = vmatpush2.msra.mxu0 0.0
    %3258 = vmatprep.subr.mxu0 0.0
    %3259 = vmatpush2.msra.mxu0 0.0
    %3260 = vmatprep.subr.mxu0 0.0
    %3261 = vmatpush2.msra.mxu0 0.0
    %3262 = vmatprep.subr.mxu0 0.0
    %3263 = vmatpush2.msra.mxu0 0.0
    %3264 = vmatprep.subr.mxu0 0.0
    %3265 = vmatpush2.msra.mxu0 0.0
    %3266 = vmatprep.mubr.f32.mxu0 0.0
    %3267 = vmatmul.mubr.f32.gmra.mxu0 %v2577
    %v3268 = vpop.f32.mrf.mxu0
    %v3269 = vadd.f32 0.0, %v3268
    %v3270 = vpop.f32.mrf.mxu0
    %v3271 = vadd.f32 0.0, %v3270
    %3272 = vdwg.mxu0
    %3273 = vmatprep.subr.mxu0 %v455
    %3274 = vmatpush1.msra.mxu0 %v454
    %3275 = vmatprep.subr.mxu0 %v451
    %3276 = vmatpush1.msra.mxu0 %v450
    %3277 = vmatprep.subr.mxu0 %v447
    %3278 = vmatpush1.msra.mxu0 %v446
    %3279 = vmatprep.subr.mxu0 %v443
    %3280 = vmatpush1.msra.mxu0 %v442
    %3281 = vmatprep.subr.mxu0 %v439
    %3282 = vmatpush1.msra.mxu0 %v438
    %3283 = vmatprep.subr.mxu0 %v435
    %3284 = vmatpush1.msra.mxu0 %v434
    %3285 = vmatprep.subr.mxu0 %v431
    %3286 = vmatpush1.msra.mxu0 %v430
    %3287 = vmatprep.subr.mxu0 %v427
    %3288 = vmatpush1.msra.mxu0 %v426
    %3289 = vmatprep.subr.mxu0 %v423
    %3290 = vmatpush1.msra.mxu0 %v422
    %3291 = vmatprep.subr.mxu0 %v419
    %3292 = vmatpush1.msra.mxu0 %v418
    %3293 = vmatprep.subr.mxu0 %v415
    %3294 = vmatpush1.msra.mxu0 %v414
    %3295 = vmatprep.subr.mxu0 %v411
    %3296 = vmatpush1.msra.mxu0 %v410
    %3297 = vmatprep.subr.mxu0 %v407
    %3298 = vmatpush1.msra.mxu0 %v406
    %3299 = vmatprep.subr.mxu0 %v403
    %3300 = vmatpush1.msra.mxu0 %v402
    %3301 = vmatprep.subr.mxu0 %v399
    %3302 = vmatpush1.msra.mxu0 %v398
    %3303 = vmatprep.subr.mxu0 %v395
    %3304 = vmatpush1.msra.mxu0 %v394
    %3305 = vmatprep.subr.mxu0 0.0
    %3306 = vmatpush2.msra.mxu0 0.0
    %3307 = vmatprep.subr.mxu0 0.0
    %3308 = vmatpush2.msra.mxu0 0.0
    %3309 = vmatprep.subr.mxu0 0.0
    %3310 = vmatpush2.msra.mxu0 0.0
    %3311 = vmatprep.subr.mxu0 0.0
    %3312 = vmatpush2.msra.mxu0 0.0
    %3313 = vmatprep.subr.mxu0 0.0
    %3314 = vmatpush2.msra.mxu0 0.0
    %3315 = vmatprep.subr.mxu0 0.0
    %3316 = vmatpush2.msra.mxu0 0.0
    %3317 = vmatprep.subr.mxu0 0.0
    %3318 = vmatpush2.msra.mxu0 0.0
    %3319 = vmatprep.subr.mxu0 0.0
    %3320 = vmatpush2.msra.mxu0 0.0
    %3321 = vmatprep.subr.mxu0 0.0
    %3322 = vmatpush2.msra.mxu0 0.0
    %3323 = vmatprep.subr.mxu0 0.0
    %3324 = vmatpush2.msra.mxu0 0.0
    %3325 = vmatprep.subr.mxu0 0.0
    %3326 = vmatpush2.msra.mxu0 0.0
    %3327 = vmatprep.subr.mxu0 0.0
    %3328 = vmatpush2.msra.mxu0 0.0
    %3329 = vmatprep.subr.mxu0 0.0
    %3330 = vmatpush2.msra.mxu0 0.0
    %3331 = vmatprep.subr.mxu0 0.0
    %3332 = vmatpush2.msra.mxu0 0.0
    %3333 = vmatprep.subr.mxu0 0.0
    %3334 = vmatpush2.msra.mxu0 0.0
    %3335 = vmatprep.subr.mxu0 0.0
    %3336 = vmatpush2.msra.mxu0 0.0
    %3337 = vmatprep.mubr.f32.mxu0 0.0
    %3338 = vmatmul.mubr.f32.gmra.mxu0 %v2577
    %v3339 = vpop.f32.mrf.mxu0
    %v3340 = vadd.f32 0.0, %v3339
    %v3341 = vpop.f32.mrf.mxu0
    %v3342 = vadd.f32 0.0, %v3341
    %3343 = vdwg.mxu0
    %v3344 = vadd.f32 %v3127, %v3269
    %v3345 = vadd.f32 %v3129, %v3271
    %v3346 = vadd.f32 %v3198, %v3340
    %v3347 = vadd.f32 %v3200, %v3342
    %v3348 = vxor.u32 %v3344, 2147483648
    %v3349 = vxor.u32 %v3345, 2147483648
    %v3350 = vxor.u32 %v3346, 2147483648
    %v3351 = vmul.f32 %v3348, 1.442695
    %v3352 = vpow.pop %v3351
    %v3353 = vmul.f32 %v3349, 1.442695
    %v3354 = vpow.pop %v3353
    %v3355 = vmul.f32 %v3350, 1.442695
    %v3356 = vpow.pop %v3355
    %v3357 = vadd.f32 %v3352, 1.0
    %v3358 = vadd.f32 %v3354, 1.0
    %v3359 = vadd.f32 %v3356, 1.0
    %v3360 = vrcp.pop %v3357
    %v3361 = vmul.f32 1.0, %v3360
    %v3362 = vrcp.pop %v3358
    %v3363 = vmul.f32 1.0, %v3362
    %v3364 = vrcp.pop %v3359
    %v3365 = vmul.f32 1.0, %v3364
    %v3366 = vtanh.pop %v3347
    %v3367 = vmul.f32 %v3363, %v2575
    %v3368 = vmul.f32 %v3361, %v3366
    %v3369 = vadd.f32 %v3367, %v3368
    %v3370 = vtanh.pop %v3369
    %v3371 = vmul.f32 %v3365, %v3370
    %3372 = vmatprep.subr.mxu0 %v261
    %3373 = vmatpush1.msra.mxu0 %v260
    %3374 = vmatprep.subr.mxu0 %v257
    %3375 = vmatpush1.msra.mxu0 %v256
    %3376 = vmatprep.subr.mxu0 %v253
    %3377 = vmatpush1.msra.mxu0 %v252
    %3378 = vmatprep.subr.mxu0 %v249
    %3379 = vmatpush1.msra.mxu0 %v248
    %3380 = vmatprep.subr.mxu0 %v245
    %3381 = vmatpush1.msra.mxu0 %v244
    %3382 = vmatprep.subr.mxu0 %v241
    %3383 = vmatpush1.msra.mxu0 %v240
    %3384 = vmatprep.subr.mxu0 %v237
    %3385 = vmatpush1.msra.mxu0 %v236
    %3386 = vmatprep.subr.mxu0 %v233
    %3387 = vmatpush1.msra.mxu0 %v232
    %3388 = vmatprep.subr.mxu0 %v229
    %3389 = vmatpush1.msra.mxu0 %v228
    %3390 = vmatprep.subr.mxu0 %v225
    %3391 = vmatpush1.msra.mxu0 %v224
    %3392 = vmatprep.subr.mxu0 %v221
    %3393 = vmatpush1.msra.mxu0 %v220
    %3394 = vmatprep.subr.mxu0 %v217
    %3395 = vmatpush1.msra.mxu0 %v216
    %3396 = vmatprep.subr.mxu0 %v213
    %3397 = vmatpush1.msra.mxu0 %v212
    %3398 = vmatprep.subr.mxu0 %v209
    %3399 = vmatpush1.msra.mxu0 %v208
    %3400 = vmatprep.subr.mxu0 %v205
    %3401 = vmatpush1.msra.mxu0 %v204
    %3402 = vmatprep.subr.mxu0 %v201
    %3403 = vmatpush1.msra.mxu0 %v200
    %3404 = vmatprep.subr.mxu0 0.0
    %3405 = vmatpush2.msra.mxu0 0.0
    %3406 = vmatprep.subr.mxu0 0.0
    %3407 = vmatpush2.msra.mxu0 0.0
    %3408 = vmatprep.subr.mxu0 0.0
    %3409 = vmatpush2.msra.mxu0 0.0
    %3410 = vmatprep.subr.mxu0 0.0
    %3411 = vmatpush2.msra.mxu0 0.0
    %3412 = vmatprep.subr.mxu0 0.0
    %3413 = vmatpush2.msra.mxu0 0.0
    %3414 = vmatprep.subr.mxu0 0.0
    %3415 = vmatpush2.msra.mxu0 0.0
    %3416 = vmatprep.subr.mxu0 0.0
    %3417 = vmatpush2.msra.mxu0 0.0
    %3418 = vmatprep.subr.mxu0 0.0
    %3419 = vmatpush2.msra.mxu0 0.0
    %3420 = vmatprep.subr.mxu0 0.0
    %3421 = vmatpush2.msra.mxu0 0.0
    %3422 = vmatprep.subr.mxu0 0.0
    %3423 = vmatpush2.msra.mxu0 0.0
    %3424 = vmatprep.subr.mxu0 0.0
    %3425 = vmatpush2.msra.mxu0 0.0
    %3426 = vmatprep.subr.mxu0 0.0
    %3427 = vmatpush2.msra.mxu0 0.0
    %3428 = vmatprep.subr.mxu0 0.0
    %3429 = vmatpush2.msra.mxu0 0.0
    %3430 = vmatprep.subr.mxu0 0.0
    %3431 = vmatpush2.msra.mxu0 0.0
    %3432 = vmatprep.subr.mxu0 0.0
    %3433 = vmatpush2.msra.mxu0 0.0
    %3434 = vmatprep.subr.mxu0 0.0
    %3435 = vmatpush2.msra.mxu0 0.0
    %3436 = vmatprep.mubr.f32.mxu0 0.0
    %3437 = vmatmul.mubr.f32.gmra.mxu0 %v3059
    %v3438 = vpop.f32.mrf.mxu0
    %v3439 = vadd.f32 %v461, %v3438
    %v3440 = vpop.f32.mrf.mxu0
    %v3441 = vadd.f32 %v465, %v3440
    %3442 = vdwg.mxu0
    %3443 = vmatprep.subr.mxu0 %v263
    %3444 = vmatpush1.msra.mxu0 %v262
    %3445 = vmatprep.subr.mxu0 %v259
    %3446 = vmatpush1.msra.mxu0 %v258
    %3447 = vmatprep.subr.mxu0 %v255
    %3448 = vmatpush1.msra.mxu0 %v254
    %3449 = vmatprep.subr.mxu0 %v251
    %3450 = vmatpush1.msra.mxu0 %v250
    %3451 = vmatprep.subr.mxu0 %v247
    %3452 = vmatpush1.msra.mxu0 %v246
    %3453 = vmatprep.subr.mxu0 %v243
    %3454 = vmatpush1.msra.mxu0 %v242
    %3455 = vmatprep.subr.mxu0 %v239
    %3456 = vmatpush1.msra.mxu0 %v238
    %3457 = vmatprep.subr.mxu0 %v235
    %3458 = vmatpush1.msra.mxu0 %v234
    %3459 = vmatprep.subr.mxu0 %v231
    %3460 = vmatpush1.msra.mxu0 %v230
    %3461 = vmatprep.subr.mxu0 %v227
    %3462 = vmatpush1.msra.mxu0 %v226
    %3463 = vmatprep.subr.mxu0 %v223
    %3464 = vmatpush1.msra.mxu0 %v222
    %3465 = vmatprep.subr.mxu0 %v219
    %3466 = vmatpush1.msra.mxu0 %v218
    %3467 = vmatprep.subr.mxu0 %v215
    %3468 = vmatpush1.msra.mxu0 %v214
    %3469 = vmatprep.subr.mxu0 %v211
    %3470 = vmatpush1.msra.mxu0 %v210
    %3471 = vmatprep.subr.mxu0 %v207
    %3472 = vmatpush1.msra.mxu0 %v206
    %3473 = vmatprep.subr.mxu0 %v203
    %3474 = vmatpush1.msra.mxu0 %v202
    %3475 = vmatprep.subr.mxu0 0.0
    %3476 = vmatpush2.msra.mxu0 0.0
    %3477 = vmatprep.subr.mxu0 0.0
    %3478 = vmatpush2.msra.mxu0 0.0
    %3479 = vmatprep.subr.mxu0 0.0
    %3480 = vmatpush2.msra.mxu0 0.0
    %3481 = vmatprep.subr.mxu0 0.0
    %3482 = vmatpush2.msra.mxu0 0.0
    %3483 = vmatprep.subr.mxu0 0.0
    %3484 = vmatpush2.msra.mxu0 0.0
    %3485 = vmatprep.subr.mxu0 0.0
    %3486 = vmatpush2.msra.mxu0 0.0
    %3487 = vmatprep.subr.mxu0 0.0
    %3488 = vmatpush2.msra.mxu0 0.0
    %3489 = vmatprep.subr.mxu0 0.0
    %3490 = vmatpush2.msra.mxu0 0.0
    %3491 = vmatprep.subr.mxu0 0.0
    %3492 = vmatpush2.msra.mxu0 0.0
    %3493 = vmatprep.subr.mxu0 0.0
    %3494 = vmatpush2.msra.mxu0 0.0
    %3495 = vmatprep.subr.mxu0 0.0
    %3496 = vmatpush2.msra.mxu0 0.0
    %3497 = vmatprep.subr.mxu0 0.0
    %3498 = vmatpush2.msra.mxu0 0.0
    %3499 = vmatprep.subr.mxu0 0.0
    %3500 = vmatpush2.msra.mxu0 0.0
    %3501 = vmatprep.subr.mxu0 0.0
    %3502 = vmatpush2.msra.mxu0 0.0
    %3503 = vmatprep.subr.mxu0 0.0
    %3504 = vmatpush2.msra.mxu0 0.0
    %3505 = vmatprep.subr.mxu0 0.0
    %3506 = vmatpush2.msra.mxu0 0.0
    %3507 = vmatprep.mubr.f32.mxu0 0.0
    %3508 = vmatmul.mubr.f32.gmra.mxu0 %v3059
    %v3509 = vpop.f32.mrf.mxu0
    %v3510 = vadd.f32 %v469, %v3509
    %v3511 = vpop.f32.mrf.mxu0
    %v3512 = vadd.f32 %v473, %v3511
    %3513 = vdwg.mxu0
    %3514 = vmatprep.subr.mxu0 %v325
    %3515 = vmatpush1.msra.mxu0 %v324
    %3516 = vmatprep.subr.mxu0 %v321
    %3517 = vmatpush1.msra.mxu0 %v320
    %3518 = vmatprep.subr.mxu0 %v317
    %3519 = vmatpush1.msra.mxu0 %v316
    %3520 = vmatprep.subr.mxu0 %v313
    %3521 = vmatpush1.msra.mxu0 %v312
    %3522 = vmatprep.subr.mxu0 %v309
    %3523 = vmatpush1.msra.mxu0 %v308
    %3524 = vmatprep.subr.mxu0 %v305
    %3525 = vmatpush1.msra.mxu0 %v304
    %3526 = vmatprep.subr.mxu0 %v301
    %3527 = vmatpush1.msra.mxu0 %v300
    %3528 = vmatprep.subr.mxu0 %v297
    %3529 = vmatpush1.msra.mxu0 %v296
    %3530 = vmatprep.subr.mxu0 %v293
    %3531 = vmatpush1.msra.mxu0 %v292
    %3532 = vmatprep.subr.mxu0 %v289
    %3533 = vmatpush1.msra.mxu0 %v288
    %3534 = vmatprep.subr.mxu0 %v285
    %3535 = vmatpush1.msra.mxu0 %v284
    %3536 = vmatprep.subr.mxu0 %v281
    %3537 = vmatpush1.msra.mxu0 %v280
    %3538 = vmatprep.subr.mxu0 %v277
    %3539 = vmatpush1.msra.mxu0 %v276
    %3540 = vmatprep.subr.mxu0 %v273
    %3541 = vmatpush1.msra.mxu0 %v272
    %3542 = vmatprep.subr.mxu0 %v269
    %3543 = vmatpush1.msra.mxu0 %v268
    %3544 = vmatprep.subr.mxu0 %v265
    %3545 = vmatpush1.msra.mxu0 %v264
    %3546 = vmatprep.subr.mxu0 0.0
    %3547 = vmatpush2.msra.mxu0 0.0
    %3548 = vmatprep.subr.mxu0 0.0
    %3549 = vmatpush2.msra.mxu0 0.0
    %3550 = vmatprep.subr.mxu0 0.0
    %3551 = vmatpush2.msra.mxu0 0.0
    %3552 = vmatprep.subr.mxu0 0.0
    %3553 = vmatpush2.msra.mxu0 0.0
    %3554 = vmatprep.subr.mxu0 0.0
    %3555 = vmatpush2.msra.mxu0 0.0
    %3556 = vmatprep.subr.mxu0 0.0
    %3557 = vmatpush2.msra.mxu0 0.0
    %3558 = vmatprep.subr.mxu0 0.0
    %3559 = vmatpush2.msra.mxu0 0.0
    %3560 = vmatprep.subr.mxu0 0.0
    %3561 = vmatpush2.msra.mxu0 0.0
    %3562 = vmatprep.subr.mxu0 0.0
    %3563 = vmatpush2.msra.mxu0 0.0
    %3564 = vmatprep.subr.mxu0 0.0
    %3565 = vmatpush2.msra.mxu0 0.0
    %3566 = vmatprep.subr.mxu0 0.0
    %3567 = vmatpush2.msra.mxu0 0.0
    %3568 = vmatprep.subr.mxu0 0.0
    %3569 = vmatpush2.msra.mxu0 0.0
    %3570 = vmatprep.subr.mxu0 0.0
    %3571 = vmatpush2.msra.mxu0 0.0
    %3572 = vmatprep.subr.mxu0 0.0
    %3573 = vmatpush2.msra.mxu0 0.0
    %3574 = vmatprep.subr.mxu0 0.0
    %3575 = vmatpush2.msra.mxu0 0.0
    %3576 = vmatprep.subr.mxu0 0.0
    %3577 = vmatpush2.msra.mxu0 0.0
    %3578 = vmatprep.mubr.f32.mxu0 0.0
    %3579 = vmatmul.mubr.f32.gmra.mxu0 %v2889
    %v3580 = vpop.f32.mrf.mxu0
    %v3581 = vadd.f32 0.0, %v3580
    %v3582 = vpop.f32.mrf.mxu0
    %v3583 = vadd.f32 0.0, %v3582
    %3584 = vdwg.mxu0
    %3585 = vmatprep.subr.mxu0 %v327
    %3586 = vmatpush1.msra.mxu0 %v326
    %3587 = vmatprep.subr.mxu0 %v323
    %3588 = vmatpush1.msra.mxu0 %v322
    %3589 = vmatprep.subr.mxu0 %v319
    %3590 = vmatpush1.msra.mxu0 %v318
    %3591 = vmatprep.subr.mxu0 %v315
    %3592 = vmatpush1.msra.mxu0 %v314
    %3593 = vmatprep.subr.mxu0 %v311
    %3594 = vmatpush1.msra.mxu0 %v310
    %3595 = vmatprep.subr.mxu0 %v307
    %3596 = vmatpush1.msra.mxu0 %v306
    %3597 = vmatprep.subr.mxu0 %v303
    %3598 = vmatpush1.msra.mxu0 %v302
    %3599 = vmatprep.subr.mxu0 %v299
    %3600 = vmatpush1.msra.mxu0 %v298
    %3601 = vmatprep.subr.mxu0 %v295
    %3602 = vmatpush1.msra.mxu0 %v294
    %3603 = vmatprep.subr.mxu0 %v291
    %3604 = vmatpush1.msra.mxu0 %v290
    %3605 = vmatprep.subr.mxu0 %v287
    %3606 = vmatpush1.msra.mxu0 %v286
    %3607 = vmatprep.subr.mxu0 %v283
    %3608 = vmatpush1.msra.mxu0 %v282
    %3609 = vmatprep.subr.mxu0 %v279
    %3610 = vmatpush1.msra.mxu0 %v278
    %3611 = vmatprep.subr.mxu0 %v275
    %3612 = vmatpush1.msra.mxu0 %v274
    %3613 = vmatprep.subr.mxu0 %v271
    %3614 = vmatpush1.msra.mxu0 %v270
    %3615 = vmatprep.subr.mxu0 %v267
    %3616 = vmatpush1.msra.mxu0 %v266
    %3617 = vmatprep.subr.mxu0 0.0
    %3618 = vmatpush2.msra.mxu0 0.0
    %3619 = vmatprep.subr.mxu0 0.0
    %3620 = vmatpush2.msra.mxu0 0.0
    %3621 = vmatprep.subr.mxu0 0.0
    %3622 = vmatpush2.msra.mxu0 0.0
    %3623 = vmatprep.subr.mxu0 0.0
    %3624 = vmatpush2.msra.mxu0 0.0
    %3625 = vmatprep.subr.mxu0 0.0
    %3626 = vmatpush2.msra.mxu0 0.0
    %3627 = vmatprep.subr.mxu0 0.0
    %3628 = vmatpush2.msra.mxu0 0.0
    %3629 = vmatprep.subr.mxu0 0.0
    %3630 = vmatpush2.msra.mxu0 0.0
    %3631 = vmatprep.subr.mxu0 0.0
    %3632 = vmatpush2.msra.mxu0 0.0
    %3633 = vmatprep.subr.mxu0 0.0
    %3634 = vmatpush2.msra.mxu0 0.0
    %3635 = vmatprep.subr.mxu0 0.0
    %3636 = vmatpush2.msra.mxu0 0.0
    %3637 = vmatprep.subr.mxu0 0.0
    %3638 = vmatpush2.msra.mxu0 0.0
    %3639 = vmatprep.subr.mxu0 0.0
    %3640 = vmatpush2.msra.mxu0 0.0
    %3641 = vmatprep.subr.mxu0 0.0
    %3642 = vmatpush2.msra.mxu0 0.0
    %3643 = vmatprep.subr.mxu0 0.0
    %3644 = vmatpush2.msra.mxu0 0.0
    %3645 = vmatprep.subr.mxu0 0.0
    %3646 = vmatpush2.msra.mxu0 0.0
    %3647 = vmatprep.subr.mxu0 0.0
    %3648 = vmatpush2.msra.mxu0 0.0
    %3649 = vmatprep.mubr.f32.mxu0 0.0
    %3650 = vmatmul.mubr.f32.gmra.mxu0 %v2889
    %v3651 = vpop.f32.mrf.mxu0
    %v3652 = vadd.f32 0.0, %v3651
    %v3653 = vpop.f32.mrf.mxu0
    %v3654 = vadd.f32 0.0, %v3653
    %3655 = vdwg.mxu0
    %v3656 = vadd.f32 %v3439, %v3581
    %v3657 = vadd.f32 %v3441, %v3583
    %v3658 = vadd.f32 %v3510, %v3652
    %v3659 = vadd.f32 %v3512, %v3654
    %v3660 = vxor.u32 %v3656, 2147483648
    %v3661 = vxor.u32 %v3657, 2147483648
    %v3662 = vxor.u32 %v3658, 2147483648
    %v3663 = vmul.f32 %v3660, 1.442695
    %v3664 = vpow.pop %v3663
    %v3665 = vmul.f32 %v3661, 1.442695
    %v3666 = vpow.pop %v3665
    %v3667 = vmul.f32 %v3662, 1.442695
    %v3668 = vpow.pop %v3667
    %v3669 = vadd.f32 %v3664, 1.0
    %v3670 = vadd.f32 %v3666, 1.0
    %v3671 = vadd.f32 %v3668, 1.0
    %v3672 = vrcp.pop %v3669
    %v3673 = vmul.f32 1.0, %v3672
    %v3674 = vrcp.pop %v3670
    %v3675 = vmul.f32 1.0, %v3674
    %v3676 = vrcp.pop %v3671
    %v3677 = vmul.f32 1.0, %v3676
    %v3678 = vtanh.pop %v3659
    %v3679 = vmul.f32 %v3675, %v2887
    %v3680 = vmul.f32 %v3673, %v3678
    %v3681 = vadd.f32 %v3679, %v3680
    %v3682 = vtanh.pop %v3681
    %v3683 = vmul.f32 %v3677, %v3682
    %3684 = vmatprep.subr.mxu0 %v197
    %3685 = vmatpush1.msra.mxu0 %v196
    %3686 = vmatprep.subr.mxu0 %v193
    %3687 = vmatpush1.msra.mxu0 %v192
    %3688 = vmatprep.subr.mxu0 %v189
    %3689 = vmatpush1.msra.mxu0 %v188
    %3690 = vmatprep.subr.mxu0 %v185
    %3691 = vmatpush1.msra.mxu0 %v184
    %3692 = vmatprep.subr.mxu0 %v181
    %3693 = vmatpush1.msra.mxu0 %v180
    %3694 = vmatprep.subr.mxu0 %v177
    %3695 = vmatpush1.msra.mxu0 %v176
    %3696 = vmatprep.subr.mxu0 %v173
    %3697 = vmatpush1.msra.mxu0 %v172
    %3698 = vmatprep.subr.mxu0 %v169
    %3699 = vmatpush1.msra.mxu0 %v168
    %3700 = vmatprep.subr.mxu0 %v165
    %3701 = vmatpush1.msra.mxu0 %v164
    %3702 = vmatprep.subr.mxu0 %v161
    %3703 = vmatpush1.msra.mxu0 %v160
    %3704 = vmatprep.subr.mxu0 %v157
    %3705 = vmatpush1.msra.mxu0 %v156
    %3706 = vmatprep.subr.mxu0 %v153
    %3707 = vmatpush1.msra.mxu0 %v152
    %3708 = vmatprep.subr.mxu0 %v149
    %3709 = vmatpush1.msra.mxu0 %v148
    %3710 = vmatprep.subr.mxu0 %v145
    %3711 = vmatpush1.msra.mxu0 %v144
    %3712 = vmatprep.subr.mxu0 %v141
    %3713 = vmatpush1.msra.mxu0 %v140
    %3714 = vmatprep.subr.mxu0 %v137
    %3715 = vmatpush1.msra.mxu0 %v136
    %3716 = vmatprep.subr.mxu0 0.0
    %3717 = vmatpush2.msra.mxu0 0.0
    %3718 = vmatprep.subr.mxu0 0.0
    %3719 = vmatpush2.msra.mxu0 0.0
    %3720 = vmatprep.subr.mxu0 0.0
    %3721 = vmatpush2.msra.mxu0 0.0
    %3722 = vmatprep.subr.mxu0 0.0
    %3723 = vmatpush2.msra.mxu0 0.0
    %3724 = vmatprep.subr.mxu0 0.0
    %3725 = vmatpush2.msra.mxu0 0.0
    %3726 = vmatprep.subr.mxu0 0.0
    %3727 = vmatpush2.msra.mxu0 0.0
    %3728 = vmatprep.subr.mxu0 0.0
    %3729 = vmatpush2.msra.mxu0 0.0
    %3730 = vmatprep.subr.mxu0 0.0
    %3731 = vmatpush2.msra.mxu0 0.0
    %3732 = vmatprep.subr.mxu0 0.0
    %3733 = vmatpush2.msra.mxu0 0.0
    %3734 = vmatprep.subr.mxu0 0.0
    %3735 = vmatpush2.msra.mxu0 0.0
    %3736 = vmatprep.subr.mxu0 0.0
    %3737 = vmatpush2.msra.mxu0 0.0
    %3738 = vmatprep.subr.mxu0 0.0
    %3739 = vmatpush2.msra.mxu0 0.0
    %3740 = vmatprep.subr.mxu0 0.0
    %3741 = vmatpush2.msra.mxu0 0.0
    %3742 = vmatprep.subr.mxu0 0.0
    %3743 = vmatpush2.msra.mxu0 0.0
    %3744 = vmatprep.subr.mxu0 0.0
    %3745 = vmatpush2.msra.mxu0 0.0
    %3746 = vmatprep.subr.mxu0 0.0
    %3747 = vmatpush2.msra.mxu0 0.0
    %3748 = vmatprep.mubr.f32.mxu0 0.0
    %3749 = vmatmul.mubr.f32.gmra.mxu0 %v3059
    %v3750 = vpop.f32.mrf.mxu0
    %v3751 = vadd.f32 0.0, %v3750
    %v3752 = vpop.f32.mrf.mxu0
    %v3753 = vadd.f32 0.0, %v3752
    %3754 = vdwg.mxu0
    %3755 = vmatprep.subr.mxu0 %v199
    %3756 = vmatpush1.msra.mxu0 %v198
    %3757 = vmatprep.subr.mxu0 %v195
    %3758 = vmatpush1.msra.mxu0 %v194
    %3759 = vmatprep.subr.mxu0 %v191
    %3760 = vmatpush1.msra.mxu0 %v190
    %3761 = vmatprep.subr.mxu0 %v187
    %3762 = vmatpush1.msra.mxu0 %v186
    %3763 = vmatprep.subr.mxu0 %v183
    %3764 = vmatpush1.msra.mxu0 %v182
    %3765 = vmatprep.subr.mxu0 %v179
    %3766 = vmatpush1.msra.mxu0 %v178
    %3767 = vmatprep.subr.mxu0 %v175
    %3768 = vmatpush1.msra.mxu0 %v174
    %3769 = vmatprep.subr.mxu0 %v171
    %3770 = vmatpush1.msra.mxu0 %v170
    %3771 = vmatprep.subr.mxu0 %v167
    %3772 = vmatpush1.msra.mxu0 %v166
    %3773 = vmatprep.subr.mxu0 %v163
    %3774 = vmatpush1.msra.mxu0 %v162
    %3775 = vmatprep.subr.mxu0 %v159
    %3776 = vmatpush1.msra.mxu0 %v158
    %3777 = vmatprep.subr.mxu0 %v155
    %3778 = vmatpush1.msra.mxu0 %v154
    %3779 = vmatprep.subr.mxu0 %v151
    %3780 = vmatpush1.msra.mxu0 %v150
    %3781 = vmatprep.subr.mxu0 %v147
    %3782 = vmatpush1.msra.mxu0 %v146
    %3783 = vmatprep.subr.mxu0 %v143
    %3784 = vmatpush1.msra.mxu0 %v142
    %3785 = vmatprep.subr.mxu0 %v139
    %3786 = vmatpush1.msra.mxu0 %v138
    %3787 = vmatprep.subr.mxu0 0.0
    %3788 = vmatpush2.msra.mxu0 0.0
    %3789 = vmatprep.subr.mxu0 0.0
    %3790 = vmatpush2.msra.mxu0 0.0
    %3791 = vmatprep.subr.mxu0 0.0
    %3792 = vmatpush2.msra.mxu0 0.0
    %3793 = vmatprep.subr.mxu0 0.0
    %3794 = vmatpush2.msra.mxu0 0.0
    %3795 = vmatprep.subr.mxu0 0.0
    %3796 = vmatpush2.msra.mxu0 0.0
    %3797 = vmatprep.subr.mxu0 0.0
    %3798 = vmatpush2.msra.mxu0 0.0
    %3799 = vmatprep.subr.mxu0 0.0
    %3800 = vmatpush2.msra.mxu0 0.0
    %3801 = vmatprep.subr.mxu0 0.0
    %3802 = vmatpush2.msra.mxu0 0.0
    %3803 = vmatprep.subr.mxu0 0.0
    %3804 = vmatpush2.msra.mxu0 0.0
    %3805 = vmatprep.subr.mxu0 0.0
    %3806 = vmatpush2.msra.mxu0 0.0
    %3807 = vmatprep.subr.mxu0 0.0
    %3808 = vmatpush2.msra.mxu0 0.0
    %3809 = vmatprep.subr.mxu0 0.0
    %3810 = vmatpush2.msra.mxu0 0.0
    %3811 = vmatprep.subr.mxu0 0.0
    %3812 = vmatpush2.msra.mxu0 0.0
    %3813 = vmatprep.subr.mxu0 0.0
    %3814 = vmatpush2.msra.mxu0 0.0
    %3815 = vmatprep.subr.mxu0 0.0
    %3816 = vmatpush2.msra.mxu0 0.0
    %3817 = vmatprep.subr.mxu0 0.0
    %3818 = vmatpush2.msra.mxu0 0.0
    %3819 = vmatprep.mubr.f32.mxu0 0.0
    %3820 = vmatmul.mubr.f32.gmra.mxu0 %v3059
    %v3821 = vpop.f32.mrf.mxu0
    %v3822 = vadd.f32 0.0, %v3821
    %v3823 = vpop.f32.mrf.mxu0
    %v3824 = vadd.f32 0.0, %v3823
    %3825 = vdwg.mxu0
    %v3826 = vadd.f32 %v685, %v3751
    %v3827 = vadd.f32 %v687, %v3753
    %v3828 = vadd.f32 %v798, %v3822
    %v3829 = vadd.f32 %v800, %v3824
    %v3830 = vxor.u32 %v3826, 2147483648
    %v3831 = vxor.u32 %v3827, 2147483648
    %v3832 = vxor.u32 %v3828, 2147483648
    %v3833 = vmul.f32 %v3830, 1.442695
    %v3834 = vpow.pop %v3833
    %v3835 = vmul.f32 %v3831, 1.442695
    %v3836 = vpow.pop %v3835
    %v3837 = vmul.f32 %v3832, 1.442695
    %v3838 = vpow.pop %v3837
    %v3839 = vadd.f32 %v3834, 1.0
    %v3840 = vadd.f32 %v3836, 1.0
    %v3841 = vadd.f32 %v3838, 1.0
    %v3842 = vrcp.pop %v3839
    %v3843 = vmul.f32 1.0, %v3842
    %v3844 = vrcp.pop %v3840
    %v3845 = vmul.f32 1.0, %v3844
    %v3846 = vrcp.pop %v3841
    %v3847 = vmul.f32 1.0, %v3846
    %v3848 = vtanh.pop %v3829
    %v3849 = vmul.f32 %v3845, %v3057
    %v3850 = vmul.f32 %v3843, %v3848
    %v3851 = vadd.f32 %v3849, %v3850
    %v3852 = vtanh.pop %v3851
    %v3853 = vmul.f32 %v3847, %v3852
    %3854 = vmatprep.subr.mxu0 %v389
    %3855 = vmatpush1.msra.mxu0 %v388
    %3856 = vmatprep.subr.mxu0 %v385
    %3857 = vmatpush1.msra.mxu0 %v384
    %3858 = vmatprep.subr.mxu0 %v381
    %3859 = vmatpush1.msra.mxu0 %v380
    %3860 = vmatprep.subr.mxu0 %v377
    %3861 = vmatpush1.msra.mxu0 %v376
    %3862 = vmatprep.subr.mxu0 %v373
    %3863 = vmatpush1.msra.mxu0 %v372
    %3864 = vmatprep.subr.mxu0 %v369
    %3865 = vmatpush1.msra.mxu0 %v368
    %3866 = vmatprep.subr.mxu0 %v365
    %3867 = vmatpush1.msra.mxu0 %v364
    %3868 = vmatprep.subr.mxu0 %v361
    %3869 = vmatpush1.msra.mxu0 %v360
    %3870 = vmatprep.subr.mxu0 %v357
    %3871 = vmatpush1.msra.mxu0 %v356
    %3872 = vmatprep.subr.mxu0 %v353
    %3873 = vmatpush1.msra.mxu0 %v352
    %3874 = vmatprep.subr.mxu0 %v349
    %3875 = vmatpush1.msra.mxu0 %v348
    %3876 = vmatprep.subr.mxu0 %v345
    %3877 = vmatpush1.msra.mxu0 %v344
    %3878 = vmatprep.subr.mxu0 %v341
    %3879 = vmatpush1.msra.mxu0 %v340
    %3880 = vmatprep.subr.mxu0 %v337
    %3881 = vmatpush1.msra.mxu0 %v336
    %3882 = vmatprep.subr.mxu0 %v333
    %3883 = vmatpush1.msra.mxu0 %v332
    %3884 = vmatprep.subr.mxu0 %v329
    %3885 = vmatpush1.msra.mxu0 %v328
    %3886 = vmatprep.subr.mxu0 0.0
    %3887 = vmatpush2.msra.mxu0 0.0
    %3888 = vmatprep.subr.mxu0 0.0
    %3889 = vmatpush2.msra.mxu0 0.0
    %3890 = vmatprep.subr.mxu0 0.0
    %3891 = vmatpush2.msra.mxu0 0.0
    %3892 = vmatprep.subr.mxu0 0.0
    %3893 = vmatpush2.msra.mxu0 0.0
    %3894 = vmatprep.subr.mxu0 0.0
    %3895 = vmatpush2.msra.mxu0 0.0
    %3896 = vmatprep.subr.mxu0 0.0
    %3897 = vmatpush2.msra.mxu0 0.0
    %3898 = vmatprep.subr.mxu0 0.0
    %3899 = vmatpush2.msra.mxu0 0.0
    %3900 = vmatprep.subr.mxu0 0.0
    %3901 = vmatpush2.msra.mxu0 0.0
    %3902 = vmatprep.subr.mxu0 0.0
    %3903 = vmatpush2.msra.mxu0 0.0
    %3904 = vmatprep.subr.mxu0 0.0
    %3905 = vmatpush2.msra.mxu0 0.0
    %3906 = vmatprep.subr.mxu0 0.0
    %3907 = vmatpush2.msra.mxu0 0.0
    %3908 = vmatprep.subr.mxu0 0.0
    %3909 = vmatpush2.msra.mxu0 0.0
    %3910 = vmatprep.subr.mxu0 0.0
    %3911 = vmatpush2.msra.mxu0 0.0
    %3912 = vmatprep.subr.mxu0 0.0
    %3913 = vmatpush2.msra.mxu0 0.0
    %3914 = vmatprep.subr.mxu0 0.0
    %3915 = vmatpush2.msra.mxu0 0.0
    %3916 = vmatprep.subr.mxu0 0.0
    %3917 = vmatpush2.msra.mxu0 0.0
    %3918 = vmatprep.mubr.f32.mxu0 0.0
    %3919 = vmatmul.mubr.f32.gmra.mxu0 %v3683
    %v3920 = vpop.f32.mrf.mxu0
    %v3921 = vadd.f32 %v483, %v3920
    %v3922 = vpop.f32.mrf.mxu0
    %v3923 = vadd.f32 %v487, %v3922
    %3924 = vdwg.mxu0
    %3925 = vmatprep.subr.mxu0 %v391
    %3926 = vmatpush1.msra.mxu0 %v390
    %3927 = vmatprep.subr.mxu0 %v387
    %3928 = vmatpush1.msra.mxu0 %v386
    %3929 = vmatprep.subr.mxu0 %v383
    %3930 = vmatpush1.msra.mxu0 %v382
    %3931 = vmatprep.subr.mxu0 %v379
    %3932 = vmatpush1.msra.mxu0 %v378
    %3933 = vmatprep.subr.mxu0 %v375
    %3934 = vmatpush1.msra.mxu0 %v374
    %3935 = vmatprep.subr.mxu0 %v371
    %3936 = vmatpush1.msra.mxu0 %v370
    %3937 = vmatprep.subr.mxu0 %v367
    %3938 = vmatpush1.msra.mxu0 %v366
    %3939 = vmatprep.subr.mxu0 %v363
    %3940 = vmatpush1.msra.mxu0 %v362
    %3941 = vmatprep.subr.mxu0 %v359
    %3942 = vmatpush1.msra.mxu0 %v358
    %3943 = vmatprep.subr.mxu0 %v355
    %3944 = vmatpush1.msra.mxu0 %v354
    %3945 = vmatprep.subr.mxu0 %v351
    %3946 = vmatpush1.msra.mxu0 %v350
    %3947 = vmatprep.subr.mxu0 %v347
    %3948 = vmatpush1.msra.mxu0 %v346
    %3949 = vmatprep.subr.mxu0 %v343
    %3950 = vmatpush1.msra.mxu0 %v342
    %3951 = vmatprep.subr.mxu0 %v339
    %3952 = vmatpush1.msra.mxu0 %v338
    %3953 = vmatprep.subr.mxu0 %v335
    %3954 = vmatpush1.msra.mxu0 %v334
    %3955 = vmatprep.subr.mxu0 %v331
    %3956 = vmatpush1.msra.mxu0 %v330
    %3957 = vmatprep.subr.mxu0 0.0
    %3958 = vmatpush2.msra.mxu0 0.0
    %3959 = vmatprep.subr.mxu0 0.0
    %3960 = vmatpush2.msra.mxu0 0.0
    %3961 = vmatprep.subr.mxu0 0.0
    %3962 = vmatpush2.msra.mxu0 0.0
    %3963 = vmatprep.subr.mxu0 0.0
    %3964 = vmatpush2.msra.mxu0 0.0
    %3965 = vmatprep.subr.mxu0 0.0
    %3966 = vmatpush2.msra.mxu0 0.0
    %3967 = vmatprep.subr.mxu0 0.0
    %3968 = vmatpush2.msra.mxu0 0.0
    %3969 = vmatprep.subr.mxu0 0.0
    %3970 = vmatpush2.msra.mxu0 0.0
    %3971 = vmatprep.subr.mxu0 0.0
    %3972 = vmatpush2.msra.mxu0 0.0
    %3973 = vmatprep.subr.mxu0 0.0
    %3974 = vmatpush2.msra.mxu0 0.0
    %3975 = vmatprep.subr.mxu0 0.0
    %3976 = vmatpush2.msra.mxu0 0.0
    %3977 = vmatprep.subr.mxu0 0.0
    %3978 = vmatpush2.msra.mxu0 0.0
    %3979 = vmatprep.subr.mxu0 0.0
    %3980 = vmatpush2.msra.mxu0 0.0
    %3981 = vmatprep.subr.mxu0 0.0
    %3982 = vmatpush2.msra.mxu0 0.0
    %3983 = vmatprep.subr.mxu0 0.0
    %3984 = vmatpush2.msra.mxu0 0.0
    %3985 = vmatprep.subr.mxu0 0.0
    %3986 = vmatpush2.msra.mxu0 0.0
    %3987 = vmatprep.subr.mxu0 0.0
    %3988 = vmatpush2.msra.mxu0 0.0
    %3989 = vmatprep.mubr.f32.mxu0 0.0
    %3990 = vmatmul.mubr.f32.gmra.mxu0 %v3683
    %v3991 = vpop.f32.mrf.mxu0
    %v3992 = vadd.f32 %v491, %v3991
    %v3993 = vpop.f32.mrf.mxu0
    %v3994 = vadd.f32 %v495, %v3993
    %3995 = vdwg.mxu0
    %3996 = vmatprep.subr.mxu0 %v453
    %3997 = vmatpush1.msra.mxu0 %v452
    %3998 = vmatprep.subr.mxu0 %v449
    %3999 = vmatpush1.msra.mxu0 %v448
    %4000 = vmatprep.subr.mxu0 %v445
    %4001 = vmatpush1.msra.mxu0 %v444
    %4002 = vmatprep.subr.mxu0 %v441
    %4003 = vmatpush1.msra.mxu0 %v440
    %4004 = vmatprep.subr.mxu0 %v437
    %4005 = vmatpush1.msra.mxu0 %v436
    %4006 = vmatprep.subr.mxu0 %v433
    %4007 = vmatpush1.msra.mxu0 %v432
    %4008 = vmatprep.subr.mxu0 %v429
    %4009 = vmatpush1.msra.mxu0 %v428
    %4010 = vmatprep.subr.mxu0 %v425
    %4011 = vmatpush1.msra.mxu0 %v424
    %4012 = vmatprep.subr.mxu0 %v421
    %4013 = vmatpush1.msra.mxu0 %v420
    %4014 = vmatprep.subr.mxu0 %v417
    %4015 = vmatpush1.msra.mxu0 %v416
    %4016 = vmatprep.subr.mxu0 %v413
    %4017 = vmatpush1.msra.mxu0 %v412
    %4018 = vmatprep.subr.mxu0 %v409
    %4019 = vmatpush1.msra.mxu0 %v408
    %4020 = vmatprep.subr.mxu0 %v405
    %4021 = vmatpush1.msra.mxu0 %v404
    %4022 = vmatprep.subr.mxu0 %v401
    %4023 = vmatpush1.msra.mxu0 %v400
    %4024 = vmatprep.subr.mxu0 %v397
    %4025 = vmatpush1.msra.mxu0 %v396
    %4026 = vmatprep.subr.mxu0 %v393
    %4027 = vmatpush1.msra.mxu0 %v392
    %4028 = vmatprep.subr.mxu0 0.0
    %4029 = vmatpush2.msra.mxu0 0.0
    %4030 = vmatprep.subr.mxu0 0.0
    %4031 = vmatpush2.msra.mxu0 0.0
    %4032 = vmatprep.subr.mxu0 0.0
    %4033 = vmatpush2.msra.mxu0 0.0
    %4034 = vmatprep.subr.mxu0 0.0
    %4035 = vmatpush2.msra.mxu0 0.0
    %4036 = vmatprep.subr.mxu0 0.0
    %4037 = vmatpush2.msra.mxu0 0.0
    %4038 = vmatprep.subr.mxu0 0.0
    %4039 = vmatpush2.msra.mxu0 0.0
    %4040 = vmatprep.subr.mxu0 0.0
    %4041 = vmatpush2.msra.mxu0 0.0
    %4042 = vmatprep.subr.mxu0 0.0
    %4043 = vmatpush2.msra.mxu0 0.0
    %4044 = vmatprep.subr.mxu0 0.0
    %4045 = vmatpush2.msra.mxu0 0.0
    %4046 = vmatprep.subr.mxu0 0.0
    %4047 = vmatpush2.msra.mxu0 0.0
    %4048 = vmatprep.subr.mxu0 0.0
    %4049 = vmatpush2.msra.mxu0 0.0
    %4050 = vmatprep.subr.mxu0 0.0
    %4051 = vmatpush2.msra.mxu0 0.0
    %4052 = vmatprep.subr.mxu0 0.0
    %4053 = vmatpush2.msra.mxu0 0.0
    %4054 = vmatprep.subr.mxu0 0.0
    %4055 = vmatpush2.msra.mxu0 0.0
    %4056 = vmatprep.subr.mxu0 0.0
    %4057 = vmatpush2.msra.mxu0 0.0
    %4058 = vmatprep.subr.mxu0 0.0
    %4059 = vmatpush2.msra.mxu0 0.0
    %4060 = vmatprep.mubr.f32.mxu0 0.0
    %4061 = vmatmul.mubr.f32.gmra.mxu0 %v3371
    %v4062 = vpop.f32.mrf.mxu0
    %v4063 = vadd.f32 0.0, %v4062
    %v4064 = vpop.f32.mrf.mxu0
    %v4065 = vadd.f32 0.0, %v4064
    %4066 = vdwg.mxu0
    %4067 = vmatprep.subr.mxu0 %v455
    %4068 = vmatpush1.msra.mxu0 %v454
    %4069 = vmatprep.subr.mxu0 %v451
    %4070 = vmatpush1.msra.mxu0 %v450
    %4071 = vmatprep.subr.mxu0 %v447
    %4072 = vmatpush1.msra.mxu0 %v446
    %4073 = vmatprep.subr.mxu0 %v443
    %4074 = vmatpush1.msra.mxu0 %v442
    %4075 = vmatprep.subr.mxu0 %v439
    %4076 = vmatpush1.msra.mxu0 %v438
    %4077 = vmatprep.subr.mxu0 %v435
    %4078 = vmatpush1.msra.mxu0 %v434
    %4079 = vmatprep.subr.mxu0 %v431
    %4080 = vmatpush1.msra.mxu0 %v430
    %4081 = vmatprep.subr.mxu0 %v427
    %4082 = vmatpush1.msra.mxu0 %v426
    %4083 = vmatprep.subr.mxu0 %v423
    %4084 = vmatpush1.msra.mxu0 %v422
    %4085 = vmatprep.subr.mxu0 %v419
    %4086 = vmatpush1.msra.mxu0 %v418
    %4087 = vmatprep.subr.mxu0 %v415
    %4088 = vmatpush1.msra.mxu0 %v414
    %4089 = vmatprep.subr.mxu0 %v411
    %4090 = vmatpush1.msra.mxu0 %v410
    %4091 = vmatprep.subr.mxu0 %v407
    %4092 = vmatpush1.msra.mxu0 %v406
    %4093 = vmatprep.subr.mxu0 %v403
    %4094 = vmatpush1.msra.mxu0 %v402
    %4095 = vmatprep.subr.mxu0 %v399
    %4096 = vmatpush1.msra.mxu0 %v398
    %4097 = vmatprep.subr.mxu0 %v395
    %4098 = vmatpush1.msra.mxu0 %v394
    %4099 = vmatprep.subr.mxu0 0.0
    %4100 = vmatpush2.msra.mxu0 0.0
    %4101 = vmatprep.subr.mxu0 0.0
    %4102 = vmatpush2.msra.mxu0 0.0
    %4103 = vmatprep.subr.mxu0 0.0
    %4104 = vmatpush2.msra.mxu0 0.0
    %4105 = vmatprep.subr.mxu0 0.0
    %4106 = vmatpush2.msra.mxu0 0.0
    %4107 = vmatprep.subr.mxu0 0.0
    %4108 = vmatpush2.msra.mxu0 0.0
    %4109 = vmatprep.subr.mxu0 0.0
    %4110 = vmatpush2.msra.mxu0 0.0
    %4111 = vmatprep.subr.mxu0 0.0
    %4112 = vmatpush2.msra.mxu0 0.0
    %4113 = vmatprep.subr.mxu0 0.0
    %4114 = vmatpush2.msra.mxu0 0.0
    %4115 = vmatprep.subr.mxu0 0.0
    %4116 = vmatpush2.msra.mxu0 0.0
    %4117 = vmatprep.subr.mxu0 0.0
    %4118 = vmatpush2.msra.mxu0 0.0
    %4119 = vmatprep.subr.mxu0 0.0
    %4120 = vmatpush2.msra.mxu0 0.0
    %4121 = vmatprep.subr.mxu0 0.0
    %4122 = vmatpush2.msra.mxu0 0.0
    %4123 = vmatprep.subr.mxu0 0.0
    %4124 = vmatpush2.msra.mxu0 0.0
    %4125 = vmatprep.subr.mxu0 0.0
    %4126 = vmatpush2.msra.mxu0 0.0
    %4127 = vmatprep.subr.mxu0 0.0
    %4128 = vmatpush2.msra.mxu0 0.0
    %4129 = vmatprep.subr.mxu0 0.0
    %4130 = vmatpush2.msra.mxu0 0.0
    %4131 = vmatprep.mubr.f32.mxu0 0.0
    %4132 = vmatmul.mubr.f32.gmra.mxu0 %v3371
    %v4133 = vpop.f32.mrf.mxu0
    %v4134 = vadd.f32 0.0, %v4133
    %v4135 = vpop.f32.mrf.mxu0
    %v4136 = vadd.f32 0.0, %v4135
    %4137 = vdwg.mxu0
    %v4138 = vadd.f32 %v3921, %v4063
    %v4139 = vadd.f32 %v3923, %v4065
    %v4140 = vadd.f32 %v3992, %v4134
    %v4141 = vadd.f32 %v3994, %v4136
    %v4142 = vxor.u32 %v4138, 2147483648
    %v4143 = vxor.u32 %v4139, 2147483648
    %v4144 = vxor.u32 %v4140, 2147483648
    %v4145 = vmul.f32 %v4142, 1.442695
    %v4146 = vpow.pop %v4145
    %v4147 = vmul.f32 %v4143, 1.442695
    %v4148 = vpow.pop %v4147
    %v4149 = vmul.f32 %v4144, 1.442695
    %v4150 = vpow.pop %v4149
    %v4151 = vadd.f32 %v4146, 1.0
    %v4152 = vadd.f32 %v4148, 1.0
    %v4153 = vadd.f32 %v4150, 1.0
    %v4154 = vrcp.pop %v4151
    %v4155 = vmul.f32 1.0, %v4154
    %v4156 = vrcp.pop %v4152
    %v4157 = vmul.f32 1.0, %v4156
    %v4158 = vrcp.pop %v4153
    %v4159 = vmul.f32 1.0, %v4158
    %v4160 = vtanh.pop %v4141
    %v4161 = vmul.f32 %v4157, %v3369
    %v4162 = vmul.f32 %v4155, %v4160
    %v4163 = vadd.f32 %v4161, %v4162
    %v4164 = vtanh.pop %v4163
    %v4165 = vmul.f32 %v4159, %v4164
    %4166 = vmatprep.subr.mxu0 %v261
    %4167 = vmatpush1.msra.mxu0 %v260
    %4168 = vmatprep.subr.mxu0 %v257
    %4169 = vmatpush1.msra.mxu0 %v256
    %4170 = vmatprep.subr.mxu0 %v253
    %4171 = vmatpush1.msra.mxu0 %v252
    %4172 = vmatprep.subr.mxu0 %v249
    %4173 = vmatpush1.msra.mxu0 %v248
    %4174 = vmatprep.subr.mxu0 %v245
    %4175 = vmatpush1.msra.mxu0 %v244
    %4176 = vmatprep.subr.mxu0 %v241
    %4177 = vmatpush1.msra.mxu0 %v240
    %4178 = vmatprep.subr.mxu0 %v237
    %4179 = vmatpush1.msra.mxu0 %v236
    %4180 = vmatprep.subr.mxu0 %v233
    %4181 = vmatpush1.msra.mxu0 %v232
    %4182 = vmatprep.subr.mxu0 %v229
    %4183 = vmatpush1.msra.mxu0 %v228
    %4184 = vmatprep.subr.mxu0 %v225
    %4185 = vmatpush1.msra.mxu0 %v224
    %4186 = vmatprep.subr.mxu0 %v221
    %4187 = vmatpush1.msra.mxu0 %v220
    %4188 = vmatprep.subr.mxu0 %v217
    %4189 = vmatpush1.msra.mxu0 %v216
    %4190 = vmatprep.subr.mxu0 %v213
    %4191 = vmatpush1.msra.mxu0 %v212
    %4192 = vmatprep.subr.mxu0 %v209
    %4193 = vmatpush1.msra.mxu0 %v208
    %4194 = vmatprep.subr.mxu0 %v205
    %4195 = vmatpush1.msra.mxu0 %v204
    %4196 = vmatprep.subr.mxu0 %v201
    %4197 = vmatpush1.msra.mxu0 %v200
    %4198 = vmatprep.subr.mxu0 0.0
    %4199 = vmatpush2.msra.mxu0 0.0
    %4200 = vmatprep.subr.mxu0 0.0
    %4201 = vmatpush2.msra.mxu0 0.0
    %4202 = vmatprep.subr.mxu0 0.0
    %4203 = vmatpush2.msra.mxu0 0.0
    %4204 = vmatprep.subr.mxu0 0.0
    %4205 = vmatpush2.msra.mxu0 0.0
    %4206 = vmatprep.subr.mxu0 0.0
    %4207 = vmatpush2.msra.mxu0 0.0
    %4208 = vmatprep.subr.mxu0 0.0
    %4209 = vmatpush2.msra.mxu0 0.0
    %4210 = vmatprep.subr.mxu0 0.0
    %4211 = vmatpush2.msra.mxu0 0.0
    %4212 = vmatprep.subr.mxu0 0.0
    %4213 = vmatpush2.msra.mxu0 0.0
    %4214 = vmatprep.subr.mxu0 0.0
    %4215 = vmatpush2.msra.mxu0 0.0
    %4216 = vmatprep.subr.mxu0 0.0
    %4217 = vmatpush2.msra.mxu0 0.0
    %4218 = vmatprep.subr.mxu0 0.0
    %4219 = vmatpush2.msra.mxu0 0.0
    %4220 = vmatprep.subr.mxu0 0.0
    %4221 = vmatpush2.msra.mxu0 0.0
    %4222 = vmatprep.subr.mxu0 0.0
    %4223 = vmatpush2.msra.mxu0 0.0
    %4224 = vmatprep.subr.mxu0 0.0
    %4225 = vmatpush2.msra.mxu0 0.0
    %4226 = vmatprep.subr.mxu0 0.0
    %4227 = vmatpush2.msra.mxu0 0.0
    %4228 = vmatprep.subr.mxu0 0.0
    %4229 = vmatpush2.msra.mxu0 0.0
    %4230 = vmatprep.mubr.f32.mxu0 0.0
    %4231 = vmatmul.mubr.f32.gmra.mxu0 %v3853
    %v4232 = vpop.f32.mrf.mxu0
    %v4233 = vadd.f32 %v461, %v4232
    %v4234 = vpop.f32.mrf.mxu0
    %v4235 = vadd.f32 %v465, %v4234
    %4236 = vdwg.mxu0
    %4237 = vmatprep.subr.mxu0 %v263
    %4238 = vmatpush1.msra.mxu0 %v262
    %4239 = vmatprep.subr.mxu0 %v259
    %4240 = vmatpush1.msra.mxu0 %v258
    %4241 = vmatprep.subr.mxu0 %v255
    %4242 = vmatpush1.msra.mxu0 %v254
    %4243 = vmatprep.subr.mxu0 %v251
    %4244 = vmatpush1.msra.mxu0 %v250
    %4245 = vmatprep.subr.mxu0 %v247
    %4246 = vmatpush1.msra.mxu0 %v246
    %4247 = vmatprep.subr.mxu0 %v243
    %4248 = vmatpush1.msra.mxu0 %v242
    %4249 = vmatprep.subr.mxu0 %v239
    %4250 = vmatpush1.msra.mxu0 %v238
    %4251 = vmatprep.subr.mxu0 %v235
    %4252 = vmatpush1.msra.mxu0 %v234
    %4253 = vmatprep.subr.mxu0 %v231
    %4254 = vmatpush1.msra.mxu0 %v230
    %4255 = vmatprep.subr.mxu0 %v227
    %4256 = vmatpush1.msra.mxu0 %v226
    %4257 = vmatprep.subr.mxu0 %v223
    %4258 = vmatpush1.msra.mxu0 %v222
    %4259 = vmatprep.subr.mxu0 %v219
    %4260 = vmatpush1.msra.mxu0 %v218
    %4261 = vmatprep.subr.mxu0 %v215
    %4262 = vmatpush1.msra.mxu0 %v214
    %4263 = vmatprep.subr.mxu0 %v211
    %4264 = vmatpush1.msra.mxu0 %v210
    %4265 = vmatprep.subr.mxu0 %v207
    %4266 = vmatpush1.msra.mxu0 %v206
    %4267 = vmatprep.subr.mxu0 %v203
    %4268 = vmatpush1.msra.mxu0 %v202
    %4269 = vmatprep.subr.mxu0 0.0
    %4270 = vmatpush2.msra.mxu0 0.0
    %4271 = vmatprep.subr.mxu0 0.0
    %4272 = vmatpush2.msra.mxu0 0.0
    %4273 = vmatprep.subr.mxu0 0.0
    %4274 = vmatpush2.msra.mxu0 0.0
    %4275 = vmatprep.subr.mxu0 0.0
    %4276 = vmatpush2.msra.mxu0 0.0
    %4277 = vmatprep.subr.mxu0 0.0
    %4278 = vmatpush2.msra.mxu0 0.0
    %4279 = vmatprep.subr.mxu0 0.0
    %4280 = vmatpush2.msra.mxu0 0.0
    %4281 = vmatprep.subr.mxu0 0.0
    %4282 = vmatpush2.msra.mxu0 0.0
    %4283 = vmatprep.subr.mxu0 0.0
    %4284 = vmatpush2.msra.mxu0 0.0
    %4285 = vmatprep.subr.mxu0 0.0
    %4286 = vmatpush2.msra.mxu0 0.0
    %4287 = vmatprep.subr.mxu0 0.0
    %4288 = vmatpush2.msra.mxu0 0.0
    %4289 = vmatprep.subr.mxu0 0.0
    %4290 = vmatpush2.msra.mxu0 0.0
    %4291 = vmatprep.subr.mxu0 0.0
    %4292 = vmatpush2.msra.mxu0 0.0
    %4293 = vmatprep.subr.mxu0 0.0
    %4294 = vmatpush2.msra.mxu0 0.0
    %4295 = vmatprep.subr.mxu0 0.0
    %4296 = vmatpush2.msra.mxu0 0.0
    %4297 = vmatprep.subr.mxu0 0.0
    %4298 = vmatpush2.msra.mxu0 0.0
    %4299 = vmatprep.subr.mxu0 0.0
    %4300 = vmatpush2.msra.mxu0 0.0
    %4301 = vmatprep.mubr.f32.mxu0 0.0
    %4302 = vmatmul.mubr.f32.gmra.mxu0 %v3853
    %v4303 = vpop.f32.mrf.mxu0
    %v4304 = vadd.f32 %v469, %v4303
    %v4305 = vpop.f32.mrf.mxu0
    %v4306 = vadd.f32 %v473, %v4305
    %4307 = vdwg.mxu0
    %4308 = vmatprep.subr.mxu0 %v325
    %4309 = vmatpush1.msra.mxu0 %v324
    %4310 = vmatprep.subr.mxu0 %v321
    %4311 = vmatpush1.msra.mxu0 %v320
    %4312 = vmatprep.subr.mxu0 %v317
    %4313 = vmatpush1.msra.mxu0 %v316
    %4314 = vmatprep.subr.mxu0 %v313
    %4315 = vmatpush1.msra.mxu0 %v312
    %4316 = vmatprep.subr.mxu0 %v309
    %4317 = vmatpush1.msra.mxu0 %v308
    %4318 = vmatprep.subr.mxu0 %v305
    %4319 = vmatpush1.msra.mxu0 %v304
    %4320 = vmatprep.subr.mxu0 %v301
    %4321 = vmatpush1.msra.mxu0 %v300
    %4322 = vmatprep.subr.mxu0 %v297
    %4323 = vmatpush1.msra.mxu0 %v296
    %4324 = vmatprep.subr.mxu0 %v293
    %4325 = vmatpush1.msra.mxu0 %v292
    %4326 = vmatprep.subr.mxu0 %v289
    %4327 = vmatpush1.msra.mxu0 %v288
    %4328 = vmatprep.subr.mxu0 %v285
    %4329 = vmatpush1.msra.mxu0 %v284
    %4330 = vmatprep.subr.mxu0 %v281
    %4331 = vmatpush1.msra.mxu0 %v280
    %4332 = vmatprep.subr.mxu0 %v277
    %4333 = vmatpush1.msra.mxu0 %v276
    %4334 = vmatprep.subr.mxu0 %v273
    %4335 = vmatpush1.msra.mxu0 %v272
    %4336 = vmatprep.subr.mxu0 %v269
    %4337 = vmatpush1.msra.mxu0 %v268
    %4338 = vmatprep.subr.mxu0 %v265
    %4339 = vmatpush1.msra.mxu0 %v264
    %4340 = vmatprep.subr.mxu0 0.0
    %4341 = vmatpush2.msra.mxu0 0.0
    %4342 = vmatprep.subr.mxu0 0.0
    %4343 = vmatpush2.msra.mxu0 0.0
    %4344 = vmatprep.subr.mxu0 0.0
    %4345 = vmatpush2.msra.mxu0 0.0
    %4346 = vmatprep.subr.mxu0 0.0
    %4347 = vmatpush2.msra.mxu0 0.0
    %4348 = vmatprep.subr.mxu0 0.0
    %4349 = vmatpush2.msra.mxu0 0.0
    %4350 = vmatprep.subr.mxu0 0.0
    %4351 = vmatpush2.msra.mxu0 0.0
    %4352 = vmatprep.subr.mxu0 0.0
    %4353 = vmatpush2.msra.mxu0 0.0
    %4354 = vmatprep.subr.mxu0 0.0
    %4355 = vmatpush2.msra.mxu0 0.0
    %4356 = vmatprep.subr.mxu0 0.0
    %4357 = vmatpush2.msra.mxu0 0.0
    %4358 = vmatprep.subr.mxu0 0.0
    %4359 = vmatpush2.msra.mxu0 0.0
    %4360 = vmatprep.subr.mxu0 0.0
    %4361 = vmatpush2.msra.mxu0 0.0
    %4362 = vmatprep.subr.mxu0 0.0
    %4363 = vmatpush2.msra.mxu0 0.0
    %4364 = vmatprep.subr.mxu0 0.0
    %4365 = vmatpush2.msra.mxu0 0.0
    %4366 = vmatprep.subr.mxu0 0.0
    %4367 = vmatpush2.msra.mxu0 0.0
    %4368 = vmatprep.subr.mxu0 0.0
    %4369 = vmatpush2.msra.mxu0 0.0
    %4370 = vmatprep.subr.mxu0 0.0
    %4371 = vmatpush2.msra.mxu0 0.0
    %4372 = vmatprep.mubr.f32.mxu0 0.0
    %4373 = vmatmul.mubr.f32.gmra.mxu0 %v3683
    %v4374 = vpop.f32.mrf.mxu0
    %v4375 = vadd.f32 0.0, %v4374
    %v4376 = vpop.f32.mrf.mxu0
    %v4377 = vadd.f32 0.0, %v4376
    %4378 = vdwg.mxu0
    %4379 = vmatprep.subr.mxu0 %v327
    %4380 = vmatpush1.msra.mxu0 %v326
    %4381 = vmatprep.subr.mxu0 %v323
    %4382 = vmatpush1.msra.mxu0 %v322
    %4383 = vmatprep.subr.mxu0 %v319
    %4384 = vmatpush1.msra.mxu0 %v318
    %4385 = vmatprep.subr.mxu0 %v315
    %4386 = vmatpush1.msra.mxu0 %v314
    %4387 = vmatprep.subr.mxu0 %v311
    %4388 = vmatpush1.msra.mxu0 %v310
    %4389 = vmatprep.subr.mxu0 %v307
    %4390 = vmatpush1.msra.mxu0 %v306
    %4391 = vmatprep.subr.mxu0 %v303
    %4392 = vmatpush1.msra.mxu0 %v302
    %4393 = vmatprep.subr.mxu0 %v299
    %4394 = vmatpush1.msra.mxu0 %v298
    %4395 = vmatprep.subr.mxu0 %v295
    %4396 = vmatpush1.msra.mxu0 %v294
    %4397 = vmatprep.subr.mxu0 %v291
    %4398 = vmatpush1.msra.mxu0 %v290
    %4399 = vmatprep.subr.mxu0 %v287
    %4400 = vmatpush1.msra.mxu0 %v286
    %4401 = vmatprep.subr.mxu0 %v283
    %4402 = vmatpush1.msra.mxu0 %v282
    %4403 = vmatprep.subr.mxu0 %v279
    %4404 = vmatpush1.msra.mxu0 %v278
    %4405 = vmatprep.subr.mxu0 %v275
    %4406 = vmatpush1.msra.mxu0 %v274
    %4407 = vmatprep.subr.mxu0 %v271
    %4408 = vmatpush1.msra.mxu0 %v270
    %4409 = vmatprep.subr.mxu0 %v267
    %4410 = vmatpush1.msra.mxu0 %v266
    %4411 = vmatprep.subr.mxu0 0.0
    %4412 = vmatpush2.msra.mxu0 0.0
    %4413 = vmatprep.subr.mxu0 0.0
    %4414 = vmatpush2.msra.mxu0 0.0
    %4415 = vmatprep.subr.mxu0 0.0
    %4416 = vmatpush2.msra.mxu0 0.0
    %4417 = vmatprep.subr.mxu0 0.0
    %4418 = vmatpush2.msra.mxu0 0.0
    %4419 = vmatprep.subr.mxu0 0.0
    %4420 = vmatpush2.msra.mxu0 0.0
    %4421 = vmatprep.subr.mxu0 0.0
    %4422 = vmatpush2.msra.mxu0 0.0
    %4423 = vmatprep.subr.mxu0 0.0
    %4424 = vmatpush2.msra.mxu0 0.0
    %4425 = vmatprep.subr.mxu0 0.0
    %4426 = vmatpush2.msra.mxu0 0.0
    %4427 = vmatprep.subr.mxu0 0.0
    %4428 = vmatpush2.msra.mxu0 0.0
    %4429 = vmatprep.subr.mxu0 0.0
    %4430 = vmatpush2.msra.mxu0 0.0
    %4431 = vmatprep.subr.mxu0 0.0
    %4432 = vmatpush2.msra.mxu0 0.0
    %4433 = vmatprep.subr.mxu0 0.0
    %4434 = vmatpush2.msra.mxu0 0.0
    %4435 = vmatprep.subr.mxu0 0.0
    %4436 = vmatpush2.msra.mxu0 0.0
    %4437 = vmatprep.subr.mxu0 0.0
    %4438 = vmatpush2.msra.mxu0 0.0
    %4439 = vmatprep.subr.mxu0 0.0
    %4440 = vmatpush2.msra.mxu0 0.0
    %4441 = vmatprep.subr.mxu0 0.0
    %4442 = vmatpush2.msra.mxu0 0.0
    %4443 = vmatprep.mubr.f32.mxu0 0.0
    %4444 = vmatmul.mubr.f32.gmra.mxu0 %v3683
    %v4445 = vpop.f32.mrf.mxu0
    %v4446 = vadd.f32 0.0, %v4445
    %v4447 = vpop.f32.mrf.mxu0
    %v4448 = vadd.f32 0.0, %v4447
    %4449 = vdwg.mxu0
    %v4450 = vadd.f32 %v4233, %v4375
    %v4451 = vadd.f32 %v4235, %v4377
    %v4452 = vadd.f32 %v4304, %v4446
    %v4453 = vadd.f32 %v4306, %v4448
    %v4454 = vxor.u32 %v4450, 2147483648
    %v4455 = vxor.u32 %v4451, 2147483648
    %v4456 = vxor.u32 %v4452, 2147483648
    %v4457 = vmul.f32 %v4454, 1.442695
    %v4458 = vpow.pop %v4457
    %v4459 = vmul.f32 %v4455, 1.442695
    %v4460 = vpow.pop %v4459
    %v4461 = vmul.f32 %v4456, 1.442695
    %v4462 = vpow.pop %v4461
    %v4463 = vadd.f32 %v4458, 1.0
    %v4464 = vadd.f32 %v4460, 1.0
    %v4465 = vadd.f32 %v4462, 1.0
    %v4466 = vrcp.pop %v4463
    %v4467 = vmul.f32 1.0, %v4466
    %v4468 = vrcp.pop %v4464
    %v4469 = vmul.f32 1.0, %v4468
    %v4470 = vrcp.pop %v4465
    %v4471 = vmul.f32 1.0, %v4470
    %v4472 = vtanh.pop %v4453
    %v4473 = vmul.f32 %v4469, %v3681
    %v4474 = vmul.f32 %v4467, %v4472
    %v4475 = vadd.f32 %v4473, %v4474
    %v4476 = vtanh.pop %v4475
    %v4477 = vmul.f32 %v4471, %v4476
    %4478 = vmatprep.subr.mxu0 %v197
    %4479 = vmatpush1.msra.mxu0 %v196
    %4480 = vmatprep.subr.mxu0 %v193
    %4481 = vmatpush1.msra.mxu0 %v192
    %4482 = vmatprep.subr.mxu0 %v189
    %4483 = vmatpush1.msra.mxu0 %v188
    %4484 = vmatprep.subr.mxu0 %v185
    %4485 = vmatpush1.msra.mxu0 %v184
    %4486 = vmatprep.subr.mxu0 %v181
    %4487 = vmatpush1.msra.mxu0 %v180
    %4488 = vmatprep.subr.mxu0 %v177
    %4489 = vmatpush1.msra.mxu0 %v176
    %4490 = vmatprep.subr.mxu0 %v173
    %4491 = vmatpush1.msra.mxu0 %v172
    %4492 = vmatprep.subr.mxu0 %v169
    %4493 = vmatpush1.msra.mxu0 %v168
    %4494 = vmatprep.subr.mxu0 %v165
    %4495 = vmatpush1.msra.mxu0 %v164
    %4496 = vmatprep.subr.mxu0 %v161
    %4497 = vmatpush1.msra.mxu0 %v160
    %4498 = vmatprep.subr.mxu0 %v157
    %4499 = vmatpush1.msra.mxu0 %v156
    %4500 = vmatprep.subr.mxu0 %v153
    %4501 = vmatpush1.msra.mxu0 %v152
    %4502 = vmatprep.subr.mxu0 %v149
    %4503 = vmatpush1.msra.mxu0 %v148
    %4504 = vmatprep.subr.mxu0 %v145
    %4505 = vmatpush1.msra.mxu0 %v144
    %4506 = vmatprep.subr.mxu0 %v141
    %4507 = vmatpush1.msra.mxu0 %v140
    %4508 = vmatprep.subr.mxu0 %v137
    %4509 = vmatpush1.msra.mxu0 %v136
    %4510 = vmatprep.subr.mxu0 0.0
    %4511 = vmatpush2.msra.mxu0 0.0
    %4512 = vmatprep.subr.mxu0 0.0
    %4513 = vmatpush2.msra.mxu0 0.0
    %4514 = vmatprep.subr.mxu0 0.0
    %4515 = vmatpush2.msra.mxu0 0.0
    %4516 = vmatprep.subr.mxu0 0.0
    %4517 = vmatpush2.msra.mxu0 0.0
    %4518 = vmatprep.subr.mxu0 0.0
    %4519 = vmatpush2.msra.mxu0 0.0
    %4520 = vmatprep.subr.mxu0 0.0
    %4521 = vmatpush2.msra.mxu0 0.0
    %4522 = vmatprep.subr.mxu0 0.0
    %4523 = vmatpush2.msra.mxu0 0.0
    %4524 = vmatprep.subr.mxu0 0.0
    %4525 = vmatpush2.msra.mxu0 0.0
    %4526 = vmatprep.subr.mxu0 0.0
    %4527 = vmatpush2.msra.mxu0 0.0
    %4528 = vmatprep.subr.mxu0 0.0
    %4529 = vmatpush2.msra.mxu0 0.0
    %4530 = vmatprep.subr.mxu0 0.0
    %4531 = vmatpush2.msra.mxu0 0.0
    %4532 = vmatprep.subr.mxu0 0.0
    %4533 = vmatpush2.msra.mxu0 0.0
    %4534 = vmatprep.subr.mxu0 0.0
    %4535 = vmatpush2.msra.mxu0 0.0
    %4536 = vmatprep.subr.mxu0 0.0
    %4537 = vmatpush2.msra.mxu0 0.0
    %4538 = vmatprep.subr.mxu0 0.0
    %4539 = vmatpush2.msra.mxu0 0.0
    %4540 = vmatprep.subr.mxu0 0.0
    %4541 = vmatpush2.msra.mxu0 0.0
    %4542 = vmatprep.mubr.f32.mxu0 0.0
    %4543 = vmatmul.mubr.f32.gmra.mxu0 %v3853
    %v4544 = vpop.f32.mrf.mxu0
    %v4545 = vadd.f32 0.0, %v4544
    %v4546 = vpop.f32.mrf.mxu0
    %v4547 = vadd.f32 0.0, %v4546
    %4548 = vdwg.mxu0
    %4549 = vmatprep.subr.mxu0 %v199
    %4550 = vmatpush1.msra.mxu0 %v198
    %4551 = vmatprep.subr.mxu0 %v195
    %4552 = vmatpush1.msra.mxu0 %v194
    %4553 = vmatprep.subr.mxu0 %v191
    %4554 = vmatpush1.msra.mxu0 %v190
    %4555 = vmatprep.subr.mxu0 %v187
    %4556 = vmatpush1.msra.mxu0 %v186
    %4557 = vmatprep.subr.mxu0 %v183
    %4558 = vmatpush1.msra.mxu0 %v182
    %4559 = vmatprep.subr.mxu0 %v179
    %4560 = vmatpush1.msra.mxu0 %v178
    %4561 = vmatprep.subr.mxu0 %v175
    %4562 = vmatpush1.msra.mxu0 %v174
    %4563 = vmatprep.subr.mxu0 %v171
    %4564 = vmatpush1.msra.mxu0 %v170
    %4565 = vmatprep.subr.mxu0 %v167
    %4566 = vmatpush1.msra.mxu0 %v166
    %4567 = vmatprep.subr.mxu0 %v163
    %4568 = vmatpush1.msra.mxu0 %v162
    %4569 = vmatprep.subr.mxu0 %v159
    %4570 = vmatpush1.msra.mxu0 %v158
    %4571 = vmatprep.subr.mxu0 %v155
    %4572 = vmatpush1.msra.mxu0 %v154
    %4573 = vmatprep.subr.mxu0 %v151
    %4574 = vmatpush1.msra.mxu0 %v150
    %4575 = vmatprep.subr.mxu0 %v147
    %4576 = vmatpush1.msra.mxu0 %v146
    %4577 = vmatprep.subr.mxu0 %v143
    %4578 = vmatpush1.msra.mxu0 %v142
    %4579 = vmatprep.subr.mxu0 %v139
    %4580 = vmatpush1.msra.mxu0 %v138
    %4581 = vmatprep.subr.mxu0 0.0
    %4582 = vmatpush2.msra.mxu0 0.0
    %4583 = vmatprep.subr.mxu0 0.0
    %4584 = vmatpush2.msra.mxu0 0.0
    %4585 = vmatprep.subr.mxu0 0.0
    %4586 = vmatpush2.msra.mxu0 0.0
    %4587 = vmatprep.subr.mxu0 0.0
    %4588 = vmatpush2.msra.mxu0 0.0
    %4589 = vmatprep.subr.mxu0 0.0
    %4590 = vmatpush2.msra.mxu0 0.0
    %4591 = vmatprep.subr.mxu0 0.0
    %4592 = vmatpush2.msra.mxu0 0.0
    %4593 = vmatprep.subr.mxu0 0.0
    %4594 = vmatpush2.msra.mxu0 0.0
    %4595 = vmatprep.subr.mxu0 0.0
    %4596 = vmatpush2.msra.mxu0 0.0
    %4597 = vmatprep.subr.mxu0 0.0
    %4598 = vmatpush2.msra.mxu0 0.0
    %4599 = vmatprep.subr.mxu0 0.0
    %4600 = vmatpush2.msra.mxu0 0.0
    %4601 = vmatprep.subr.mxu0 0.0
    %4602 = vmatpush2.msra.mxu0 0.0
    %4603 = vmatprep.subr.mxu0 0.0
    %4604 = vmatpush2.msra.mxu0 0.0
    %4605 = vmatprep.subr.mxu0 0.0
    %4606 = vmatpush2.msra.mxu0 0.0
    %4607 = vmatprep.subr.mxu0 0.0
    %4608 = vmatpush2.msra.mxu0 0.0
    %4609 = vmatprep.subr.mxu0 0.0
    %4610 = vmatpush2.msra.mxu0 0.0
    %4611 = vmatprep.subr.mxu0 0.0
    %4612 = vmatpush2.msra.mxu0 0.0
    %4613 = vmatprep.mubr.f32.mxu0 0.0
    %4614 = vmatmul.mubr.f32.gmra.mxu0 %v3853
    %v4615 = vpop.f32.mrf.mxu0
    %v4616 = vadd.f32 0.0, %v4615
    %v4617 = vpop.f32.mrf.mxu0
    %v4618 = vadd.f32 0.0, %v4617
    %4619 = vdwg.mxu0
    %v4620 = vadd.f32 %v691, %v4545
    %v4621 = vadd.f32 %v693, %v4547
    %v4622 = vadd.f32 %v804, %v4616
    %v4623 = vadd.f32 %v806, %v4618
    %v4624 = vxor.u32 %v4620, 2147483648
    %v4625 = vxor.u32 %v4621, 2147483648
    %v4626 = vxor.u32 %v4622, 2147483648
    %v4627 = vmul.f32 %v4624, 1.442695
    %v4628 = vpow.pop %v4627
    %v4629 = vmul.f32 %v4625, 1.442695
    %v4630 = vpow.pop %v4629
    %v4631 = vmul.f32 %v4626, 1.442695
    %v4632 = vpow.pop %v4631
    %v4633 = vadd.f32 %v4628, 1.0
    %v4634 = vadd.f32 %v4630, 1.0
    %v4635 = vadd.f32 %v4632, 1.0
    %v4636 = vrcp.pop %v4633
    %v4637 = vmul.f32 1.0, %v4636
    %v4638 = vrcp.pop %v4634
    %v4639 = vmul.f32 1.0, %v4638
    %v4640 = vrcp.pop %v4635
    %v4641 = vmul.f32 1.0, %v4640
    %v4642 = vtanh.pop %v4623
    %v4643 = vmul.f32 %v4639, %v3851
    %v4644 = vmul.f32 %v4637, %v4642
    %v4645 = vadd.f32 %v4643, %v4644
    %v4646 = vtanh.pop %v4645
    %v4647 = vmul.f32 %v4641, %v4646
    %4648 = vmatprep.subr.mxu0 %v389
    %4649 = vmatpush1.msra.mxu0 %v388
    %4650 = vmatprep.subr.mxu0 %v385
    %4651 = vmatpush1.msra.mxu0 %v384
    %4652 = vmatprep.subr.mxu0 %v381
    %4653 = vmatpush1.msra.mxu0 %v380
    %4654 = vmatprep.subr.mxu0 %v377
    %4655 = vmatpush1.msra.mxu0 %v376
    %4656 = vmatprep.subr.mxu0 %v373
    %4657 = vmatpush1.msra.mxu0 %v372
    %4658 = vmatprep.subr.mxu0 %v369
    %4659 = vmatpush1.msra.mxu0 %v368
    %4660 = vmatprep.subr.mxu0 %v365
    %4661 = vmatpush1.msra.mxu0 %v364
    %4662 = vmatprep.subr.mxu0 %v361
    %4663 = vmatpush1.msra.mxu0 %v360
    %4664 = vmatprep.subr.mxu0 %v357
    %4665 = vmatpush1.msra.mxu0 %v356
    %4666 = vmatprep.subr.mxu0 %v353
    %4667 = vmatpush1.msra.mxu0 %v352
    %4668 = vmatprep.subr.mxu0 %v349
    %4669 = vmatpush1.msra.mxu0 %v348
    %4670 = vmatprep.subr.mxu0 %v345
    %4671 = vmatpush1.msra.mxu0 %v344
    %4672 = vmatprep.subr.mxu0 %v341
    %4673 = vmatpush1.msra.mxu0 %v340
    %4674 = vmatprep.subr.mxu0 %v337
    %4675 = vmatpush1.msra.mxu0 %v336
    %4676 = vmatprep.subr.mxu0 %v333
    %4677 = vmatpush1.msra.mxu0 %v332
    %4678 = vmatprep.subr.mxu0 %v329
    %4679 = vmatpush1.msra.mxu0 %v328
    %4680 = vmatprep.subr.mxu0 0.0
    %4681 = vmatpush2.msra.mxu0 0.0
    %4682 = vmatprep.subr.mxu0 0.0
    %4683 = vmatpush2.msra.mxu0 0.0
    %4684 = vmatprep.subr.mxu0 0.0
    %4685 = vmatpush2.msra.mxu0 0.0
    %4686 = vmatprep.subr.mxu0 0.0
    %4687 = vmatpush2.msra.mxu0 0.0
    %4688 = vmatprep.subr.mxu0 0.0
    %4689 = vmatpush2.msra.mxu0 0.0
    %4690 = vmatprep.subr.mxu0 0.0
    %4691 = vmatpush2.msra.mxu0 0.0
    %4692 = vmatprep.subr.mxu0 0.0
    %4693 = vmatpush2.msra.mxu0 0.0
    %4694 = vmatprep.subr.mxu0 0.0
    %4695 = vmatpush2.msra.mxu0 0.0
    %4696 = vmatprep.subr.mxu0 0.0
    %4697 = vmatpush2.msra.mxu0 0.0
    %4698 = vmatprep.subr.mxu0 0.0
    %4699 = vmatpush2.msra.mxu0 0.0
    %4700 = vmatprep.subr.mxu0 0.0
    %4701 = vmatpush2.msra.mxu0 0.0
    %4702 = vmatprep.subr.mxu0 0.0
    %4703 = vmatpush2.msra.mxu0 0.0
    %4704 = vmatprep.subr.mxu0 0.0
    %4705 = vmatpush2.msra.mxu0 0.0
    %4706 = vmatprep.subr.mxu0 0.0
    %4707 = vmatpush2.msra.mxu0 0.0
    %4708 = vmatprep.subr.mxu0 0.0
    %4709 = vmatpush2.msra.mxu0 0.0
    %4710 = vmatprep.subr.mxu0 0.0
    %4711 = vmatpush2.msra.mxu0 0.0
    %4712 = vmatprep.mubr.f32.mxu0 0.0
    %4713 = vmatmul.mubr.f32.gmra.mxu0 %v4477
    %v4714 = vpop.f32.mrf.mxu0
    %v4715 = vadd.f32 %v483, %v4714
    %v4716 = vpop.f32.mrf.mxu0
    %v4717 = vadd.f32 %v487, %v4716
    %4718 = vdwg.mxu0
    %4719 = vmatprep.subr.mxu0 %v391
    %4720 = vmatpush1.msra.mxu0 %v390
    %4721 = vmatprep.subr.mxu0 %v387
    %4722 = vmatpush1.msra.mxu0 %v386
    %4723 = vmatprep.subr.mxu0 %v383
    %4724 = vmatpush1.msra.mxu0 %v382
    %4725 = vmatprep.subr.mxu0 %v379
    %4726 = vmatpush1.msra.mxu0 %v378
    %4727 = vmatprep.subr.mxu0 %v375
    %4728 = vmatpush1.msra.mxu0 %v374
    %4729 = vmatprep.subr.mxu0 %v371
    %4730 = vmatpush1.msra.mxu0 %v370
    %4731 = vmatprep.subr.mxu0 %v367
    %4732 = vmatpush1.msra.mxu0 %v366
    %4733 = vmatprep.subr.mxu0 %v363
    %4734 = vmatpush1.msra.mxu0 %v362
    %4735 = vmatprep.subr.mxu0 %v359
    %4736 = vmatpush1.msra.mxu0 %v358
    %4737 = vmatprep.subr.mxu0 %v355
    %4738 = vmatpush1.msra.mxu0 %v354
    %4739 = vmatprep.subr.mxu0 %v351
    %4740 = vmatpush1.msra.mxu0 %v350
    %4741 = vmatprep.subr.mxu0 %v347
    %4742 = vmatpush1.msra.mxu0 %v346
    %4743 = vmatprep.subr.mxu0 %v343
    %4744 = vmatpush1.msra.mxu0 %v342
    %4745 = vmatprep.subr.mxu0 %v339
    %4746 = vmatpush1.msra.mxu0 %v338
    %4747 = vmatprep.subr.mxu0 %v335
    %4748 = vmatpush1.msra.mxu0 %v334
    %4749 = vmatprep.subr.mxu0 %v331
    %4750 = vmatpush1.msra.mxu0 %v330
    %4751 = vmatprep.subr.mxu0 0.0
    %4752 = vmatpush2.msra.mxu0 0.0
    %4753 = vmatprep.subr.mxu0 0.0
    %4754 = vmatpush2.msra.mxu0 0.0
    %4755 = vmatprep.subr.mxu0 0.0
    %4756 = vmatpush2.msra.mxu0 0.0
    %4757 = vmatprep.subr.mxu0 0.0
    %4758 = vmatpush2.msra.mxu0 0.0
    %4759 = vmatprep.subr.mxu0 0.0
    %4760 = vmatpush2.msra.mxu0 0.0
    %4761 = vmatprep.subr.mxu0 0.0
    %4762 = vmatpush2.msra.mxu0 0.0
    %4763 = vmatprep.subr.mxu0 0.0
    %4764 = vmatpush2.msra.mxu0 0.0
    %4765 = vmatprep.subr.mxu0 0.0
    %4766 = vmatpush2.msra.mxu0 0.0
    %4767 = vmatprep.subr.mxu0 0.0
    %4768 = vmatpush2.msra.mxu0 0.0
    %4769 = vmatprep.subr.mxu0 0.0
    %4770 = vmatpush2.msra.mxu0 0.0
    %4771 = vmatprep.subr.mxu0 0.0
    %4772 = vmatpush2.msra.mxu0 0.0
    %4773 = vmatprep.subr.mxu0 0.0
    %4774 = vmatpush2.msra.mxu0 0.0
    %4775 = vmatprep.subr.mxu0 0.0
    %4776 = vmatpush2.msra.mxu0 0.0
    %4777 = vmatprep.subr.mxu0 0.0
    %4778 = vmatpush2.msra.mxu0 0.0
    %4779 = vmatprep.subr.mxu0 0.0
    %4780 = vmatpush2.msra.mxu0 0.0
    %4781 = vmatprep.subr.mxu0 0.0
    %4782 = vmatpush2.msra.mxu0 0.0
    %4783 = vmatprep.mubr.f32.mxu0 0.0
    %4784 = vmatmul.mubr.f32.gmra.mxu0 %v4477
    %v4785 = vpop.f32.mrf.mxu0
    %v4786 = vadd.f32 %v491, %v4785
    %v4787 = vpop.f32.mrf.mxu0
    %v4788 = vadd.f32 %v495, %v4787
    %4789 = vdwg.mxu0
    %4790 = vmatprep.subr.mxu0 %v453
    %4791 = vmatpush1.msra.mxu0 %v452
    %4792 = vmatprep.subr.mxu0 %v449
    %4793 = vmatpush1.msra.mxu0 %v448
    %4794 = vmatprep.subr.mxu0 %v445
    %4795 = vmatpush1.msra.mxu0 %v444
    %4796 = vmatprep.subr.mxu0 %v441
    %4797 = vmatpush1.msra.mxu0 %v440
    %4798 = vmatprep.subr.mxu0 %v437
    %4799 = vmatpush1.msra.mxu0 %v436
    %4800 = vmatprep.subr.mxu0 %v433
    %4801 = vmatpush1.msra.mxu0 %v432
    %4802 = vmatprep.subr.mxu0 %v429
    %4803 = vmatpush1.msra.mxu0 %v428
    %4804 = vmatprep.subr.mxu0 %v425
    %4805 = vmatpush1.msra.mxu0 %v424
    %4806 = vmatprep.subr.mxu0 %v421
    %4807 = vmatpush1.msra.mxu0 %v420
    %4808 = vmatprep.subr.mxu0 %v417
    %4809 = vmatpush1.msra.mxu0 %v416
    %4810 = vmatprep.subr.mxu0 %v413
    %4811 = vmatpush1.msra.mxu0 %v412
    %4812 = vmatprep.subr.mxu0 %v409
    %4813 = vmatpush1.msra.mxu0 %v408
    %4814 = vmatprep.subr.mxu0 %v405
    %4815 = vmatpush1.msra.mxu0 %v404
    %4816 = vmatprep.subr.mxu0 %v401
    %4817 = vmatpush1.msra.mxu0 %v400
    %4818 = vmatprep.subr.mxu0 %v397
    %4819 = vmatpush1.msra.mxu0 %v396
    %4820 = vmatprep.subr.mxu0 %v393
    %4821 = vmatpush1.msra.mxu0 %v392
    %4822 = vmatprep.subr.mxu0 0.0
    %4823 = vmatpush2.msra.mxu0 0.0
    %4824 = vmatprep.subr.mxu0 0.0
    %4825 = vmatpush2.msra.mxu0 0.0
    %4826 = vmatprep.subr.mxu0 0.0
    %4827 = vmatpush2.msra.mxu0 0.0
    %4828 = vmatprep.subr.mxu0 0.0
    %4829 = vmatpush2.msra.mxu0 0.0
    %4830 = vmatprep.subr.mxu0 0.0
    %4831 = vmatpush2.msra.mxu0 0.0
    %4832 = vmatprep.subr.mxu0 0.0
    %4833 = vmatpush2.msra.mxu0 0.0
    %4834 = vmatprep.subr.mxu0 0.0
    %4835 = vmatpush2.msra.mxu0 0.0
    %4836 = vmatprep.subr.mxu0 0.0
    %4837 = vmatpush2.msra.mxu0 0.0
    %4838 = vmatprep.subr.mxu0 0.0
    %4839 = vmatpush2.msra.mxu0 0.0
    %4840 = vmatprep.subr.mxu0 0.0
    %4841 = vmatpush2.msra.mxu0 0.0
    %4842 = vmatprep.subr.mxu0 0.0
    %4843 = vmatpush2.msra.mxu0 0.0
    %4844 = vmatprep.subr.mxu0 0.0
    %4845 = vmatpush2.msra.mxu0 0.0
    %4846 = vmatprep.subr.mxu0 0.0
    %4847 = vmatpush2.msra.mxu0 0.0
    %4848 = vmatprep.subr.mxu0 0.0
    %4849 = vmatpush2.msra.mxu0 0.0
    %4850 = vmatprep.subr.mxu0 0.0
    %4851 = vmatpush2.msra.mxu0 0.0
    %4852 = vmatprep.subr.mxu0 0.0
    %4853 = vmatpush2.msra.mxu0 0.0
    %4854 = vmatprep.mubr.f32.mxu0 0.0
    %4855 = vmatmul.mubr.f32.gmra.mxu0 %v4165
    %v4856 = vpop.f32.mrf.mxu0
    %v4857 = vadd.f32 0.0, %v4856
    %v4858 = vpop.f32.mrf.mxu0
    %v4859 = vadd.f32 0.0, %v4858
    %4860 = vdwg.mxu0
    %4861 = vmatprep.subr.mxu0 %v455
    %4862 = vmatpush1.msra.mxu0 %v454
    %4863 = vmatprep.subr.mxu0 %v451
    %4864 = vmatpush1.msra.mxu0 %v450
    %4865 = vmatprep.subr.mxu0 %v447
    %4866 = vmatpush1.msra.mxu0 %v446
    %4867 = vmatprep.subr.mxu0 %v443
    %4868 = vmatpush1.msra.mxu0 %v442
    %4869 = vmatprep.subr.mxu0 %v439
    %4870 = vmatpush1.msra.mxu0 %v438
    %4871 = vmatprep.subr.mxu0 %v435
    %4872 = vmatpush1.msra.mxu0 %v434
    %4873 = vmatprep.subr.mxu0 %v431
    %4874 = vmatpush1.msra.mxu0 %v430
    %4875 = vmatprep.subr.mxu0 %v427
    %4876 = vmatpush1.msra.mxu0 %v426
    %4877 = vmatprep.subr.mxu0 %v423
    %4878 = vmatpush1.msra.mxu0 %v422
    %4879 = vmatprep.subr.mxu0 %v419
    %4880 = vmatpush1.msra.mxu0 %v418
    %4881 = vmatprep.subr.mxu0 %v415
    %4882 = vmatpush1.msra.mxu0 %v414
    %4883 = vmatprep.subr.mxu0 %v411
    %4884 = vmatpush1.msra.mxu0 %v410
    %4885 = vmatprep.subr.mxu0 %v407
    %4886 = vmatpush1.msra.mxu0 %v406
    %4887 = vmatprep.subr.mxu0 %v403
    %4888 = vmatpush1.msra.mxu0 %v402
    %4889 = vmatprep.subr.mxu0 %v399
    %4890 = vmatpush1.msra.mxu0 %v398
    %4891 = vmatprep.subr.mxu0 %v395
    %4892 = vmatpush1.msra.mxu0 %v394
    %4893 = vmatprep.subr.mxu0 0.0
    %4894 = vmatpush2.msra.mxu0 0.0
    %4895 = vmatprep.subr.mxu0 0.0
    %4896 = vmatpush2.msra.mxu0 0.0
    %4897 = vmatprep.subr.mxu0 0.0
    %4898 = vmatpush2.msra.mxu0 0.0
    %4899 = vmatprep.subr.mxu0 0.0
    %4900 = vmatpush2.msra.mxu0 0.0
    %4901 = vmatprep.subr.mxu0 0.0
    %4902 = vmatpush2.msra.mxu0 0.0
    %4903 = vmatprep.subr.mxu0 0.0
    %4904 = vmatpush2.msra.mxu0 0.0
    %4905 = vmatprep.subr.mxu0 0.0
    %4906 = vmatpush2.msra.mxu0 0.0
    %4907 = vmatprep.subr.mxu0 0.0
    %4908 = vmatpush2.msra.mxu0 0.0
    %4909 = vmatprep.subr.mxu0 0.0
    %4910 = vmatpush2.msra.mxu0 0.0
    %4911 = vmatprep.subr.mxu0 0.0
    %4912 = vmatpush2.msra.mxu0 0.0
    %4913 = vmatprep.subr.mxu0 0.0
    %4914 = vmatpush2.msra.mxu0 0.0
    %4915 = vmatprep.subr.mxu0 0.0
    %4916 = vmatpush2.msra.mxu0 0.0
    %4917 = vmatprep.subr.mxu0 0.0
    %4918 = vmatpush2.msra.mxu0 0.0
    %4919 = vmatprep.subr.mxu0 0.0
    %4920 = vmatpush2.msra.mxu0 0.0
    %4921 = vmatprep.subr.mxu0 0.0
    %4922 = vmatpush2.msra.mxu0 0.0
    %4923 = vmatprep.subr.mxu0 0.0
    %4924 = vmatpush2.msra.mxu0 0.0
    %4925 = vmatprep.mubr.f32.mxu0 0.0
    %4926 = vmatmul.mubr.f32.gmra.mxu0 %v4165
    %v4927 = vpop.f32.mrf.mxu0
    %v4928 = vadd.f32 0.0, %v4927
    %v4929 = vpop.f32.mrf.mxu0
    %v4930 = vadd.f32 0.0, %v4929
    %4931 = vdwg.mxu0
    %v4932 = vadd.f32 %v4715, %v4857
    %v4933 = vadd.f32 %v4717, %v4859
    %v4934 = vadd.f32 %v4786, %v4928
    %v4935 = vadd.f32 %v4788, %v4930
    %v4936 = vxor.u32 %v4932, 2147483648
    %v4937 = vxor.u32 %v4933, 2147483648
    %v4938 = vxor.u32 %v4934, 2147483648
    %v4939 = vmul.f32 %v4936, 1.442695
    %v4940 = vpow.pop %v4939
    %v4941 = vmul.f32 %v4937, 1.442695
    %v4942 = vpow.pop %v4941
    %v4943 = vmul.f32 %v4938, 1.442695
    %v4944 = vpow.pop %v4943
    %v4945 = vadd.f32 %v4940, 1.0
    %v4946 = vadd.f32 %v4942, 1.0
    %v4947 = vadd.f32 %v4944, 1.0
    %v4948 = vrcp.pop %v4945
    %v4949 = vmul.f32 1.0, %v4948
    %v4950 = vrcp.pop %v4946
    %v4951 = vmul.f32 1.0, %v4950
    %v4952 = vrcp.pop %v4947
    %v4953 = vmul.f32 1.0, %v4952
    %v4954 = vtanh.pop %v4935
    %v4955 = vmul.f32 %v4951, %v4163
    %v4956 = vmul.f32 %v4949, %v4954
    %v4957 = vadd.f32 %v4955, %v4956
    %v4958 = vtanh.pop %v4957
    %v4959 = vmul.f32 %v4953, %v4958
    %4960 = vmatprep.subr.mxu0 %v261
    %4961 = vmatpush1.msra.mxu0 %v260
    %4962 = vmatprep.subr.mxu0 %v257
    %4963 = vmatpush1.msra.mxu0 %v256
    %4964 = vmatprep.subr.mxu0 %v253
    %4965 = vmatpush1.msra.mxu0 %v252
    %4966 = vmatprep.subr.mxu0 %v249
    %4967 = vmatpush1.msra.mxu0 %v248
    %4968 = vmatprep.subr.mxu0 %v245
    %4969 = vmatpush1.msra.mxu0 %v244
    %4970 = vmatprep.subr.mxu0 %v241
    %4971 = vmatpush1.msra.mxu0 %v240
    %4972 = vmatprep.subr.mxu0 %v237
    %4973 = vmatpush1.msra.mxu0 %v236
    %4974 = vmatprep.subr.mxu0 %v233
    %4975 = vmatpush1.msra.mxu0 %v232
    %4976 = vmatprep.subr.mxu0 %v229
    %4977 = vmatpush1.msra.mxu0 %v228
    %4978 = vmatprep.subr.mxu0 %v225
    %4979 = vmatpush1.msra.mxu0 %v224
    %4980 = vmatprep.subr.mxu0 %v221
    %4981 = vmatpush1.msra.mxu0 %v220
    %4982 = vmatprep.subr.mxu0 %v217
    %4983 = vmatpush1.msra.mxu0 %v216
    %4984 = vmatprep.subr.mxu0 %v213
    %4985 = vmatpush1.msra.mxu0 %v212
    %4986 = vmatprep.subr.mxu0 %v209
    %4987 = vmatpush1.msra.mxu0 %v208
    %4988 = vmatprep.subr.mxu0 %v205
    %4989 = vmatpush1.msra.mxu0 %v204
    %4990 = vmatprep.subr.mxu0 %v201
    %4991 = vmatpush1.msra.mxu0 %v200
    %4992 = vmatprep.subr.mxu0 0.0
    %4993 = vmatpush2.msra.mxu0 0.0
    %4994 = vmatprep.subr.mxu0 0.0
    %4995 = vmatpush2.msra.mxu0 0.0
    %4996 = vmatprep.subr.mxu0 0.0
    %4997 = vmatpush2.msra.mxu0 0.0
    %4998 = vmatprep.subr.mxu0 0.0
    %4999 = vmatpush2.msra.mxu0 0.0
    %5000 = vmatprep.subr.mxu0 0.0
    %5001 = vmatpush2.msra.mxu0 0.0
    %5002 = vmatprep.subr.mxu0 0.0
    %5003 = vmatpush2.msra.mxu0 0.0
    %5004 = vmatprep.subr.mxu0 0.0
    %5005 = vmatpush2.msra.mxu0 0.0
    %5006 = vmatprep.subr.mxu0 0.0
    %5007 = vmatpush2.msra.mxu0 0.0
    %5008 = vmatprep.subr.mxu0 0.0
    %5009 = vmatpush2.msra.mxu0 0.0
    %5010 = vmatprep.subr.mxu0 0.0
    %5011 = vmatpush2.msra.mxu0 0.0
    %5012 = vmatprep.subr.mxu0 0.0
    %5013 = vmatpush2.msra.mxu0 0.0
    %5014 = vmatprep.subr.mxu0 0.0
    %5015 = vmatpush2.msra.mxu0 0.0
    %5016 = vmatprep.subr.mxu0 0.0
    %5017 = vmatpush2.msra.mxu0 0.0
    %5018 = vmatprep.subr.mxu0 0.0
    %5019 = vmatpush2.msra.mxu0 0.0
    %5020 = vmatprep.subr.mxu0 0.0
    %5021 = vmatpush2.msra.mxu0 0.0
    %5022 = vmatprep.subr.mxu0 0.0
    %5023 = vmatpush2.msra.mxu0 0.0
    %5024 = vmatprep.mubr.f32.mxu0 0.0
    %5025 = vmatmul.mubr.f32.gmra.mxu0 %v4647
    %v5026 = vpop.f32.mrf.mxu0
    %v5027 = vadd.f32 %v461, %v5026
    %v5028 = vpop.f32.mrf.mxu0
    %v5029 = vadd.f32 %v465, %v5028
    %5030 = vdwg.mxu0
    %5031 = vmatprep.subr.mxu0 %v263
    %5032 = vmatpush1.msra.mxu0 %v262
    %5033 = vmatprep.subr.mxu0 %v259
    %5034 = vmatpush1.msra.mxu0 %v258
    %5035 = vmatprep.subr.mxu0 %v255
    %5036 = vmatpush1.msra.mxu0 %v254
    %5037 = vmatprep.subr.mxu0 %v251
    %5038 = vmatpush1.msra.mxu0 %v250
    %5039 = vmatprep.subr.mxu0 %v247
    %5040 = vmatpush1.msra.mxu0 %v246
    %5041 = vmatprep.subr.mxu0 %v243
    %5042 = vmatpush1.msra.mxu0 %v242
    %5043 = vmatprep.subr.mxu0 %v239
    %5044 = vmatpush1.msra.mxu0 %v238
    %5045 = vmatprep.subr.mxu0 %v235
    %5046 = vmatpush1.msra.mxu0 %v234
    %5047 = vmatprep.subr.mxu0 %v231
    %5048 = vmatpush1.msra.mxu0 %v230
    %5049 = vmatprep.subr.mxu0 %v227
    %5050 = vmatpush1.msra.mxu0 %v226
    %5051 = vmatprep.subr.mxu0 %v223
    %5052 = vmatpush1.msra.mxu0 %v222
    %5053 = vmatprep.subr.mxu0 %v219
    %5054 = vmatpush1.msra.mxu0 %v218
    %5055 = vmatprep.subr.mxu0 %v215
    %5056 = vmatpush1.msra.mxu0 %v214
    %5057 = vmatprep.subr.mxu0 %v211
    %5058 = vmatpush1.msra.mxu0 %v210
    %5059 = vmatprep.subr.mxu0 %v207
    %5060 = vmatpush1.msra.mxu0 %v206
    %5061 = vmatprep.subr.mxu0 %v203
    %5062 = vmatpush1.msra.mxu0 %v202
    %5063 = vmatprep.subr.mxu0 0.0
    %5064 = vmatpush2.msra.mxu0 0.0
    %5065 = vmatprep.subr.mxu0 0.0
    %5066 = vmatpush2.msra.mxu0 0.0
    %5067 = vmatprep.subr.mxu0 0.0
    %5068 = vmatpush2.msra.mxu0 0.0
    %5069 = vmatprep.subr.mxu0 0.0
    %5070 = vmatpush2.msra.mxu0 0.0
    %5071 = vmatprep.subr.mxu0 0.0
    %5072 = vmatpush2.msra.mxu0 0.0
    %5073 = vmatprep.subr.mxu0 0.0
    %5074 = vmatpush2.msra.mxu0 0.0
    %5075 = vmatprep.subr.mxu0 0.0
    %5076 = vmatpush2.msra.mxu0 0.0
    %5077 = vmatprep.subr.mxu0 0.0
    %5078 = vmatpush2.msra.mxu0 0.0
    %5079 = vmatprep.subr.mxu0 0.0
    %5080 = vmatpush2.msra.mxu0 0.0
    %5081 = vmatprep.subr.mxu0 0.0
    %5082 = vmatpush2.msra.mxu0 0.0
    %5083 = vmatprep.subr.mxu0 0.0
    %5084 = vmatpush2.msra.mxu0 0.0
    %5085 = vmatprep.subr.mxu0 0.0
    %5086 = vmatpush2.msra.mxu0 0.0
    %5087 = vmatprep.subr.mxu0 0.0
    %5088 = vmatpush2.msra.mxu0 0.0
    %5089 = vmatprep.subr.mxu0 0.0
    %5090 = vmatpush2.msra.mxu0 0.0
    %5091 = vmatprep.subr.mxu0 0.0
    %5092 = vmatpush2.msra.mxu0 0.0
    %5093 = vmatprep.subr.mxu0 0.0
    %5094 = vmatpush2.msra.mxu0 0.0
    %5095 = vmatprep.mubr.f32.mxu0 0.0
    %5096 = vmatmul.mubr.f32.gmra.mxu0 %v4647
    %v5097 = vpop.f32.mrf.mxu0
    %v5098 = vadd.f32 %v469, %v5097
    %v5099 = vpop.f32.mrf.mxu0
    %v5100 = vadd.f32 %v473, %v5099
    %5101 = vdwg.mxu0
    %5102 = vmatprep.subr.mxu0 %v325
    %5103 = vmatpush1.msra.mxu0 %v324
    %5104 = vmatprep.subr.mxu0 %v321
    %5105 = vmatpush1.msra.mxu0 %v320
    %5106 = vmatprep.subr.mxu0 %v317
    %5107 = vmatpush1.msra.mxu0 %v316
    %5108 = vmatprep.subr.mxu0 %v313
    %5109 = vmatpush1.msra.mxu0 %v312
    %5110 = vmatprep.subr.mxu0 %v309
    %5111 = vmatpush1.msra.mxu0 %v308
    %5112 = vmatprep.subr.mxu0 %v305
    %5113 = vmatpush1.msra.mxu0 %v304
    %5114 = vmatprep.subr.mxu0 %v301
    %5115 = vmatpush1.msra.mxu0 %v300
    %5116 = vmatprep.subr.mxu0 %v297
    %5117 = vmatpush1.msra.mxu0 %v296
    %5118 = vmatprep.subr.mxu0 %v293
    %5119 = vmatpush1.msra.mxu0 %v292
    %5120 = vmatprep.subr.mxu0 %v289
    %5121 = vmatpush1.msra.mxu0 %v288
    %5122 = vmatprep.subr.mxu0 %v285
    %5123 = vmatpush1.msra.mxu0 %v284
    %5124 = vmatprep.subr.mxu0 %v281
    %5125 = vmatpush1.msra.mxu0 %v280
    %5126 = vmatprep.subr.mxu0 %v277
    %5127 = vmatpush1.msra.mxu0 %v276
    %5128 = vmatprep.subr.mxu0 %v273
    %5129 = vmatpush1.msra.mxu0 %v272
    %5130 = vmatprep.subr.mxu0 %v269
    %5131 = vmatpush1.msra.mxu0 %v268
    %5132 = vmatprep.subr.mxu0 %v265
    %5133 = vmatpush1.msra.mxu0 %v264
    %5134 = vmatprep.subr.mxu0 0.0
    %5135 = vmatpush2.msra.mxu0 0.0
    %5136 = vmatprep.subr.mxu0 0.0
    %5137 = vmatpush2.msra.mxu0 0.0
    %5138 = vmatprep.subr.mxu0 0.0
    %5139 = vmatpush2.msra.mxu0 0.0
    %5140 = vmatprep.subr.mxu0 0.0
    %5141 = vmatpush2.msra.mxu0 0.0
    %5142 = vmatprep.subr.mxu0 0.0
    %5143 = vmatpush2.msra.mxu0 0.0
    %5144 = vmatprep.subr.mxu0 0.0
    %5145 = vmatpush2.msra.mxu0 0.0
    %5146 = vmatprep.subr.mxu0 0.0
    %5147 = vmatpush2.msra.mxu0 0.0
    %5148 = vmatprep.subr.mxu0 0.0
    %5149 = vmatpush2.msra.mxu0 0.0
    %5150 = vmatprep.subr.mxu0 0.0
    %5151 = vmatpush2.msra.mxu0 0.0
    %5152 = vmatprep.subr.mxu0 0.0
    %5153 = vmatpush2.msra.mxu0 0.0
    %5154 = vmatprep.subr.mxu0 0.0
    %5155 = vmatpush2.msra.mxu0 0.0
    %5156 = vmatprep.subr.mxu0 0.0
    %5157 = vmatpush2.msra.mxu0 0.0
    %5158 = vmatprep.subr.mxu0 0.0
    %5159 = vmatpush2.msra.mxu0 0.0
    %5160 = vmatprep.subr.mxu0 0.0
    %5161 = vmatpush2.msra.mxu0 0.0
    %5162 = vmatprep.subr.mxu0 0.0
    %5163 = vmatpush2.msra.mxu0 0.0
    %5164 = vmatprep.subr.mxu0 0.0
    %5165 = vmatpush2.msra.mxu0 0.0
    %5166 = vmatprep.mubr.f32.mxu0 0.0
    %5167 = vmatmul.mubr.f32.gmra.mxu0 %v4477
    %v5168 = vpop.f32.mrf.mxu0
    %v5169 = vadd.f32 0.0, %v5168
    %v5170 = vpop.f32.mrf.mxu0
    %v5171 = vadd.f32 0.0, %v5170
    %5172 = vdwg.mxu0
    %5173 = vmatprep.subr.mxu0 %v327
    %5174 = vmatpush1.msra.mxu0 %v326
    %5175 = vmatprep.subr.mxu0 %v323
    %5176 = vmatpush1.msra.mxu0 %v322
    %5177 = vmatprep.subr.mxu0 %v319
    %5178 = vmatpush1.msra.mxu0 %v318
    %5179 = vmatprep.subr.mxu0 %v315
    %5180 = vmatpush1.msra.mxu0 %v314
    %5181 = vmatprep.subr.mxu0 %v311
    %5182 = vmatpush1.msra.mxu0 %v310
    %5183 = vmatprep.subr.mxu0 %v307
    %5184 = vmatpush1.msra.mxu0 %v306
    %5185 = vmatprep.subr.mxu0 %v303
    %5186 = vmatpush1.msra.mxu0 %v302
    %5187 = vmatprep.subr.mxu0 %v299
    %5188 = vmatpush1.msra.mxu0 %v298
    %5189 = vmatprep.subr.mxu0 %v295
    %5190 = vmatpush1.msra.mxu0 %v294
    %5191 = vmatprep.subr.mxu0 %v291
    %5192 = vmatpush1.msra.mxu0 %v290
    %5193 = vmatprep.subr.mxu0 %v287
    %5194 = vmatpush1.msra.mxu0 %v286
    %5195 = vmatprep.subr.mxu0 %v283
    %5196 = vmatpush1.msra.mxu0 %v282
    %5197 = vmatprep.subr.mxu0 %v279
    %5198 = vmatpush1.msra.mxu0 %v278
    %5199 = vmatprep.subr.mxu0 %v275
    %5200 = vmatpush1.msra.mxu0 %v274
    %5201 = vmatprep.subr.mxu0 %v271
    %5202 = vmatpush1.msra.mxu0 %v270
    %5203 = vmatprep.subr.mxu0 %v267
    %5204 = vmatpush1.msra.mxu0 %v266
    %5205 = vmatprep.subr.mxu0 0.0
    %5206 = vmatpush2.msra.mxu0 0.0
    %5207 = vmatprep.subr.mxu0 0.0
    %5208 = vmatpush2.msra.mxu0 0.0
    %5209 = vmatprep.subr.mxu0 0.0
    %5210 = vmatpush2.msra.mxu0 0.0
    %5211 = vmatprep.subr.mxu0 0.0
    %5212 = vmatpush2.msra.mxu0 0.0
    %5213 = vmatprep.subr.mxu0 0.0
    %5214 = vmatpush2.msra.mxu0 0.0
    %5215 = vmatprep.subr.mxu0 0.0
    %5216 = vmatpush2.msra.mxu0 0.0
    %5217 = vmatprep.subr.mxu0 0.0
    %5218 = vmatpush2.msra.mxu0 0.0
    %5219 = vmatprep.subr.mxu0 0.0
    %5220 = vmatpush2.msra.mxu0 0.0
    %5221 = vmatprep.subr.mxu0 0.0
    %5222 = vmatpush2.msra.mxu0 0.0
    %5223 = vmatprep.subr.mxu0 0.0
    %5224 = vmatpush2.msra.mxu0 0.0
    %5225 = vmatprep.subr.mxu0 0.0
    %5226 = vmatpush2.msra.mxu0 0.0
    %5227 = vmatprep.subr.mxu0 0.0
    %5228 = vmatpush2.msra.mxu0 0.0
    %5229 = vmatprep.subr.mxu0 0.0
    %5230 = vmatpush2.msra.mxu0 0.0
    %5231 = vmatprep.subr.mxu0 0.0
    %5232 = vmatpush2.msra.mxu0 0.0
    %5233 = vmatprep.subr.mxu0 0.0
    %5234 = vmatpush2.msra.mxu0 0.0
    %5235 = vmatprep.subr.mxu0 0.0
    %5236 = vmatpush2.msra.mxu0 0.0
    %5237 = vmatprep.mubr.f32.mxu0 0.0
    %5238 = vmatmul.mubr.f32.gmra.mxu0 %v4477
    %v5239 = vpop.f32.mrf.mxu0
    %v5240 = vadd.f32 0.0, %v5239
    %v5241 = vpop.f32.mrf.mxu0
    %v5242 = vadd.f32 0.0, %v5241
    %5243 = vdwg.mxu0
    %v5244 = vadd.f32 %v5027, %v5169
    %v5245 = vadd.f32 %v5029, %v5171
    %v5246 = vadd.f32 %v5098, %v5240
    %v5247 = vadd.f32 %v5100, %v5242
    %v5248 = vxor.u32 %v5244, 2147483648
    %v5249 = vxor.u32 %v5245, 2147483648
    %v5250 = vxor.u32 %v5246, 2147483648
    %v5251 = vmul.f32 %v5248, 1.442695
    %v5252 = vpow.pop %v5251
    %v5253 = vmul.f32 %v5249, 1.442695
    %v5254 = vpow.pop %v5253
    %v5255 = vmul.f32 %v5250, 1.442695
    %v5256 = vpow.pop %v5255
    %v5257 = vadd.f32 %v5252, 1.0
    %v5258 = vadd.f32 %v5254, 1.0
    %v5259 = vadd.f32 %v5256, 1.0
    %v5260 = vrcp.pop %v5257
    %v5261 = vmul.f32 1.0, %v5260
    %v5262 = vrcp.pop %v5258
    %v5263 = vmul.f32 1.0, %v5262
    %v5264 = vrcp.pop %v5259
    %v5265 = vmul.f32 1.0, %v5264
    %v5266 = vtanh.pop %v5247
    %v5267 = vmul.f32 %v5263, %v4475
    %v5268 = vmul.f32 %v5261, %v5266
    %v5269 = vadd.f32 %v5267, %v5268
    %v5270 = vtanh.pop %v5269
    %v5271 = vmul.f32 %v5265, %v5270
    %5272 = vmatprep.subr.mxu0 %v197
    %5273 = vmatpush1.msra.mxu0 %v196
    %5274 = vmatprep.subr.mxu0 %v193
    %5275 = vmatpush1.msra.mxu0 %v192
    %5276 = vmatprep.subr.mxu0 %v189
    %5277 = vmatpush1.msra.mxu0 %v188
    %5278 = vmatprep.subr.mxu0 %v185
    %5279 = vmatpush1.msra.mxu0 %v184
    %5280 = vmatprep.subr.mxu0 %v181
    %5281 = vmatpush1.msra.mxu0 %v180
    %5282 = vmatprep.subr.mxu0 %v177
    %5283 = vmatpush1.msra.mxu0 %v176
    %5284 = vmatprep.subr.mxu0 %v173
    %5285 = vmatpush1.msra.mxu0 %v172
    %5286 = vmatprep.subr.mxu0 %v169
    %5287 = vmatpush1.msra.mxu0 %v168
    %5288 = vmatprep.subr.mxu0 %v165
    %5289 = vmatpush1.msra.mxu0 %v164
    %5290 = vmatprep.subr.mxu0 %v161
    %5291 = vmatpush1.msra.mxu0 %v160
    %5292 = vmatprep.subr.mxu0 %v157
    %5293 = vmatpush1.msra.mxu0 %v156
    %5294 = vmatprep.subr.mxu0 %v153
    %5295 = vmatpush1.msra.mxu0 %v152
    %5296 = vmatprep.subr.mxu0 %v149
    %5297 = vmatpush1.msra.mxu0 %v148
    %5298 = vmatprep.subr.mxu0 %v145
    %5299 = vmatpush1.msra.mxu0 %v144
    %5300 = vmatprep.subr.mxu0 %v141
    %5301 = vmatpush1.msra.mxu0 %v140
    %5302 = vmatprep.subr.mxu0 %v137
    %5303 = vmatpush1.msra.mxu0 %v136
    %5304 = vmatprep.subr.mxu0 0.0
    %5305 = vmatpush2.msra.mxu0 0.0
    %5306 = vmatprep.subr.mxu0 0.0
    %5307 = vmatpush2.msra.mxu0 0.0
    %5308 = vmatprep.subr.mxu0 0.0
    %5309 = vmatpush2.msra.mxu0 0.0
    %5310 = vmatprep.subr.mxu0 0.0
    %5311 = vmatpush2.msra.mxu0 0.0
    %5312 = vmatprep.subr.mxu0 0.0
    %5313 = vmatpush2.msra.mxu0 0.0
    %5314 = vmatprep.subr.mxu0 0.0
    %5315 = vmatpush2.msra.mxu0 0.0
    %5316 = vmatprep.subr.mxu0 0.0
    %5317 = vmatpush2.msra.mxu0 0.0
    %5318 = vmatprep.subr.mxu0 0.0
    %5319 = vmatpush2.msra.mxu0 0.0
    %5320 = vmatprep.subr.mxu0 0.0
    %5321 = vmatpush2.msra.mxu0 0.0
    %5322 = vmatprep.subr.mxu0 0.0
    %5323 = vmatpush2.msra.mxu0 0.0
    %5324 = vmatprep.subr.mxu0 0.0
    %5325 = vmatpush2.msra.mxu0 0.0
    %5326 = vmatprep.subr.mxu0 0.0
    %5327 = vmatpush2.msra.mxu0 0.0
    %5328 = vmatprep.subr.mxu0 0.0
    %5329 = vmatpush2.msra.mxu0 0.0
    %5330 = vmatprep.subr.mxu0 0.0
    %5331 = vmatpush2.msra.mxu0 0.0
    %5332 = vmatprep.subr.mxu0 0.0
    %5333 = vmatpush2.msra.mxu0 0.0
    %5334 = vmatprep.subr.mxu0 0.0
    %5335 = vmatpush2.msra.mxu0 0.0
    %5336 = vmatprep.mubr.f32.mxu0 0.0
    %5337 = vmatmul.mubr.f32.gmra.mxu0 %v4647
    %v5338 = vpop.f32.mrf.mxu0
    %v5339 = vadd.f32 0.0, %v5338
    %v5340 = vpop.f32.mrf.mxu0
    %v5341 = vadd.f32 0.0, %v5340
    %5342 = vdwg.mxu0
    %5343 = vmatprep.subr.mxu0 %v199
    %5344 = vmatpush1.msra.mxu0 %v198
    %5345 = vmatprep.subr.mxu0 %v195
    %5346 = vmatpush1.msra.mxu0 %v194
    %5347 = vmatprep.subr.mxu0 %v191
    %5348 = vmatpush1.msra.mxu0 %v190
    %5349 = vmatprep.subr.mxu0 %v187
    %5350 = vmatpush1.msra.mxu0 %v186
    %5351 = vmatprep.subr.mxu0 %v183
    %5352 = vmatpush1.msra.mxu0 %v182
    %5353 = vmatprep.subr.mxu0 %v179
    %5354 = vmatpush1.msra.mxu0 %v178
    %5355 = vmatprep.subr.mxu0 %v175
    %5356 = vmatpush1.msra.mxu0 %v174
    %5357 = vmatprep.subr.mxu0 %v171
    %5358 = vmatpush1.msra.mxu0 %v170
    %5359 = vmatprep.subr.mxu0 %v167
    %5360 = vmatpush1.msra.mxu0 %v166
    %5361 = vmatprep.subr.mxu0 %v163
    %5362 = vmatpush1.msra.mxu0 %v162
    %5363 = vmatprep.subr.mxu0 %v159
    %5364 = vmatpush1.msra.mxu0 %v158
    %5365 = vmatprep.subr.mxu0 %v155
    %5366 = vmatpush1.msra.mxu0 %v154
    %5367 = vmatprep.subr.mxu0 %v151
    %5368 = vmatpush1.msra.mxu0 %v150
    %5369 = vmatprep.subr.mxu0 %v147
    %5370 = vmatpush1.msra.mxu0 %v146
    %5371 = vmatprep.subr.mxu0 %v143
    %5372 = vmatpush1.msra.mxu0 %v142
    %5373 = vmatprep.subr.mxu0 %v139
    %5374 = vmatpush1.msra.mxu0 %v138
    %5375 = vmatprep.subr.mxu0 0.0
    %5376 = vmatpush2.msra.mxu0 0.0
    %5377 = vmatprep.subr.mxu0 0.0
    %5378 = vmatpush2.msra.mxu0 0.0
    %5379 = vmatprep.subr.mxu0 0.0
    %5380 = vmatpush2.msra.mxu0 0.0
    %5381 = vmatprep.subr.mxu0 0.0
    %5382 = vmatpush2.msra.mxu0 0.0
    %5383 = vmatprep.subr.mxu0 0.0
    %5384 = vmatpush2.msra.mxu0 0.0
    %5385 = vmatprep.subr.mxu0 0.0
    %5386 = vmatpush2.msra.mxu0 0.0
    %5387 = vmatprep.subr.mxu0 0.0
    %5388 = vmatpush2.msra.mxu0 0.0
    %5389 = vmatprep.subr.mxu0 0.0
    %5390 = vmatpush2.msra.mxu0 0.0
    %5391 = vmatprep.subr.mxu0 0.0
    %5392 = vmatpush2.msra.mxu0 0.0
    %5393 = vmatprep.subr.mxu0 0.0
    %5394 = vmatpush2.msra.mxu0 0.0
    %5395 = vmatprep.subr.mxu0 0.0
    %5396 = vmatpush2.msra.mxu0 0.0
    %5397 = vmatprep.subr.mxu0 0.0
    %5398 = vmatpush2.msra.mxu0 0.0
    %5399 = vmatprep.subr.mxu0 0.0
    %5400 = vmatpush2.msra.mxu0 0.0
    %5401 = vmatprep.subr.mxu0 0.0
    %5402 = vmatpush2.msra.mxu0 0.0
    %5403 = vmatprep.subr.mxu0 0.0
    %5404 = vmatpush2.msra.mxu0 0.0
    %5405 = vmatprep.subr.mxu0 0.0
    %5406 = vmatpush2.msra.mxu0 0.0
    %5407 = vmatprep.mubr.f32.mxu0 0.0
    %5408 = vmatmul.mubr.f32.gmra.mxu0 %v4647
    %v5409 = vpop.f32.mrf.mxu0
    %v5410 = vadd.f32 0.0, %v5409
    %v5411 = vpop.f32.mrf.mxu0
    %v5412 = vadd.f32 0.0, %v5411
    %5413 = vdwg.mxu0
    %v5414 = vadd.f32 %v697, %v5339
    %v5415 = vadd.f32 %v699, %v5341
    %v5416 = vadd.f32 %v810, %v5410
    %v5417 = vadd.f32 %v812, %v5412
    %v5418 = vxor.u32 %v5414, 2147483648
    %v5419 = vxor.u32 %v5415, 2147483648
    %v5420 = vxor.u32 %v5416, 2147483648
    %v5421 = vmul.f32 %v5418, 1.442695
    %v5422 = vpow.pop %v5421
    %v5423 = vmul.f32 %v5419, 1.442695
    %v5424 = vpow.pop %v5423
    %v5425 = vmul.f32 %v5420, 1.442695
    %v5426 = vpow.pop %v5425
    %v5427 = vadd.f32 %v5422, 1.0
    %v5428 = vadd.f32 %v5424, 1.0
    %v5429 = vadd.f32 %v5426, 1.0
    %v5430 = vrcp.pop %v5427
    %v5431 = vmul.f32 1.0, %v5430
    %v5432 = vrcp.pop %v5428
    %v5433 = vmul.f32 1.0, %v5432
    %v5434 = vrcp.pop %v5429
    %v5435 = vmul.f32 1.0, %v5434
    %v5436 = vtanh.pop %v5417
    %v5437 = vmul.f32 %v5433, %v4645
    %v5438 = vmul.f32 %v5431, %v5436
    %v5439 = vadd.f32 %v5437, %v5438
    %v5440 = vtanh.pop %v5439
    %v5441 = vmul.f32 %v5435, %v5440
    %5442 = vmatprep.subr.mxu0 %v389
    %5443 = vmatpush1.msra.mxu0 %v388
    %5444 = vmatprep.subr.mxu0 %v385
    %5445 = vmatpush1.msra.mxu0 %v384
    %5446 = vmatprep.subr.mxu0 %v381
    %5447 = vmatpush1.msra.mxu0 %v380
    %5448 = vmatprep.subr.mxu0 %v377
    %5449 = vmatpush1.msra.mxu0 %v376
    %5450 = vmatprep.subr.mxu0 %v373
    %5451 = vmatpush1.msra.mxu0 %v372
    %5452 = vmatprep.subr.mxu0 %v369
    %5453 = vmatpush1.msra.mxu0 %v368
    %5454 = vmatprep.subr.mxu0 %v365
    %5455 = vmatpush1.msra.mxu0 %v364
    %5456 = vmatprep.subr.mxu0 %v361
    %5457 = vmatpush1.msra.mxu0 %v360
    %5458 = vmatprep.subr.mxu0 %v357
    %5459 = vmatpush1.msra.mxu0 %v356
    %5460 = vmatprep.subr.mxu0 %v353
    %5461 = vmatpush1.msra.mxu0 %v352
    %5462 = vmatprep.subr.mxu0 %v349
    %5463 = vmatpush1.msra.mxu0 %v348
    %5464 = vmatprep.subr.mxu0 %v345
    %5465 = vmatpush1.msra.mxu0 %v344
    %5466 = vmatprep.subr.mxu0 %v341
    %5467 = vmatpush1.msra.mxu0 %v340
    %5468 = vmatprep.subr.mxu0 %v337
    %5469 = vmatpush1.msra.mxu0 %v336
    %5470 = vmatprep.subr.mxu0 %v333
    %5471 = vmatpush1.msra.mxu0 %v332
    %5472 = vmatprep.subr.mxu0 %v329
    %5473 = vmatpush1.msra.mxu0 %v328
    %5474 = vmatprep.subr.mxu0 0.0
    %5475 = vmatpush2.msra.mxu0 0.0
    %5476 = vmatprep.subr.mxu0 0.0
    %5477 = vmatpush2.msra.mxu0 0.0
    %5478 = vmatprep.subr.mxu0 0.0
    %5479 = vmatpush2.msra.mxu0 0.0
    %5480 = vmatprep.subr.mxu0 0.0
    %5481 = vmatpush2.msra.mxu0 0.0
    %5482 = vmatprep.subr.mxu0 0.0
    %5483 = vmatpush2.msra.mxu0 0.0
    %5484 = vmatprep.subr.mxu0 0.0
    %5485 = vmatpush2.msra.mxu0 0.0
    %5486 = vmatprep.subr.mxu0 0.0
    %5487 = vmatpush2.msra.mxu0 0.0
    %5488 = vmatprep.subr.mxu0 0.0
    %5489 = vmatpush2.msra.mxu0 0.0
    %5490 = vmatprep.subr.mxu0 0.0
    %5491 = vmatpush2.msra.mxu0 0.0
    %5492 = vmatprep.subr.mxu0 0.0
    %5493 = vmatpush2.msra.mxu0 0.0
    %5494 = vmatprep.subr.mxu0 0.0
    %5495 = vmatpush2.msra.mxu0 0.0
    %5496 = vmatprep.subr.mxu0 0.0
    %5497 = vmatpush2.msra.mxu0 0.0
    %5498 = vmatprep.subr.mxu0 0.0
    %5499 = vmatpush2.msra.mxu0 0.0
    %5500 = vmatprep.subr.mxu0 0.0
    %5501 = vmatpush2.msra.mxu0 0.0
    %5502 = vmatprep.subr.mxu0 0.0
    %5503 = vmatpush2.msra.mxu0 0.0
    %5504 = vmatprep.subr.mxu0 0.0
    %5505 = vmatpush2.msra.mxu0 0.0
    %5506 = vmatprep.mubr.f32.mxu0 0.0
    %5507 = vmatmul.mubr.f32.gmra.mxu0 %v5271
    %v5508 = vpop.f32.mrf.mxu0
    %v5509 = vadd.f32 %v483, %v5508
    %v5510 = vpop.f32.mrf.mxu0
    %v5511 = vadd.f32 %v487, %v5510
    %5512 = vdwg.mxu0
    %5513 = vmatprep.subr.mxu0 %v391
    %5514 = vmatpush1.msra.mxu0 %v390
    %5515 = vmatprep.subr.mxu0 %v387
    %5516 = vmatpush1.msra.mxu0 %v386
    %5517 = vmatprep.subr.mxu0 %v383
    %5518 = vmatpush1.msra.mxu0 %v382
    %5519 = vmatprep.subr.mxu0 %v379
    %5520 = vmatpush1.msra.mxu0 %v378
    %5521 = vmatprep.subr.mxu0 %v375
    %5522 = vmatpush1.msra.mxu0 %v374
    %5523 = vmatprep.subr.mxu0 %v371
    %5524 = vmatpush1.msra.mxu0 %v370
    %5525 = vmatprep.subr.mxu0 %v367
    %5526 = vmatpush1.msra.mxu0 %v366
    %5527 = vmatprep.subr.mxu0 %v363
    %5528 = vmatpush1.msra.mxu0 %v362
    %5529 = vmatprep.subr.mxu0 %v359
    %5530 = vmatpush1.msra.mxu0 %v358
    %5531 = vmatprep.subr.mxu0 %v355
    %5532 = vmatpush1.msra.mxu0 %v354
    %5533 = vmatprep.subr.mxu0 %v351
    %5534 = vmatpush1.msra.mxu0 %v350
    %5535 = vmatprep.subr.mxu0 %v347
    %5536 = vmatpush1.msra.mxu0 %v346
    %5537 = vmatprep.subr.mxu0 %v343
    %5538 = vmatpush1.msra.mxu0 %v342
    %5539 = vmatprep.subr.mxu0 %v339
    %5540 = vmatpush1.msra.mxu0 %v338
    %5541 = vmatprep.subr.mxu0 %v335
    %5542 = vmatpush1.msra.mxu0 %v334
    %5543 = vmatprep.subr.mxu0 %v331
    %5544 = vmatpush1.msra.mxu0 %v330
    %5545 = vmatprep.subr.mxu0 0.0
    %5546 = vmatpush2.msra.mxu0 0.0
    %5547 = vmatprep.subr.mxu0 0.0
    %5548 = vmatpush2.msra.mxu0 0.0
    %5549 = vmatprep.subr.mxu0 0.0
    %5550 = vmatpush2.msra.mxu0 0.0
    %5551 = vmatprep.subr.mxu0 0.0
    %5552 = vmatpush2.msra.mxu0 0.0
    %5553 = vmatprep.subr.mxu0 0.0
    %5554 = vmatpush2.msra.mxu0 0.0
    %5555 = vmatprep.subr.mxu0 0.0
    %5556 = vmatpush2.msra.mxu0 0.0
    %5557 = vmatprep.subr.mxu0 0.0
    %5558 = vmatpush2.msra.mxu0 0.0
    %5559 = vmatprep.subr.mxu0 0.0
    %5560 = vmatpush2.msra.mxu0 0.0
    %5561 = vmatprep.subr.mxu0 0.0
    %5562 = vmatpush2.msra.mxu0 0.0
    %5563 = vmatprep.subr.mxu0 0.0
    %5564 = vmatpush2.msra.mxu0 0.0
    %5565 = vmatprep.subr.mxu0 0.0
    %5566 = vmatpush2.msra.mxu0 0.0
    %5567 = vmatprep.subr.mxu0 0.0
    %5568 = vmatpush2.msra.mxu0 0.0
    %5569 = vmatprep.subr.mxu0 0.0
    %5570 = vmatpush2.msra.mxu0 0.0
    %5571 = vmatprep.subr.mxu0 0.0
    %5572 = vmatpush2.msra.mxu0 0.0
    %5573 = vmatprep.subr.mxu0 0.0
    %5574 = vmatpush2.msra.mxu0 0.0
    %5575 = vmatprep.subr.mxu0 0.0
    %5576 = vmatpush2.msra.mxu0 0.0
    %5577 = vmatprep.mubr.f32.mxu0 0.0
    %5578 = vmatmul.mubr.f32.gmra.mxu0 %v5271
    %v5579 = vpop.f32.mrf.mxu0
    %v5580 = vadd.f32 %v491, %v5579
    %v5581 = vpop.f32.mrf.mxu0
    %v5582 = vadd.f32 %v495, %v5581
    %5583 = vdwg.mxu0
    %5584 = vmatprep.subr.mxu0 %v453
    %5585 = vmatpush1.msra.mxu0 %v452
    %5586 = vmatprep.subr.mxu0 %v449
    %5587 = vmatpush1.msra.mxu0 %v448
    %5588 = vmatprep.subr.mxu0 %v445
    %5589 = vmatpush1.msra.mxu0 %v444
    %5590 = vmatprep.subr.mxu0 %v441
    %5591 = vmatpush1.msra.mxu0 %v440
    %5592 = vmatprep.subr.mxu0 %v437
    %5593 = vmatpush1.msra.mxu0 %v436
    %5594 = vmatprep.subr.mxu0 %v433
    %5595 = vmatpush1.msra.mxu0 %v432
    %5596 = vmatprep.subr.mxu0 %v429
    %5597 = vmatpush1.msra.mxu0 %v428
    %5598 = vmatprep.subr.mxu0 %v425
    %5599 = vmatpush1.msra.mxu0 %v424
    %5600 = vmatprep.subr.mxu0 %v421
    %5601 = vmatpush1.msra.mxu0 %v420
    %5602 = vmatprep.subr.mxu0 %v417
    %5603 = vmatpush1.msra.mxu0 %v416
    %5604 = vmatprep.subr.mxu0 %v413
    %5605 = vmatpush1.msra.mxu0 %v412
    %5606 = vmatprep.subr.mxu0 %v409
    %5607 = vmatpush1.msra.mxu0 %v408
    %5608 = vmatprep.subr.mxu0 %v405
    %5609 = vmatpush1.msra.mxu0 %v404
    %5610 = vmatprep.subr.mxu0 %v401
    %5611 = vmatpush1.msra.mxu0 %v400
    %5612 = vmatprep.subr.mxu0 %v397
    %5613 = vmatpush1.msra.mxu0 %v396
    %5614 = vmatprep.subr.mxu0 %v393
    %5615 = vmatpush1.msra.mxu0 %v392
    %5616 = vmatprep.subr.mxu0 0.0
    %5617 = vmatpush2.msra.mxu0 0.0
    %5618 = vmatprep.subr.mxu0 0.0
    %5619 = vmatpush2.msra.mxu0 0.0
    %5620 = vmatprep.subr.mxu0 0.0
    %5621 = vmatpush2.msra.mxu0 0.0
    %5622 = vmatprep.subr.mxu0 0.0
    %5623 = vmatpush2.msra.mxu0 0.0
    %5624 = vmatprep.subr.mxu0 0.0
    %5625 = vmatpush2.msra.mxu0 0.0
    %5626 = vmatprep.subr.mxu0 0.0
    %5627 = vmatpush2.msra.mxu0 0.0
    %5628 = vmatprep.subr.mxu0 0.0
    %5629 = vmatpush2.msra.mxu0 0.0
    %5630 = vmatprep.subr.mxu0 0.0
    %5631 = vmatpush2.msra.mxu0 0.0
    %5632 = vmatprep.subr.mxu0 0.0
    %5633 = vmatpush2.msra.mxu0 0.0
    %5634 = vmatprep.subr.mxu0 0.0
    %5635 = vmatpush2.msra.mxu0 0.0
    %5636 = vmatprep.subr.mxu0 0.0
    %5637 = vmatpush2.msra.mxu0 0.0
    %5638 = vmatprep.subr.mxu0 0.0
    %5639 = vmatpush2.msra.mxu0 0.0
    %5640 = vmatprep.subr.mxu0 0.0
    %5641 = vmatpush2.msra.mxu0 0.0
    %5642 = vmatprep.subr.mxu0 0.0
    %5643 = vmatpush2.msra.mxu0 0.0
    %5644 = vmatprep.subr.mxu0 0.0
    %5645 = vmatpush2.msra.mxu0 0.0
    %5646 = vmatprep.subr.mxu0 0.0
    %5647 = vmatpush2.msra.mxu0 0.0
    %5648 = vmatprep.mubr.f32.mxu0 0.0
    %5649 = vmatmul.mubr.f32.gmra.mxu0 %v4959
    %v5650 = vpop.f32.mrf.mxu0
    %v5651 = vadd.f32 0.0, %v5650
    %v5652 = vpop.f32.mrf.mxu0
    %v5653 = vadd.f32 0.0, %v5652
    %5654 = vdwg.mxu0
    %5655 = vmatprep.subr.mxu0 %v455
    %5656 = vmatpush1.msra.mxu0 %v454
    %5657 = vmatprep.subr.mxu0 %v451
    %5658 = vmatpush1.msra.mxu0 %v450
    %5659 = vmatprep.subr.mxu0 %v447
    %5660 = vmatpush1.msra.mxu0 %v446
    %5661 = vmatprep.subr.mxu0 %v443
    %5662 = vmatpush1.msra.mxu0 %v442
    %5663 = vmatprep.subr.mxu0 %v439
    %5664 = vmatpush1.msra.mxu0 %v438
    %5665 = vmatprep.subr.mxu0 %v435
    %5666 = vmatpush1.msra.mxu0 %v434
    %5667 = vmatprep.subr.mxu0 %v431
    %5668 = vmatpush1.msra.mxu0 %v430
    %5669 = vmatprep.subr.mxu0 %v427
    %5670 = vmatpush1.msra.mxu0 %v426
    %5671 = vmatprep.subr.mxu0 %v423
    %5672 = vmatpush1.msra.mxu0 %v422
    %5673 = vmatprep.subr.mxu0 %v419
    %5674 = vmatpush1.msra.mxu0 %v418
    %5675 = vmatprep.subr.mxu0 %v415
    %5676 = vmatpush1.msra.mxu0 %v414
    %5677 = vmatprep.subr.mxu0 %v411
    %5678 = vmatpush1.msra.mxu0 %v410
    %5679 = vmatprep.subr.mxu0 %v407
    %5680 = vmatpush1.msra.mxu0 %v406
    %5681 = vmatprep.subr.mxu0 %v403
    %5682 = vmatpush1.msra.mxu0 %v402
    %5683 = vmatprep.subr.mxu0 %v399
    %5684 = vmatpush1.msra.mxu0 %v398
    %5685 = vmatprep.subr.mxu0 %v395
    %5686 = vmatpush1.msra.mxu0 %v394
    %5687 = vmatprep.subr.mxu0 0.0
    %5688 = vmatpush2.msra.mxu0 0.0
    %5689 = vmatprep.subr.mxu0 0.0
    %5690 = vmatpush2.msra.mxu0 0.0
    %5691 = vmatprep.subr.mxu0 0.0
    %5692 = vmatpush2.msra.mxu0 0.0
    %5693 = vmatprep.subr.mxu0 0.0
    %5694 = vmatpush2.msra.mxu0 0.0
    %5695 = vmatprep.subr.mxu0 0.0
    %5696 = vmatpush2.msra.mxu0 0.0
    %5697 = vmatprep.subr.mxu0 0.0
    %5698 = vmatpush2.msra.mxu0 0.0
    %5699 = vmatprep.subr.mxu0 0.0
    %5700 = vmatpush2.msra.mxu0 0.0
    %5701 = vmatprep.subr.mxu0 0.0
    %5702 = vmatpush2.msra.mxu0 0.0
    %5703 = vmatprep.subr.mxu0 0.0
    %5704 = vmatpush2.msra.mxu0 0.0
    %5705 = vmatprep.subr.mxu0 0.0
    %5706 = vmatpush2.msra.mxu0 0.0
    %5707 = vmatprep.subr.mxu0 0.0
    %5708 = vmatpush2.msra.mxu0 0.0
    %5709 = vmatprep.subr.mxu0 0.0
    %5710 = vmatpush2.msra.mxu0 0.0
    %5711 = vmatprep.subr.mxu0 0.0
    %5712 = vmatpush2.msra.mxu0 0.0
    %5713 = vmatprep.subr.mxu0 0.0
    %5714 = vmatpush2.msra.mxu0 0.0
    %5715 = vmatprep.subr.mxu0 0.0
    %5716 = vmatpush2.msra.mxu0 0.0
    %5717 = vmatprep.subr.mxu0 0.0
    %5718 = vmatpush2.msra.mxu0 0.0
    %5719 = vmatprep.mubr.f32.mxu0 0.0
    %5720 = vmatmul.mubr.f32.gmra.mxu0 %v4959
    %v5721 = vpop.f32.mrf.mxu0
    %v5722 = vadd.f32 0.0, %v5721
    %v5723 = vpop.f32.mrf.mxu0
    %v5724 = vadd.f32 0.0, %v5723
    %5725 = vdwg.mxu0
    %v5726 = vadd.f32 %v5509, %v5651
    %v5727 = vadd.f32 %v5511, %v5653
    %v5728 = vadd.f32 %v5580, %v5722
    %v5729 = vadd.f32 %v5582, %v5724
    %v5730 = vxor.u32 %v5726, 2147483648
    %v5731 = vxor.u32 %v5727, 2147483648
    %v5732 = vxor.u32 %v5728, 2147483648
    %v5733 = vmul.f32 %v5730, 1.442695
    %v5734 = vpow.pop %v5733
    %v5735 = vmul.f32 %v5731, 1.442695
    %v5736 = vpow.pop %v5735
    %v5737 = vmul.f32 %v5732, 1.442695
    %v5738 = vpow.pop %v5737
    %v5739 = vadd.f32 %v5734, 1.0
    %v5740 = vadd.f32 %v5736, 1.0
    %v5741 = vadd.f32 %v5738, 1.0
    %v5742 = vrcp.pop %v5739
    %v5743 = vmul.f32 1.0, %v5742
    %v5744 = vrcp.pop %v5740
    %v5745 = vmul.f32 1.0, %v5744
    %v5746 = vrcp.pop %v5741
    %v5747 = vmul.f32 1.0, %v5746
    %v5748 = vtanh.pop %v5729
    %v5749 = vmul.f32 %v5745, %v4957
    %v5750 = vmul.f32 %v5743, %v5748
    %v5751 = vadd.f32 %v5749, %v5750
    %v5752 = vtanh.pop %v5751
    %v5753 = vmul.f32 %v5747, %v5752
    %5754 = vmatprep.subr.mxu0 %v261
    %5755 = vmatpush1.msra.mxu0 %v260
    %5756 = vmatprep.subr.mxu0 %v257
    %5757 = vmatpush1.msra.mxu0 %v256
    %5758 = vmatprep.subr.mxu0 %v253
    %5759 = vmatpush1.msra.mxu0 %v252
    %5760 = vmatprep.subr.mxu0 %v249
    %5761 = vmatpush1.msra.mxu0 %v248
    %5762 = vmatprep.subr.mxu0 %v245
    %5763 = vmatpush1.msra.mxu0 %v244
    %5764 = vmatprep.subr.mxu0 %v241
    %5765 = vmatpush1.msra.mxu0 %v240
    %5766 = vmatprep.subr.mxu0 %v237
    %5767 = vmatpush1.msra.mxu0 %v236
    %5768 = vmatprep.subr.mxu0 %v233
    %5769 = vmatpush1.msra.mxu0 %v232
    %5770 = vmatprep.subr.mxu0 %v229
    %5771 = vmatpush1.msra.mxu0 %v228
    %5772 = vmatprep.subr.mxu0 %v225
    %5773 = vmatpush1.msra.mxu0 %v224
    %5774 = vmatprep.subr.mxu0 %v221
    %5775 = vmatpush1.msra.mxu0 %v220
    %5776 = vmatprep.subr.mxu0 %v217
    %5777 = vmatpush1.msra.mxu0 %v216
    %5778 = vmatprep.subr.mxu0 %v213
    %5779 = vmatpush1.msra.mxu0 %v212
    %5780 = vmatprep.subr.mxu0 %v209
    %5781 = vmatpush1.msra.mxu0 %v208
    %5782 = vmatprep.subr.mxu0 %v205
    %5783 = vmatpush1.msra.mxu0 %v204
    %5784 = vmatprep.subr.mxu0 %v201
    %5785 = vmatpush1.msra.mxu0 %v200
    %5786 = vmatprep.subr.mxu0 0.0
    %5787 = vmatpush2.msra.mxu0 0.0
    %5788 = vmatprep.subr.mxu0 0.0
    %5789 = vmatpush2.msra.mxu0 0.0
    %5790 = vmatprep.subr.mxu0 0.0
    %5791 = vmatpush2.msra.mxu0 0.0
    %5792 = vmatprep.subr.mxu0 0.0
    %5793 = vmatpush2.msra.mxu0 0.0
    %5794 = vmatprep.subr.mxu0 0.0
    %5795 = vmatpush2.msra.mxu0 0.0
    %5796 = vmatprep.subr.mxu0 0.0
    %5797 = vmatpush2.msra.mxu0 0.0
    %5798 = vmatprep.subr.mxu0 0.0
    %5799 = vmatpush2.msra.mxu0 0.0
    %5800 = vmatprep.subr.mxu0 0.0
    %5801 = vmatpush2.msra.mxu0 0.0
    %5802 = vmatprep.subr.mxu0 0.0
    %5803 = vmatpush2.msra.mxu0 0.0
    %5804 = vmatprep.subr.mxu0 0.0
    %5805 = vmatpush2.msra.mxu0 0.0
    %5806 = vmatprep.subr.mxu0 0.0
    %5807 = vmatpush2.msra.mxu0 0.0
    %5808 = vmatprep.subr.mxu0 0.0
    %5809 = vmatpush2.msra.mxu0 0.0
    %5810 = vmatprep.subr.mxu0 0.0
    %5811 = vmatpush2.msra.mxu0 0.0
    %5812 = vmatprep.subr.mxu0 0.0
    %5813 = vmatpush2.msra.mxu0 0.0
    %5814 = vmatprep.subr.mxu0 0.0
    %5815 = vmatpush2.msra.mxu0 0.0
    %5816 = vmatprep.subr.mxu0 0.0
    %5817 = vmatpush2.msra.mxu0 0.0
    %5818 = vmatprep.mubr.f32.mxu0 0.0
    %5819 = vmatmul.mubr.f32.gmra.mxu0 %v5441
    %v5820 = vpop.f32.mrf.mxu0
    %v5821 = vadd.f32 %v461, %v5820
    %v5822 = vpop.f32.mrf.mxu0
    %v5823 = vadd.f32 %v465, %v5822
    %5824 = vdwg.mxu0
    %5825 = vmatprep.subr.mxu0 %v263
    %5826 = vmatpush1.msra.mxu0 %v262
    %5827 = vmatprep.subr.mxu0 %v259
    %5828 = vmatpush1.msra.mxu0 %v258
    %5829 = vmatprep.subr.mxu0 %v255
    %5830 = vmatpush1.msra.mxu0 %v254
    %5831 = vmatprep.subr.mxu0 %v251
    %5832 = vmatpush1.msra.mxu0 %v250
    %5833 = vmatprep.subr.mxu0 %v247
    %5834 = vmatpush1.msra.mxu0 %v246
    %5835 = vmatprep.subr.mxu0 %v243
    %5836 = vmatpush1.msra.mxu0 %v242
    %5837 = vmatprep.subr.mxu0 %v239
    %5838 = vmatpush1.msra.mxu0 %v238
    %5839 = vmatprep.subr.mxu0 %v235
    %5840 = vmatpush1.msra.mxu0 %v234
    %5841 = vmatprep.subr.mxu0 %v231
    %5842 = vmatpush1.msra.mxu0 %v230
    %5843 = vmatprep.subr.mxu0 %v227
    %5844 = vmatpush1.msra.mxu0 %v226
    %5845 = vmatprep.subr.mxu0 %v223
    %5846 = vmatpush1.msra.mxu0 %v222
    %5847 = vmatprep.subr.mxu0 %v219
    %5848 = vmatpush1.msra.mxu0 %v218
    %5849 = vmatprep.subr.mxu0 %v215
    %5850 = vmatpush1.msra.mxu0 %v214
    %5851 = vmatprep.subr.mxu0 %v211
    %5852 = vmatpush1.msra.mxu0 %v210
    %5853 = vmatprep.subr.mxu0 %v207
    %5854 = vmatpush1.msra.mxu0 %v206
    %5855 = vmatprep.subr.mxu0 %v203
    %5856 = vmatpush1.msra.mxu0 %v202
    %5857 = vmatprep.subr.mxu0 0.0
    %5858 = vmatpush2.msra.mxu0 0.0
    %5859 = vmatprep.subr.mxu0 0.0
    %5860 = vmatpush2.msra.mxu0 0.0
    %5861 = vmatprep.subr.mxu0 0.0
    %5862 = vmatpush2.msra.mxu0 0.0
    %5863 = vmatprep.subr.mxu0 0.0
    %5864 = vmatpush2.msra.mxu0 0.0
    %5865 = vmatprep.subr.mxu0 0.0
    %5866 = vmatpush2.msra.mxu0 0.0
    %5867 = vmatprep.subr.mxu0 0.0
    %5868 = vmatpush2.msra.mxu0 0.0
    %5869 = vmatprep.subr.mxu0 0.0
    %5870 = vmatpush2.msra.mxu0 0.0
    %5871 = vmatprep.subr.mxu0 0.0
    %5872 = vmatpush2.msra.mxu0 0.0
    %5873 = vmatprep.subr.mxu0 0.0
    %5874 = vmatpush2.msra.mxu0 0.0
    %5875 = vmatprep.subr.mxu0 0.0
    %5876 = vmatpush2.msra.mxu0 0.0
    %5877 = vmatprep.subr.mxu0 0.0
    %5878 = vmatpush2.msra.mxu0 0.0
    %5879 = vmatprep.subr.mxu0 0.0
    %5880 = vmatpush2.msra.mxu0 0.0
    %5881 = vmatprep.subr.mxu0 0.0
    %5882 = vmatpush2.msra.mxu0 0.0
    %5883 = vmatprep.subr.mxu0 0.0
    %5884 = vmatpush2.msra.mxu0 0.0
    %5885 = vmatprep.subr.mxu0 0.0
    %5886 = vmatpush2.msra.mxu0 0.0
    %5887 = vmatprep.subr.mxu0 0.0
    %5888 = vmatpush2.msra.mxu0 0.0
    %5889 = vmatprep.mubr.f32.mxu0 0.0
    %5890 = vmatmul.mubr.f32.gmra.mxu0 %v5441
    %v5891 = vpop.f32.mrf.mxu0
    %v5892 = vadd.f32 %v469, %v5891
    %v5893 = vpop.f32.mrf.mxu0
    %v5894 = vadd.f32 %v473, %v5893
    %5895 = vdwg.mxu0
    %5896 = vmatprep.subr.mxu0 %v325
    %5897 = vmatpush1.msra.mxu0 %v324
    %5898 = vmatprep.subr.mxu0 %v321
    %5899 = vmatpush1.msra.mxu0 %v320
    %5900 = vmatprep.subr.mxu0 %v317
    %5901 = vmatpush1.msra.mxu0 %v316
    %5902 = vmatprep.subr.mxu0 %v313
    %5903 = vmatpush1.msra.mxu0 %v312
    %5904 = vmatprep.subr.mxu0 %v309
    %5905 = vmatpush1.msra.mxu0 %v308
    %5906 = vmatprep.subr.mxu0 %v305
    %5907 = vmatpush1.msra.mxu0 %v304
    %5908 = vmatprep.subr.mxu0 %v301
    %5909 = vmatpush1.msra.mxu0 %v300
    %5910 = vmatprep.subr.mxu0 %v297
    %5911 = vmatpush1.msra.mxu0 %v296
    %5912 = vmatprep.subr.mxu0 %v293
    %5913 = vmatpush1.msra.mxu0 %v292
    %5914 = vmatprep.subr.mxu0 %v289
    %5915 = vmatpush1.msra.mxu0 %v288
    %5916 = vmatprep.subr.mxu0 %v285
    %5917 = vmatpush1.msra.mxu0 %v284
    %5918 = vmatprep.subr.mxu0 %v281
    %5919 = vmatpush1.msra.mxu0 %v280
    %5920 = vmatprep.subr.mxu0 %v277
    %5921 = vmatpush1.msra.mxu0 %v276
    %5922 = vmatprep.subr.mxu0 %v273
    %5923 = vmatpush1.msra.mxu0 %v272
    %5924 = vmatprep.subr.mxu0 %v269
    %5925 = vmatpush1.msra.mxu0 %v268
    %5926 = vmatprep.subr.mxu0 %v265
    %5927 = vmatpush1.msra.mxu0 %v264
    %5928 = vmatprep.subr.mxu0 0.0
    %5929 = vmatpush2.msra.mxu0 0.0
    %5930 = vmatprep.subr.mxu0 0.0
    %5931 = vmatpush2.msra.mxu0 0.0
    %5932 = vmatprep.subr.mxu0 0.0
    %5933 = vmatpush2.msra.mxu0 0.0
    %5934 = vmatprep.subr.mxu0 0.0
    %5935 = vmatpush2.msra.mxu0 0.0
    %5936 = vmatprep.subr.mxu0 0.0
    %5937 = vmatpush2.msra.mxu0 0.0
    %5938 = vmatprep.subr.mxu0 0.0
    %5939 = vmatpush2.msra.mxu0 0.0
    %5940 = vmatprep.subr.mxu0 0.0
    %5941 = vmatpush2.msra.mxu0 0.0
    %5942 = vmatprep.subr.mxu0 0.0
    %5943 = vmatpush2.msra.mxu0 0.0
    %5944 = vmatprep.subr.mxu0 0.0
    %5945 = vmatpush2.msra.mxu0 0.0
    %5946 = vmatprep.subr.mxu0 0.0
    %5947 = vmatpush2.msra.mxu0 0.0
    %5948 = vmatprep.subr.mxu0 0.0
    %5949 = vmatpush2.msra.mxu0 0.0
    %5950 = vmatprep.subr.mxu0 0.0
    %5951 = vmatpush2.msra.mxu0 0.0
    %5952 = vmatprep.subr.mxu0 0.0
    %5953 = vmatpush2.msra.mxu0 0.0
    %5954 = vmatprep.subr.mxu0 0.0
    %5955 = vmatpush2.msra.mxu0 0.0
    %5956 = vmatprep.subr.mxu0 0.0
    %5957 = vmatpush2.msra.mxu0 0.0
    %5958 = vmatprep.subr.mxu0 0.0
    %5959 = vmatpush2.msra.mxu0 0.0
    %5960 = vmatprep.mubr.f32.mxu0 0.0
    %5961 = vmatmul.mubr.f32.gmra.mxu0 %v5271
    %v5962 = vpop.f32.mrf.mxu0
    %v5963 = vadd.f32 0.0, %v5962
    %v5964 = vpop.f32.mrf.mxu0
    %v5965 = vadd.f32 0.0, %v5964
    %5966 = vdwg.mxu0
    %5967 = vmatprep.subr.mxu0 %v327
    %5968 = vmatpush1.msra.mxu0 %v326
    %5969 = vmatprep.subr.mxu0 %v323
    %5970 = vmatpush1.msra.mxu0 %v322
    %5971 = vmatprep.subr.mxu0 %v319
    %5972 = vmatpush1.msra.mxu0 %v318
    %5973 = vmatprep.subr.mxu0 %v315
    %5974 = vmatpush1.msra.mxu0 %v314
    %5975 = vmatprep.subr.mxu0 %v311
    %5976 = vmatpush1.msra.mxu0 %v310
    %5977 = vmatprep.subr.mxu0 %v307
    %5978 = vmatpush1.msra.mxu0 %v306
    %5979 = vmatprep.subr.mxu0 %v303
    %5980 = vmatpush1.msra.mxu0 %v302
    %5981 = vmatprep.subr.mxu0 %v299
    %5982 = vmatpush1.msra.mxu0 %v298
    %5983 = vmatprep.subr.mxu0 %v295
    %5984 = vmatpush1.msra.mxu0 %v294
    %5985 = vmatprep.subr.mxu0 %v291
    %5986 = vmatpush1.msra.mxu0 %v290
    %5987 = vmatprep.subr.mxu0 %v287
    %5988 = vmatpush1.msra.mxu0 %v286
    %5989 = vmatprep.subr.mxu0 %v283
    %5990 = vmatpush1.msra.mxu0 %v282
    %5991 = vmatprep.subr.mxu0 %v279
    %5992 = vmatpush1.msra.mxu0 %v278
    %5993 = vmatprep.subr.mxu0 %v275
    %5994 = vmatpush1.msra.mxu0 %v274
    %5995 = vmatprep.subr.mxu0 %v271
    %5996 = vmatpush1.msra.mxu0 %v270
    %5997 = vmatprep.subr.mxu0 %v267
    %5998 = vmatpush1.msra.mxu0 %v266
    %5999 = vmatprep.subr.mxu0 0.0
    %6000 = vmatpush2.msra.mxu0 0.0
    %6001 = vmatprep.subr.mxu0 0.0
    %6002 = vmatpush2.msra.mxu0 0.0
    %6003 = vmatprep.subr.mxu0 0.0
    %6004 = vmatpush2.msra.mxu0 0.0
    %6005 = vmatprep.subr.mxu0 0.0
    %6006 = vmatpush2.msra.mxu0 0.0
    %6007 = vmatprep.subr.mxu0 0.0
    %6008 = vmatpush2.msra.mxu0 0.0
    %6009 = vmatprep.subr.mxu0 0.0
    %6010 = vmatpush2.msra.mxu0 0.0
    %6011 = vmatprep.subr.mxu0 0.0
    %6012 = vmatpush2.msra.mxu0 0.0
    %6013 = vmatprep.subr.mxu0 0.0
    %6014 = vmatpush2.msra.mxu0 0.0
    %6015 = vmatprep.subr.mxu0 0.0
    %6016 = vmatpush2.msra.mxu0 0.0
    %6017 = vmatprep.subr.mxu0 0.0
    %6018 = vmatpush2.msra.mxu0 0.0
    %6019 = vmatprep.subr.mxu0 0.0
    %6020 = vmatpush2.msra.mxu0 0.0
    %6021 = vmatprep.subr.mxu0 0.0
    %6022 = vmatpush2.msra.mxu0 0.0
    %6023 = vmatprep.subr.mxu0 0.0
    %6024 = vmatpush2.msra.mxu0 0.0
    %6025 = vmatprep.subr.mxu0 0.0
    %6026 = vmatpush2.msra.mxu0 0.0
    %6027 = vmatprep.subr.mxu0 0.0
    %6028 = vmatpush2.msra.mxu0 0.0
    %6029 = vmatprep.subr.mxu0 0.0
    %6030 = vmatpush2.msra.mxu0 0.0
    %6031 = vmatprep.mubr.f32.mxu0 0.0
    %6032 = vmatmul.mubr.f32.gmra.mxu0 %v5271
    %v6033 = vpop.f32.mrf.mxu0
    %v6034 = vadd.f32 0.0, %v6033
    %v6035 = vpop.f32.mrf.mxu0
    %v6036 = vadd.f32 0.0, %v6035
    %6037 = vdwg.mxu0
    %v6038 = vadd.f32 %v5821, %v5963
    %v6039 = vadd.f32 %v5823, %v5965
    %v6040 = vadd.f32 %v5892, %v6034
    %v6041 = vadd.f32 %v5894, %v6036
    %v6042 = vxor.u32 %v6038, 2147483648
    %v6043 = vxor.u32 %v6039, 2147483648
    %v6044 = vxor.u32 %v6040, 2147483648
    %v6045 = vmul.f32 %v6042, 1.442695
    %v6046 = vpow.pop %v6045
    %v6047 = vmul.f32 %v6043, 1.442695
    %v6048 = vpow.pop %v6047
    %v6049 = vmul.f32 %v6044, 1.442695
    %v6050 = vpow.pop %v6049
    %v6051 = vadd.f32 %v6046, 1.0
    %v6052 = vadd.f32 %v6048, 1.0
    %v6053 = vadd.f32 %v6050, 1.0
    %v6054 = vrcp.pop %v6051
    %v6055 = vmul.f32 1.0, %v6054
    %v6056 = vrcp.pop %v6052
    %v6057 = vmul.f32 1.0, %v6056
    %v6058 = vrcp.pop %v6053
    %v6059 = vmul.f32 1.0, %v6058
    %v6060 = vtanh.pop %v6041
    %v6061 = vmul.f32 %v6057, %v5269
    %v6062 = vmul.f32 %v6055, %v6060
    %v6063 = vadd.f32 %v6061, %v6062
    %v6064 = vtanh.pop %v6063
    %v6065 = vmul.f32 %v6059, %v6064
    %6066 = vmatprep.subr.mxu0 %v197
    %6067 = vmatpush1.msra.mxu0 %v196
    %6068 = vmatprep.subr.mxu0 %v193
    %6069 = vmatpush1.msra.mxu0 %v192
    %6070 = vmatprep.subr.mxu0 %v189
    %6071 = vmatpush1.msra.mxu0 %v188
    %6072 = vmatprep.subr.mxu0 %v185
    %6073 = vmatpush1.msra.mxu0 %v184
    %6074 = vmatprep.subr.mxu0 %v181
    %6075 = vmatpush1.msra.mxu0 %v180
    %6076 = vmatprep.subr.mxu0 %v177
    %6077 = vmatpush1.msra.mxu0 %v176
    %6078 = vmatprep.subr.mxu0 %v173
    %6079 = vmatpush1.msra.mxu0 %v172
    %6080 = vmatprep.subr.mxu0 %v169
    %6081 = vmatpush1.msra.mxu0 %v168
    %6082 = vmatprep.subr.mxu0 %v165
    %6083 = vmatpush1.msra.mxu0 %v164
    %6084 = vmatprep.subr.mxu0 %v161
    %6085 = vmatpush1.msra.mxu0 %v160
    %6086 = vmatprep.subr.mxu0 %v157
    %6087 = vmatpush1.msra.mxu0 %v156
    %6088 = vmatprep.subr.mxu0 %v153
    %6089 = vmatpush1.msra.mxu0 %v152
    %6090 = vmatprep.subr.mxu0 %v149
    %6091 = vmatpush1.msra.mxu0 %v148
    %6092 = vmatprep.subr.mxu0 %v145
    %6093 = vmatpush1.msra.mxu0 %v144
    %6094 = vmatprep.subr.mxu0 %v141
    %6095 = vmatpush1.msra.mxu0 %v140
    %6096 = vmatprep.subr.mxu0 %v137
    %6097 = vmatpush1.msra.mxu0 %v136
    %6098 = vmatprep.subr.mxu0 0.0
    %6099 = vmatpush2.msra.mxu0 0.0
    %6100 = vmatprep.subr.mxu0 0.0
    %6101 = vmatpush2.msra.mxu0 0.0
    %6102 = vmatprep.subr.mxu0 0.0
    %6103 = vmatpush2.msra.mxu0 0.0
    %6104 = vmatprep.subr.mxu0 0.0
    %6105 = vmatpush2.msra.mxu0 0.0
    %6106 = vmatprep.subr.mxu0 0.0
    %6107 = vmatpush2.msra.mxu0 0.0
    %6108 = vmatprep.subr.mxu0 0.0
    %6109 = vmatpush2.msra.mxu0 0.0
    %6110 = vmatprep.subr.mxu0 0.0
    %6111 = vmatpush2.msra.mxu0 0.0
    %6112 = vmatprep.subr.mxu0 0.0
    %6113 = vmatpush2.msra.mxu0 0.0
    %6114 = vmatprep.subr.mxu0 0.0
    %6115 = vmatpush2.msra.mxu0 0.0
    %6116 = vmatprep.subr.mxu0 0.0
    %6117 = vmatpush2.msra.mxu0 0.0
    %6118 = vmatprep.subr.mxu0 0.0
    %6119 = vmatpush2.msra.mxu0 0.0
    %6120 = vmatprep.subr.mxu0 0.0
    %6121 = vmatpush2.msra.mxu0 0.0
    %6122 = vmatprep.subr.mxu0 0.0
    %6123 = vmatpush2.msra.mxu0 0.0
    %6124 = vmatprep.subr.mxu0 0.0
    %6125 = vmatpush2.msra.mxu0 0.0
    %6126 = vmatprep.subr.mxu0 0.0
    %6127 = vmatpush2.msra.mxu0 0.0
    %6128 = vmatprep.subr.mxu0 0.0
    %6129 = vmatpush2.msra.mxu0 0.0
    %6130 = vmatprep.mubr.f32.mxu0 0.0
    %6131 = vmatmul.mubr.f32.gmra.mxu0 %v5441
    %v6132 = vpop.f32.mrf.mxu0
    %v6133 = vadd.f32 0.0, %v6132
    %v6134 = vpop.f32.mrf.mxu0
    %v6135 = vadd.f32 0.0, %v6134
    %6136 = vdwg.mxu0
    %6137 = vmatprep.subr.mxu0 %v199
    %6138 = vmatpush1.msra.mxu0 %v198
    %6139 = vmatprep.subr.mxu0 %v195
    %6140 = vmatpush1.msra.mxu0 %v194
    %6141 = vmatprep.subr.mxu0 %v191
    %6142 = vmatpush1.msra.mxu0 %v190
    %6143 = vmatprep.subr.mxu0 %v187
    %6144 = vmatpush1.msra.mxu0 %v186
    %6145 = vmatprep.subr.mxu0 %v183
    %6146 = vmatpush1.msra.mxu0 %v182
    %6147 = vmatprep.subr.mxu0 %v179
    %6148 = vmatpush1.msra.mxu0 %v178
    %6149 = vmatprep.subr.mxu0 %v175
    %6150 = vmatpush1.msra.mxu0 %v174
    %6151 = vmatprep.subr.mxu0 %v171
    %6152 = vmatpush1.msra.mxu0 %v170
    %6153 = vmatprep.subr.mxu0 %v167
    %6154 = vmatpush1.msra.mxu0 %v166
    %6155 = vmatprep.subr.mxu0 %v163
    %6156 = vmatpush1.msra.mxu0 %v162
    %6157 = vmatprep.subr.mxu0 %v159
    %6158 = vmatpush1.msra.mxu0 %v158
    %6159 = vmatprep.subr.mxu0 %v155
    %6160 = vmatpush1.msra.mxu0 %v154
    %6161 = vmatprep.subr.mxu0 %v151
    %6162 = vmatpush1.msra.mxu0 %v150
    %6163 = vmatprep.subr.mxu0 %v147
    %6164 = vmatpush1.msra.mxu0 %v146
    %6165 = vmatprep.subr.mxu0 %v143
    %6166 = vmatpush1.msra.mxu0 %v142
    %6167 = vmatprep.subr.mxu0 %v139
    %6168 = vmatpush1.msra.mxu0 %v138
    %6169 = vmatprep.subr.mxu0 0.0
    %6170 = vmatpush2.msra.mxu0 0.0
    %6171 = vmatprep.subr.mxu0 0.0
    %6172 = vmatpush2.msra.mxu0 0.0
    %6173 = vmatprep.subr.mxu0 0.0
    %6174 = vmatpush2.msra.mxu0 0.0
    %6175 = vmatprep.subr.mxu0 0.0
    %6176 = vmatpush2.msra.mxu0 0.0
    %6177 = vmatprep.subr.mxu0 0.0
    %6178 = vmatpush2.msra.mxu0 0.0
    %6179 = vmatprep.subr.mxu0 0.0
    %6180 = vmatpush2.msra.mxu0 0.0
    %6181 = vmatprep.subr.mxu0 0.0
    %6182 = vmatpush2.msra.mxu0 0.0
    %6183 = vmatprep.subr.mxu0 0.0
    %6184 = vmatpush2.msra.mxu0 0.0
    %6185 = vmatprep.subr.mxu0 0.0
    %6186 = vmatpush2.msra.mxu0 0.0
    %6187 = vmatprep.subr.mxu0 0.0
    %6188 = vmatpush2.msra.mxu0 0.0
    %6189 = vmatprep.subr.mxu0 0.0
    %6190 = vmatpush2.msra.mxu0 0.0
    %6191 = vmatprep.subr.mxu0 0.0
    %6192 = vmatpush2.msra.mxu0 0.0
    %6193 = vmatprep.subr.mxu0 0.0
    %6194 = vmatpush2.msra.mxu0 0.0
    %6195 = vmatprep.subr.mxu0 0.0
    %6196 = vmatpush2.msra.mxu0 0.0
    %6197 = vmatprep.subr.mxu0 0.0
    %6198 = vmatpush2.msra.mxu0 0.0
    %6199 = vmatprep.subr.mxu0 0.0
    %6200 = vmatpush2.msra.mxu0 0.0
    %6201 = vmatprep.mubr.f32.mxu0 0.0
    %6202 = vmatmul.mubr.f32.gmra.mxu0 %v5441
    %v6203 = vpop.f32.mrf.mxu0
    %v6204 = vadd.f32 0.0, %v6203
    %v6205 = vpop.f32.mrf.mxu0
    %v6206 = vadd.f32 0.0, %v6205
    %6207 = vdwg.mxu0
    %v6208 = vadd.f32 %v703, %v6133
    %v6209 = vadd.f32 %v705, %v6135
    %v6210 = vadd.f32 %v816, %v6204
    %v6211 = vadd.f32 %v818, %v6206
    %v6212 = vxor.u32 %v6208, 2147483648
    %v6213 = vxor.u32 %v6209, 2147483648
    %v6214 = vxor.u32 %v6210, 2147483648
    %v6215 = vmul.f32 %v6212, 1.442695
    %v6216 = vpow.pop %v6215
    %v6217 = vmul.f32 %v6213, 1.442695
    %v6218 = vpow.pop %v6217
    %v6219 = vmul.f32 %v6214, 1.442695
    %v6220 = vpow.pop %v6219
    %v6221 = vadd.f32 %v6216, 1.0
    %v6222 = vadd.f32 %v6218, 1.0
    %v6223 = vadd.f32 %v6220, 1.0
    %v6224 = vrcp.pop %v6221
    %v6225 = vmul.f32 1.0, %v6224
    %v6226 = vrcp.pop %v6222
    %v6227 = vmul.f32 1.0, %v6226
    %v6228 = vrcp.pop %v6223
    %v6229 = vmul.f32 1.0, %v6228
    %v6230 = vtanh.pop %v6211
    %v6231 = vmul.f32 %v6227, %v5439
    %v6232 = vmul.f32 %v6225, %v6230
    %v6233 = vadd.f32 %v6231, %v6232
    %v6234 = vtanh.pop %v6233
    %v6235 = vmul.f32 %v6229, %v6234
    %6236 = vmatprep.subr.mxu0 %v389
    %6237 = vmatpush1.msra.mxu0 %v388
    %6238 = vmatprep.subr.mxu0 %v385
    %6239 = vmatpush1.msra.mxu0 %v384
    %6240 = vmatprep.subr.mxu0 %v381
    %6241 = vmatpush1.msra.mxu0 %v380
    %6242 = vmatprep.subr.mxu0 %v377
    %6243 = vmatpush1.msra.mxu0 %v376
    %6244 = vmatprep.subr.mxu0 %v373
    %6245 = vmatpush1.msra.mxu0 %v372
    %6246 = vmatprep.subr.mxu0 %v369
    %6247 = vmatpush1.msra.mxu0 %v368
    %6248 = vmatprep.subr.mxu0 %v365
    %6249 = vmatpush1.msra.mxu0 %v364
    %6250 = vmatprep.subr.mxu0 %v361
    %6251 = vmatpush1.msra.mxu0 %v360
    %6252 = vmatprep.subr.mxu0 %v357
    %6253 = vmatpush1.msra.mxu0 %v356
    %6254 = vmatprep.subr.mxu0 %v353
    %6255 = vmatpush1.msra.mxu0 %v352
    %6256 = vmatprep.subr.mxu0 %v349
    %6257 = vmatpush1.msra.mxu0 %v348
    %6258 = vmatprep.subr.mxu0 %v345
    %6259 = vmatpush1.msra.mxu0 %v344
    %6260 = vmatprep.subr.mxu0 %v341
    %6261 = vmatpush1.msra.mxu0 %v340
    %6262 = vmatprep.subr.mxu0 %v337
    %6263 = vmatpush1.msra.mxu0 %v336
    %6264 = vmatprep.subr.mxu0 %v333
    %6265 = vmatpush1.msra.mxu0 %v332
    %6266 = vmatprep.subr.mxu0 %v329
    %6267 = vmatpush1.msra.mxu0 %v328
    %6268 = vmatprep.subr.mxu0 0.0
    %6269 = vmatpush2.msra.mxu0 0.0
    %6270 = vmatprep.subr.mxu0 0.0
    %6271 = vmatpush2.msra.mxu0 0.0
    %6272 = vmatprep.subr.mxu0 0.0
    %6273 = vmatpush2.msra.mxu0 0.0
    %6274 = vmatprep.subr.mxu0 0.0
    %6275 = vmatpush2.msra.mxu0 0.0
    %6276 = vmatprep.subr.mxu0 0.0
    %6277 = vmatpush2.msra.mxu0 0.0
    %6278 = vmatprep.subr.mxu0 0.0
    %6279 = vmatpush2.msra.mxu0 0.0
    %6280 = vmatprep.subr.mxu0 0.0
    %6281 = vmatpush2.msra.mxu0 0.0
    %6282 = vmatprep.subr.mxu0 0.0
    %6283 = vmatpush2.msra.mxu0 0.0
    %6284 = vmatprep.subr.mxu0 0.0
    %6285 = vmatpush2.msra.mxu0 0.0
    %6286 = vmatprep.subr.mxu0 0.0
    %6287 = vmatpush2.msra.mxu0 0.0
    %6288 = vmatprep.subr.mxu0 0.0
    %6289 = vmatpush2.msra.mxu0 0.0
    %6290 = vmatprep.subr.mxu0 0.0
    %6291 = vmatpush2.msra.mxu0 0.0
    %6292 = vmatprep.subr.mxu0 0.0
    %6293 = vmatpush2.msra.mxu0 0.0
    %6294 = vmatprep.subr.mxu0 0.0
    %6295 = vmatpush2.msra.mxu0 0.0
    %6296 = vmatprep.subr.mxu0 0.0
    %6297 = vmatpush2.msra.mxu0 0.0
    %6298 = vmatprep.subr.mxu0 0.0
    %6299 = vmatpush2.msra.mxu0 0.0
    %6300 = vmatprep.mubr.f32.mxu0 0.0
    %6301 = vmatmul.mubr.f32.gmra.mxu0 %v6065
    %v6302 = vpop.f32.mrf.mxu0
    %v6303 = vadd.f32 %v483, %v6302
    %v6304 = vpop.f32.mrf.mxu0
    %v6305 = vadd.f32 %v487, %v6304
    %6306 = vdwg.mxu0
    %6307 = vmatprep.subr.mxu0 %v391
    %6308 = vmatpush1.msra.mxu0 %v390
    %6309 = vmatprep.subr.mxu0 %v387
    %6310 = vmatpush1.msra.mxu0 %v386
    %6311 = vmatprep.subr.mxu0 %v383
    %6312 = vmatpush1.msra.mxu0 %v382
    %6313 = vmatprep.subr.mxu0 %v379
    %6314 = vmatpush1.msra.mxu0 %v378
    %6315 = vmatprep.subr.mxu0 %v375
    %6316 = vmatpush1.msra.mxu0 %v374
    %6317 = vmatprep.subr.mxu0 %v371
    %6318 = vmatpush1.msra.mxu0 %v370
    %6319 = vmatprep.subr.mxu0 %v367
    %6320 = vmatpush1.msra.mxu0 %v366
    %6321 = vmatprep.subr.mxu0 %v363
    %6322 = vmatpush1.msra.mxu0 %v362
    %6323 = vmatprep.subr.mxu0 %v359
    %6324 = vmatpush1.msra.mxu0 %v358
    %6325 = vmatprep.subr.mxu0 %v355
    %6326 = vmatpush1.msra.mxu0 %v354
    %6327 = vmatprep.subr.mxu0 %v351
    %6328 = vmatpush1.msra.mxu0 %v350
    %6329 = vmatprep.subr.mxu0 %v347
    %6330 = vmatpush1.msra.mxu0 %v346
    %6331 = vmatprep.subr.mxu0 %v343
    %6332 = vmatpush1.msra.mxu0 %v342
    %6333 = vmatprep.subr.mxu0 %v339
    %6334 = vmatpush1.msra.mxu0 %v338
    %6335 = vmatprep.subr.mxu0 %v335
    %6336 = vmatpush1.msra.mxu0 %v334
    %6337 = vmatprep.subr.mxu0 %v331
    %6338 = vmatpush1.msra.mxu0 %v330
    %6339 = vmatprep.subr.mxu0 0.0
    %6340 = vmatpush2.msra.mxu0 0.0
    %6341 = vmatprep.subr.mxu0 0.0
    %6342 = vmatpush2.msra.mxu0 0.0
    %6343 = vmatprep.subr.mxu0 0.0
    %6344 = vmatpush2.msra.mxu0 0.0
    %6345 = vmatprep.subr.mxu0 0.0
    %6346 = vmatpush2.msra.mxu0 0.0
    %6347 = vmatprep.subr.mxu0 0.0
    %6348 = vmatpush2.msra.mxu0 0.0
    %6349 = vmatprep.subr.mxu0 0.0
    %6350 = vmatpush2.msra.mxu0 0.0
    %6351 = vmatprep.subr.mxu0 0.0
    %6352 = vmatpush2.msra.mxu0 0.0
    %6353 = vmatprep.subr.mxu0 0.0
    %6354 = vmatpush2.msra.mxu0 0.0
    %6355 = vmatprep.subr.mxu0 0.0
    %6356 = vmatpush2.msra.mxu0 0.0
    %6357 = vmatprep.subr.mxu0 0.0
    %6358 = vmatpush2.msra.mxu0 0.0
    %6359 = vmatprep.subr.mxu0 0.0
    %6360 = vmatpush2.msra.mxu0 0.0
    %6361 = vmatprep.subr.mxu0 0.0
    %6362 = vmatpush2.msra.mxu0 0.0
    %6363 = vmatprep.subr.mxu0 0.0
    %6364 = vmatpush2.msra.mxu0 0.0
    %6365 = vmatprep.subr.mxu0 0.0
    %6366 = vmatpush2.msra.mxu0 0.0
    %6367 = vmatprep.subr.mxu0 0.0
    %6368 = vmatpush2.msra.mxu0 0.0
    %6369 = vmatprep.subr.mxu0 0.0
    %6370 = vmatpush2.msra.mxu0 0.0
    %6371 = vmatprep.mubr.f32.mxu0 0.0
    %6372 = vmatmul.mubr.f32.gmra.mxu0 %v6065
    %v6373 = vpop.f32.mrf.mxu0
    %v6374 = vadd.f32 %v491, %v6373
    %v6375 = vpop.f32.mrf.mxu0
    %v6376 = vadd.f32 %v495, %v6375
    %6377 = vdwg.mxu0
    %6378 = vmatprep.subr.mxu0 %v453
    %6379 = vmatpush1.msra.mxu0 %v452
    %6380 = vmatprep.subr.mxu0 %v449
    %6381 = vmatpush1.msra.mxu0 %v448
    %6382 = vmatprep.subr.mxu0 %v445
    %6383 = vmatpush1.msra.mxu0 %v444
    %6384 = vmatprep.subr.mxu0 %v441
    %6385 = vmatpush1.msra.mxu0 %v440
    %6386 = vmatprep.subr.mxu0 %v437
    %6387 = vmatpush1.msra.mxu0 %v436
    %6388 = vmatprep.subr.mxu0 %v433
    %6389 = vmatpush1.msra.mxu0 %v432
    %6390 = vmatprep.subr.mxu0 %v429
    %6391 = vmatpush1.msra.mxu0 %v428
    %6392 = vmatprep.subr.mxu0 %v425
    %6393 = vmatpush1.msra.mxu0 %v424
    %6394 = vmatprep.subr.mxu0 %v421
    %6395 = vmatpush1.msra.mxu0 %v420
    %6396 = vmatprep.subr.mxu0 %v417
    %6397 = vmatpush1.msra.mxu0 %v416
    %6398 = vmatprep.subr.mxu0 %v413
    %6399 = vmatpush1.msra.mxu0 %v412
    %6400 = vmatprep.subr.mxu0 %v409
    %6401 = vmatpush1.msra.mxu0 %v408
    %6402 = vmatprep.subr.mxu0 %v405
    %6403 = vmatpush1.msra.mxu0 %v404
    %6404 = vmatprep.subr.mxu0 %v401
    %6405 = vmatpush1.msra.mxu0 %v400
    %6406 = vmatprep.subr.mxu0 %v397
    %6407 = vmatpush1.msra.mxu0 %v396
    %6408 = vmatprep.subr.mxu0 %v393
    %6409 = vmatpush1.msra.mxu0 %v392
    %6410 = vmatprep.subr.mxu0 0.0
    %6411 = vmatpush2.msra.mxu0 0.0
    %6412 = vmatprep.subr.mxu0 0.0
    %6413 = vmatpush2.msra.mxu0 0.0
    %6414 = vmatprep.subr.mxu0 0.0
    %6415 = vmatpush2.msra.mxu0 0.0
    %6416 = vmatprep.subr.mxu0 0.0
    %6417 = vmatpush2.msra.mxu0 0.0
    %6418 = vmatprep.subr.mxu0 0.0
    %6419 = vmatpush2.msra.mxu0 0.0
    %6420 = vmatprep.subr.mxu0 0.0
    %6421 = vmatpush2.msra.mxu0 0.0
    %6422 = vmatprep.subr.mxu0 0.0
    %6423 = vmatpush2.msra.mxu0 0.0
    %6424 = vmatprep.subr.mxu0 0.0
    %6425 = vmatpush2.msra.mxu0 0.0
    %6426 = vmatprep.subr.mxu0 0.0
    %6427 = vmatpush2.msra.mxu0 0.0
    %6428 = vmatprep.subr.mxu0 0.0
    %6429 = vmatpush2.msra.mxu0 0.0
    %6430 = vmatprep.subr.mxu0 0.0
    %6431 = vmatpush2.msra.mxu0 0.0
    %6432 = vmatprep.subr.mxu0 0.0
    %6433 = vmatpush2.msra.mxu0 0.0
    %6434 = vmatprep.subr.mxu0 0.0
    %6435 = vmatpush2.msra.mxu0 0.0
    %6436 = vmatprep.subr.mxu0 0.0
    %6437 = vmatpush2.msra.mxu0 0.0
    %6438 = vmatprep.subr.mxu0 0.0
    %6439 = vmatpush2.msra.mxu0 0.0
    %6440 = vmatprep.subr.mxu0 0.0
    %6441 = vmatpush2.msra.mxu0 0.0
    %6442 = vmatprep.mubr.f32.mxu0 0.0
    %6443 = vmatmul.mubr.f32.gmra.mxu0 %v5753
    %v6444 = vpop.f32.mrf.mxu0
    %v6445 = vadd.f32 0.0, %v6444
    %v6446 = vpop.f32.mrf.mxu0
    %v6447 = vadd.f32 0.0, %v6446
    %6448 = vdwg.mxu0
    %6449 = vmatprep.subr.mxu0 %v455
    %6450 = vmatpush1.msra.mxu0 %v454
    %6451 = vmatprep.subr.mxu0 %v451
    %6452 = vmatpush1.msra.mxu0 %v450
    %6453 = vmatprep.subr.mxu0 %v447
    %6454 = vmatpush1.msra.mxu0 %v446
    %6455 = vmatprep.subr.mxu0 %v443
    %6456 = vmatpush1.msra.mxu0 %v442
    %6457 = vmatprep.subr.mxu0 %v439
    %6458 = vmatpush1.msra.mxu0 %v438
    %6459 = vmatprep.subr.mxu0 %v435
    %6460 = vmatpush1.msra.mxu0 %v434
    %6461 = vmatprep.subr.mxu0 %v431
    %6462 = vmatpush1.msra.mxu0 %v430
    %6463 = vmatprep.subr.mxu0 %v427
    %6464 = vmatpush1.msra.mxu0 %v426
    %6465 = vmatprep.subr.mxu0 %v423
    %6466 = vmatpush1.msra.mxu0 %v422
    %6467 = vmatprep.subr.mxu0 %v419
    %6468 = vmatpush1.msra.mxu0 %v418
    %6469 = vmatprep.subr.mxu0 %v415
    %6470 = vmatpush1.msra.mxu0 %v414
    %6471 = vmatprep.subr.mxu0 %v411
    %6472 = vmatpush1.msra.mxu0 %v410
    %6473 = vmatprep.subr.mxu0 %v407
    %6474 = vmatpush1.msra.mxu0 %v406
    %6475 = vmatprep.subr.mxu0 %v403
    %6476 = vmatpush1.msra.mxu0 %v402
    %6477 = vmatprep.subr.mxu0 %v399
    %6478 = vmatpush1.msra.mxu0 %v398
    %6479 = vmatprep.subr.mxu0 %v395
    %6480 = vmatpush1.msra.mxu0 %v394
    %6481 = vmatprep.subr.mxu0 0.0
    %6482 = vmatpush2.msra.mxu0 0.0
    %6483 = vmatprep.subr.mxu0 0.0
    %6484 = vmatpush2.msra.mxu0 0.0
    %6485 = vmatprep.subr.mxu0 0.0
    %6486 = vmatpush2.msra.mxu0 0.0
    %6487 = vmatprep.subr.mxu0 0.0
    %6488 = vmatpush2.msra.mxu0 0.0
    %6489 = vmatprep.subr.mxu0 0.0
    %6490 = vmatpush2.msra.mxu0 0.0
    %6491 = vmatprep.subr.mxu0 0.0
    %6492 = vmatpush2.msra.mxu0 0.0
    %6493 = vmatprep.subr.mxu0 0.0
    %6494 = vmatpush2.msra.mxu0 0.0
    %6495 = vmatprep.subr.mxu0 0.0
    %6496 = vmatpush2.msra.mxu0 0.0
    %6497 = vmatprep.subr.mxu0 0.0
    %6498 = vmatpush2.msra.mxu0 0.0
    %6499 = vmatprep.subr.mxu0 0.0
    %6500 = vmatpush2.msra.mxu0 0.0
    %6501 = vmatprep.subr.mxu0 0.0
    %6502 = vmatpush2.msra.mxu0 0.0
    %6503 = vmatprep.subr.mxu0 0.0
    %6504 = vmatpush2.msra.mxu0 0.0
    %6505 = vmatprep.subr.mxu0 0.0
    %6506 = vmatpush2.msra.mxu0 0.0
    %6507 = vmatprep.subr.mxu0 0.0
    %6508 = vmatpush2.msra.mxu0 0.0
    %6509 = vmatprep.subr.mxu0 0.0
    %6510 = vmatpush2.msra.mxu0 0.0
    %6511 = vmatprep.subr.mxu0 0.0
    %6512 = vmatpush2.msra.mxu0 0.0
    %6513 = vmatprep.mubr.f32.mxu0 0.0
    %6514 = vmatmul.mubr.f32.gmra.mxu0 %v5753
    %v6515 = vpop.f32.mrf.mxu0
    %v6516 = vadd.f32 0.0, %v6515
    %v6517 = vpop.f32.mrf.mxu0
    %v6518 = vadd.f32 0.0, %v6517
    %6519 = vdwg.mxu0
    %v6520 = vadd.f32 %v6303, %v6445
    %v6521 = vadd.f32 %v6305, %v6447
    %v6522 = vadd.f32 %v6374, %v6516
    %v6523 = vadd.f32 %v6376, %v6518
    %v6524 = vxor.u32 %v6520, 2147483648
    %v6525 = vxor.u32 %v6521, 2147483648
    %v6526 = vxor.u32 %v6522, 2147483648
    %v6527 = vmul.f32 %v6524, 1.442695
    %v6528 = vpow.pop %v6527
    %v6529 = vmul.f32 %v6525, 1.442695
    %v6530 = vpow.pop %v6529
    %v6531 = vmul.f32 %v6526, 1.442695
    %v6532 = vpow.pop %v6531
    %v6533 = vadd.f32 %v6528, 1.0
    %v6534 = vadd.f32 %v6530, 1.0
    %v6535 = vadd.f32 %v6532, 1.0
    %v6536 = vrcp.pop %v6533
    %v6537 = vmul.f32 1.0, %v6536
    %v6538 = vrcp.pop %v6534
    %v6539 = vmul.f32 1.0, %v6538
    %v6540 = vrcp.pop %v6535
    %v6541 = vmul.f32 1.0, %v6540
    %v6542 = vtanh.pop %v6523
    %v6543 = vmul.f32 %v6539, %v5751
    %v6544 = vmul.f32 %v6537, %v6542
    %v6545 = vadd.f32 %v6543, %v6544
    %v6546 = vtanh.pop %v6545
    %v6547 = vmul.f32 %v6541, %v6546
    %6548 = vmatprep.subr.mxu0 %v261
    %6549 = vmatpush1.msra.mxu0 %v260
    %6550 = vmatprep.subr.mxu0 %v257
    %6551 = vmatpush1.msra.mxu0 %v256
    %6552 = vmatprep.subr.mxu0 %v253
    %6553 = vmatpush1.msra.mxu0 %v252
    %6554 = vmatprep.subr.mxu0 %v249
    %6555 = vmatpush1.msra.mxu0 %v248
    %6556 = vmatprep.subr.mxu0 %v245
    %6557 = vmatpush1.msra.mxu0 %v244
    %6558 = vmatprep.subr.mxu0 %v241
    %6559 = vmatpush1.msra.mxu0 %v240
    %6560 = vmatprep.subr.mxu0 %v237
    %6561 = vmatpush1.msra.mxu0 %v236
    %6562 = vmatprep.subr.mxu0 %v233
    %6563 = vmatpush1.msra.mxu0 %v232
    %6564 = vmatprep.subr.mxu0 %v229
    %6565 = vmatpush1.msra.mxu0 %v228
    %6566 = vmatprep.subr.mxu0 %v225
    %6567 = vmatpush1.msra.mxu0 %v224
    %6568 = vmatprep.subr.mxu0 %v221
    %6569 = vmatpush1.msra.mxu0 %v220
    %6570 = vmatprep.subr.mxu0 %v217
    %6571 = vmatpush1.msra.mxu0 %v216
    %6572 = vmatprep.subr.mxu0 %v213
    %6573 = vmatpush1.msra.mxu0 %v212
    %6574 = vmatprep.subr.mxu0 %v209
    %6575 = vmatpush1.msra.mxu0 %v208
    %6576 = vmatprep.subr.mxu0 %v205
    %6577 = vmatpush1.msra.mxu0 %v204
    %6578 = vmatprep.subr.mxu0 %v201
    %6579 = vmatpush1.msra.mxu0 %v200
    %6580 = vmatprep.subr.mxu0 0.0
    %6581 = vmatpush2.msra.mxu0 0.0
    %6582 = vmatprep.subr.mxu0 0.0
    %6583 = vmatpush2.msra.mxu0 0.0
    %6584 = vmatprep.subr.mxu0 0.0
    %6585 = vmatpush2.msra.mxu0 0.0
    %6586 = vmatprep.subr.mxu0 0.0
    %6587 = vmatpush2.msra.mxu0 0.0
    %6588 = vmatprep.subr.mxu0 0.0
    %6589 = vmatpush2.msra.mxu0 0.0
    %6590 = vmatprep.subr.mxu0 0.0
    %6591 = vmatpush2.msra.mxu0 0.0
    %6592 = vmatprep.subr.mxu0 0.0
    %6593 = vmatpush2.msra.mxu0 0.0
    %6594 = vmatprep.subr.mxu0 0.0
    %6595 = vmatpush2.msra.mxu0 0.0
    %6596 = vmatprep.subr.mxu0 0.0
    %6597 = vmatpush2.msra.mxu0 0.0
    %6598 = vmatprep.subr.mxu0 0.0
    %6599 = vmatpush2.msra.mxu0 0.0
    %6600 = vmatprep.subr.mxu0 0.0
    %6601 = vmatpush2.msra.mxu0 0.0
    %6602 = vmatprep.subr.mxu0 0.0
    %6603 = vmatpush2.msra.mxu0 0.0
    %6604 = vmatprep.subr.mxu0 0.0
    %6605 = vmatpush2.msra.mxu0 0.0
    %6606 = vmatprep.subr.mxu0 0.0
    %6607 = vmatpush2.msra.mxu0 0.0
    %6608 = vmatprep.subr.mxu0 0.0
    %6609 = vmatpush2.msra.mxu0 0.0
    %6610 = vmatprep.subr.mxu0 0.0
    %6611 = vmatpush2.msra.mxu0 0.0
    %6612 = vmatprep.mubr.f32.mxu0 0.0
    %6613 = vmatmul.mubr.f32.gmra.mxu0 %v6235
    %v6614 = vpop.f32.mrf.mxu0
    %v6615 = vadd.f32 %v461, %v6614
    %v6616 = vpop.f32.mrf.mxu0
    %v6617 = vadd.f32 %v465, %v6616
    %6618 = vdwg.mxu0
    %6619 = vmatprep.subr.mxu0 %v263
    %6620 = vmatpush1.msra.mxu0 %v262
    %6621 = vmatprep.subr.mxu0 %v259
    %6622 = vmatpush1.msra.mxu0 %v258
    %6623 = vmatprep.subr.mxu0 %v255
    %6624 = vmatpush1.msra.mxu0 %v254
    %6625 = vmatprep.subr.mxu0 %v251
    %6626 = vmatpush1.msra.mxu0 %v250
    %6627 = vmatprep.subr.mxu0 %v247
    %6628 = vmatpush1.msra.mxu0 %v246
    %6629 = vmatprep.subr.mxu0 %v243
    %6630 = vmatpush1.msra.mxu0 %v242
    %6631 = vmatprep.subr.mxu0 %v239
    %6632 = vmatpush1.msra.mxu0 %v238
    %6633 = vmatprep.subr.mxu0 %v235
    %6634 = vmatpush1.msra.mxu0 %v234
    %6635 = vmatprep.subr.mxu0 %v231
    %6636 = vmatpush1.msra.mxu0 %v230
    %6637 = vmatprep.subr.mxu0 %v227
    %6638 = vmatpush1.msra.mxu0 %v226
    %6639 = vmatprep.subr.mxu0 %v223
    %6640 = vmatpush1.msra.mxu0 %v222
    %6641 = vmatprep.subr.mxu0 %v219
    %6642 = vmatpush1.msra.mxu0 %v218
    %6643 = vmatprep.subr.mxu0 %v215
    %6644 = vmatpush1.msra.mxu0 %v214
    %6645 = vmatprep.subr.mxu0 %v211
    %6646 = vmatpush1.msra.mxu0 %v210
    %6647 = vmatprep.subr.mxu0 %v207
    %6648 = vmatpush1.msra.mxu0 %v206
    %6649 = vmatprep.subr.mxu0 %v203
    %6650 = vmatpush1.msra.mxu0 %v202
    %6651 = vmatprep.subr.mxu0 0.0
    %6652 = vmatpush2.msra.mxu0 0.0
    %6653 = vmatprep.subr.mxu0 0.0
    %6654 = vmatpush2.msra.mxu0 0.0
    %6655 = vmatprep.subr.mxu0 0.0
    %6656 = vmatpush2.msra.mxu0 0.0
    %6657 = vmatprep.subr.mxu0 0.0
    %6658 = vmatpush2.msra.mxu0 0.0
    %6659 = vmatprep.subr.mxu0 0.0
    %6660 = vmatpush2.msra.mxu0 0.0
    %6661 = vmatprep.subr.mxu0 0.0
    %6662 = vmatpush2.msra.mxu0 0.0
    %6663 = vmatprep.subr.mxu0 0.0
    %6664 = vmatpush2.msra.mxu0 0.0
    %6665 = vmatprep.subr.mxu0 0.0
    %6666 = vmatpush2.msra.mxu0 0.0
    %6667 = vmatprep.subr.mxu0 0.0
    %6668 = vmatpush2.msra.mxu0 0.0
    %6669 = vmatprep.subr.mxu0 0.0
    %6670 = vmatpush2.msra.mxu0 0.0
    %6671 = vmatprep.subr.mxu0 0.0
    %6672 = vmatpush2.msra.mxu0 0.0
    %6673 = vmatprep.subr.mxu0 0.0
    %6674 = vmatpush2.msra.mxu0 0.0
    %6675 = vmatprep.subr.mxu0 0.0
    %6676 = vmatpush2.msra.mxu0 0.0
    %6677 = vmatprep.subr.mxu0 0.0
    %6678 = vmatpush2.msra.mxu0 0.0
    %6679 = vmatprep.subr.mxu0 0.0
    %6680 = vmatpush2.msra.mxu0 0.0
    %6681 = vmatprep.subr.mxu0 0.0
    %6682 = vmatpush2.msra.mxu0 0.0
    %6683 = vmatprep.mubr.f32.mxu0 0.0
    %6684 = vmatmul.mubr.f32.gmra.mxu0 %v6235
    %v6685 = vpop.f32.mrf.mxu0
    %v6686 = vadd.f32 %v469, %v6685
    %v6687 = vpop.f32.mrf.mxu0
    %v6688 = vadd.f32 %v473, %v6687
    %6689 = vdwg.mxu0
    %6690 = vmatprep.subr.mxu0 %v325
    %6691 = vmatpush1.msra.mxu0 %v324
    %6692 = vmatprep.subr.mxu0 %v321
    %6693 = vmatpush1.msra.mxu0 %v320
    %6694 = vmatprep.subr.mxu0 %v317
    %6695 = vmatpush1.msra.mxu0 %v316
    %6696 = vmatprep.subr.mxu0 %v313
    %6697 = vmatpush1.msra.mxu0 %v312
    %6698 = vmatprep.subr.mxu0 %v309
    %6699 = vmatpush1.msra.mxu0 %v308
    %6700 = vmatprep.subr.mxu0 %v305
    %6701 = vmatpush1.msra.mxu0 %v304
    %6702 = vmatprep.subr.mxu0 %v301
    %6703 = vmatpush1.msra.mxu0 %v300
    %6704 = vmatprep.subr.mxu0 %v297
    %6705 = vmatpush1.msra.mxu0 %v296
    %6706 = vmatprep.subr.mxu0 %v293
    %6707 = vmatpush1.msra.mxu0 %v292
    %6708 = vmatprep.subr.mxu0 %v289
    %6709 = vmatpush1.msra.mxu0 %v288
    %6710 = vmatprep.subr.mxu0 %v285
    %6711 = vmatpush1.msra.mxu0 %v284
    %6712 = vmatprep.subr.mxu0 %v281
    %6713 = vmatpush1.msra.mxu0 %v280
    %6714 = vmatprep.subr.mxu0 %v277
    %6715 = vmatpush1.msra.mxu0 %v276
    %6716 = vmatprep.subr.mxu0 %v273
    %6717 = vmatpush1.msra.mxu0 %v272
    %6718 = vmatprep.subr.mxu0 %v269
    %6719 = vmatpush1.msra.mxu0 %v268
    %6720 = vmatprep.subr.mxu0 %v265
    %6721 = vmatpush1.msra.mxu0 %v264
    %6722 = vmatprep.subr.mxu0 0.0
    %6723 = vmatpush2.msra.mxu0 0.0
    %6724 = vmatprep.subr.mxu0 0.0
    %6725 = vmatpush2.msra.mxu0 0.0
    %6726 = vmatprep.subr.mxu0 0.0
    %6727 = vmatpush2.msra.mxu0 0.0
    %6728 = vmatprep.subr.mxu0 0.0
    %6729 = vmatpush2.msra.mxu0 0.0
    %6730 = vmatprep.subr.mxu0 0.0
    %6731 = vmatpush2.msra.mxu0 0.0
    %6732 = vmatprep.subr.mxu0 0.0
    %6733 = vmatpush2.msra.mxu0 0.0
    %6734 = vmatprep.subr.mxu0 0.0
    %6735 = vmatpush2.msra.mxu0 0.0
    %6736 = vmatprep.subr.mxu0 0.0
    %6737 = vmatpush2.msra.mxu0 0.0
    %6738 = vmatprep.subr.mxu0 0.0
    %6739 = vmatpush2.msra.mxu0 0.0
    %6740 = vmatprep.subr.mxu0 0.0
    %6741 = vmatpush2.msra.mxu0 0.0
    %6742 = vmatprep.subr.mxu0 0.0
    %6743 = vmatpush2.msra.mxu0 0.0
    %6744 = vmatprep.subr.mxu0 0.0
    %6745 = vmatpush2.msra.mxu0 0.0
    %6746 = vmatprep.subr.mxu0 0.0
    %6747 = vmatpush2.msra.mxu0 0.0
    %6748 = vmatprep.subr.mxu0 0.0
    %6749 = vmatpush2.msra.mxu0 0.0
    %6750 = vmatprep.subr.mxu0 0.0
    %6751 = vmatpush2.msra.mxu0 0.0
    %6752 = vmatprep.subr.mxu0 0.0
    %6753 = vmatpush2.msra.mxu0 0.0
    %6754 = vmatprep.mubr.f32.mxu0 0.0
    %6755 = vmatmul.mubr.f32.gmra.mxu0 %v6065
    %v6756 = vpop.f32.mrf.mxu0
    %v6757 = vadd.f32 0.0, %v6756
    %v6758 = vpop.f32.mrf.mxu0
    %v6759 = vadd.f32 0.0, %v6758
    %6760 = vdwg.mxu0
    %6761 = vmatprep.subr.mxu0 %v327
    %6762 = vmatpush1.msra.mxu0 %v326
    %6763 = vmatprep.subr.mxu0 %v323
    %6764 = vmatpush1.msra.mxu0 %v322
    %6765 = vmatprep.subr.mxu0 %v319
    %6766 = vmatpush1.msra.mxu0 %v318
    %6767 = vmatprep.subr.mxu0 %v315
    %6768 = vmatpush1.msra.mxu0 %v314
    %6769 = vmatprep.subr.mxu0 %v311
    %6770 = vmatpush1.msra.mxu0 %v310
    %6771 = vmatprep.subr.mxu0 %v307
    %6772 = vmatpush1.msra.mxu0 %v306
    %6773 = vmatprep.subr.mxu0 %v303
    %6774 = vmatpush1.msra.mxu0 %v302
    %6775 = vmatprep.subr.mxu0 %v299
    %6776 = vmatpush1.msra.mxu0 %v298
    %6777 = vmatprep.subr.mxu0 %v295
    %6778 = vmatpush1.msra.mxu0 %v294
    %6779 = vmatprep.subr.mxu0 %v291
    %6780 = vmatpush1.msra.mxu0 %v290
    %6781 = vmatprep.subr.mxu0 %v287
    %6782 = vmatpush1.msra.mxu0 %v286
    %6783 = vmatprep.subr.mxu0 %v283
    %6784 = vmatpush1.msra.mxu0 %v282
    %6785 = vmatprep.subr.mxu0 %v279
    %6786 = vmatpush1.msra.mxu0 %v278
    %6787 = vmatprep.subr.mxu0 %v275
    %6788 = vmatpush1.msra.mxu0 %v274
    %6789 = vmatprep.subr.mxu0 %v271
    %6790 = vmatpush1.msra.mxu0 %v270
    %6791 = vmatprep.subr.mxu0 %v267
    %6792 = vmatpush1.msra.mxu0 %v266
    %6793 = vmatprep.subr.mxu0 0.0
    %6794 = vmatpush2.msra.mxu0 0.0
    %6795 = vmatprep.subr.mxu0 0.0
    %6796 = vmatpush2.msra.mxu0 0.0
    %6797 = vmatprep.subr.mxu0 0.0
    %6798 = vmatpush2.msra.mxu0 0.0
    %6799 = vmatprep.subr.mxu0 0.0
    %6800 = vmatpush2.msra.mxu0 0.0
    %6801 = vmatprep.subr.mxu0 0.0
    %6802 = vmatpush2.msra.mxu0 0.0
    %6803 = vmatprep.subr.mxu0 0.0
    %6804 = vmatpush2.msra.mxu0 0.0
    %6805 = vmatprep.subr.mxu0 0.0
    %6806 = vmatpush2.msra.mxu0 0.0
    %6807 = vmatprep.subr.mxu0 0.0
    %6808 = vmatpush2.msra.mxu0 0.0
    %6809 = vmatprep.subr.mxu0 0.0
    %6810 = vmatpush2.msra.mxu0 0.0
    %6811 = vmatprep.subr.mxu0 0.0
    %6812 = vmatpush2.msra.mxu0 0.0
    %6813 = vmatprep.subr.mxu0 0.0
    %6814 = vmatpush2.msra.mxu0 0.0
    %6815 = vmatprep.subr.mxu0 0.0
    %6816 = vmatpush2.msra.mxu0 0.0
    %6817 = vmatprep.subr.mxu0 0.0
    %6818 = vmatpush2.msra.mxu0 0.0
    %6819 = vmatprep.subr.mxu0 0.0
    %6820 = vmatpush2.msra.mxu0 0.0
    %6821 = vmatprep.subr.mxu0 0.0
    %6822 = vmatpush2.msra.mxu0 0.0
    %6823 = vmatprep.subr.mxu0 0.0
    %6824 = vmatpush2.msra.mxu0 0.0
    %6825 = vmatprep.mubr.f32.mxu0 0.0
    %6826 = vmatmul.mubr.f32.gmra.mxu0 %v6065
    %v6827 = vpop.f32.mrf.mxu0
    %v6828 = vadd.f32 0.0, %v6827
    %v6829 = vpop.f32.mrf.mxu0
    %v6830 = vadd.f32 0.0, %v6829
    %6831 = vdwg.mxu0
    %v6832 = vadd.f32 %v6615, %v6757
    %v6833 = vadd.f32 %v6617, %v6759
    %v6834 = vadd.f32 %v6686, %v6828
    %v6835 = vadd.f32 %v6688, %v6830
    %v6836 = vxor.u32 %v6832, 2147483648
    %v6837 = vxor.u32 %v6833, 2147483648
    %v6838 = vxor.u32 %v6834, 2147483648
    %v6839 = vmul.f32 %v6836, 1.442695
    %v6840 = vpow.pop %v6839
    %v6841 = vmul.f32 %v6837, 1.442695
    %v6842 = vpow.pop %v6841
    %v6843 = vmul.f32 %v6838, 1.442695
    %v6844 = vpow.pop %v6843
    %v6845 = vadd.f32 %v6840, 1.0
    %v6846 = vadd.f32 %v6842, 1.0
    %v6847 = vadd.f32 %v6844, 1.0
    %v6848 = vrcp.pop %v6845
    %v6849 = vmul.f32 1.0, %v6848
    %v6850 = vrcp.pop %v6846
    %v6851 = vmul.f32 1.0, %v6850
    %v6852 = vrcp.pop %v6847
    %v6853 = vmul.f32 1.0, %v6852
    %v6854 = vtanh.pop %v6835
    %v6855 = vmul.f32 %v6851, %v6063
    %v6856 = vmul.f32 %v6849, %v6854
    %v6857 = vadd.f32 %v6855, %v6856
    %v6858 = vtanh.pop %v6857
    %v6859 = vmul.f32 %v6853, %v6858
    %6860 = vmatprep.subr.mxu0 %v389
    %6861 = vmatpush1.msra.mxu0 %v388
    %6862 = vmatprep.subr.mxu0 %v385
    %6863 = vmatpush1.msra.mxu0 %v384
    %6864 = vmatprep.subr.mxu0 %v381
    %6865 = vmatpush1.msra.mxu0 %v380
    %6866 = vmatprep.subr.mxu0 %v377
    %6867 = vmatpush1.msra.mxu0 %v376
    %6868 = vmatprep.subr.mxu0 %v373
    %6869 = vmatpush1.msra.mxu0 %v372
    %6870 = vmatprep.subr.mxu0 %v369
    %6871 = vmatpush1.msra.mxu0 %v368
    %6872 = vmatprep.subr.mxu0 %v365
    %6873 = vmatpush1.msra.mxu0 %v364
    %6874 = vmatprep.subr.mxu0 %v361
    %6875 = vmatpush1.msra.mxu0 %v360
    %6876 = vmatprep.subr.mxu0 %v357
    %6877 = vmatpush1.msra.mxu0 %v356
    %6878 = vmatprep.subr.mxu0 %v353
    %6879 = vmatpush1.msra.mxu0 %v352
    %6880 = vmatprep.subr.mxu0 %v349
    %6881 = vmatpush1.msra.mxu0 %v348
    %6882 = vmatprep.subr.mxu0 %v345
    %6883 = vmatpush1.msra.mxu0 %v344
    %6884 = vmatprep.subr.mxu0 %v341
    %6885 = vmatpush1.msra.mxu0 %v340
    %6886 = vmatprep.subr.mxu0 %v337
    %6887 = vmatpush1.msra.mxu0 %v336
    %6888 = vmatprep.subr.mxu0 %v333
    %6889 = vmatpush1.msra.mxu0 %v332
    %6890 = vmatprep.subr.mxu0 %v329
    %6891 = vmatpush1.msra.mxu0 %v328
    %6892 = vmatprep.subr.mxu0 0.0
    %6893 = vmatpush2.msra.mxu0 0.0
    %6894 = vmatprep.subr.mxu0 0.0
    %6895 = vmatpush2.msra.mxu0 0.0
    %6896 = vmatprep.subr.mxu0 0.0
    %6897 = vmatpush2.msra.mxu0 0.0
    %6898 = vmatprep.subr.mxu0 0.0
    %6899 = vmatpush2.msra.mxu0 0.0
    %6900 = vmatprep.subr.mxu0 0.0
    %6901 = vmatpush2.msra.mxu0 0.0
    %6902 = vmatprep.subr.mxu0 0.0
    %6903 = vmatpush2.msra.mxu0 0.0
    %6904 = vmatprep.subr.mxu0 0.0
    %6905 = vmatpush2.msra.mxu0 0.0
    %6906 = vmatprep.subr.mxu0 0.0
    %6907 = vmatpush2.msra.mxu0 0.0
    %6908 = vmatprep.subr.mxu0 0.0
    %6909 = vmatpush2.msra.mxu0 0.0
    %6910 = vmatprep.subr.mxu0 0.0
    %6911 = vmatpush2.msra.mxu0 0.0
    %6912 = vmatprep.subr.mxu0 0.0
    %6913 = vmatpush2.msra.mxu0 0.0
    %6914 = vmatprep.subr.mxu0 0.0
    %6915 = vmatpush2.msra.mxu0 0.0
    %6916 = vmatprep.subr.mxu0 0.0
    %6917 = vmatpush2.msra.mxu0 0.0
    %6918 = vmatprep.subr.mxu0 0.0
    %6919 = vmatpush2.msra.mxu0 0.0
    %6920 = vmatprep.subr.mxu0 0.0
    %6921 = vmatpush2.msra.mxu0 0.0
    %6922 = vmatprep.subr.mxu0 0.0
    %6923 = vmatpush2.msra.mxu0 0.0
    %6924 = vmatprep.mubr.f32.mxu0 0.0
    %6925 = vmatmul.mubr.f32.gmra.mxu0 %v6859
    %v6926 = vpop.f32.mrf.mxu0
    %v6927 = vadd.f32 %v483, %v6926
    %v6928 = vpop.f32.mrf.mxu0
    %v6929 = vadd.f32 %v487, %v6928
    %6930 = vdwg.mxu0
    %6931 = vmatprep.subr.mxu0 %v391
    %6932 = vmatpush1.msra.mxu0 %v390
    %6933 = vmatprep.subr.mxu0 %v387
    %6934 = vmatpush1.msra.mxu0 %v386
    %6935 = vmatprep.subr.mxu0 %v383
    %6936 = vmatpush1.msra.mxu0 %v382
    %6937 = vmatprep.subr.mxu0 %v379
    %6938 = vmatpush1.msra.mxu0 %v378
    %6939 = vmatprep.subr.mxu0 %v375
    %6940 = vmatpush1.msra.mxu0 %v374
    %6941 = vmatprep.subr.mxu0 %v371
    %6942 = vmatpush1.msra.mxu0 %v370
    %6943 = vmatprep.subr.mxu0 %v367
    %6944 = vmatpush1.msra.mxu0 %v366
    %6945 = vmatprep.subr.mxu0 %v363
    %6946 = vmatpush1.msra.mxu0 %v362
    %6947 = vmatprep.subr.mxu0 %v359
    %6948 = vmatpush1.msra.mxu0 %v358
    %6949 = vmatprep.subr.mxu0 %v355
    %6950 = vmatpush1.msra.mxu0 %v354
    %6951 = vmatprep.subr.mxu0 %v351
    %6952 = vmatpush1.msra.mxu0 %v350
    %6953 = vmatprep.subr.mxu0 %v347
    %6954 = vmatpush1.msra.mxu0 %v346
    %6955 = vmatprep.subr.mxu0 %v343
    %6956 = vmatpush1.msra.mxu0 %v342
    %6957 = vmatprep.subr.mxu0 %v339
    %6958 = vmatpush1.msra.mxu0 %v338
    %6959 = vmatprep.subr.mxu0 %v335
    %6960 = vmatpush1.msra.mxu0 %v334
    %6961 = vmatprep.subr.mxu0 %v331
    %6962 = vmatpush1.msra.mxu0 %v330
    %6963 = vmatprep.subr.mxu0 0.0
    %6964 = vmatpush2.msra.mxu0 0.0
    %6965 = vmatprep.subr.mxu0 0.0
    %6966 = vmatpush2.msra.mxu0 0.0
    %6967 = vmatprep.subr.mxu0 0.0
    %6968 = vmatpush2.msra.mxu0 0.0
    %6969 = vmatprep.subr.mxu0 0.0
    %6970 = vmatpush2.msra.mxu0 0.0
    %6971 = vmatprep.subr.mxu0 0.0
    %6972 = vmatpush2.msra.mxu0 0.0
    %6973 = vmatprep.subr.mxu0 0.0
    %6974 = vmatpush2.msra.mxu0 0.0
    %6975 = vmatprep.subr.mxu0 0.0
    %6976 = vmatpush2.msra.mxu0 0.0
    %6977 = vmatprep.subr.mxu0 0.0
    %6978 = vmatpush2.msra.mxu0 0.0
    %6979 = vmatprep.subr.mxu0 0.0
    %6980 = vmatpush2.msra.mxu0 0.0
    %6981 = vmatprep.subr.mxu0 0.0
    %6982 = vmatpush2.msra.mxu0 0.0
    %6983 = vmatprep.subr.mxu0 0.0
    %6984 = vmatpush2.msra.mxu0 0.0
    %6985 = vmatprep.subr.mxu0 0.0
    %6986 = vmatpush2.msra.mxu0 0.0
    %6987 = vmatprep.subr.mxu0 0.0
    %6988 = vmatpush2.msra.mxu0 0.0
    %6989 = vmatprep.subr.mxu0 0.0
    %6990 = vmatpush2.msra.mxu0 0.0
    %6991 = vmatprep.subr.mxu0 0.0
    %6992 = vmatpush2.msra.mxu0 0.0
    %6993 = vmatprep.subr.mxu0 0.0
    %6994 = vmatpush2.msra.mxu0 0.0
    %6995 = vmatprep.mubr.f32.mxu0 0.0
    %6996 = vmatmul.mubr.f32.gmra.mxu0 %v6859
    %v6997 = vpop.f32.mrf.mxu0
    %v6998 = vadd.f32 %v491, %v6997
    %v6999 = vpop.f32.mrf.mxu0
    %v7000 = vadd.f32 %v495, %v6999
    %7001 = vdwg.mxu0
    %7002 = vmatprep.subr.mxu0 %v453
    %7003 = vmatpush1.msra.mxu0 %v452
    %7004 = vmatprep.subr.mxu0 %v449
    %7005 = vmatpush1.msra.mxu0 %v448
    %7006 = vmatprep.subr.mxu0 %v445
    %7007 = vmatpush1.msra.mxu0 %v444
    %7008 = vmatprep.subr.mxu0 %v441
    %7009 = vmatpush1.msra.mxu0 %v440
    %7010 = vmatprep.subr.mxu0 %v437
    %7011 = vmatpush1.msra.mxu0 %v436
    %7012 = vmatprep.subr.mxu0 %v433
    %7013 = vmatpush1.msra.mxu0 %v432
    %7014 = vmatprep.subr.mxu0 %v429
    %7015 = vmatpush1.msra.mxu0 %v428
    %7016 = vmatprep.subr.mxu0 %v425
    %7017 = vmatpush1.msra.mxu0 %v424
    %7018 = vmatprep.subr.mxu0 %v421
    %7019 = vmatpush1.msra.mxu0 %v420
    %7020 = vmatprep.subr.mxu0 %v417
    %7021 = vmatpush1.msra.mxu0 %v416
    %7022 = vmatprep.subr.mxu0 %v413
    %7023 = vmatpush1.msra.mxu0 %v412
    %7024 = vmatprep.subr.mxu0 %v409
    %7025 = vmatpush1.msra.mxu0 %v408
    %7026 = vmatprep.subr.mxu0 %v405
    %7027 = vmatpush1.msra.mxu0 %v404
    %7028 = vmatprep.subr.mxu0 %v401
    %7029 = vmatpush1.msra.mxu0 %v400
    %7030 = vmatprep.subr.mxu0 %v397
    %7031 = vmatpush1.msra.mxu0 %v396
    %7032 = vmatprep.subr.mxu0 %v393
    %7033 = vmatpush1.msra.mxu0 %v392
    %7034 = vmatprep.subr.mxu0 0.0
    %7035 = vmatpush2.msra.mxu0 0.0
    %7036 = vmatprep.subr.mxu0 0.0
    %7037 = vmatpush2.msra.mxu0 0.0
    %7038 = vmatprep.subr.mxu0 0.0
    %7039 = vmatpush2.msra.mxu0 0.0
    %7040 = vmatprep.subr.mxu0 0.0
    %7041 = vmatpush2.msra.mxu0 0.0
    %7042 = vmatprep.subr.mxu0 0.0
    %7043 = vmatpush2.msra.mxu0 0.0
    %7044 = vmatprep.subr.mxu0 0.0
    %7045 = vmatpush2.msra.mxu0 0.0
    %7046 = vmatprep.subr.mxu0 0.0
    %7047 = vmatpush2.msra.mxu0 0.0
    %7048 = vmatprep.subr.mxu0 0.0
    %7049 = vmatpush2.msra.mxu0 0.0
    %7050 = vmatprep.subr.mxu0 0.0
    %7051 = vmatpush2.msra.mxu0 0.0
    %7052 = vmatprep.subr.mxu0 0.0
    %7053 = vmatpush2.msra.mxu0 0.0
    %7054 = vmatprep.subr.mxu0 0.0
    %7055 = vmatpush2.msra.mxu0 0.0
    %7056 = vmatprep.subr.mxu0 0.0
    %7057 = vmatpush2.msra.mxu0 0.0
    %7058 = vmatprep.subr.mxu0 0.0
    %7059 = vmatpush2.msra.mxu0 0.0
    %7060 = vmatprep.subr.mxu0 0.0
    %7061 = vmatpush2.msra.mxu0 0.0
    %7062 = vmatprep.subr.mxu0 0.0
    %7063 = vmatpush2.msra.mxu0 0.0
    %7064 = vmatprep.subr.mxu0 0.0
    %7065 = vmatpush2.msra.mxu0 0.0
    %7066 = vmatprep.mubr.f32.mxu0 0.0
    %7067 = vmatmul.mubr.f32.gmra.mxu0 %v6547
    %v7068 = vpop.f32.mrf.mxu0
    %v7069 = vadd.f32 0.0, %v7068
    %v7070 = vpop.f32.mrf.mxu0
    %v7071 = vadd.f32 0.0, %v7070
    %7072 = vdwg.mxu0
    %7073 = vmatprep.subr.mxu0 %v455
    %7074 = vmatpush1.msra.mxu0 %v454
    %7075 = vmatprep.subr.mxu0 %v451
    %7076 = vmatpush1.msra.mxu0 %v450
    %7077 = vmatprep.subr.mxu0 %v447
    %7078 = vmatpush1.msra.mxu0 %v446
    %7079 = vmatprep.subr.mxu0 %v443
    %7080 = vmatpush1.msra.mxu0 %v442
    %7081 = vmatprep.subr.mxu0 %v439
    %7082 = vmatpush1.msra.mxu0 %v438
    %7083 = vmatprep.subr.mxu0 %v435
    %7084 = vmatpush1.msra.mxu0 %v434
    %7085 = vmatprep.subr.mxu0 %v431
    %7086 = vmatpush1.msra.mxu0 %v430
    %7087 = vmatprep.subr.mxu0 %v427
    %7088 = vmatpush1.msra.mxu0 %v426
    %7089 = vmatprep.subr.mxu0 %v423
    %7090 = vmatpush1.msra.mxu0 %v422
    %7091 = vmatprep.subr.mxu0 %v419
    %7092 = vmatpush1.msra.mxu0 %v418
    %7093 = vmatprep.subr.mxu0 %v415
    %7094 = vmatpush1.msra.mxu0 %v414
    %7095 = vmatprep.subr.mxu0 %v411
    %7096 = vmatpush1.msra.mxu0 %v410
    %7097 = vmatprep.subr.mxu0 %v407
    %7098 = vmatpush1.msra.mxu0 %v406
    %7099 = vmatprep.subr.mxu0 %v403
    %7100 = vmatpush1.msra.mxu0 %v402
    %7101 = vmatprep.subr.mxu0 %v399
    %7102 = vmatpush1.msra.mxu0 %v398
    %7103 = vmatprep.subr.mxu0 %v395
    %7104 = vmatpush1.msra.mxu0 %v394
    %7105 = vmatprep.subr.mxu0 0.0
    %7106 = vmatpush2.msra.mxu0 0.0
    %7107 = vmatprep.subr.mxu0 0.0
    %7108 = vmatpush2.msra.mxu0 0.0
    %7109 = vmatprep.subr.mxu0 0.0
    %7110 = vmatpush2.msra.mxu0 0.0
    %7111 = vmatprep.subr.mxu0 0.0
    %7112 = vmatpush2.msra.mxu0 0.0
    %7113 = vmatprep.subr.mxu0 0.0
    %7114 = vmatpush2.msra.mxu0 0.0
    %7115 = vmatprep.subr.mxu0 0.0
    %7116 = vmatpush2.msra.mxu0 0.0
    %7117 = vmatprep.subr.mxu0 0.0
    %7118 = vmatpush2.msra.mxu0 0.0
    %7119 = vmatprep.subr.mxu0 0.0
    %7120 = vmatpush2.msra.mxu0 0.0
    %7121 = vmatprep.subr.mxu0 0.0
    %7122 = vmatpush2.msra.mxu0 0.0
    %7123 = vmatprep.subr.mxu0 0.0
    %7124 = vmatpush2.msra.mxu0 0.0
    %7125 = vmatprep.subr.mxu0 0.0
    %7126 = vmatpush2.msra.mxu0 0.0
    %7127 = vmatprep.subr.mxu0 0.0
    %7128 = vmatpush2.msra.mxu0 0.0
    %7129 = vmatprep.subr.mxu0 0.0
    %7130 = vmatpush2.msra.mxu0 0.0
    %7131 = vmatprep.subr.mxu0 0.0
    %7132 = vmatpush2.msra.mxu0 0.0
    %7133 = vmatprep.subr.mxu0 0.0
    %7134 = vmatpush2.msra.mxu0 0.0
    %7135 = vmatprep.subr.mxu0 0.0
    %7136 = vmatpush2.msra.mxu0 0.0
    %7137 = vmatprep.mubr.f32.mxu0 0.0
    %7138 = vmatmul.mubr.f32.gmra.mxu0 %v6547
    %v7139 = vpop.f32.mrf.mxu0
    %v7140 = vadd.f32 0.0, %v7139
    %v7141 = vpop.f32.mrf.mxu0
    %v7142 = vadd.f32 0.0, %v7141
    %7143 = vdwg.mxu0
    %v7144 = vadd.f32 %v6927, %v7069
    %v7145 = vadd.f32 %v6929, %v7071
    %v7146 = vadd.f32 %v6998, %v7140
    %v7147 = vadd.f32 %v7000, %v7142
    %v7148 = vxor.u32 %v7144, 2147483648
    %v7149 = vxor.u32 %v7145, 2147483648
    %v7150 = vxor.u32 %v7146, 2147483648
    %v7151 = vmul.f32 %v7148, 1.442695
    %v7152 = vpow.pop %v7151
    %v7153 = vmul.f32 %v7149, 1.442695
    %v7154 = vpow.pop %v7153
    %v7155 = vmul.f32 %v7150, 1.442695
    %v7156 = vpow.pop %v7155
    %v7157 = vadd.f32 %v7152, 1.0
    %v7158 = vadd.f32 %v7154, 1.0
    %v7159 = vadd.f32 %v7156, 1.0
    %v7160 = vrcp.pop %v7157
    %v7161 = vmul.f32 1.0, %v7160
    %v7162 = vrcp.pop %v7158
    %v7163 = vmul.f32 1.0, %v7162
    %v7164 = vrcp.pop %v7159
    %v7165 = vmul.f32 1.0, %v7164
    %v7166 = vtanh.pop %v7147
    %v7167 = vmul.f32 %v7163, %v6545
    %v7168 = vmul.f32 %v7161, %v7166
    %v7169 = vadd.f32 %v7167, %v7168
    %v7170 = vtanh.pop %v7169
    %v7171 = vmul.f32 %v7165, %v7170
    %v7172 = vld [vmem:[#allocation12] sm:$0xff]
    %v7173 = vld [vmem:[#allocation12 + $0x8] sm:$0xff]
    %v7174 = vld [vmem:[#allocation12 + $0x10] sm:$0xff]
    %v7175 = vld [vmem:[#allocation12 + $0x18] sm:$0xff]
    %v7176 = vld [vmem:[#allocation12 + $0x20] sm:$0xff]
    %v7177 = vld [vmem:[#allocation12 + $0x28] sm:$0xff]
    %v7178 = vld [vmem:[#allocation12 + $0x30] sm:$0xff]
    %v7179 = vld [vmem:[#allocation12 + $0x38] sm:$0xff]
    %v7180 = vld [vmem:[#allocation12 + $0x40] sm:$0xff]
    %v7181 = vld [vmem:[#allocation12 + $0x48] sm:$0xff]
    %v7182 = vld [vmem:[#allocation12 + $0x50] sm:$0xff]
    %v7183 = vld [vmem:[#allocation12 + $0x58] sm:$0xff]
    %v7184 = vld [vmem:[#allocation12 + $0x60] sm:$0xff]
    %v7185 = vld [vmem:[#allocation12 + $0x68] sm:$0xff]
    %v7186 = vld [vmem:[#allocation12 + $0x70] sm:$0xff]
    %v7187 = vld [vmem:[#allocation12 + $0x78] sm:$0xff]
    %v7188 = vld [vmem:[%s11] sm:$0x1]
    %v7190 = vlaneseq
    %v7191 = vshrl.u32 %v7190, 7
    %v7192 = vsub.s32 0, %v7191
    %v7193 = vrot.slane %v7188, %v7192
    %7195 = vmatprep.subr.mxu0 0.0
    %7196 = vmatpush1.msra.mxu0 %v7187
    %7197 = vmatprep.subr.mxu0 0.0
    %7198 = vmatpush1.msra.mxu0 %v7186
    %7199 = vmatprep.subr.mxu0 0.0
    %7200 = vmatpush1.msra.mxu0 %v7185
    %7201 = vmatprep.subr.mxu0 0.0
    %7202 = vmatpush1.msra.mxu0 %v7184
    %7203 = vmatprep.subr.mxu0 0.0
    %7204 = vmatpush1.msra.mxu0 %v7183
    %7205 = vmatprep.subr.mxu0 0.0
    %7206 = vmatpush1.msra.mxu0 %v7182
    %7207 = vmatprep.subr.mxu0 0.0
    %7208 = vmatpush1.msra.mxu0 %v7181
    %7209 = vmatprep.subr.mxu0 0.0
    %7210 = vmatpush1.msra.mxu0 %v7180
    %7211 = vmatprep.subr.mxu0 0.0
    %7212 = vmatpush1.msra.mxu0 %v7179
    %7213 = vmatprep.subr.mxu0 0.0
    %7214 = vmatpush1.msra.mxu0 %v7178
    %7215 = vmatprep.subr.mxu0 0.0
    %7216 = vmatpush1.msra.mxu0 %v7177
    %7217 = vmatprep.subr.mxu0 0.0
    %7218 = vmatpush1.msra.mxu0 %v7176
    %7219 = vmatprep.subr.mxu0 0.0
    %7220 = vmatpush1.msra.mxu0 %v7175
    %7221 = vmatprep.subr.mxu0 0.0
    %7222 = vmatpush1.msra.mxu0 %v7174
    %7223 = vmatprep.subr.mxu0 0.0
    %7224 = vmatpush1.msra.mxu0 %v7173
    %7225 = vmatprep.subr.mxu0 0.0
    %7226 = vmatpush1.msra.mxu0 %v7172
    %7227 = vmatprep.subr.mxu0 0.0
    %7228 = vmatpush2.msra.mxu0 0.0
    %7229 = vmatprep.subr.mxu0 0.0
    %7230 = vmatpush2.msra.mxu0 0.0
    %7231 = vmatprep.subr.mxu0 0.0
    %7232 = vmatpush2.msra.mxu0 0.0
    %7233 = vmatprep.subr.mxu0 0.0
    %7234 = vmatpush2.msra.mxu0 0.0
    %7235 = vmatprep.subr.mxu0 0.0
    %7236 = vmatpush2.msra.mxu0 0.0
    %7237 = vmatprep.subr.mxu0 0.0
    %7238 = vmatpush2.msra.mxu0 0.0
    %7239 = vmatprep.subr.mxu0 0.0
    %7240 = vmatpush2.msra.mxu0 0.0
    %7241 = vmatprep.subr.mxu0 0.0
    %7242 = vmatpush2.msra.mxu0 0.0
    %7243 = vmatprep.subr.mxu0 0.0
    %7244 = vmatpush2.msra.mxu0 0.0
    %7245 = vmatprep.subr.mxu0 0.0
    %7246 = vmatpush2.msra.mxu0 0.0
    %7247 = vmatprep.subr.mxu0 0.0
    %7248 = vmatpush2.msra.mxu0 0.0
    %7249 = vmatprep.subr.mxu0 0.0
    %7250 = vmatpush2.msra.mxu0 0.0
    %7251 = vmatprep.subr.mxu0 0.0
    %7252 = vmatpush2.msra.mxu0 0.0
    %7253 = vmatprep.subr.mxu0 0.0
    %7254 = vmatpush2.msra.mxu0 0.0
    %7255 = vmatprep.subr.mxu0 0.0
    %7256 = vmatpush2.msra.mxu0 0.0
    %7257 = vmatprep.subr.mxu0 0.0
    %7258 = vmatpush2.msra.mxu0 0.0
    %7259 = vmatprep.mubr.f32.mxu0 0.0
    %7260 = vmatmul.mubr.f32.gmra.mxu0 %v7171
    %v7261 = vpop.f32.mrf.mxu0
    %v7262 = vadd.f32 %v7193, %v7261
    %v7263 = vpop.f32.mrf.mxu0
    %7264 = vdwg.mxu0
    %7265 = vst [vmem:[%s12] sm:$0xff] %v7262
    // Predicated region
    $region78: #{lstm_network_forward.1} parent=1 // pred_check
      _
    $region79: #{lstm_network_forward.1} parent=1 // pred_check_branch
      %7267 = sbr.rel (0) target = $region81
    $region80: #{lstm_network_forward.1} parent=1 // pred_region
      _
    $region81: #{lstm_network_forward.1} parent=1 // pred_fallthru
      _
    // Predicated region
    $region82: #{lstm_network_forward.1} parent=1 // pred_check
      _
    $region83: #{lstm_network_forward.1} parent=1 // pred_check_branch
      %7269 = sbr.rel (0) target = $region85
    $region84: #{lstm_network_forward.1} parent=1 // pred_region
      _
    $region85: #{lstm_network_forward.1} parent=1 // pred_fallthru
      _
    %7270 = vsyncpa [#allocation3], 1
    %7271 = vsyncpa [#allocation5], 1
    %7272 = vsyncpa [#allocation8], 1
    %7273 = vsyncpa [#allocation11], 1

</llo_original>
